<compile_context>
chip_gen: v5e
topology: v5e:2x2
jax: 0.10.0
libtpu: 0.0.40
codegen_flags: <defaults>
</compile_context>

<pallas_src>
import functools

import jax
import jax.numpy as jnp
from jax import lax
from jax.experimental import pallas as pl
from jax.experimental.pallas import tpu as pltpu


# Conv stack hard-coded by the PyTorch module:
#   Conv2d(1,32,k=8,s=4) -> ReLU -> Conv2d(32,64,k=4,s=2) -> ReLU -> Conv2d(64,64,k=3,s=1) -> ReLU
CONV1 = dict(k=8, s=4, cin=1, cout=32)
CONV2 = dict(k=4, s=2, cin=32, cout=64)
CONV3 = dict(k=3, s=1, cin=64, cout=64)
HIDDEN = 512
OUT_PAD = 128      # lane-dense padded Q width (sliced to num_actions in the wrapper)
DEFAULT_TB = 64    # batch tile: multiple of 16; sweep 64-256 (v5e/v6e), 64-128 (v7x)


def _conv_out(n, k, s):
    return (n - k) // s + 1


def _round_up(n, m):
    return -(-n // m) * m


def conv_geometry(h, w):
    oh1, ow1 = _conv_out(h, CONV1["k"], CONV1["s"]), _conv_out(w, CONV1["k"], CONV1["s"])
    oh2, ow2 = _conv_out(oh1, CONV2["k"], CONV2["s"]), _conv_out(ow1, CONV2["k"], CONV2["s"])
    oh3, ow3 = _conv_out(oh2, CONV3["k"], CONV3["s"]), _conv_out(ow2, CONV3["k"], CONV3["s"])
    return (oh1, ow1), (oh2, ow2), (oh3, ow3)


# ----------------------------------------------------------------------------
# Fused Pallas kernel: conv1 matmul + scratch-staged im2col for conv2/conv3 +
# merged dueling heads (combine pre-folded into the head-2 weights).
# One batch tile (tb samples) per grid step.
# ----------------------------------------------------------------------------
def dueling_dqn_kernel(p1_ref, w1_ref, b1_ref, w2_ref, b2_ref, w3_ref, b3_ref,
                       wh1_ref, bh1_ref, wh2_ref, bh2_ref, o_ref,
                       y1_s, p2_s, y2_s, p3_s, feat_s, *, tb, geom):
    (oh1, ow1), (oh2, ow2), (oh3, ow3) = geom
    k2, s2, c1 = CONV2["k"], CONV2["s"], CONV2["cin"]
    k3, s3, c2 = CONV3["k"], CONV3["s"], CONV3["cin"]
    c3 = CONV3["cout"]
    f32, bf16 = jnp.float32, jnp.bfloat16

    # ---- conv1: one matmul over host-prepared patches (rows ordered (h, w, b)) ----
    y1 = jnp.dot(p1_ref[...], w1_ref[...], preferred_element_type=f32)
    y1_s[...] = jnp.maximum(y1 + b1_ref[...], 0.0).astype(bf16)   # single cast, pre-gather

    # ---- conv2: im2col staged through VMEM scratch (aligned bf16 copies) ----
    for oh in range(oh2):
        for ow in range(ow2):
            dst = (oh * ow2 + ow) * tb
            for i in range(k2):
                for j in range(k2):
                    src = ((s2 * oh + i) * ow1 + (s2 * ow + j)) * tb
                    col = (i * k2 + j) * c1
                    p2_s[pl.ds(dst, tb), pl.ds(col, c1)] = y1_s[pl.ds(src, tb), :]
    y2 = jnp.dot(p2_s[...], w2_ref[...], preferred_element_type=f32)
    y2_s[...] = jnp.maximum(y2 + b2_ref[...], 0.0).astype(bf16)

    # ---- conv3: same staged im2col ----
    for oh in range(oh3):
        for ow in range(ow3):
            dst = (oh * ow3 + ow) * tb
            for i in range(k3):
                for j in range(k3):
                    src = ((s3 * oh + i) * ow2 + (s3 * ow + j)) * tb
                    col = (i * k3 + j) * c2
                    p3_s[pl.ds(dst, tb), pl.ds(col, c2)] = y2_s[pl.ds(src, tb), :]
    y3 = jnp.dot(p3_s[...], w3_ref[...], preferred_element_type=f32)
    y3 = jnp.maximum(y3 + b3_ref[...], 0.0).astype(bf16)

    # ---- flatten to (tb, F), feature order (h, w, c); head-1 weights permuted to match ----
    for pos in range(oh3 * ow3):
        feat_s[:, pl.ds(pos * c3, c3)] = y3[pos * tb:(pos + 1) * tb, :]

    # ---- merged dueling heads; dueling combine pre-folded into wh2/bh2 ----
    h = jnp.dot(feat_s[...], wh1_ref[...], preferred_element_type=f32)
    h = jnp.maximum(h + bh1_ref[...], 0.0).astype(bf16)           # (tb, 2*HIDDEN) = [hv | ha]
    # Output is already Q padded to 128 lanes -> single unmasked lane-dense store.
    o_ref[...] = jnp.dot(h, wh2_ref[...], preferred_element_type=f32) + bh2_ref[...]


# ----------------------------------------------------------------------------
# Host-side glue: input-layer im2col (per-tile layout) and parameter packing.
# ----------------------------------------------------------------------------
def conv1_im2col(x_nchw, tb, geom):
    """Input-layer im2col, per batch tile, rows ordered (oh, ow, b-in-tile)."""
    (oh1, ow1), _, _ = geom
    k1, s1 = CONV1["k"], CONV1["s"]
    B = x_nchw.shape[0]
    nb = -(-B // tb)
    x = jnp.pad(x_nchw, ((0, nb * tb - B), (0, 0), (0, 0), (0, 0)))[:, 0]   # (Bp, H, W)
    cols = [x[:, ki:ki + s1 * (oh1 - 1) + 1:s1, kj:kj + s1 * (ow1 - 1) + 1:s1]
            for ki in range(k1) for kj in range(k1)]
    pt = jnp.stack(cols, axis=-1)                        # (Bp, oh1, ow1, k1*k1)
    pt = pt.reshape(nb, tb, oh1, ow1, k1 * k1)
    pt = jnp.transpose(pt, (0, 2, 3, 1, 4))              # (nb, oh1, ow1, tb, kk)
    return pt.reshape(nb, oh1 * ow1 * tb, k1 * k1).astype(jnp.bfloat16), nb


def pack_params(p, num_actions, input_hw):
    """Re-pack PyTorch-layout params into kernel-ready (bf16 matmul) matrices."""
    _, _, (oh3, ow3) = conv_geometry(*input_hw)
    bf16 = jnp.bfloat16

    def conv_w(w):  # OIHW -> [kh*kw*Cin, Cout], row order (kh, kw, cin)
        co, ci, kh, kw = w.shape
        return jnp.transpose(w, (2, 3, 1, 0)).reshape(kh * kw * ci, co)

    # Permute head layer-1 rows from torch's flatten order (c, h, w) to the
    # kernel's feature order (h, w, c).  Identity when the conv output is 1x1.
    hw, c3 = oh3 * ow3, CONV3["cout"]
    perm = (jnp.arange(c3)[None, :] * hw + jnp.arange(hw)[:, None]).reshape(-1)
    v1w, a1w = p["v1w"][perm], p["a1w"][perm]

    hidden = p["v1w"].shape[1]
    A = num_actions
    assert A <= OUT_PAD
    # Fold the dueling combine  Q = V*1_A + A_logits @ (I_A - ones/A)  into the
    # packed second head layer (in f32, before the bf16 cast).
    comb = jnp.eye(A, dtype=jnp.float32) - jnp.full((A, A), 1.0 / A, jnp.float32)
    wh2 = jnp.zeros((2 * hidden, OUT_PAD), jnp.float32)
    wh2 = wh2.at[:hidden, :A].set(jnp.tile(p["v2w"], (1, A)))     # V broadcast per action lane
    wh2 = wh2.at[hidden:, :A].set(p["a2w"] @ comb)
    bh2 = jnp.zeros((1, OUT_PAD), jnp.float32)
    bh2 = bh2.at[:, :A].set(p["v2b"] + p["a2b"] @ comb)

    return dict(
        w1=conv_w(p["c1w"]).astype(bf16), b1=p["c1b"],
        w2=conv_w(p["c2w"]).astype(bf16), b2=p["c2b"],
        w3=conv_w(p["c3w"]).astype(bf16), b3=p["c3b"],
        wh1=jnp.concatenate([v1w, a1w], axis=1).astype(bf16),
        bh1=jnp.concatenate([p["v1b"], p["a1b"]], axis=1),
        wh2=wh2.astype(bf16), bh2=bh2,
    )


def dueling_dqn_forward(packed, x_nchw, *, num_actions, tb=DEFAULT_TB):
    """Forward pass matching DuelingDQNModel.forward (NCHW float32 input)."""
    B, cin, H, W = x_nchw.shape
    assert cin == CONV1["cin"]
    geom = conv_geometry(H, W)
    (oh1, ow1), (oh2, ow2), (oh3, ow3) = geom

    # Batch tile: multiple of 16 (bf16 sublane packing); clamp for small batches.
    tb = min(_round_up(tb, 16), _round_up(B, 16))
    p1, nb = conv1_im2col(x_nchw, tb, geom)
    F = oh3 * ow3 * CONV3["cout"]

    flops = 2 * nb * (
        oh1 * ow1 * tb * (CONV1["k"] ** 2 * CONV1["cin"]) * CONV1["cout"]
        + oh2 * ow2 * tb * (CONV2["k"] ** 2 * CONV2["cin"]) * CONV2["cout"]
        + oh3 * ow3 * tb * (CONV3["k"] ** 2 * CONV3["cin"]) * CONV3["cout"]
        + tb * F * 2 * HIDDEN
        + tb * 2 * HIDDEN * OUT_PAD)
    weight_bytes = sum(int(packed[k].size) * packed[k].dtype.itemsize
                       for k in ("w1", "b1", "w2", "b2", "w3", "b3",
                                 "wh1", "bh1", "wh2", "bh2"))
    bytes_accessed = int(p1.size) * 2 + weight_bytes + nb * tb * OUT_PAD * 4

    def const_spec(a):   # whole-array block, constant index map (weights / biases)
        return pl.BlockSpec(a.shape, lambda t: (0,) * a.ndim)

    kernel = functools.partial(dueling_dqn_kernel, tb=tb, geom=geom)
    out = pl.pallas_call(
        kernel,
        out_shape=jax.ShapeDtypeStruct((nb, tb, OUT_PAD), jnp.float32),
        grid=(nb,),
        in_specs=[
            pl.BlockSpec((None,) + p1.shape[1:], lambda t: (t, 0, 0)),
            const_spec(packed["w1"]), const_spec(packed["b1"]),
            const_spec(packed["w2"]), const_spec(packed["b2"]),
            const_spec(packed["w3"]), const_spec(packed["b3"]),
            const_spec(packed["wh1"]), const_spec(packed["bh1"]),
            const_spec(packed["wh2"]), const_spec(packed["bh2"]),
        ],
        out_specs=pl.BlockSpec((None, tb, OUT_PAD), lambda t: (t, 0, 0)),
        scratch_shapes=[
            pltpu.VMEM((oh1 * ow1 * tb, CONV1["cout"]), jnp.bfloat16),                   # y1
            pltpu.VMEM((oh2 * ow2 * tb, CONV2["k"] ** 2 * CONV2["cin"]), jnp.bfloat16),  # p2
            pltpu.VMEM((oh2 * ow2 * tb, CONV2["cout"]), jnp.bfloat16),                   # y2
            pltpu.VMEM((oh3 * ow3 * tb, CONV3["k"] ** 2 * CONV3["cin"]), jnp.bfloat16),  # p3
            pltpu.VMEM((tb, F), jnp.bfloat16),                                            # feat
        ],
        compiler_params=pltpu.CompilerParams(
            dimension_semantics=("parallel",),
            vmem_limit_bytes=64 * 1024 * 1024),
        cost_estimate=pl.CostEstimate(flops=flops, transcendentals=0,
                                      bytes_accessed=bytes_accessed),
    )(p1, packed["w1"], packed["b1"], packed["w2"], packed["b2"],
      packed["w3"], packed["b3"], packed["wh1"], packed["bh1"],
      packed["wh2"], packed["bh2"])
    return out.reshape(nb * tb, OUT_PAD)[:B, :num_actions]


# ----------------------------------------------------------------------------
# Parameter init (PyTorch-style uniform) and pure-JAX f32 reference.
# ----------------------------------------------------------------------------
def init_params(key, conv_out_size, num_actions, hidden=HIDDEN):
    def u(k, fan_in, shape):
        s = 1.0 / jnp.sqrt(jnp.float32(fan_in))
        return jax.random.uniform(k, shape, jnp.float32, -s, s)

    ks = jax.random.split(key, 14)
    p = {}
    p["c1w"] = u(ks[0], 1 * 8 * 8, (32, 1, 8, 8))
    p["c1b"] = u(ks[1], 1 * 8 * 8, (1, 32))
    p["c2w"] = u(ks[2], 32 * 4 * 4, (64, 32, 4, 4))
    p["c2b"] = u(ks[3], 32 * 4 * 4, (1, 64))
    p["c3w"] = u(ks[4], 64 * 3 * 3, (64, 64, 3, 3))
    p["c3b"] = u(ks[5], 64 * 3 * 3, (1, 64))
    p["v1w"] = u(ks[6], conv_out_size, (conv_out_size, hidden))
    p["v1b"] = u(ks[7], conv_out_size, (1, hidden))
    p["v2w"] = u(ks[8], hidden, (hidden, 1))
    p["v2b"] = u(ks[9], hidden, (1, 1))
    p["a1w"] = u(ks[10], conv_out_size, (conv_out_size, hidden))
    p["a1b"] = u(ks[11], conv_out_size, (1, hidden))
    p["a2w"] = u(ks[12], hidden, (hidden, num_actions))
    p["a2b"] = u(ks[13], hidden, (1, num_actions))
    return p


def reference_forward(params, x_nchw):
    y = x_nchw
    for wk, bk, stride in [("c1w", "c1b", 4), ("c2w", "c2b", 2), ("c3w", "c3b", 1)]:
        y = lax.conv_general_dilated(
            y, params[wk], (stride, stride), "VALID",
            dimension_numbers=("NCHW", "OIHW", "NCHW"))
        y = jnp.maximum(y + params[bk].reshape(1, -1, 1, 1), 0.0)
    feat = y.reshape(y.shape[0], -1)
    hv = jnp.maximum(feat @ params["v1w"] + params["v1b"], 0.0)
    v = hv @ params["v2w"] + params["v2b"]
    ha = jnp.maximum(feat @ params["a1w"] + params["a1b"], 0.0)
    a = ha @ params["a2w"] + params["a2b"]
    return v + (a - a.mean(axis=1, keepdims=True))


# ----------------------------------------------------------------------------
if __name__ == "__main__":
    # Smallest spatial size that survives the conv stack: 36 -> 8 -> 3 -> 1.
    batch, in_ch, spatial = 2, 1, 36
    num_actions = 6

    _, _, (oh3, ow3) = conv_geometry(spatial, spatial)
    conv_out_size = CONV3["cout"] * oh3 * ow3          # 64 for a 36x36 input

    key = jax.random.PRNGKey(0)
    k_x, k_p = jax.random.split(key)
    x = jax.random.normal(k_x, (batch, in_ch, spatial, spatial), jnp.float32)
    params = init_params(k_p, conv_out_size, num_actions)
    packed = pack_params(params, num_actions, (spatial, spatial))

    forward = jax.jit(functools.partial(dueling_dqn_forward, num_actions=num_actions))
    q = jax.block_until_ready(forward(packed, x))
    assert q.shape == (batch, num_actions), q.shape

    q_ref = jax.block_until_ready(reference_forward(params, x))
    err = float(jnp.max(jnp.abs(q - q_ref)))
    # bf16 MXU matmuls (f32 accumulation) vs. pure-f32 reference.
    assert jnp.allclose(q, q_ref, rtol=2e-2, atol=2e-2), ("mismatch vs reference", err)

    print("KERNEL_OK")
</pallas_src>

<mosaic_0001>
module attributes {stable_mosaic.version = 11 : i64} {
  func.func @dueling_dqn_kernel(%arg0: i32, %arg1: memref<1x1024x64xbf16, #tpu.memory_space<vmem>>, %arg2: memref<64x32xbf16, #tpu.memory_space<vmem>>, %arg3: memref<1x32xf32, #tpu.memory_space<vmem>>, %arg4: memref<512x64xbf16, #tpu.memory_space<vmem>>, %arg5: memref<1x64xf32, #tpu.memory_space<vmem>>, %arg6: memref<576x64xbf16, #tpu.memory_space<vmem>>, %arg7: memref<1x64xf32, #tpu.memory_space<vmem>>, %arg8: memref<64x1024xbf16, #tpu.memory_space<vmem>>, %arg9: memref<1x1024xf32, #tpu.memory_space<vmem>>, %arg10: memref<1024x128xbf16, #tpu.memory_space<vmem>>, %arg11: memref<1x128xf32, #tpu.memory_space<vmem>>, %arg12: memref<1x16x128xf32, #tpu.memory_space<vmem>>, %arg13: memref<1024x32xbf16, #tpu.memory_space<vmem>>, %arg14: memref<144x512xbf16, #tpu.memory_space<vmem>>, %arg15: memref<144x64xbf16, #tpu.memory_space<vmem>>, %arg16: memref<16x576xbf16, #tpu.memory_space<vmem>>, %arg17: memref<16x64xbf16, #tpu.memory_space<vmem>>) attributes {dimension_semantics = [#tpu.dimension_semantics<parallel>], iteration_bounds = array<i64: 1>, scalar_prefetch = 0 : i64, scratch_operands = 5 : i64, tpu.core_type = #tpu.core_type<tc>, window_params = [{transform_indices = @transform_0, window_bounds = array<i64: 1, 1024, 64>}, {pipeline_mode = #tpu.pipeline_mode<synchronous>, transform_indices = @transform_1, window_bounds = array<i64: 64, 32>}, {pipeline_mode = #tpu.pipeline_mode<synchronous>, transform_indices = @transform_2, window_bounds = array<i64: 1, 32>}, {pipeline_mode = #tpu.pipeline_mode<synchronous>, transform_indices = @transform_3, window_bounds = array<i64: 512, 64>}, {pipeline_mode = #tpu.pipeline_mode<synchronous>, transform_indices = @transform_4, window_bounds = array<i64: 1, 64>}, {pipeline_mode = #tpu.pipeline_mode<synchronous>, transform_indices = @transform_5, window_bounds = array<i64: 576, 64>}, {pipeline_mode = #tpu.pipeline_mode<synchronous>, transform_indices = @transform_6, window_bounds = array<i64: 1, 64>}, {pipeline_mode = #tpu.pipeline_mode<synchronous>, transform_indices = @transform_7, window_bounds = array<i64: 64, 1024>}, {pipeline_mode = #tpu.pipeline_mode<synchronous>, transform_indices = @transform_8, window_bounds = array<i64: 1, 1024>}, {pipeline_mode = #tpu.pipeline_mode<synchronous>, transform_indices = @transform_9, window_bounds = array<i64: 1024, 128>}, {pipeline_mode = #tpu.pipeline_mode<synchronous>, transform_indices = @transform_10, window_bounds = array<i64: 1, 128>}, {transform_indices = @transform_11, window_bounds = array<i64: 1, 16, 128>}]} {
    %c0 = arith.constant 0 : index
    %c0_0 = arith.constant 0 : index
    %c0_1 = arith.constant 0 : index
    %0 = vector.load %arg1[%c0, %c0_0, %c0_1] : memref<1x1024x64xbf16, #tpu.memory_space<vmem>>, vector<1x1024x64xbf16>
    %1 = vector.shape_cast %0 : vector<1x1024x64xbf16> to vector<1024x64xbf16>
    %c0_2 = arith.constant 0 : index
    %c0_3 = arith.constant 0 : index
    %2 = vector.load %arg2[%c0_2, %c0_3] : memref<64x32xbf16, #tpu.memory_space<vmem>>, vector<64x32xbf16>
    %cst = arith.constant dense<0.000000e+00> : vector<1024x32xf32>
    %3 = tpu.matmul %1, %2, %cst {dimension_numbers = #tpu.dot_dimension_numbers<[1], [0], [0], [1], [0, 0, 1, 1], [], []>} : vector<1024x64xbf16>, vector<64x32xbf16>, vector<1024x32xf32> -> vector<1024x32xf32>
    %c0_4 = arith.constant 0 : index
    %c0_5 = arith.constant 0 : index
    %4 = vector.load %arg3[%c0_4, %c0_5] : memref<1x32xf32, #tpu.memory_space<vmem>>, vector<1x32xf32>
    %5 = vector.broadcast %4 : vector<1x32xf32> to vector<1024x32xf32>
    %6 = arith.addf %3, %5 : vector<1024x32xf32>
    %cst_6 = arith.constant 0.000000e+00 : f32
    %7 = vector.broadcast %cst_6 : f32 to vector<1024x32xf32>
    %8 = arith.maximumf %6, %7 : vector<1024x32xf32>
    %9 = arith.truncf %8 : vector<1024x32xf32> to vector<1024x32xbf16>
    %c0_7 = arith.constant 0 : index
    %c0_8 = arith.constant 0 : index
    %10 = vector.load %arg13[%c0_7, %c0_8] : memref<1024x32xbf16, #tpu.memory_space<vmem>>, vector<1024x32xbf16>
    tpu.vector_store %arg13[%c0_7, %c0_8], %9 {strides = array<i32>} : memref<1024x32xbf16, #tpu.memory_space<vmem>>, vector<1024x32xbf16>,
    %c0_9 = arith.constant 0 : index
    %c0_10 = arith.constant 0 : index
    %11 = vector.load %arg13[%c0_9, %c0_10] : memref<1024x32xbf16, #tpu.memory_space<vmem>>, vector<16x32xbf16>
    %c0_11 = arith.constant 0 : index
    %c0_12 = arith.constant 0 : index
    %12 = vector.load %arg14[%c0_11, %c0_12] : memref<144x512xbf16, #tpu.memory_space<vmem>>, vector<16x32xbf16>
    tpu.vector_store %arg14[%c0_11, %c0_12], %11 {strides = array<i32>} : memref<144x512xbf16, #tpu.memory_space<vmem>>, vector<16x32xbf16>,
    %c16 = arith.constant 16 : index
    %c0_13 = arith.constant 0 : index
    %13 = vector.load %arg13[%c16, %c0_13] : memref<1024x32xbf16, #tpu.memory_space<vmem>>, vector<16x32xbf16>
    %c0_14 = arith.constant 0 : index
    %c32 = arith.constant 32 : index
    %14 = vector.load %arg14[%c0_14, %c32] : memref<144x512xbf16, #tpu.memory_space<vmem>>, vector<16x32xbf16>
    tpu.vector_store %arg14[%c0_14, %c32], %13 {strides = array<i32>} : memref<144x512xbf16, #tpu.memory_space<vmem>>, vector<16x32xbf16>,
    %c32_15 = arith.constant 32 : index
    %c0_16 = arith.constant 0 : index
    %15 = vector.load %arg13[%c32_15, %c0_16] : memref<1024x32xbf16, #tpu.memory_space<vmem>>, vector<16x32xbf16>
    %c0_17 = arith.constant 0 : index
    %c64 = arith.constant 64 : index
    %16 = vector.load %arg14[%c0_17, %c64] : memref<144x512xbf16, #tpu.memory_space<vmem>>, vector<16x32xbf16>
    tpu.vector_store %arg14[%c0_17, %c64], %15 {strides = array<i32>} : memref<144x512xbf16, #tpu.memory_space<vmem>>, vector<16x32xbf16>,
    %c48 = arith.constant 48 : index
    %c0_18 = arith.constant 0 : index
    %17 = vector.load %arg13[%c48, %c0_18] : memref<1024x32xbf16, #tpu.memory_space<vmem>>, vector<16x32xbf16>
    %c0_19 = arith.constant 0 : index
    %c96 = arith.constant 96 : index
    %18 = vector.load %arg14[%c0_19, %c96] : memref<144x512xbf16, #tpu.memory_space<vmem>>, vector<16x32xbf16>
    tpu.vector_store %arg14[%c0_19, %c96], %17 {strides = array<i32>} : memref<144x512xbf16, #tpu.memory_space<vmem>>, vector<16x32xbf16>,
    %c128 = arith.constant 128 : index
    %c0_20 = arith.constant 0 : index
    %19 = vector.load %arg13[%c128, %c0_20] : memref<1024x32xbf16, #tpu.memory_space<vmem>>, vector<16x32xbf16>
    %c0_21 = arith.constant 0 : index
    %c128_22 = arith.constant 128 : index
    %20 = vector.load %arg14[%c0_21, %c128_22] : memref<144x512xbf16, #tpu.memory_space<vmem>>, vector<16x32xbf16>
    tpu.vector_store %arg14[%c0_21, %c128_22], %19 {strides = array<i32>} : memref<144x512xbf16, #tpu.memory_space<vmem>>, vector<16x32xbf16>,
    %c144 = arith.constant 144 : index
    %c0_23 = arith.constant 0 : index
    %21 = vector.load %arg13[%c144, %c0_23] : memref<1024x32xbf16, #tpu.memory_space<vmem>>, vector<16x32xbf16>
    %c0_24 = arith.constant 0 : index
    %c160 = arith.constant 160 : index
    %22 = vector.load %arg14[%c0_24, %c160] : memref<144x512xbf16, #tpu.memory_space<vmem>>, vector<16x32xbf16>
    tpu.vector_store %arg14[%c0_24, %c160], %21 {strides = array<i32>} : memref<144x512xbf16, #tpu.memory_space<vmem>>, vector<16x32xbf16>,
    %c160_25 = arith.constant 160 : index
    %c0_26 = arith.constant 0 : index
    %23 = vector.load %arg13[%c160_25, %c0_26] : memref<1024x32xbf16, #tpu.memory_space<vmem>>, vector<16x32xbf16>
    %c0_27 = arith.constant 0 : index
    %c192 = arith.constant 192 : index
    %24 = vector.load %arg14[%c0_27, %c192] : memref<144x512xbf16, #tpu.memory_space<vmem>>, vector<16x32xbf16>
    tpu.vector_store %arg14[%c0_27, %c192], %23 {strides = array<i32>} : memref<144x512xbf16, #tpu.memory_space<vmem>>, vector<16x32xbf16>,
    %c176 = arith.constant 176 : index
    %c0_28 = arith.constant 0 : index
    %25 = vector.load %arg13[%c176, %c0_28] : memref<1024x32xbf16, #tpu.memory_space<vmem>>, vector<16x32xbf16>
    %c0_29 = arith.constant 0 : index
    %c224 = arith.constant 224 : index
    %26 = vector.load %arg14[%c0_29, %c224] : memref<144x512xbf16, #tpu.memory_space<vmem>>, vector<16x32xbf16>
    tpu.vector_store %arg14[%c0_29, %c224], %25 {strides = array<i32>} : memref<144x512xbf16, #tpu.memory_space<vmem>>, vector<16x32xbf16>,
    %c256 = arith.constant 256 : index
    %c0_30 = arith.constant 0 : index
    %27 = vector.load %arg13[%c256, %c0_30] : memref<1024x32xbf16, #tpu.memory_space<vmem>>, vector<16x32xbf16>
    %c0_31 = arith.constant 0 : index
    %c256_32 = arith.constant 256 : index
    %28 = vector.load %arg14[%c0_31, %c256_32] : memref<144x512xbf16, #tpu.memory_space<vmem>>, vector<16x32xbf16>
    tpu.vector_store %arg14[%c0_31, %c256_32], %27 {strides = array<i32>} : memref<144x512xbf16, #tpu.memory_space<vmem>>, vector<16x32xbf16>,
    %c272 = arith.constant 272 : index
    %c0_33 = arith.constant 0 : index
    %29 = vector.load %arg13[%c272, %c0_33] : memref<1024x32xbf16, #tpu.memory_space<vmem>>, vector<16x32xbf16>
    %c0_34 = arith.constant 0 : index
    %c288 = arith.constant 288 : index
    %30 = vector.load %arg14[%c0_34, %c288] : memref<144x512xbf16, #tpu.memory_space<vmem>>, vector<16x32xbf16>
    tpu.vector_store %arg14[%c0_34, %c288], %29 {strides = array<i32>} : memref<144x512xbf16, #tpu.memory_space<vmem>>, vector<16x32xbf16>,
    %c288_35 = arith.constant 288 : index
    %c0_36 = arith.constant 0 : index
    %31 = vector.load %arg13[%c288_35, %c0_36] : memref<1024x32xbf16, #tpu.memory_space<vmem>>, vector<16x32xbf16>
    %c0_37 = arith.constant 0 : index
    %c320 = arith.constant 320 : index
    %32 = vector.load %arg14[%c0_37, %c320] : memref<144x512xbf16, #tpu.memory_space<vmem>>, vector<16x32xbf16>
    tpu.vector_store %arg14[%c0_37, %c320], %31 {strides = array<i32>} : memref<144x512xbf16, #tpu.memory_space<vmem>>, vector<16x32xbf16>,
    %c304 = arith.constant 304 : index
    %c0_38 = arith.constant 0 : index
    %33 = vector.load %arg13[%c304, %c0_38] : memref<1024x32xbf16, #tpu.memory_space<vmem>>, vector<16x32xbf16>
    %c0_39 = arith.constant 0 : index
    %c352 = arith.constant 352 : index
    %34 = vector.load %arg14[%c0_39, %c352] : memref<144x512xbf16, #tpu.memory_space<vmem>>, vector<16x32xbf16>
    tpu.vector_store %arg14[%c0_39, %c352], %33 {strides = array<i32>} : memref<144x512xbf16, #tpu.memory_space<vmem>>, vector<16x32xbf16>,
    %c384 = arith.constant 384 : index
    %c0_40 = arith.constant 0 : index
    %35 = vector.load %arg13[%c384, %c0_40] : memref<1024x32xbf16, #tpu.memory_space<vmem>>, vector<16x32xbf16>
    %c0_41 = arith.constant 0 : index
    %c384_42 = arith.constant 384 : index
    %36 = vector.load %arg14[%c0_41, %c384_42] : memref<144x512xbf16, #tpu.memory_space<vmem>>, vector<16x32xbf16>
    tpu.vector_store %arg14[%c0_41, %c384_42], %35 {strides = array<i32>} : memref<144x512xbf16, #tpu.memory_space<vmem>>, vector<16x32xbf16>,
    %c400 = arith.constant 400 : index
    %c0_43 = arith.constant 0 : index
    %37 = vector.load %arg13[%c400, %c0_43] : memref<1024x32xbf16, #tpu.memory_space<vmem>>, vector<16x32xbf16>
    %c0_44 = arith.constant 0 : index
    %c416 = arith.constant 416 : index
    %38 = vector.load %arg14[%c0_44, %c416] : memref<144x512xbf16, #tpu.memory_space<vmem>>, vector<16x32xbf16>
    tpu.vector_store %arg14[%c0_44, %c416], %37 {strides = array<i32>} : memref<144x512xbf16, #tpu.memory_space<vmem>>, vector<16x32xbf16>,
    %c416_45 = arith.constant 416 : index
    %c0_46 = arith.constant 0 : index
    %39 = vector.load %arg13[%c416_45, %c0_46] : memref<1024x32xbf16, #tpu.memory_space<vmem>>, vector<16x32xbf16>
    %c0_47 = arith.constant 0 : index
    %c448 = arith.constant 448 : index
    %40 = vector.load %arg14[%c0_47, %c448] : memref<144x512xbf16, #tpu.memory_space<vmem>>, vector<16x32xbf16>
    tpu.vector_store %arg14[%c0_47, %c448], %39 {strides = array<i32>} : memref<144x512xbf16, #tpu.memory_space<vmem>>, vector<16x32xbf16>,
    %c432 = arith.constant 432 : index
    %c0_48 = arith.constant 0 : index
    %41 = vector.load %arg13[%c432, %c0_48] : memref<1024x32xbf16, #tpu.memory_space<vmem>>, vector<16x32xbf16>
    %c0_49 = arith.constant 0 : index
    %c480 = arith.constant 480 : index
    %42 = vector.load %arg14[%c0_49, %c480] : memref<144x512xbf16, #tpu.memory_space<vmem>>, vector<16x32xbf16>
    tpu.vector_store %arg14[%c0_49, %c480], %41 {strides = array<i32>} : memref<144x512xbf16, #tpu.memory_space<vmem>>, vector<16x32xbf16>,
    %c32_50 = arith.constant 32 : index
    %c0_51 = arith.constant 0 : index
    %43 = vector.load %arg13[%c32_50, %c0_51] : memref<1024x32xbf16, #tpu.memory_space<vmem>>, vector<16x32xbf16>
    %c16_52 = arith.constant 16 : index
    %c0_53 = arith.constant 0 : index
    %44 = vector.load %arg14[%c16_52, %c0_53] : memref<144x512xbf16, #tpu.memory_space<vmem>>, vector<16x32xbf16>
    tpu.vector_store %arg14[%c16_52, %c0_53], %43 {strides = array<i32>} : memref<144x512xbf16, #tpu.memory_space<vmem>>, vector<16x32xbf16>,
    %c48_54 = arith.constant 48 : index
    %c0_55 = arith.constant 0 : index
    %45 = vector.load %arg13[%c48_54, %c0_55] : memref<1024x32xbf16, #tpu.memory_space<vmem>>, vector<16x32xbf16>
    %c16_56 = arith.constant 16 : index
    %c32_57 = arith.constant 32 : index
    %46 = vector.load %arg14[%c16_56, %c32_57] : memref<144x512xbf16, #tpu.memory_space<vmem>>, vector<16x32xbf16>
    tpu.vector_store %arg14[%c16_56, %c32_57], %45 {strides = array<i32>} : memref<144x512xbf16, #tpu.memory_space<vmem>>, vector<16x32xbf16>,
    %c64_58 = arith.constant 64 : index
    %c0_59 = arith.constant 0 : index
    %47 = vector.load %arg13[%c64_58, %c0_59] : memref<1024x32xbf16, #tpu.memory_space<vmem>>, vector<16x32xbf16>
    %c16_60 = arith.constant 16 : index
    %c64_61 = arith.constant 64 : index
    %48 = vector.load %arg14[%c16_60, %c64_61] : memref<144x512xbf16, #tpu.memory_space<vmem>>, vector<16x32xbf16>
    tpu.vector_store %arg14[%c16_60, %c64_61], %47 {strides = array<i32>} : memref<144x512xbf16, #tpu.memory_space<vmem>>, vector<16x32xbf16>,
    %c80 = arith.constant 80 : index
    %c0_62 = arith.constant 0 : index
    %49 = vector.load %arg13[%c80, %c0_62] : memref<1024x32xbf16, #tpu.memory_space<vmem>>, vector<16x32xbf16>
    %c16_63 = arith.constant 16 : index
    %c96_64 = arith.constant 96 : index
    %50 = vector.load %arg14[%c16_63, %c96_64] : memref<144x512xbf16, #tpu.memory_space<vmem>>, vector<16x32xbf16>
    tpu.vector_store %arg14[%c16_63, %c96_64], %49 {strides = array<i32>} : memref<144x512xbf16, #tpu.memory_space<vmem>>, vector<16x32xbf16>,
    %c160_65 = arith.constant 160 : index
    %c0_66 = arith.constant 0 : index
    %51 = vector.load %arg13[%c160_65, %c0_66] : memref<1024x32xbf16, #tpu.memory_space<vmem>>, vector<16x32xbf16>
    %c16_67 = arith.constant 16 : index
    %c128_68 = arith.constant 128 : index
    %52 = vector.load %arg14[%c16_67, %c128_68] : memref<144x512xbf16, #tpu.memory_space<vmem>>, vector<16x32xbf16>
    tpu.vector_store %arg14[%c16_67, %c128_68], %51 {strides = array<i32>} : memref<144x512xbf16, #tpu.memory_space<vmem>>, vector<16x32xbf16>,
    %c176_69 = arith.constant 176 : index
    %c0_70 = arith.constant 0 : index
    %53 = vector.load %arg13[%c176_69, %c0_70] : memref<1024x32xbf16, #tpu.memory_space<vmem>>, vector<16x32xbf16>
    %c16_71 = arith.constant 16 : index
    %c160_72 = arith.constant 160 : index
    %54 = vector.load %arg14[%c16_71, %c160_72] : memref<144x512xbf16, #tpu.memory_space<vmem>>, vector<16x32xbf16>
    tpu.vector_store %arg14[%c16_71, %c160_72], %53 {strides = array<i32>} : memref<144x512xbf16, #tpu.memory_space<vmem>>, vector<16x32xbf16>,
    %c192_73 = arith.constant 192 : index
    %c0_74 = arith.constant 0 : index
    %55 = vector.load %arg13[%c192_73, %c0_74] : memref<1024x32xbf16, #tpu.memory_space<vmem>>, vector<16x32xbf16>
    %c16_75 = arith.constant 16 : index
    %c192_76 = arith.constant 192 : index
    %56 = vector.load %arg14[%c16_75, %c192_76] : memref<144x512xbf16, #tpu.memory_space<vmem>>, vector<16x32xbf16>
    tpu.vector_store %arg14[%c16_75, %c192_76], %55 {strides = array<i32>} : memref<144x512xbf16, #tpu.memory_space<vmem>>, vector<16x32xbf16>,
    %c208 = arith.constant 208 : index
    %c0_77 = arith.constant 0 : index
    %57 = vector.load %arg13[%c208, %c0_77] : memref<1024x32xbf16, #tpu.memory_space<vmem>>, vector<16x32xbf16>
    %c16_78 = arith.constant 16 : index
    %c224_79 = arith.constant 224 : index
    %58 = vector.load %arg14[%c16_78, %c224_79] : memref<144x512xbf16, #tpu.memory_space<vmem>>, vector<16x32xbf16>
    tpu.vector_store %arg14[%c16_78, %c224_79], %57 {strides = array<i32>} : memref<144x512xbf16, #tpu.memory_space<vmem>>, vector<16x32xbf16>,
    %c288_80 = arith.constant 288 : index
    %c0_81 = arith.constant 0 : index
    %59 = vector.load %arg13[%c288_80, %c0_81] : memref<1024x32xbf16, #tpu.memory_space<vmem>>, vector<16x32xbf16>
    %c16_82 = arith.constant 16 : index
    %c256_83 = arith.constant 256 : index
    %60 = vector.load %arg14[%c16_82, %c256_83] : memref<144x512xbf16, #tpu.memory_space<vmem>>, vector<16x32xbf16>
    tpu.vector_store %arg14[%c16_82, %c256_83], %59 {strides = array<i32>} : memref<144x512xbf16, #tpu.memory_space<vmem>>, vector<16x32xbf16>,
    %c304_84 = arith.constant 304 : index
    %c0_85 = arith.constant 0 : index
    %61 = vector.load %arg13[%c304_84, %c0_85] : memref<1024x32xbf16, #tpu.memory_space<vmem>>, vector<16x32xbf16>
    %c16_86 = arith.constant 16 : index
    %c288_87 = arith.constant 288 : index
    %62 = vector.load %arg14[%c16_86, %c288_87] : memref<144x512xbf16, #tpu.memory_space<vmem>>, vector<16x32xbf16>
    tpu.vector_store %arg14[%c16_86, %c288_87], %61 {strides = array<i32>} : memref<144x512xbf16, #tpu.memory_space<vmem>>, vector<16x32xbf16>,
    %c320_88 = arith.constant 320 : index
    %c0_89 = arith.constant 0 : index
    %63 = vector.load %arg13[%c320_88, %c0_89] : memref<1024x32xbf16, #tpu.memory_space<vmem>>, vector<16x32xbf16>
    %c16_90 = arith.constant 16 : index
    %c320_91 = arith.constant 320 : index
    %64 = vector.load %arg14[%c16_90, %c320_91] : memref<144x512xbf16, #tpu.memory_space<vmem>>, vector<16x32xbf16>
    tpu.vector_store %arg14[%c16_90, %c320_91], %63 {strides = array<i32>} : memref<144x512xbf16, #tpu.memory_space<vmem>>, vector<16x32xbf16>,
    %c336 = arith.constant 336 : index
    %c0_92 = arith.constant 0 : index
    %65 = vector.load %arg13[%c336, %c0_92] : memref<1024x32xbf16, #tpu.memory_space<vmem>>, vector<16x32xbf16>
    %c16_93 = arith.constant 16 : index
    %c352_94 = arith.constant 352 : index
    %66 = vector.load %arg14[%c16_93, %c352_94] : memref<144x512xbf16, #tpu.memory_space<vmem>>, vector<16x32xbf16>
    tpu.vector_store %arg14[%c16_93, %c352_94], %65 {strides = array<i32>} : memref<144x512xbf16, #tpu.memory_space<vmem>>, vector<16x32xbf16>,
    %c416_95 = arith.constant 416 : index
    %c0_96 = arith.constant 0 : index
    %67 = vector.load %arg13[%c416_95, %c0_96] : memref<1024x32xbf16, #tpu.memory_space<vmem>>, vector<16x32xbf16>
    %c16_97 = arith.constant 16 : index
    %c384_98 = arith.constant 384 : index
    %68 = vector.load %arg14[%c16_97, %c384_98] : memref<144x512xbf16, #tpu.memory_space<vmem>>, vector<16x32xbf16>
    tpu.vector_store %arg14[%c16_97, %c384_98], %67 {strides = array<i32>} : memref<144x512xbf16, #tpu.memory_space<vmem>>, vector<16x32xbf16>,
    %c432_99 = arith.constant 432 : index
    %c0_100 = arith.constant 0 : index
    %69 = vector.load %arg13[%c432_99, %c0_100] : memref<1024x32xbf16, #tpu.memory_space<vmem>>, vector<16x32xbf16>
    %c16_101 = arith.constant 16 : index
    %c416_102 = arith.constant 416 : index
    %70 = vector.load %arg14[%c16_101, %c416_102] : memref<144x512xbf16, #tpu.memory_space<vmem>>, vector<16x32xbf16>
    tpu.vector_store %arg14[%c16_101, %c416_102], %69 {strides = array<i32>} : memref<144x512xbf16, #tpu.memory_space<vmem>>, vector<16x32xbf16>,
    %c448_103 = arith.constant 448 : index
    %c0_104 = arith.constant 0 : index
    %71 = vector.load %arg13[%c448_103, %c0_104] : memref<1024x32xbf16, #tpu.memory_space<vmem>>, vector<16x32xbf16>
    %c16_105 = arith.constant 16 : index
    %c448_106 = arith.constant 448 : index
    %72 = vector.load %arg14[%c16_105, %c448_106] : memref<144x512xbf16, #tpu.memory_space<vmem>>, vector<16x32xbf16>
    tpu.vector_store %arg14[%c16_105, %c448_106], %71 {strides = array<i32>} : memref<144x512xbf16, #tpu.memory_space<vmem>>, vector<16x32xbf16>,
    %c464 = arith.constant 464 : index
    %c0_107 = arith.constant 0 : index
    %73 = vector.load %arg13[%c464, %c0_107] : memref<1024x32xbf16, #tpu.memory_space<vmem>>, vector<16x32xbf16>
    %c16_108 = arith.constant 16 : index
    %c480_109 = arith.constant 480 : index
    %74 = vector.load %arg14[%c16_108, %c480_109] : memref<144x512xbf16, #tpu.memory_space<vmem>>, vector<16x32xbf16>
    tpu.vector_store %arg14[%c16_108, %c480_109], %73 {strides = array<i32>} : memref<144x512xbf16, #tpu.memory_space<vmem>>, vector<16x32xbf16>,
    %c64_110 = arith.constant 64 : index
    %c0_111 = arith.constant 0 : index
    %75 = vector.load %arg13[%c64_110, %c0_111] : memref<1024x32xbf16, #tpu.memory_space<vmem>>, vector<16x32xbf16>
    %c32_112 = arith.constant 32 : index
    %c0_113 = arith.constant 0 : index
    %76 = vector.load %arg14[%c32_112, %c0_113] : memref<144x512xbf16, #tpu.memory_space<vmem>>, vector<16x32xbf16>
    tpu.vector_store %arg14[%c32_112, %c0_113], %75 {strides = array<i32>} : memref<144x512xbf16, #tpu.memory_space<vmem>>, vector<16x32xbf16>,
    %c80_114 = arith.constant 80 : index
    %c0_115 = arith.constant 0 : index
    %77 = vector.load %arg13[%c80_114, %c0_115] : memref<1024x32xbf16, #tpu.memory_space<vmem>>, vector<16x32xbf16>
    %c32_116 = arith.constant 32 : index
    %c32_117 = arith.constant 32 : index
    %78 = vector.load %arg14[%c32_116, %c32_117] : memref<144x512xbf16, #tpu.memory_space<vmem>>, vector<16x32xbf16>
    tpu.vector_store %arg14[%c32_116, %c32_117], %77 {strides = array<i32>} : memref<144x512xbf16, #tpu.memory_space<vmem>>, vector<16x32xbf16>,
    %c96_118 = arith.constant 96 : index
    %c0_119 = arith.constant 0 : index
    %79 = vector.load %arg13[%c96_118, %c0_119] : memref<1024x32xbf16, #tpu.memory_space<vmem>>, vector<16x32xbf16>
    %c32_120 = arith.constant 32 : index
    %c64_121 = arith.constant 64 : index
    %80 = vector.load %arg14[%c32_120, %c64_121] : memref<144x512xbf16, #tpu.memory_space<vmem>>, vector<16x32xbf16>
    tpu.vector_store %arg14[%c32_120, %c64_121], %79 {strides = array<i32>} : memref<144x512xbf16, #tpu.memory_space<vmem>>, vector<16x32xbf16>,
    %c112 = arith.constant 112 : index
    %c0_122 = arith.constant 0 : index
    %81 = vector.load %arg13[%c112, %c0_122] : memref<1024x32xbf16, #tpu.memory_space<vmem>>, vector<16x32xbf16>
    %c32_123 = arith.constant 32 : index
    %c96_124 = arith.constant 96 : index
    %82 = vector.load %arg14[%c32_123, %c96_124] : memref<144x512xbf16, #tpu.memory_space<vmem>>, vector<16x32xbf16>
    tpu.vector_store %arg14[%c32_123, %c96_124], %81 {strides = array<i32>} : memref<144x512xbf16, #tpu.memory_space<vmem>>, vector<16x32xbf16>,
    %c192_125 = arith.constant 192 : index
    %c0_126 = arith.constant 0 : index
    %83 = vector.load %arg13[%c192_125, %c0_126] : memref<1024x32xbf16, #tpu.memory_space<vmem>>, vector<16x32xbf16>
    %c32_127 = arith.constant 32 : index
    %c128_128 = arith.constant 128 : index
    %84 = vector.load %arg14[%c32_127, %c128_128] : memref<144x512xbf16, #tpu.memory_space<vmem>>, vector<16x32xbf16>
    tpu.vector_store %arg14[%c32_127, %c128_128], %83 {strides = array<i32>} : memref<144x512xbf16, #tpu.memory_space<vmem>>, vector<16x32xbf16>,
    %c208_129 = arith.constant 208 : index
    %c0_130 = arith.constant 0 : index
    %85 = vector.load %arg13[%c208_129, %c0_130] : memref<1024x32xbf16, #tpu.memory_space<vmem>>, vector<16x32xbf16>
    %c32_131 = arith.constant 32 : index
    %c160_132 = arith.constant 160 : index
    %86 = vector.load %arg14[%c32_131, %c160_132] : memref<144x512xbf16, #tpu.memory_space<vmem>>, vector<16x32xbf16>
    tpu.vector_store %arg14[%c32_131, %c160_132], %85 {strides = array<i32>} : memref<144x512xbf16, #tpu.memory_space<vmem>>, vector<16x32xbf16>,
    %c224_133 = arith.constant 224 : index
    %c0_134 = arith.constant 0 : index
    %87 = vector.load %arg13[%c224_133, %c0_134] : memref<1024x32xbf16, #tpu.memory_space<vmem>>, vector<16x32xbf16>
    %c32_135 = arith.constant 32 : index
    %c192_136 = arith.constant 192 : index
    %88 = vector.load %arg14[%c32_135, %c192_136] : memref<144x512xbf16, #tpu.memory_space<vmem>>, vector<16x32xbf16>
    tpu.vector_store %arg14[%c32_135, %c192_136], %87 {strides = array<i32>} : memref<144x512xbf16, #tpu.memory_space<vmem>>, vector<16x32xbf16>,
    %c240 = arith.constant 240 : index
    %c0_137 = arith.constant 0 : index
    %89 = vector.load %arg13[%c240, %c0_137] : memref<1024x32xbf16, #tpu.memory_space<vmem>>, vector<16x32xbf16>
    %c32_138 = arith.constant 32 : index
    %c224_139 = arith.constant 224 : index
    %90 = vector.load %arg14[%c32_138, %c224_139] : memref<144x512xbf16, #tpu.memory_space<vmem>>, vector<16x32xbf16>
    tpu.vector_store %arg14[%c32_138, %c224_139], %89 {strides = array<i32>} : memref<144x512xbf16, #tpu.memory_space<vmem>>, vector<16x32xbf16>,
    %c320_140 = arith.constant 320 : index
    %c0_141 = arith.constant 0 : index
    %91 = vector.load %arg13[%c320_140, %c0_141] : memref<1024x32xbf16, #tpu.memory_space<vmem>>, vector<16x32xbf16>
    %c32_142 = arith.constant 32 : index
    %c256_143 = arith.constant 256 : index
    %92 = vector.load %arg14[%c32_142, %c256_143] : memref<144x512xbf16, #tpu.memory_space<vmem>>, vector<16x32xbf16>
    tpu.vector_store %arg14[%c32_142, %c256_143], %91 {strides = array<i32>} : memref<144x512xbf16, #tpu.memory_space<vmem>>, vector<16x32xbf16>,
    %c336_144 = arith.constant 336 : index
    %c0_145 = arith.constant 0 : index
    %93 = vector.load %arg13[%c336_144, %c0_145] : memref<1024x32xbf16, #tpu.memory_space<vmem>>, vector<16x32xbf16>
    %c32_146 = arith.constant 32 : index
    %c288_147 = arith.constant 288 : index
    %94 = vector.load %arg14[%c32_146, %c288_147] : memref<144x512xbf16, #tpu.memory_space<vmem>>, vector<16x32xbf16>
    tpu.vector_store %arg14[%c32_146, %c288_147], %93 {strides = array<i32>} : memref<144x512xbf16, #tpu.memory_space<vmem>>, vector<16x32xbf16>,
    %c352_148 = arith.constant 352 : index
    %c0_149 = arith.constant 0 : index
    %95 = vector.load %arg13[%c352_148, %c0_149] : memref<1024x32xbf16, #tpu.memory_space<vmem>>, vector<16x32xbf16>
    %c32_150 = arith.constant 32 : index
    %c320_151 = arith.constant 320 : index
    %96 = vector.load %arg14[%c32_150, %c320_151] : memref<144x512xbf16, #tpu.memory_space<vmem>>, vector<16x32xbf16>
    tpu.vector_store %arg14[%c32_150, %c320_151], %95 {strides = array<i32>} : memref<144x512xbf16, #tpu.memory_space<vmem>>, vector<16x32xbf16>,
    %c368 = arith.constant 368 : index
    %c0_152 = arith.constant 0 : index
    %97 = vector.load %arg13[%c368, %c0_152] : memref<1024x32xbf16, #tpu.memory_space<vmem>>, vector<16x32xbf16>
    %c32_153 = arith.constant 32 : index
    %c352_154 = arith.constant 352 : index
    %98 = vector.load %arg14[%c32_153, %c352_154] : memref<144x512xbf16, #tpu.memory_space<vmem>>, vector<16x32xbf16>
    tpu.vector_store %arg14[%c32_153, %c352_154], %97 {strides = array<i32>} : memref<144x512xbf16, #tpu.memory_space<vmem>>, vector<16x32xbf16>,
    %c448_155 = arith.constant 448 : index
    %c0_156 = arith.constant 0 : index
    %99 = vector.load %arg13[%c448_155, %c0_156] : memref<1024x32xbf16, #tpu.memory_space<vmem>>, vector<16x32xbf16>
    %c32_157 = arith.constant 32 : index
    %c384_158 = arith.constant 384 : index
    %100 = vector.load %arg14[%c32_157, %c384_158] : memref<144x512xbf16, #tpu.memory_space<vmem>>, vector<16x32xbf16>
    tpu.vector_store %arg14[%c32_157, %c384_158], %99 {strides = array<i32>} : memref<144x512xbf16, #tpu.memory_space<vmem>>, vector<16x32xbf16>,
    %c464_159 = arith.constant 464 : index
    %c0_160 = arith.constant 0 : index
    %101 = vector.load %arg13[%c464_159, %c0_160] : memref<1024x32xbf16, #tpu.memory_space<vmem>>, vector<16x32xbf16>
    %c32_161 = arith.constant 32 : index
    %c416_162 = arith.constant 416 : index
    %102 = vector.load %arg14[%c32_161, %c416_162] : memref<144x512xbf16, #tpu.memory_space<vmem>>, vector<16x32xbf16>
    tpu.vector_store %arg14[%c32_161, %c416_162], %101 {strides = array<i32>} : memref<144x512xbf16, #tpu.memory_space<vmem>>, vector<16x32xbf16>,
    %c480_163 = arith.constant 480 : index
    %c0_164 = arith.constant 0 : index
    %103 = vector.load %arg13[%c480_163, %c0_164] : memref<1024x32xbf16, #tpu.memory_space<vmem>>, vector<16x32xbf16>
    %c32_165 = arith.constant 32 : index
    %c448_166 = arith.constant 448 : index
    %104 = vector.load %arg14[%c32_165, %c448_166] : memref<144x512xbf16, #tpu.memory_space<vmem>>, vector<16x32xbf16>
    tpu.vector_store %arg14[%c32_165, %c448_166], %103 {strides = array<i32>} : memref<144x512xbf16, #tpu.memory_space<vmem>>, vector<16x32xbf16>,
    %c496 = arith.constant 496 : index
    %c0_167 = arith.constant 0 : index
    %105 = vector.load %arg13[%c496, %c0_167] : memref<1024x32xbf16, #tpu.memory_space<vmem>>, vector<16x32xbf16>
    %c32_168 = arith.constant 32 : index
    %c480_169 = arith.constant 480 : index
    %106 = vector.load %arg14[%c32_168, %c480_169] : memref<144x512xbf16, #tpu.memory_space<vmem>>, vector<16x32xbf16>
    tpu.vector_store %arg14[%c32_168, %c480_169], %105 {strides = array<i32>} : memref<144x512xbf16, #tpu.memory_space<vmem>>, vector<16x32xbf16>,
    %c256_170 = arith.constant 256 : index
    %c0_171 = arith.constant 0 : index
    %107 = vector.load %arg13[%c256_170, %c0_171] : memref<1024x32xbf16, #tpu.memory_space<vmem>>, vector<16x32xbf16>
    %c48_172 = arith.constant 48 : index
    %c0_173 = arith.constant 0 : index
    %108 = vector.load %arg14[%c48_172, %c0_173] : memref<144x512xbf16, #tpu.memory_space<vmem>>, vector<16x32xbf16>
    tpu.vector_store %arg14[%c48_172, %c0_173], %107 {strides = array<i32>} : memref<144x512xbf16, #tpu.memory_space<vmem>>, vector<16x32xbf16>,
    %c272_174 = arith.constant 272 : index
    %c0_175 = arith.constant 0 : index
    %109 = vector.load %arg13[%c272_174, %c0_175] : memref<1024x32xbf16, #tpu.memory_space<vmem>>, vector<16x32xbf16>
    %c48_176 = arith.constant 48 : index
    %c32_177 = arith.constant 32 : index
    %110 = vector.load %arg14[%c48_176, %c32_177] : memref<144x512xbf16, #tpu.memory_space<vmem>>, vector<16x32xbf16>
    tpu.vector_store %arg14[%c48_176, %c32_177], %109 {strides = array<i32>} : memref<144x512xbf16, #tpu.memory_space<vmem>>, vector<16x32xbf16>,
    %c288_178 = arith.constant 288 : index
    %c0_179 = arith.constant 0 : index
    %111 = vector.load %arg13[%c288_178, %c0_179] : memref<1024x32xbf16, #tpu.memory_space<vmem>>, vector<16x32xbf16>
    %c48_180 = arith.constant 48 : index
    %c64_181 = arith.constant 64 : index
    %112 = vector.load %arg14[%c48_180, %c64_181] : memref<144x512xbf16, #tpu.memory_space<vmem>>, vector<16x32xbf16>
    tpu.vector_store %arg14[%c48_180, %c64_181], %111 {strides = array<i32>} : memref<144x512xbf16, #tpu.memory_space<vmem>>, vector<16x32xbf16>,
    %c304_182 = arith.constant 304 : index
    %c0_183 = arith.constant 0 : index
    %113 = vector.load %arg13[%c304_182, %c0_183] : memref<1024x32xbf16, #tpu.memory_space<vmem>>, vector<16x32xbf16>
    %c48_184 = arith.constant 48 : index
    %c96_185 = arith.constant 96 : index
    %114 = vector.load %arg14[%c48_184, %c96_185] : memref<144x512xbf16, #tpu.memory_space<vmem>>, vector<16x32xbf16>
    tpu.vector_store %arg14[%c48_184, %c96_185], %113 {strides = array<i32>} : memref<144x512xbf16, #tpu.memory_space<vmem>>, vector<16x32xbf16>,
    %c384_186 = arith.constant 384 : index
    %c0_187 = arith.constant 0 : index
    %115 = vector.load %arg13[%c384_186, %c0_187] : memref<1024x32xbf16, #tpu.memory_space<vmem>>, vector<16x32xbf16>
    %c48_188 = arith.constant 48 : index
    %c128_189 = arith.constant 128 : index
    %116 = vector.load %arg14[%c48_188, %c128_189] : memref<144x512xbf16, #tpu.memory_space<vmem>>, vector<16x32xbf16>
    tpu.vector_store %arg14[%c48_188, %c128_189], %115 {strides = array<i32>} : memref<144x512xbf16, #tpu.memory_space<vmem>>, vector<16x32xbf16>,
    %c400_190 = arith.constant 400 : index
    %c0_191 = arith.constant 0 : index
    %117 = vector.load %arg13[%c400_190, %c0_191] : memref<1024x32xbf16, #tpu.memory_space<vmem>>, vector<16x32xbf16>
    %c48_192 = arith.constant 48 : index
    %c160_193 = arith.constant 160 : index
    %118 = vector.load %arg14[%c48_192, %c160_193] : memref<144x512xbf16, #tpu.memory_space<vmem>>, vector<16x32xbf16>
    tpu.vector_store %arg14[%c48_192, %c160_193], %117 {strides = array<i32>} : memref<144x512xbf16, #tpu.memory_space<vmem>>, vector<16x32xbf16>,
    %c416_194 = arith.constant 416 : index
    %c0_195 = arith.constant 0 : index
    %119 = vector.load %arg13[%c416_194, %c0_195] : memref<1024x32xbf16, #tpu.memory_space<vmem>>, vector<16x32xbf16>
    %c48_196 = arith.constant 48 : index
    %c192_197 = arith.constant 192 : index
    %120 = vector.load %arg14[%c48_196, %c192_197] : memref<144x512xbf16, #tpu.memory_space<vmem>>, vector<16x32xbf16>
    tpu.vector_store %arg14[%c48_196, %c192_197], %119 {strides = array<i32>} : memref<144x512xbf16, #tpu.memory_space<vmem>>, vector<16x32xbf16>,
    %c432_198 = arith.constant 432 : index
    %c0_199 = arith.constant 0 : index
    %121 = vector.load %arg13[%c432_198, %c0_199] : memref<1024x32xbf16, #tpu.memory_space<vmem>>, vector<16x32xbf16>
    %c48_200 = arith.constant 48 : index
    %c224_201 = arith.constant 224 : index
    %122 = vector.load %arg14[%c48_200, %c224_201] : memref<144x512xbf16, #tpu.memory_space<vmem>>, vector<16x32xbf16>
    tpu.vector_store %arg14[%c48_200, %c224_201], %121 {strides = array<i32>} : memref<144x512xbf16, #tpu.memory_space<vmem>>, vector<16x32xbf16>,
    %c512 = arith.constant 512 : index
    %c0_202 = arith.constant 0 : index
    %123 = vector.load %arg13[%c512, %c0_202] : memref<1024x32xbf16, #tpu.memory_space<vmem>>, vector<16x32xbf16>
    %c48_203 = arith.constant 48 : index
    %c256_204 = arith.constant 256 : index
    %124 = vector.load %arg14[%c48_203, %c256_204] : memref<144x512xbf16, #tpu.memory_space<vmem>>, vector<16x32xbf16>
    tpu.vector_store %arg14[%c48_203, %c256_204], %123 {strides = array<i32>} : memref<144x512xbf16, #tpu.memory_space<vmem>>, vector<16x32xbf16>,
    %c528 = arith.constant 528 : index
    %c0_205 = arith.constant 0 : index
    %125 = vector.load %arg13[%c528, %c0_205] : memref<1024x32xbf16, #tpu.memory_space<vmem>>, vector<16x32xbf16>
    %c48_206 = arith.constant 48 : index
    %c288_207 = arith.constant 288 : index
    %126 = vector.load %arg14[%c48_206, %c288_207] : memref<144x512xbf16, #tpu.memory_space<vmem>>, vector<16x32xbf16>
    tpu.vector_store %arg14[%c48_206, %c288_207], %125 {strides = array<i32>} : memref<144x512xbf16, #tpu.memory_space<vmem>>, vector<16x32xbf16>,
    %c544 = arith.constant 544 : index
    %c0_208 = arith.constant 0 : index
    %127 = vector.load %arg13[%c544, %c0_208] : memref<1024x32xbf16, #tpu.memory_space<vmem>>, vector<16x32xbf16>
    %c48_209 = arith.constant 48 : index
    %c320_210 = arith.constant 320 : index
    %128 = vector.load %arg14[%c48_209, %c320_210] : memref<144x512xbf16, #tpu.memory_space<vmem>>, vector<16x32xbf16>
    tpu.vector_store %arg14[%c48_209, %c320_210], %127 {strides = array<i32>} : memref<144x512xbf16, #tpu.memory_space<vmem>>, vector<16x32xbf16>,
    %c560 = arith.constant 560 : index
    %c0_211 = arith.constant 0 : index
    %129 = vector.load %arg13[%c560, %c0_211] : memref<1024x32xbf16, #tpu.memory_space<vmem>>, vector<16x32xbf16>
    %c48_212 = arith.constant 48 : index
    %c352_213 = arith.constant 352 : index
    %130 = vector.load %arg14[%c48_212, %c352_213] : memref<144x512xbf16, #tpu.memory_space<vmem>>, vector<16x32xbf16>
    tpu.vector_store %arg14[%c48_212, %c352_213], %129 {strides = array<i32>} : memref<144x512xbf16, #tpu.memory_space<vmem>>, vector<16x32xbf16>,
    %c640 = arith.constant 640 : index
    %c0_214 = arith.constant 0 : index
    %131 = vector.load %arg13[%c640, %c0_214] : memref<1024x32xbf16, #tpu.memory_space<vmem>>, vector<16x32xbf16>
    %c48_215 = arith.constant 48 : index
    %c384_216 = arith.constant 384 : index
    %132 = vector.load %arg14[%c48_215, %c384_216] : memref<144x512xbf16, #tpu.memory_space<vmem>>, vector<16x32xbf16>
    tpu.vector_store %arg14[%c48_215, %c384_216], %131 {strides = array<i32>} : memref<144x512xbf16, #tpu.memory_space<vmem>>, vector<16x32xbf16>,
    %c656 = arith.constant 656 : index
    %c0_217 = arith.constant 0 : index
    %133 = vector.load %arg13[%c656, %c0_217] : memref<1024x32xbf16, #tpu.memory_space<vmem>>, vector<16x32xbf16>
    %c48_218 = arith.constant 48 : index
    %c416_219 = arith.constant 416 : index
    %134 = vector.load %arg14[%c48_218, %c416_219] : memref<144x512xbf16, #tpu.memory_space<vmem>>, vector<16x32xbf16>
    tpu.vector_store %arg14[%c48_218, %c416_219], %133 {strides = array<i32>} : memref<144x512xbf16, #tpu.memory_space<vmem>>, vector<16x32xbf16>,
    %c672 = arith.constant 672 : index
    %c0_220 = arith.constant 0 : index
    %135 = vector.load %arg13[%c672, %c0_220] : memref<1024x32xbf16, #tpu.memory_space<vmem>>, vector<16x32xbf16>
    %c48_221 = arith.constant 48 : index
    %c448_222 = arith.constant 448 : index
    %136 = vector.load %arg14[%c48_221, %c448_222] : memref<144x512xbf16, #tpu.memory_space<vmem>>, vector<16x32xbf16>
    tpu.vector_store %arg14[%c48_221, %c448_222], %135 {strides = array<i32>} : memref<144x512xbf16, #tpu.memory_space<vmem>>, vector<16x32xbf16>,
    %c688 = arith.constant 688 : index
    %c0_223 = arith.constant 0 : index
    %137 = vector.load %arg13[%c688, %c0_223] : memref<1024x32xbf16, #tpu.memory_space<vmem>>, vector<16x32xbf16>
    %c48_224 = arith.constant 48 : index
    %c480_225 = arith.constant 480 : index
    %138 = vector.load %arg14[%c48_224, %c480_225] : memref<144x512xbf16, #tpu.memory_space<vmem>>, vector<16x32xbf16>
    tpu.vector_store %arg14[%c48_224, %c480_225], %137 {strides = array<i32>} : memref<144x512xbf16, #tpu.memory_space<vmem>>, vector<16x32xbf16>,
    %c288_226 = arith.constant 288 : index
    %c0_227 = arith.constant 0 : index
    %139 = vector.load %arg13[%c288_226, %c0_227] : memref<1024x32xbf16, #tpu.memory_space<vmem>>, vector<16x32xbf16>
    %c64_228 = arith.constant 64 : index
    %c0_229 = arith.constant 0 : index
    %140 = vector.load %arg14[%c64_228, %c0_229] : memref<144x512xbf16, #tpu.memory_space<vmem>>, vector<16x32xbf16>
    tpu.vector_store %arg14[%c64_228, %c0_229], %139 {strides = array<i32>} : memref<144x512xbf16, #tpu.memory_space<vmem>>, vector<16x32xbf16>,
    %c304_230 = arith.constant 304 : index
    %c0_231 = arith.constant 0 : index
    %141 = vector.load %arg13[%c304_230, %c0_231] : memref<1024x32xbf16, #tpu.memory_space<vmem>>, vector<16x32xbf16>
    %c64_232 = arith.constant 64 : index
    %c32_233 = arith.constant 32 : index
    %142 = vector.load %arg14[%c64_232, %c32_233] : memref<144x512xbf16, #tpu.memory_space<vmem>>, vector<16x32xbf16>
    tpu.vector_store %arg14[%c64_232, %c32_233], %141 {strides = array<i32>} : memref<144x512xbf16, #tpu.memory_space<vmem>>, vector<16x32xbf16>,
    %c320_234 = arith.constant 320 : index
    %c0_235 = arith.constant 0 : index
    %143 = vector.load %arg13[%c320_234, %c0_235] : memref<1024x32xbf16, #tpu.memory_space<vmem>>, vector<16x32xbf16>
    %c64_236 = arith.constant 64 : index
    %c64_237 = arith.constant 64 : index
    %144 = vector.load %arg14[%c64_236, %c64_237] : memref<144x512xbf16, #tpu.memory_space<vmem>>, vector<16x32xbf16>
    tpu.vector_store %arg14[%c64_236, %c64_237], %143 {strides = array<i32>} : memref<144x512xbf16, #tpu.memory_space<vmem>>, vector<16x32xbf16>,
    %c336_238 = arith.constant 336 : index
    %c0_239 = arith.constant 0 : index
    %145 = vector.load %arg13[%c336_238, %c0_239] : memref<1024x32xbf16, #tpu.memory_space<vmem>>, vector<16x32xbf16>
    %c64_240 = arith.constant 64 : index
    %c96_241 = arith.constant 96 : index
    %146 = vector.load %arg14[%c64_240, %c96_241] : memref<144x512xbf16, #tpu.memory_space<vmem>>, vector<16x32xbf16>
    tpu.vector_store %arg14[%c64_240, %c96_241], %145 {strides = array<i32>} : memref<144x512xbf16, #tpu.memory_space<vmem>>, vector<16x32xbf16>,
    %c416_242 = arith.constant 416 : index
    %c0_243 = arith.constant 0 : index
    %147 = vector.load %arg13[%c416_242, %c0_243] : memref<1024x32xbf16, #tpu.memory_space<vmem>>, vector<16x32xbf16>
    %c64_244 = arith.constant 64 : index
    %c128_245 = arith.constant 128 : index
    %148 = vector.load %arg14[%c64_244, %c128_245] : memref<144x512xbf16, #tpu.memory_space<vmem>>, vector<16x32xbf16>
    tpu.vector_store %arg14[%c64_244, %c128_245], %147 {strides = array<i32>} : memref<144x512xbf16, #tpu.memory_space<vmem>>, vector<16x32xbf16>,
    %c432_246 = arith.constant 432 : index
    %c0_247 = arith.constant 0 : index
    %149 = vector.load %arg13[%c432_246, %c0_247] : memref<1024x32xbf16, #tpu.memory_space<vmem>>, vector<16x32xbf16>
    %c64_248 = arith.constant 64 : index
    %c160_249 = arith.constant 160 : index
    %150 = vector.load %arg14[%c64_248, %c160_249] : memref<144x512xbf16, #tpu.memory_space<vmem>>, vector<16x32xbf16>
    tpu.vector_store %arg14[%c64_248, %c160_249], %149 {strides = array<i32>} : memref<144x512xbf16, #tpu.memory_space<vmem>>, vector<16x32xbf16>,
    %c448_250 = arith.constant 448 : index
    %c0_251 = arith.constant 0 : index
    %151 = vector.load %arg13[%c448_250, %c0_251] : memref<1024x32xbf16, #tpu.memory_space<vmem>>, vector<16x32xbf16>
    %c64_252 = arith.constant 64 : index
    %c192_253 = arith.constant 192 : index
    %152 = vector.load %arg14[%c64_252, %c192_253] : memref<144x512xbf16, #tpu.memory_space<vmem>>, vector<16x32xbf16>
    tpu.vector_store %arg14[%c64_252, %c192_253], %151 {strides = array<i32>} : memref<144x512xbf16, #tpu.memory_space<vmem>>, vector<16x32xbf16>,
    %c464_254 = arith.constant 464 : index
    %c0_255 = arith.constant 0 : index
    %153 = vector.load %arg13[%c464_254, %c0_255] : memref<1024x32xbf16, #tpu.memory_space<vmem>>, vector<16x32xbf16>
    %c64_256 = arith.constant 64 : index
    %c224_257 = arith.constant 224 : index
    %154 = vector.load %arg14[%c64_256, %c224_257] : memref<144x512xbf16, #tpu.memory_space<vmem>>, vector<16x32xbf16>
    tpu.vector_store %arg14[%c64_256, %c224_257], %153 {strides = array<i32>} : memref<144x512xbf16, #tpu.memory_space<vmem>>, vector<16x32xbf16>,
    %c544_258 = arith.constant 544 : index
    %c0_259 = arith.constant 0 : index
    %155 = vector.load %arg13[%c544_258, %c0_259] : memref<1024x32xbf16, #tpu.memory_space<vmem>>, vector<16x32xbf16>
    %c64_260 = arith.constant 64 : index
    %c256_261 = arith.constant 256 : index
    %156 = vector.load %arg14[%c64_260, %c256_261] : memref<144x512xbf16, #tpu.memory_space<vmem>>, vector<16x32xbf16>
    tpu.vector_store %arg14[%c64_260, %c256_261], %155 {strides = array<i32>} : memref<144x512xbf16, #tpu.memory_space<vmem>>, vector<16x32xbf16>,
    %c560_262 = arith.constant 560 : index
    %c0_263 = arith.constant 0 : index
    %157 = vector.load %arg13[%c560_262, %c0_263] : memref<1024x32xbf16, #tpu.memory_space<vmem>>, vector<16x32xbf16>
    %c64_264 = arith.constant 64 : index
    %c288_265 = arith.constant 288 : index
    %158 = vector.load %arg14[%c64_264, %c288_265] : memref<144x512xbf16, #tpu.memory_space<vmem>>, vector<16x32xbf16>
    tpu.vector_store %arg14[%c64_264, %c288_265], %157 {strides = array<i32>} : memref<144x512xbf16, #tpu.memory_space<vmem>>, vector<16x32xbf16>,
    %c576 = arith.constant 576 : index
    %c0_266 = arith.constant 0 : index
    %159 = vector.load %arg13[%c576, %c0_266] : memref<1024x32xbf16, #tpu.memory_space<vmem>>, vector<16x32xbf16>
    %c64_267 = arith.constant 64 : index
    %c320_268 = arith.constant 320 : index
    %160 = vector.load %arg14[%c64_267, %c320_268] : memref<144x512xbf16, #tpu.memory_space<vmem>>, vector<16x32xbf16>
    tpu.vector_store %arg14[%c64_267, %c320_268], %159 {strides = array<i32>} : memref<144x512xbf16, #tpu.memory_space<vmem>>, vector<16x32xbf16>,
    %c592 = arith.constant 592 : index
    %c0_269 = arith.constant 0 : index
    %161 = vector.load %arg13[%c592, %c0_269] : memref<1024x32xbf16, #tpu.memory_space<vmem>>, vector<16x32xbf16>
    %c64_270 = arith.constant 64 : index
    %c352_271 = arith.constant 352 : index
    %162 = vector.load %arg14[%c64_270, %c352_271] : memref<144x512xbf16, #tpu.memory_space<vmem>>, vector<16x32xbf16>
    tpu.vector_store %arg14[%c64_270, %c352_271], %161 {strides = array<i32>} : memref<144x512xbf16, #tpu.memory_space<vmem>>, vector<16x32xbf16>,
    %c672_272 = arith.constant 672 : index
    %c0_273 = arith.constant 0 : index
    %163 = vector.load %arg13[%c672_272, %c0_273] : memref<1024x32xbf16, #tpu.memory_space<vmem>>, vector<16x32xbf16>
    %c64_274 = arith.constant 64 : index
    %c384_275 = arith.constant 384 : index
    %164 = vector.load %arg14[%c64_274, %c384_275] : memref<144x512xbf16, #tpu.memory_space<vmem>>, vector<16x32xbf16>
    tpu.vector_store %arg14[%c64_274, %c384_275], %163 {strides = array<i32>} : memref<144x512xbf16, #tpu.memory_space<vmem>>, vector<16x32xbf16>,
    %c688_276 = arith.constant 688 : index
    %c0_277 = arith.constant 0 : index
    %165 = vector.load %arg13[%c688_276, %c0_277] : memref<1024x32xbf16, #tpu.memory_space<vmem>>, vector<16x32xbf16>
    %c64_278 = arith.constant 64 : index
    %c416_279 = arith.constant 416 : index
    %166 = vector.load %arg14[%c64_278, %c416_279] : memref<144x512xbf16, #tpu.memory_space<vmem>>, vector<16x32xbf16>
    tpu.vector_store %arg14[%c64_278, %c416_279], %165 {strides = array<i32>} : memref<144x512xbf16, #tpu.memory_space<vmem>>, vector<16x32xbf16>,
    %c704 = arith.constant 704 : index
    %c0_280 = arith.constant 0 : index
    %167 = vector.load %arg13[%c704, %c0_280] : memref<1024x32xbf16, #tpu.memory_space<vmem>>, vector<16x32xbf16>
    %c64_281 = arith.constant 64 : index
    %c448_282 = arith.constant 448 : index
    %168 = vector.load %arg14[%c64_281, %c448_282] : memref<144x512xbf16, #tpu.memory_space<vmem>>, vector<16x32xbf16>
    tpu.vector_store %arg14[%c64_281, %c448_282], %167 {strides = array<i32>} : memref<144x512xbf16, #tpu.memory_space<vmem>>, vector<16x32xbf16>,
    %c720 = arith.constant 720 : index
    %c0_283 = arith.constant 0 : index
    %169 = vector.load %arg13[%c720, %c0_283] : memref<1024x32xbf16, #tpu.memory_space<vmem>>, vector<16x32xbf16>
    %c64_284 = arith.constant 64 : index
    %c480_285 = arith.constant 480 : index
    %170 = vector.load %arg14[%c64_284, %c480_285] : memref<144x512xbf16, #tpu.memory_space<vmem>>, vector<16x32xbf16>
    tpu.vector_store %arg14[%c64_284, %c480_285], %169 {strides = array<i32>} : memref<144x512xbf16, #tpu.memory_space<vmem>>, vector<16x32xbf16>,
    %c320_286 = arith.constant 320 : index
    %c0_287 = arith.constant 0 : index
    %171 = vector.load %arg13[%c320_286, %c0_287] : memref<1024x32xbf16, #tpu.memory_space<vmem>>, vector<16x32xbf16>
    %c80_288 = arith.constant 80 : index
    %c0_289 = arith.constant 0 : index
    %172 = vector.load %arg14[%c80_288, %c0_289] : memref<144x512xbf16, #tpu.memory_space<vmem>>, vector<16x32xbf16>
    tpu.vector_store %arg14[%c80_288, %c0_289], %171 {strides = array<i32>} : memref<144x512xbf16, #tpu.memory_space<vmem>>, vector<16x32xbf16>,
    %c336_290 = arith.constant 336 : index
    %c0_291 = arith.constant 0 : index
    %173 = vector.load %arg13[%c336_290, %c0_291] : memref<1024x32xbf16, #tpu.memory_space<vmem>>, vector<16x32xbf16>
    %c80_292 = arith.constant 80 : index
    %c32_293 = arith.constant 32 : index
    %174 = vector.load %arg14[%c80_292, %c32_293] : memref<144x512xbf16, #tpu.memory_space<vmem>>, vector<16x32xbf16>
    tpu.vector_store %arg14[%c80_292, %c32_293], %173 {strides = array<i32>} : memref<144x512xbf16, #tpu.memory_space<vmem>>, vector<16x32xbf16>,
    %c352_294 = arith.constant 352 : index
    %c0_295 = arith.constant 0 : index
    %175 = vector.load %arg13[%c352_294, %c0_295] : memref<1024x32xbf16, #tpu.memory_space<vmem>>, vector<16x32xbf16>
    %c80_296 = arith.constant 80 : index
    %c64_297 = arith.constant 64 : index
    %176 = vector.load %arg14[%c80_296, %c64_297] : memref<144x512xbf16, #tpu.memory_space<vmem>>, vector<16x32xbf16>
    tpu.vector_store %arg14[%c80_296, %c64_297], %175 {strides = array<i32>} : memref<144x512xbf16, #tpu.memory_space<vmem>>, vector<16x32xbf16>,
    %c368_298 = arith.constant 368 : index
    %c0_299 = arith.constant 0 : index
    %177 = vector.load %arg13[%c368_298, %c0_299] : memref<1024x32xbf16, #tpu.memory_space<vmem>>, vector<16x32xbf16>
    %c80_300 = arith.constant 80 : index
    %c96_301 = arith.constant 96 : index
    %178 = vector.load %arg14[%c80_300, %c96_301] : memref<144x512xbf16, #tpu.memory_space<vmem>>, vector<16x32xbf16>
    tpu.vector_store %arg14[%c80_300, %c96_301], %177 {strides = array<i32>} : memref<144x512xbf16, #tpu.memory_space<vmem>>, vector<16x32xbf16>,
    %c448_302 = arith.constant 448 : index
    %c0_303 = arith.constant 0 : index
    %179 = vector.load %arg13[%c448_302, %c0_303] : memref<1024x32xbf16, #tpu.memory_space<vmem>>, vector<16x32xbf16>
    %c80_304 = arith.constant 80 : index
    %c128_305 = arith.constant 128 : index
    %180 = vector.load %arg14[%c80_304, %c128_305] : memref<144x512xbf16, #tpu.memory_space<vmem>>, vector<16x32xbf16>
    tpu.vector_store %arg14[%c80_304, %c128_305], %179 {strides = array<i32>} : memref<144x512xbf16, #tpu.memory_space<vmem>>, vector<16x32xbf16>,
    %c464_306 = arith.constant 464 : index
    %c0_307 = arith.constant 0 : index
    %181 = vector.load %arg13[%c464_306, %c0_307] : memref<1024x32xbf16, #tpu.memory_space<vmem>>, vector<16x32xbf16>
    %c80_308 = arith.constant 80 : index
    %c160_309 = arith.constant 160 : index
    %182 = vector.load %arg14[%c80_308, %c160_309] : memref<144x512xbf16, #tpu.memory_space<vmem>>, vector<16x32xbf16>
    tpu.vector_store %arg14[%c80_308, %c160_309], %181 {strides = array<i32>} : memref<144x512xbf16, #tpu.memory_space<vmem>>, vector<16x32xbf16>,
    %c480_310 = arith.constant 480 : index
    %c0_311 = arith.constant 0 : index
    %183 = vector.load %arg13[%c480_310, %c0_311] : memref<1024x32xbf16, #tpu.memory_space<vmem>>, vector<16x32xbf16>
    %c80_312 = arith.constant 80 : index
    %c192_313 = arith.constant 192 : index
    %184 = vector.load %arg14[%c80_312, %c192_313] : memref<144x512xbf16, #tpu.memory_space<vmem>>, vector<16x32xbf16>
    tpu.vector_store %arg14[%c80_312, %c192_313], %183 {strides = array<i32>} : memref<144x512xbf16, #tpu.memory_space<vmem>>, vector<16x32xbf16>,
    %c496_314 = arith.constant 496 : index
    %c0_315 = arith.constant 0 : index
    %185 = vector.load %arg13[%c496_314, %c0_315] : memref<1024x32xbf16, #tpu.memory_space<vmem>>, vector<16x32xbf16>
    %c80_316 = arith.constant 80 : index
    %c224_317 = arith.constant 224 : index
    %186 = vector.load %arg14[%c80_316, %c224_317] : memref<144x512xbf16, #tpu.memory_space<vmem>>, vector<16x32xbf16>
    tpu.vector_store %arg14[%c80_316, %c224_317], %185 {strides = array<i32>} : memref<144x512xbf16, #tpu.memory_space<vmem>>, vector<16x32xbf16>,
    %c576_318 = arith.constant 576 : index
    %c0_319 = arith.constant 0 : index
    %187 = vector.load %arg13[%c576_318, %c0_319] : memref<1024x32xbf16, #tpu.memory_space<vmem>>, vector<16x32xbf16>
    %c80_320 = arith.constant 80 : index
    %c256_321 = arith.constant 256 : index
    %188 = vector.load %arg14[%c80_320, %c256_321] : memref<144x512xbf16, #tpu.memory_space<vmem>>, vector<16x32xbf16>
    tpu.vector_store %arg14[%c80_320, %c256_321], %187 {strides = array<i32>} : memref<144x512xbf16, #tpu.memory_space<vmem>>, vector<16x32xbf16>,
    %c592_322 = arith.constant 592 : index
    %c0_323 = arith.constant 0 : index
    %189 = vector.load %arg13[%c592_322, %c0_323] : memref<1024x32xbf16, #tpu.memory_space<vmem>>, vector<16x32xbf16>
    %c80_324 = arith.constant 80 : index
    %c288_325 = arith.constant 288 : index
    %190 = vector.load %arg14[%c80_324, %c288_325] : memref<144x512xbf16, #tpu.memory_space<vmem>>, vector<16x32xbf16>
    tpu.vector_store %arg14[%c80_324, %c288_325], %189 {strides = array<i32>} : memref<144x512xbf16, #tpu.memory_space<vmem>>, vector<16x32xbf16>,
    %c608 = arith.constant 608 : index
    %c0_326 = arith.constant 0 : index
    %191 = vector.load %arg13[%c608, %c0_326] : memref<1024x32xbf16, #tpu.memory_space<vmem>>, vector<16x32xbf16>
    %c80_327 = arith.constant 80 : index
    %c320_328 = arith.constant 320 : index
    %192 = vector.load %arg14[%c80_327, %c320_328] : memref<144x512xbf16, #tpu.memory_space<vmem>>, vector<16x32xbf16>
    tpu.vector_store %arg14[%c80_327, %c320_328], %191 {strides = array<i32>} : memref<144x512xbf16, #tpu.memory_space<vmem>>, vector<16x32xbf16>,
    %c624 = arith.constant 624 : index
    %c0_329 = arith.constant 0 : index
    %193 = vector.load %arg13[%c624, %c0_329] : memref<1024x32xbf16, #tpu.memory_space<vmem>>, vector<16x32xbf16>
    %c80_330 = arith.constant 80 : index
    %c352_331 = arith.constant 352 : index
    %194 = vector.load %arg14[%c80_330, %c352_331] : memref<144x512xbf16, #tpu.memory_space<vmem>>, vector<16x32xbf16>
    tpu.vector_store %arg14[%c80_330, %c352_331], %193 {strides = array<i32>} : memref<144x512xbf16, #tpu.memory_space<vmem>>, vector<16x32xbf16>,
    %c704_332 = arith.constant 704 : index
    %c0_333 = arith.constant 0 : index
    %195 = vector.load %arg13[%c704_332, %c0_333] : memref<1024x32xbf16, #tpu.memory_space<vmem>>, vector<16x32xbf16>
    %c80_334 = arith.constant 80 : index
    %c384_335 = arith.constant 384 : index
    %196 = vector.load %arg14[%c80_334, %c384_335] : memref<144x512xbf16, #tpu.memory_space<vmem>>, vector<16x32xbf16>
    tpu.vector_store %arg14[%c80_334, %c384_335], %195 {strides = array<i32>} : memref<144x512xbf16, #tpu.memory_space<vmem>>, vector<16x32xbf16>,
    %c720_336 = arith.constant 720 : index
    %c0_337 = arith.constant 0 : index
    %197 = vector.load %arg13[%c720_336, %c0_337] : memref<1024x32xbf16, #tpu.memory_space<vmem>>, vector<16x32xbf16>
    %c80_338 = arith.constant 80 : index
    %c416_339 = arith.constant 416 : index
    %198 = vector.load %arg14[%c80_338, %c416_339] : memref<144x512xbf16, #tpu.memory_space<vmem>>, vector<16x32xbf16>
    tpu.vector_store %arg14[%c80_338, %c416_339], %197 {strides = array<i32>} : memref<144x512xbf16, #tpu.memory_space<vmem>>, vector<16x32xbf16>,
    %c736 = arith.constant 736 : index
    %c0_340 = arith.constant 0 : index
    %199 = vector.load %arg13[%c736, %c0_340] : memref<1024x32xbf16, #tpu.memory_space<vmem>>, vector<16x32xbf16>
    %c80_341 = arith.constant 80 : index
    %c448_342 = arith.constant 448 : index
    %200 = vector.load %arg14[%c80_341, %c448_342] : memref<144x512xbf16, #tpu.memory_space<vmem>>, vector<16x32xbf16>
    tpu.vector_store %arg14[%c80_341, %c448_342], %199 {strides = array<i32>} : memref<144x512xbf16, #tpu.memory_space<vmem>>, vector<16x32xbf16>,
    %c752 = arith.constant 752 : index
    %c0_343 = arith.constant 0 : index
    %201 = vector.load %arg13[%c752, %c0_343] : memref<1024x32xbf16, #tpu.memory_space<vmem>>, vector<16x32xbf16>
    %c80_344 = arith.constant 80 : index
    %c480_345 = arith.constant 480 : index
    %202 = vector.load %arg14[%c80_344, %c480_345] : memref<144x512xbf16, #tpu.memory_space<vmem>>, vector<16x32xbf16>
    tpu.vector_store %arg14[%c80_344, %c480_345], %201 {strides = array<i32>} : memref<144x512xbf16, #tpu.memory_space<vmem>>, vector<16x32xbf16>,
    %c512_346 = arith.constant 512 : index
    %c0_347 = arith.constant 0 : index
    %203 = vector.load %arg13[%c512_346, %c0_347] : memref<1024x32xbf16, #tpu.memory_space<vmem>>, vector<16x32xbf16>
    %c96_348 = arith.constant 96 : index
    %c0_349 = arith.constant 0 : index
    %204 = vector.load %arg14[%c96_348, %c0_349] : memref<144x512xbf16, #tpu.memory_space<vmem>>, vector<16x32xbf16>
    tpu.vector_store %arg14[%c96_348, %c0_349], %203 {strides = array<i32>} : memref<144x512xbf16, #tpu.memory_space<vmem>>, vector<16x32xbf16>,
    %c528_350 = arith.constant 528 : index
    %c0_351 = arith.constant 0 : index
    %205 = vector.load %arg13[%c528_350, %c0_351] : memref<1024x32xbf16, #tpu.memory_space<vmem>>, vector<16x32xbf16>
    %c96_352 = arith.constant 96 : index
    %c32_353 = arith.constant 32 : index
    %206 = vector.load %arg14[%c96_352, %c32_353] : memref<144x512xbf16, #tpu.memory_space<vmem>>, vector<16x32xbf16>
    tpu.vector_store %arg14[%c96_352, %c32_353], %205 {strides = array<i32>} : memref<144x512xbf16, #tpu.memory_space<vmem>>, vector<16x32xbf16>,
    %c544_354 = arith.constant 544 : index
    %c0_355 = arith.constant 0 : index
    %207 = vector.load %arg13[%c544_354, %c0_355] : memref<1024x32xbf16, #tpu.memory_space<vmem>>, vector<16x32xbf16>
    %c96_356 = arith.constant 96 : index
    %c64_357 = arith.constant 64 : index
    %208 = vector.load %arg14[%c96_356, %c64_357] : memref<144x512xbf16, #tpu.memory_space<vmem>>, vector<16x32xbf16>
    tpu.vector_store %arg14[%c96_356, %c64_357], %207 {strides = array<i32>} : memref<144x512xbf16, #tpu.memory_space<vmem>>, vector<16x32xbf16>,
    %c560_358 = arith.constant 560 : index
    %c0_359 = arith.constant 0 : index
    %209 = vector.load %arg13[%c560_358, %c0_359] : memref<1024x32xbf16, #tpu.memory_space<vmem>>, vector<16x32xbf16>
    %c96_360 = arith.constant 96 : index
    %c96_361 = arith.constant 96 : index
    %210 = vector.load %arg14[%c96_360, %c96_361] : memref<144x512xbf16, #tpu.memory_space<vmem>>, vector<16x32xbf16>
    tpu.vector_store %arg14[%c96_360, %c96_361], %209 {strides = array<i32>} : memref<144x512xbf16, #tpu.memory_space<vmem>>, vector<16x32xbf16>,
    %c640_362 = arith.constant 640 : index
    %c0_363 = arith.constant 0 : index
    %211 = vector.load %arg13[%c640_362, %c0_363] : memref<1024x32xbf16, #tpu.memory_space<vmem>>, vector<16x32xbf16>
    %c96_364 = arith.constant 96 : index
    %c128_365 = arith.constant 128 : index
    %212 = vector.load %arg14[%c96_364, %c128_365] : memref<144x512xbf16, #tpu.memory_space<vmem>>, vector<16x32xbf16>
    tpu.vector_store %arg14[%c96_364, %c128_365], %211 {strides = array<i32>} : memref<144x512xbf16, #tpu.memory_space<vmem>>, vector<16x32xbf16>,
    %c656_366 = arith.constant 656 : index
    %c0_367 = arith.constant 0 : index
    %213 = vector.load %arg13[%c656_366, %c0_367] : memref<1024x32xbf16, #tpu.memory_space<vmem>>, vector<16x32xbf16>
    %c96_368 = arith.constant 96 : index
    %c160_369 = arith.constant 160 : index
    %214 = vector.load %arg14[%c96_368, %c160_369] : memref<144x512xbf16, #tpu.memory_space<vmem>>, vector<16x32xbf16>
    tpu.vector_store %arg14[%c96_368, %c160_369], %213 {strides = array<i32>} : memref<144x512xbf16, #tpu.memory_space<vmem>>, vector<16x32xbf16>,
    %c672_370 = arith.constant 672 : index
    %c0_371 = arith.constant 0 : index
    %215 = vector.load %arg13[%c672_370, %c0_371] : memref<1024x32xbf16, #tpu.memory_space<vmem>>, vector<16x32xbf16>
    %c96_372 = arith.constant 96 : index
    %c192_373 = arith.constant 192 : index
    %216 = vector.load %arg14[%c96_372, %c192_373] : memref<144x512xbf16, #tpu.memory_space<vmem>>, vector<16x32xbf16>
    tpu.vector_store %arg14[%c96_372, %c192_373], %215 {strides = array<i32>} : memref<144x512xbf16, #tpu.memory_space<vmem>>, vector<16x32xbf16>,
    %c688_374 = arith.constant 688 : index
    %c0_375 = arith.constant 0 : index
    %217 = vector.load %arg13[%c688_374, %c0_375] : memref<1024x32xbf16, #tpu.memory_space<vmem>>, vector<16x32xbf16>
    %c96_376 = arith.constant 96 : index
    %c224_377 = arith.constant 224 : index
    %218 = vector.load %arg14[%c96_376, %c224_377] : memref<144x512xbf16, #tpu.memory_space<vmem>>, vector<16x32xbf16>
    tpu.vector_store %arg14[%c96_376, %c224_377], %217 {strides = array<i32>} : memref<144x512xbf16, #tpu.memory_space<vmem>>, vector<16x32xbf16>,
    %c768 = arith.constant 768 : index
    %c0_378 = arith.constant 0 : index
    %219 = vector.load %arg13[%c768, %c0_378] : memref<1024x32xbf16, #tpu.memory_space<vmem>>, vector<16x32xbf16>
    %c96_379 = arith.constant 96 : index
    %c256_380 = arith.constant 256 : index
    %220 = vector.load %arg14[%c96_379, %c256_380] : memref<144x512xbf16, #tpu.memory_space<vmem>>, vector<16x32xbf16>
    tpu.vector_store %arg14[%c96_379, %c256_380], %219 {strides = array<i32>} : memref<144x512xbf16, #tpu.memory_space<vmem>>, vector<16x32xbf16>,
    %c784 = arith.constant 784 : index
    %c0_381 = arith.constant 0 : index
    %221 = vector.load %arg13[%c784, %c0_381] : memref<1024x32xbf16, #tpu.memory_space<vmem>>, vector<16x32xbf16>
    %c96_382 = arith.constant 96 : index
    %c288_383 = arith.constant 288 : index
    %222 = vector.load %arg14[%c96_382, %c288_383] : memref<144x512xbf16, #tpu.memory_space<vmem>>, vector<16x32xbf16>
    tpu.vector_store %arg14[%c96_382, %c288_383], %221 {strides = array<i32>} : memref<144x512xbf16, #tpu.memory_space<vmem>>, vector<16x32xbf16>,
    %c800 = arith.constant 800 : index
    %c0_384 = arith.constant 0 : index
    %223 = vector.load %arg13[%c800, %c0_384] : memref<1024x32xbf16, #tpu.memory_space<vmem>>, vector<16x32xbf16>
    %c96_385 = arith.constant 96 : index
    %c320_386 = arith.constant 320 : index
    %224 = vector.load %arg14[%c96_385, %c320_386] : memref<144x512xbf16, #tpu.memory_space<vmem>>, vector<16x32xbf16>
    tpu.vector_store %arg14[%c96_385, %c320_386], %223 {strides = array<i32>} : memref<144x512xbf16, #tpu.memory_space<vmem>>, vector<16x32xbf16>,
    %c816 = arith.constant 816 : index
    %c0_387 = arith.constant 0 : index
    %225 = vector.load %arg13[%c816, %c0_387] : memref<1024x32xbf16, #tpu.memory_space<vmem>>, vector<16x32xbf16>
    %c96_388 = arith.constant 96 : index
    %c352_389 = arith.constant 352 : index
    %226 = vector.load %arg14[%c96_388, %c352_389] : memref<144x512xbf16, #tpu.memory_space<vmem>>, vector<16x32xbf16>
    tpu.vector_store %arg14[%c96_388, %c352_389], %225 {strides = array<i32>} : memref<144x512xbf16, #tpu.memory_space<vmem>>, vector<16x32xbf16>,
    %c896 = arith.constant 896 : index
    %c0_390 = arith.constant 0 : index
    %227 = vector.load %arg13[%c896, %c0_390] : memref<1024x32xbf16, #tpu.memory_space<vmem>>, vector<16x32xbf16>
    %c96_391 = arith.constant 96 : index
    %c384_392 = arith.constant 384 : index
    %228 = vector.load %arg14[%c96_391, %c384_392] : memref<144x512xbf16, #tpu.memory_space<vmem>>, vector<16x32xbf16>
    tpu.vector_store %arg14[%c96_391, %c384_392], %227 {strides = array<i32>} : memref<144x512xbf16, #tpu.memory_space<vmem>>, vector<16x32xbf16>,
    %c912 = arith.constant 912 : index
    %c0_393 = arith.constant 0 : index
    %229 = vector.load %arg13[%c912, %c0_393] : memref<1024x32xbf16, #tpu.memory_space<vmem>>, vector<16x32xbf16>
    %c96_394 = arith.constant 96 : index
    %c416_395 = arith.constant 416 : index
    %230 = vector.load %arg14[%c96_394, %c416_395] : memref<144x512xbf16, #tpu.memory_space<vmem>>, vector<16x32xbf16>
    tpu.vector_store %arg14[%c96_394, %c416_395], %229 {strides = array<i32>} : memref<144x512xbf16, #tpu.memory_space<vmem>>, vector<16x32xbf16>,
    %c928 = arith.constant 928 : index
    %c0_396 = arith.constant 0 : index
    %231 = vector.load %arg13[%c928, %c0_396] : memref<1024x32xbf16, #tpu.memory_space<vmem>>, vector<16x32xbf16>
    %c96_397 = arith.constant 96 : index
    %c448_398 = arith.constant 448 : index
    %232 = vector.load %arg14[%c96_397, %c448_398] : memref<144x512xbf16, #tpu.memory_space<vmem>>, vector<16x32xbf16>
    tpu.vector_store %arg14[%c96_397, %c448_398], %231 {strides = array<i32>} : memref<144x512xbf16, #tpu.memory_space<vmem>>, vector<16x32xbf16>,
    %c944 = arith.constant 944 : index
    %c0_399 = arith.constant 0 : index
    %233 = vector.load %arg13[%c944, %c0_399] : memref<1024x32xbf16, #tpu.memory_space<vmem>>, vector<16x32xbf16>
    %c96_400 = arith.constant 96 : index
    %c480_401 = arith.constant 480 : index
    %234 = vector.load %arg14[%c96_400, %c480_401] : memref<144x512xbf16, #tpu.memory_space<vmem>>, vector<16x32xbf16>
    tpu.vector_store %arg14[%c96_400, %c480_401], %233 {strides = array<i32>} : memref<144x512xbf16, #tpu.memory_space<vmem>>, vector<16x32xbf16>,
    %c544_402 = arith.constant 544 : index
    %c0_403 = arith.constant 0 : index
    %235 = vector.load %arg13[%c544_402, %c0_403] : memref<1024x32xbf16, #tpu.memory_space<vmem>>, vector<16x32xbf16>
    %c112_404 = arith.constant 112 : index
    %c0_405 = arith.constant 0 : index
    %236 = vector.load %arg14[%c112_404, %c0_405] : memref<144x512xbf16, #tpu.memory_space<vmem>>, vector<16x32xbf16>
    tpu.vector_store %arg14[%c112_404, %c0_405], %235 {strides = array<i32>} : memref<144x512xbf16, #tpu.memory_space<vmem>>, vector<16x32xbf16>,
    %c560_406 = arith.constant 560 : index
    %c0_407 = arith.constant 0 : index
    %237 = vector.load %arg13[%c560_406, %c0_407] : memref<1024x32xbf16, #tpu.memory_space<vmem>>, vector<16x32xbf16>
    %c112_408 = arith.constant 112 : index
    %c32_409 = arith.constant 32 : index
    %238 = vector.load %arg14[%c112_408, %c32_409] : memref<144x512xbf16, #tpu.memory_space<vmem>>, vector<16x32xbf16>
    tpu.vector_store %arg14[%c112_408, %c32_409], %237 {strides = array<i32>} : memref<144x512xbf16, #tpu.memory_space<vmem>>, vector<16x32xbf16>,
    %c576_410 = arith.constant 576 : index
    %c0_411 = arith.constant 0 : index
    %239 = vector.load %arg13[%c576_410, %c0_411] : memref<1024x32xbf16, #tpu.memory_space<vmem>>, vector<16x32xbf16>
    %c112_412 = arith.constant 112 : index
    %c64_413 = arith.constant 64 : index
    %240 = vector.load %arg14[%c112_412, %c64_413] : memref<144x512xbf16, #tpu.memory_space<vmem>>, vector<16x32xbf16>
    tpu.vector_store %arg14[%c112_412, %c64_413], %239 {strides = array<i32>} : memref<144x512xbf16, #tpu.memory_space<vmem>>, vector<16x32xbf16>,
    %c592_414 = arith.constant 592 : index
    %c0_415 = arith.constant 0 : index
    %241 = vector.load %arg13[%c592_414, %c0_415] : memref<1024x32xbf16, #tpu.memory_space<vmem>>, vector<16x32xbf16>
    %c112_416 = arith.constant 112 : index
    %c96_417 = arith.constant 96 : index
    %242 = vector.load %arg14[%c112_416, %c96_417] : memref<144x512xbf16, #tpu.memory_space<vmem>>, vector<16x32xbf16>
    tpu.vector_store %arg14[%c112_416, %c96_417], %241 {strides = array<i32>} : memref<144x512xbf16, #tpu.memory_space<vmem>>, vector<16x32xbf16>,
    %c672_418 = arith.constant 672 : index
    %c0_419 = arith.constant 0 : index
    %243 = vector.load %arg13[%c672_418, %c0_419] : memref<1024x32xbf16, #tpu.memory_space<vmem>>, vector<16x32xbf16>
    %c112_420 = arith.constant 112 : index
    %c128_421 = arith.constant 128 : index
    %244 = vector.load %arg14[%c112_420, %c128_421] : memref<144x512xbf16, #tpu.memory_space<vmem>>, vector<16x32xbf16>
    tpu.vector_store %arg14[%c112_420, %c128_421], %243 {strides = array<i32>} : memref<144x512xbf16, #tpu.memory_space<vmem>>, vector<16x32xbf16>,
    %c688_422 = arith.constant 688 : index
    %c0_423 = arith.constant 0 : index
    %245 = vector.load %arg13[%c688_422, %c0_423] : memref<1024x32xbf16, #tpu.memory_space<vmem>>, vector<16x32xbf16>
    %c112_424 = arith.constant 112 : index
    %c160_425 = arith.constant 160 : index
    %246 = vector.load %arg14[%c112_424, %c160_425] : memref<144x512xbf16, #tpu.memory_space<vmem>>, vector<16x32xbf16>
    tpu.vector_store %arg14[%c112_424, %c160_425], %245 {strides = array<i32>} : memref<144x512xbf16, #tpu.memory_space<vmem>>, vector<16x32xbf16>,
    %c704_426 = arith.constant 704 : index
    %c0_427 = arith.constant 0 : index
    %247 = vector.load %arg13[%c704_426, %c0_427] : memref<1024x32xbf16, #tpu.memory_space<vmem>>, vector<16x32xbf16>
    %c112_428 = arith.constant 112 : index
    %c192_429 = arith.constant 192 : index
    %248 = vector.load %arg14[%c112_428, %c192_429] : memref<144x512xbf16, #tpu.memory_space<vmem>>, vector<16x32xbf16>
    tpu.vector_store %arg14[%c112_428, %c192_429], %247 {strides = array<i32>} : memref<144x512xbf16, #tpu.memory_space<vmem>>, vector<16x32xbf16>,
    %c720_430 = arith.constant 720 : index
    %c0_431 = arith.constant 0 : index
    %249 = vector.load %arg13[%c720_430, %c0_431] : memref<1024x32xbf16, #tpu.memory_space<vmem>>, vector<16x32xbf16>
    %c112_432 = arith.constant 112 : index
    %c224_433 = arith.constant 224 : index
    %250 = vector.load %arg14[%c112_432, %c224_433] : memref<144x512xbf16, #tpu.memory_space<vmem>>, vector<16x32xbf16>
    tpu.vector_store %arg14[%c112_432, %c224_433], %249 {strides = array<i32>} : memref<144x512xbf16, #tpu.memory_space<vmem>>, vector<16x32xbf16>,
    %c800_434 = arith.constant 800 : index
    %c0_435 = arith.constant 0 : index
    %251 = vector.load %arg13[%c800_434, %c0_435] : memref<1024x32xbf16, #tpu.memory_space<vmem>>, vector<16x32xbf16>
    %c112_436 = arith.constant 112 : index
    %c256_437 = arith.constant 256 : index
    %252 = vector.load %arg14[%c112_436, %c256_437] : memref<144x512xbf16, #tpu.memory_space<vmem>>, vector<16x32xbf16>
    tpu.vector_store %arg14[%c112_436, %c256_437], %251 {strides = array<i32>} : memref<144x512xbf16, #tpu.memory_space<vmem>>, vector<16x32xbf16>,
    %c816_438 = arith.constant 816 : index
    %c0_439 = arith.constant 0 : index
    %253 = vector.load %arg13[%c816_438, %c0_439] : memref<1024x32xbf16, #tpu.memory_space<vmem>>, vector<16x32xbf16>
    %c112_440 = arith.constant 112 : index
    %c288_441 = arith.constant 288 : index
    %254 = vector.load %arg14[%c112_440, %c288_441] : memref<144x512xbf16, #tpu.memory_space<vmem>>, vector<16x32xbf16>
    tpu.vector_store %arg14[%c112_440, %c288_441], %253 {strides = array<i32>} : memref<144x512xbf16, #tpu.memory_space<vmem>>, vector<16x32xbf16>,
    %c832 = arith.constant 832 : index
    %c0_442 = arith.constant 0 : index
    %255 = vector.load %arg13[%c832, %c0_442] : memref<1024x32xbf16, #tpu.memory_space<vmem>>, vector<16x32xbf16>
    %c112_443 = arith.constant 112 : index
    %c320_444 = arith.constant 320 : index
    %256 = vector.load %arg14[%c112_443, %c320_444] : memref<144x512xbf16, #tpu.memory_space<vmem>>, vector<16x32xbf16>
    tpu.vector_store %arg14[%c112_443, %c320_444], %255 {strides = array<i32>} : memref<144x512xbf16, #tpu.memory_space<vmem>>, vector<16x32xbf16>,
    %c848 = arith.constant 848 : index
    %c0_445 = arith.constant 0 : index
    %257 = vector.load %arg13[%c848, %c0_445] : memref<1024x32xbf16, #tpu.memory_space<vmem>>, vector<16x32xbf16>
    %c112_446 = arith.constant 112 : index
    %c352_447 = arith.constant 352 : index
    %258 = vector.load %arg14[%c112_446, %c352_447] : memref<144x512xbf16, #tpu.memory_space<vmem>>, vector<16x32xbf16>
    tpu.vector_store %arg14[%c112_446, %c352_447], %257 {strides = array<i32>} : memref<144x512xbf16, #tpu.memory_space<vmem>>, vector<16x32xbf16>,
    %c928_448 = arith.constant 928 : index
    %c0_449 = arith.constant 0 : index
    %259 = vector.load %arg13[%c928_448, %c0_449] : memref<1024x32xbf16, #tpu.memory_space<vmem>>, vector<16x32xbf16>
    %c112_450 = arith.constant 112 : index
    %c384_451 = arith.constant 384 : index
    %260 = vector.load %arg14[%c112_450, %c384_451] : memref<144x512xbf16, #tpu.memory_space<vmem>>, vector<16x32xbf16>
    tpu.vector_store %arg14[%c112_450, %c384_451], %259 {strides = array<i32>} : memref<144x512xbf16, #tpu.memory_space<vmem>>, vector<16x32xbf16>,
    %c944_452 = arith.constant 944 : index
    %c0_453 = arith.constant 0 : index
    %261 = vector.load %arg13[%c944_452, %c0_453] : memref<1024x32xbf16, #tpu.memory_space<vmem>>, vector<16x32xbf16>
    %c112_454 = arith.constant 112 : index
    %c416_455 = arith.constant 416 : index
    %262 = vector.load %arg14[%c112_454, %c416_455] : memref<144x512xbf16, #tpu.memory_space<vmem>>, vector<16x32xbf16>
    tpu.vector_store %arg14[%c112_454, %c416_455], %261 {strides = array<i32>} : memref<144x512xbf16, #tpu.memory_space<vmem>>, vector<16x32xbf16>,
    %c960 = arith.constant 960 : index
    %c0_456 = arith.constant 0 : index
    %263 = vector.load %arg13[%c960, %c0_456] : memref<1024x32xbf16, #tpu.memory_space<vmem>>, vector<16x32xbf16>
    %c112_457 = arith.constant 112 : index
    %c448_458 = arith.constant 448 : index
    %264 = vector.load %arg14[%c112_457, %c448_458] : memref<144x512xbf16, #tpu.memory_space<vmem>>, vector<16x32xbf16>
    tpu.vector_store %arg14[%c112_457, %c448_458], %263 {strides = array<i32>} : memref<144x512xbf16, #tpu.memory_space<vmem>>, vector<16x32xbf16>,
    %c976 = arith.constant 976 : index
    %c0_459 = arith.constant 0 : index
    %265 = vector.load %arg13[%c976, %c0_459] : memref<1024x32xbf16, #tpu.memory_space<vmem>>, vector<16x32xbf16>
    %c112_460 = arith.constant 112 : index
    %c480_461 = arith.constant 480 : index
    %266 = vector.load %arg14[%c112_460, %c480_461] : memref<144x512xbf16, #tpu.memory_space<vmem>>, vector<16x32xbf16>
    tpu.vector_store %arg14[%c112_460, %c480_461], %265 {strides = array<i32>} : memref<144x512xbf16, #tpu.memory_space<vmem>>, vector<16x32xbf16>,
    %c576_462 = arith.constant 576 : index
    %c0_463 = arith.constant 0 : index
    %267 = vector.load %arg13[%c576_462, %c0_463] : memref<1024x32xbf16, #tpu.memory_space<vmem>>, vector<16x32xbf16>
    %c128_464 = arith.constant 128 : index
    %c0_465 = arith.constant 0 : index
    %268 = vector.load %arg14[%c128_464, %c0_465] : memref<144x512xbf16, #tpu.memory_space<vmem>>, vector<16x32xbf16>
    tpu.vector_store %arg14[%c128_464, %c0_465], %267 {strides = array<i32>} : memref<144x512xbf16, #tpu.memory_space<vmem>>, vector<16x32xbf16>,
    %c592_466 = arith.constant 592 : index
    %c0_467 = arith.constant 0 : index
    %269 = vector.load %arg13[%c592_466, %c0_467] : memref<1024x32xbf16, #tpu.memory_space<vmem>>, vector<16x32xbf16>
    %c128_468 = arith.constant 128 : index
    %c32_469 = arith.constant 32 : index
    %270 = vector.load %arg14[%c128_468, %c32_469] : memref<144x512xbf16, #tpu.memory_space<vmem>>, vector<16x32xbf16>
    tpu.vector_store %arg14[%c128_468, %c32_469], %269 {strides = array<i32>} : memref<144x512xbf16, #tpu.memory_space<vmem>>, vector<16x32xbf16>,
    %c608_470 = arith.constant 608 : index
    %c0_471 = arith.constant 0 : index
    %271 = vector.load %arg13[%c608_470, %c0_471] : memref<1024x32xbf16, #tpu.memory_space<vmem>>, vector<16x32xbf16>
    %c128_472 = arith.constant 128 : index
    %c64_473 = arith.constant 64 : index
    %272 = vector.load %arg14[%c128_472, %c64_473] : memref<144x512xbf16, #tpu.memory_space<vmem>>, vector<16x32xbf16>
    tpu.vector_store %arg14[%c128_472, %c64_473], %271 {strides = array<i32>} : memref<144x512xbf16, #tpu.memory_space<vmem>>, vector<16x32xbf16>,
    %c624_474 = arith.constant 624 : index
    %c0_475 = arith.constant 0 : index
    %273 = vector.load %arg13[%c624_474, %c0_475] : memref<1024x32xbf16, #tpu.memory_space<vmem>>, vector<16x32xbf16>
    %c128_476 = arith.constant 128 : index
    %c96_477 = arith.constant 96 : index
    %274 = vector.load %arg14[%c128_476, %c96_477] : memref<144x512xbf16, #tpu.memory_space<vmem>>, vector<16x32xbf16>
    tpu.vector_store %arg14[%c128_476, %c96_477], %273 {strides = array<i32>} : memref<144x512xbf16, #tpu.memory_space<vmem>>, vector<16x32xbf16>,
    %c704_478 = arith.constant 704 : index
    %c0_479 = arith.constant 0 : index
    %275 = vector.load %arg13[%c704_478, %c0_479] : memref<1024x32xbf16, #tpu.memory_space<vmem>>, vector<16x32xbf16>
    %c128_480 = arith.constant 128 : index
    %c128_481 = arith.constant 128 : index
    %276 = vector.load %arg14[%c128_480, %c128_481] : memref<144x512xbf16, #tpu.memory_space<vmem>>, vector<16x32xbf16>
    tpu.vector_store %arg14[%c128_480, %c128_481], %275 {strides = array<i32>} : memref<144x512xbf16, #tpu.memory_space<vmem>>, vector<16x32xbf16>,
    %c720_482 = arith.constant 720 : index
    %c0_483 = arith.constant 0 : index
    %277 = vector.load %arg13[%c720_482, %c0_483] : memref<1024x32xbf16, #tpu.memory_space<vmem>>, vector<16x32xbf16>
    %c128_484 = arith.constant 128 : index
    %c160_485 = arith.constant 160 : index
    %278 = vector.load %arg14[%c128_484, %c160_485] : memref<144x512xbf16, #tpu.memory_space<vmem>>, vector<16x32xbf16>
    tpu.vector_store %arg14[%c128_484, %c160_485], %277 {strides = array<i32>} : memref<144x512xbf16, #tpu.memory_space<vmem>>, vector<16x32xbf16>,
    %c736_486 = arith.constant 736 : index
    %c0_487 = arith.constant 0 : index
    %279 = vector.load %arg13[%c736_486, %c0_487] : memref<1024x32xbf16, #tpu.memory_space<vmem>>, vector<16x32xbf16>
    %c128_488 = arith.constant 128 : index
    %c192_489 = arith.constant 192 : index
    %280 = vector.load %arg14[%c128_488, %c192_489] : memref<144x512xbf16, #tpu.memory_space<vmem>>, vector<16x32xbf16>
    tpu.vector_store %arg14[%c128_488, %c192_489], %279 {strides = array<i32>} : memref<144x512xbf16, #tpu.memory_space<vmem>>, vector<16x32xbf16>,
    %c752_490 = arith.constant 752 : index
    %c0_491 = arith.constant 0 : index
    %281 = vector.load %arg13[%c752_490, %c0_491] : memref<1024x32xbf16, #tpu.memory_space<vmem>>, vector<16x32xbf16>
    %c128_492 = arith.constant 128 : index
    %c224_493 = arith.constant 224 : index
    %282 = vector.load %arg14[%c128_492, %c224_493] : memref<144x512xbf16, #tpu.memory_space<vmem>>, vector<16x32xbf16>
    tpu.vector_store %arg14[%c128_492, %c224_493], %281 {strides = array<i32>} : memref<144x512xbf16, #tpu.memory_space<vmem>>, vector<16x32xbf16>,
    %c832_494 = arith.constant 832 : index
    %c0_495 = arith.constant 0 : index
    %283 = vector.load %arg13[%c832_494, %c0_495] : memref<1024x32xbf16, #tpu.memory_space<vmem>>, vector<16x32xbf16>
    %c128_496 = arith.constant 128 : index
    %c256_497 = arith.constant 256 : index
    %284 = vector.load %arg14[%c128_496, %c256_497] : memref<144x512xbf16, #tpu.memory_space<vmem>>, vector<16x32xbf16>
    tpu.vector_store %arg14[%c128_496, %c256_497], %283 {strides = array<i32>} : memref<144x512xbf16, #tpu.memory_space<vmem>>, vector<16x32xbf16>,
    %c848_498 = arith.constant 848 : index
    %c0_499 = arith.constant 0 : index
    %285 = vector.load %arg13[%c848_498, %c0_499] : memref<1024x32xbf16, #tpu.memory_space<vmem>>, vector<16x32xbf16>
    %c128_500 = arith.constant 128 : index
    %c288_501 = arith.constant 288 : index
    %286 = vector.load %arg14[%c128_500, %c288_501] : memref<144x512xbf16, #tpu.memory_space<vmem>>, vector<16x32xbf16>
    tpu.vector_store %arg14[%c128_500, %c288_501], %285 {strides = array<i32>} : memref<144x512xbf16, #tpu.memory_space<vmem>>, vector<16x32xbf16>,
    %c864 = arith.constant 864 : index
    %c0_502 = arith.constant 0 : index
    %287 = vector.load %arg13[%c864, %c0_502] : memref<1024x32xbf16, #tpu.memory_space<vmem>>, vector<16x32xbf16>
    %c128_503 = arith.constant 128 : index
    %c320_504 = arith.constant 320 : index
    %288 = vector.load %arg14[%c128_503, %c320_504] : memref<144x512xbf16, #tpu.memory_space<vmem>>, vector<16x32xbf16>
    tpu.vector_store %arg14[%c128_503, %c320_504], %287 {strides = array<i32>} : memref<144x512xbf16, #tpu.memory_space<vmem>>, vector<16x32xbf16>,
    %c880 = arith.constant 880 : index
    %c0_505 = arith.constant 0 : index
    %289 = vector.load %arg13[%c880, %c0_505] : memref<1024x32xbf16, #tpu.memory_space<vmem>>, vector<16x32xbf16>
    %c128_506 = arith.constant 128 : index
    %c352_507 = arith.constant 352 : index
    %290 = vector.load %arg14[%c128_506, %c352_507] : memref<144x512xbf16, #tpu.memory_space<vmem>>, vector<16x32xbf16>
    tpu.vector_store %arg14[%c128_506, %c352_507], %289 {strides = array<i32>} : memref<144x512xbf16, #tpu.memory_space<vmem>>, vector<16x32xbf16>,
    %c960_508 = arith.constant 960 : index
    %c0_509 = arith.constant 0 : index
    %291 = vector.load %arg13[%c960_508, %c0_509] : memref<1024x32xbf16, #tpu.memory_space<vmem>>, vector<16x32xbf16>
    %c128_510 = arith.constant 128 : index
    %c384_511 = arith.constant 384 : index
    %292 = vector.load %arg14[%c128_510, %c384_511] : memref<144x512xbf16, #tpu.memory_space<vmem>>, vector<16x32xbf16>
    tpu.vector_store %arg14[%c128_510, %c384_511], %291 {strides = array<i32>} : memref<144x512xbf16, #tpu.memory_space<vmem>>, vector<16x32xbf16>,
    %c976_512 = arith.constant 976 : index
    %c0_513 = arith.constant 0 : index
    %293 = vector.load %arg13[%c976_512, %c0_513] : memref<1024x32xbf16, #tpu.memory_space<vmem>>, vector<16x32xbf16>
    %c128_514 = arith.constant 128 : index
    %c416_515 = arith.constant 416 : index
    %294 = vector.load %arg14[%c128_514, %c416_515] : memref<144x512xbf16, #tpu.memory_space<vmem>>, vector<16x32xbf16>
    tpu.vector_store %arg14[%c128_514, %c416_515], %293 {strides = array<i32>} : memref<144x512xbf16, #tpu.memory_space<vmem>>, vector<16x32xbf16>,
    %c992 = arith.constant 992 : index
    %c0_516 = arith.constant 0 : index
    %295 = vector.load %arg13[%c992, %c0_516] : memref<1024x32xbf16, #tpu.memory_space<vmem>>, vector<16x32xbf16>
    %c128_517 = arith.constant 128 : index
    %c448_518 = arith.constant 448 : index
    %296 = vector.load %arg14[%c128_517, %c448_518] : memref<144x512xbf16, #tpu.memory_space<vmem>>, vector<16x32xbf16>
    tpu.vector_store %arg14[%c128_517, %c448_518], %295 {strides = array<i32>} : memref<144x512xbf16, #tpu.memory_space<vmem>>, vector<16x32xbf16>,
    %c1008 = arith.constant 1008 : index
    %c0_519 = arith.constant 0 : index
    %297 = vector.load %arg13[%c1008, %c0_519] : memref<1024x32xbf16, #tpu.memory_space<vmem>>, vector<16x32xbf16>
    %c128_520 = arith.constant 128 : index
    %c480_521 = arith.constant 480 : index
    %298 = vector.load %arg14[%c128_520, %c480_521] : memref<144x512xbf16, #tpu.memory_space<vmem>>, vector<16x32xbf16>
    tpu.vector_store %arg14[%c128_520, %c480_521], %297 {strides = array<i32>} : memref<144x512xbf16, #tpu.memory_space<vmem>>, vector<16x32xbf16>,
    %c0_522 = arith.constant 0 : index
    %c0_523 = arith.constant 0 : index
    %299 = vector.load %arg14[%c0_522, %c0_523] : memref<144x512xbf16, #tpu.memory_space<vmem>>, vector<144x512xbf16>
    %c0_524 = arith.constant 0 : index
    %c0_525 = arith.constant 0 : index
    %300 = vector.load %arg4[%c0_524, %c0_525] : memref<512x64xbf16, #tpu.memory_space<vmem>>, vector<512x64xbf16>
    %cst_526 = arith.constant dense<0.000000e+00> : vector<144x64xf32>
    %301 = tpu.matmul %299, %300, %cst_526 {dimension_numbers = #tpu.dot_dimension_numbers<[1], [0], [0], [1], [0, 0, 1, 1], [], []>} : vector<144x512xbf16>, vector<512x64xbf16>, vector<144x64xf32> -> vector<144x64xf32>
    %c0_527 = arith.constant 0 : index
    %c0_528 = arith.constant 0 : index
    %302 = vector.load %arg5[%c0_527, %c0_528] : memref<1x64xf32, #tpu.memory_space<vmem>>, vector<1x64xf32>
    %303 = vector.broadcast %302 : vector<1x64xf32> to vector<144x64xf32>
    %304 = arith.addf %301, %303 : vector<144x64xf32>
    %cst_529 = arith.constant 0.000000e+00 : f32
    %305 = vector.broadcast %cst_529 : f32 to vector<144x64xf32>
    %306 = arith.maximumf %304, %305 : vector<144x64xf32>
    %307 = arith.truncf %306 : vector<144x64xf32> to vector<144x64xbf16>
    %c0_530 = arith.constant 0 : index
    %c0_531 = arith.constant 0 : index
    %308 = vector.load %arg15[%c0_530, %c0_531] : memref<144x64xbf16, #tpu.memory_space<vmem>>, vector<144x64xbf16>
    tpu.vector_store %arg15[%c0_530, %c0_531], %307 {strides = array<i32>} : memref<144x64xbf16, #tpu.memory_space<vmem>>, vector<144x64xbf16>,
    %c0_532 = arith.constant 0 : index
    %c0_533 = arith.constant 0 : index
    %309 = vector.load %arg15[%c0_532, %c0_533] : memref<144x64xbf16, #tpu.memory_space<vmem>>, vector<16x64xbf16>
    %c0_534 = arith.constant 0 : index
    %c0_535 = arith.constant 0 : index
    %310 = vector.load %arg16[%c0_534, %c0_535] : memref<16x576xbf16, #tpu.memory_space<vmem>>, vector<16x64xbf16>
    tpu.vector_store %arg16[%c0_534, %c0_535], %309 {strides = array<i32>} : memref<16x576xbf16, #tpu.memory_space<vmem>>, vector<16x64xbf16>,
    %c16_536 = arith.constant 16 : index
    %c0_537 = arith.constant 0 : index
    %311 = vector.load %arg15[%c16_536, %c0_537] : memref<144x64xbf16, #tpu.memory_space<vmem>>, vector<16x64xbf16>
    %c0_538 = arith.constant 0 : index
    %c64_539 = arith.constant 64 : index
    %312 = vector.load %arg16[%c0_538, %c64_539] : memref<16x576xbf16, #tpu.memory_space<vmem>>, vector<16x64xbf16>
    tpu.vector_store %arg16[%c0_538, %c64_539], %311 {strides = array<i32>} : memref<16x576xbf16, #tpu.memory_space<vmem>>, vector<16x64xbf16>,
    %c32_540 = arith.constant 32 : index
    %c0_541 = arith.constant 0 : index
    %313 = vector.load %arg15[%c32_540, %c0_541] : memref<144x64xbf16, #tpu.memory_space<vmem>>, vector<16x64xbf16>
    %c0_542 = arith.constant 0 : index
    %c128_543 = arith.constant 128 : index
    %314 = vector.load %arg16[%c0_542, %c128_543] : memref<16x576xbf16, #tpu.memory_space<vmem>>, vector<16x64xbf16>
    tpu.vector_store %arg16[%c0_542, %c128_543], %313 {strides = array<i32>} : memref<16x576xbf16, #tpu.memory_space<vmem>>, vector<16x64xbf16>,
    %c48_544 = arith.constant 48 : index
    %c0_545 = arith.constant 0 : index
    %315 = vector.load %arg15[%c48_544, %c0_545] : memref<144x64xbf16, #tpu.memory_space<vmem>>, vector<16x64xbf16>
    %c0_546 = arith.constant 0 : index
    %c192_547 = arith.constant 192 : index
    %316 = vector.load %arg16[%c0_546, %c192_547] : memref<16x576xbf16, #tpu.memory_space<vmem>>, vector<16x64xbf16>
    tpu.vector_store %arg16[%c0_546, %c192_547], %315 {strides = array<i32>} : memref<16x576xbf16, #tpu.memory_space<vmem>>, vector<16x64xbf16>,
    %c64_548 = arith.constant 64 : index
    %c0_549 = arith.constant 0 : index
    %317 = vector.load %arg15[%c64_548, %c0_549] : memref<144x64xbf16, #tpu.memory_space<vmem>>, vector<16x64xbf16>
    %c0_550 = arith.constant 0 : index
    %c256_551 = arith.constant 256 : index
    %318 = vector.load %arg16[%c0_550, %c256_551] : memref<16x576xbf16, #tpu.memory_space<vmem>>, vector<16x64xbf16>
    tpu.vector_store %arg16[%c0_550, %c256_551], %317 {strides = array<i32>} : memref<16x576xbf16, #tpu.memory_space<vmem>>, vector<16x64xbf16>,
    %c80_552 = arith.constant 80 : index
    %c0_553 = arith.constant 0 : index
    %319 = vector.load %arg15[%c80_552, %c0_553] : memref<144x64xbf16, #tpu.memory_space<vmem>>, vector<16x64xbf16>
    %c0_554 = arith.constant 0 : index
    %c320_555 = arith.constant 320 : index
    %320 = vector.load %arg16[%c0_554, %c320_555] : memref<16x576xbf16, #tpu.memory_space<vmem>>, vector<16x64xbf16>
    tpu.vector_store %arg16[%c0_554, %c320_555], %319 {strides = array<i32>} : memref<16x576xbf16, #tpu.memory_space<vmem>>, vector<16x64xbf16>,
    %c96_556 = arith.constant 96 : index
    %c0_557 = arith.constant 0 : index
    %321 = vector.load %arg15[%c96_556, %c0_557] : memref<144x64xbf16, #tpu.memory_space<vmem>>, vector<16x64xbf16>
    %c0_558 = arith.constant 0 : index
    %c384_559 = arith.constant 384 : index
    %322 = vector.load %arg16[%c0_558, %c384_559] : memref<16x576xbf16, #tpu.memory_space<vmem>>, vector<16x64xbf16>
    tpu.vector_store %arg16[%c0_558, %c384_559], %321 {strides = array<i32>} : memref<16x576xbf16, #tpu.memory_space<vmem>>, vector<16x64xbf16>,
    %c112_560 = arith.constant 112 : index
    %c0_561 = arith.constant 0 : index
    %323 = vector.load %arg15[%c112_560, %c0_561] : memref<144x64xbf16, #tpu.memory_space<vmem>>, vector<16x64xbf16>
    %c0_562 = arith.constant 0 : index
    %c448_563 = arith.constant 448 : index
    %324 = vector.load %arg16[%c0_562, %c448_563] : memref<16x576xbf16, #tpu.memory_space<vmem>>, vector<16x64xbf16>
    tpu.vector_store %arg16[%c0_562, %c448_563], %323 {strides = array<i32>} : memref<16x576xbf16, #tpu.memory_space<vmem>>, vector<16x64xbf16>,
    %c128_564 = arith.constant 128 : index
    %c0_565 = arith.constant 0 : index
    %325 = vector.load %arg15[%c128_564, %c0_565] : memref<144x64xbf16, #tpu.memory_space<vmem>>, vector<16x64xbf16>
    %c0_566 = arith.constant 0 : index
    %c512_567 = arith.constant 512 : index
    %326 = vector.load %arg16[%c0_566, %c512_567] : memref<16x576xbf16, #tpu.memory_space<vmem>>, vector<16x64xbf16>
    tpu.vector_store %arg16[%c0_566, %c512_567], %325 {strides = array<i32>} : memref<16x576xbf16, #tpu.memory_space<vmem>>, vector<16x64xbf16>,
    %c0_568 = arith.constant 0 : index
    %c0_569 = arith.constant 0 : index
    %327 = vector.load %arg16[%c0_568, %c0_569] : memref<16x576xbf16, #tpu.memory_space<vmem>>, vector<16x576xbf16>
    %c0_570 = arith.constant 0 : index
    %c0_571 = arith.constant 0 : index
    %328 = vector.load %arg6[%c0_570, %c0_571] : memref<576x64xbf16, #tpu.memory_space<vmem>>, vector<576x64xbf16>
    %cst_572 = arith.constant dense<0.000000e+00> : vector<16x64xf32>
    %329 = tpu.matmul %327, %328, %cst_572 {dimension_numbers = #tpu.dot_dimension_numbers<[1], [0], [0], [1], [0, 0, 1, 1], [], []>} : vector<16x576xbf16>, vector<576x64xbf16>, vector<16x64xf32> -> vector<16x64xf32>
    %c0_573 = arith.constant 0 : index
    %c0_574 = arith.constant 0 : index
    %330 = vector.load %arg7[%c0_573, %c0_574] : memref<1x64xf32, #tpu.memory_space<vmem>>, vector<1x64xf32>
    %331 = vector.broadcast %330 : vector<1x64xf32> to vector<16x64xf32>
    %332 = arith.addf %329, %331 : vector<16x64xf32>
    %cst_575 = arith.constant 0.000000e+00 : f32
    %333 = vector.broadcast %cst_575 : f32 to vector<16x64xf32>
    %334 = arith.maximumf %332, %333 : vector<16x64xf32>
    %335 = arith.truncf %334 : vector<16x64xf32> to vector<16x64xbf16>
    %c0_576 = arith.constant 0 : index
    %c0_577 = arith.constant 0 : index
    %336 = vector.load %arg17[%c0_576, %c0_577] : memref<16x64xbf16, #tpu.memory_space<vmem>>, vector<16x64xbf16>
    tpu.vector_store %arg17[%c0_576, %c0_577], %335 {strides = array<i32>} : memref<16x64xbf16, #tpu.memory_space<vmem>>, vector<16x64xbf16>,
    %c0_578 = arith.constant 0 : index
    %c0_579 = arith.constant 0 : index
    %337 = vector.load %arg17[%c0_578, %c0_579] : memref<16x64xbf16, #tpu.memory_space<vmem>>, vector<16x64xbf16>
    %c0_580 = arith.constant 0 : index
    %c0_581 = arith.constant 0 : index
    %338 = vector.load %arg8[%c0_580, %c0_581] : memref<64x1024xbf16, #tpu.memory_space<vmem>>, vector<64x1024xbf16>
    %cst_582 = arith.constant dense<0.000000e+00> : vector<16x1024xf32>
    %339 = tpu.matmul %337, %338, %cst_582 {dimension_numbers = #tpu.dot_dimension_numbers<[1], [0], [0], [1], [0, 0, 1, 1], [], []>} : vector<16x64xbf16>, vector<64x1024xbf16>, vector<16x1024xf32> -> vector<16x1024xf32>
    %c0_583 = arith.constant 0 : index
    %c0_584 = arith.constant 0 : index
    %340 = vector.load %arg9[%c0_583, %c0_584] : memref<1x1024xf32, #tpu.memory_space<vmem>>, vector<1x1024xf32>
    %341 = vector.broadcast %340 : vector<1x1024xf32> to vector<16x1024xf32>
    %342 = arith.addf %339, %341 : vector<16x1024xf32>
    %cst_585 = arith.constant 0.000000e+00 : f32
    %343 = vector.broadcast %cst_585 : f32 to vector<16x1024xf32>
    %344 = arith.maximumf %342, %343 : vector<16x1024xf32>
    %345 = arith.truncf %344 : vector<16x1024xf32> to vector<16x1024xbf16>
    %c0_586 = arith.constant 0 : index
    %c0_587 = arith.constant 0 : index
    %346 = vector.load %arg10[%c0_586, %c0_587] : memref<1024x128xbf16, #tpu.memory_space<vmem>>, vector<1024x128xbf16>
    %cst_588 = arith.constant dense<0.000000e+00> : vector<16x128xf32>
    %347 = tpu.matmul %345, %346, %cst_588 {dimension_numbers = #tpu.dot_dimension_numbers<[1], [0], [0], [1], [0, 0, 1, 1], [], []>} : vector<16x1024xbf16>, vector<1024x128xbf16>, vector<16x128xf32> -> vector<16x128xf32>
    %c0_589 = arith.constant 0 : index
    %c0_590 = arith.constant 0 : index
    %348 = vector.load %arg11[%c0_589, %c0_590] : memref<1x128xf32, #tpu.memory_space<vmem>>, vector<1x128xf32>
    %349 = vector.broadcast %348 : vector<1x128xf32> to vector<16x128xf32>
    %350 = arith.addf %347, %349 : vector<16x128xf32>
    %c0_591 = arith.constant 0 : index
    %c0_592 = arith.constant 0 : index
    %c0_593 = arith.constant 0 : index
    %351 = vector.load %arg12[%c0_591, %c0_592, %c0_593] : memref<1x16x128xf32, #tpu.memory_space<vmem>>, vector<1x16x128xf32>
    %352 = vector.shape_cast %351 : vector<1x16x128xf32> to vector<16x128xf32>
    %353 = vector.shape_cast %350 : vector<16x128xf32> to vector<1x16x128xf32>
    tpu.vector_store %arg12[%c0_591, %c0_592, %c0_593], %353 {strides = array<i32>} : memref<1x16x128xf32, #tpu.memory_space<vmem>>, vector<1x16x128xf32>,
    return
  }
  func.func @transform_0(%arg0: i32) -> (i32, i32, i32) {
    %c0_i32 = arith.constant 0 : i32
    %c0_i32_0 = arith.constant 0 : i32
    %c0_i32_1 = arith.constant 0 : i32
    return %arg0, %c0_i32, %c0_i32_0 : i32, i32, i32
  }
  func.func @transform_1(%arg0: i32) -> (i32, i32) {
    %c0_i32 = arith.constant 0 : i32
    %c0_i32_0 = arith.constant 0 : i32
    %c0_i32_1 = arith.constant 0 : i32
    return %c0_i32, %c0_i32_0 : i32, i32
  }
  func.func @transform_2(%arg0: i32) -> (i32, i32) {
    %c0_i32 = arith.constant 0 : i32
    %c0_i32_0 = arith.constant 0 : i32
    %c0_i32_1 = arith.constant 0 : i32
    return %c0_i32, %c0_i32_0 : i32, i32
  }
  func.func @transform_3(%arg0: i32) -> (i32, i32) {
    %c0_i32 = arith.constant 0 : i32
    %c0_i32_0 = arith.constant 0 : i32
    %c0_i32_1 = arith.constant 0 : i32
    return %c0_i32, %c0_i32_0 : i32, i32
  }
  func.func @transform_4(%arg0: i32) -> (i32, i32) {
    %c0_i32 = arith.constant 0 : i32
    %c0_i32_0 = arith.constant 0 : i32
    %c0_i32_1 = arith.constant 0 : i32
    return %c0_i32, %c0_i32_0 : i32, i32
  }
  func.func @transform_5(%arg0: i32) -> (i32, i32) {
    %c0_i32 = arith.constant 0 : i32
    %c0_i32_0 = arith.constant 0 : i32
    %c0_i32_1 = arith.constant 0 : i32
    return %c0_i32, %c0_i32_0 : i32, i32
  }
  func.func @transform_6(%arg0: i32) -> (i32, i32) {
    %c0_i32 = arith.constant 0 : i32
    %c0_i32_0 = arith.constant 0 : i32
    %c0_i32_1 = arith.constant 0 : i32
    return %c0_i32, %c0_i32_0 : i32, i32
  }
  func.func @transform_7(%arg0: i32) -> (i32, i32) {
    %c0_i32 = arith.constant 0 : i32
    %c0_i32_0 = arith.constant 0 : i32
    %c0_i32_1 = arith.constant 0 : i32
    return %c0_i32, %c0_i32_0 : i32, i32
  }
  func.func @transform_8(%arg0: i32) -> (i32, i32) {
    %c0_i32 = arith.constant 0 : i32
    %c0_i32_0 = arith.constant 0 : i32
    %c0_i32_1 = arith.constant 0 : i32
    return %c0_i32, %c0_i32_0 : i32, i32
  }
  func.func @transform_9(%arg0: i32) -> (i32, i32) {
    %c0_i32 = arith.constant 0 : i32
    %c0_i32_0 = arith.constant 0 : i32
    %c0_i32_1 = arith.constant 0 : i32
    return %c0_i32, %c0_i32_0 : i32, i32
  }
  func.func @transform_10(%arg0: i32) -> (i32, i32) {
    %c0_i32 = arith.constant 0 : i32
    %c0_i32_0 = arith.constant 0 : i32
    %c0_i32_1 = arith.constant 0 : i32
    return %c0_i32, %c0_i32_0 : i32, i32
  }
  func.func @transform_11(%arg0: i32) -> (i32, i32, i32) {
    %c0_i32 = arith.constant 0 : i32
    %c0_i32_0 = arith.constant 0 : i32
    %c0_i32_1 = arith.constant 0 : i32
    return %arg0, %c0_i32, %c0_i32_0 : i32, i32, i32
  }
}

</mosaic_0001>

<llo_original>
// kernel: dueling_dqn_forward.1
$region0: #{dueling_dqn_forward.1}
  #allocation0 [shape = 'u32[]', space=smem, size = 0x4, offset = 0x4, fixed_abs, tag = 'smem constant byte address 0x4 - core index']
  #allocation1 [shape = 'u32[72,128]{1,0:T(1,128)}', space=vmem, size = 0x9000, scoped, tag = 'internal scratch']
  #allocation2 [shape = 'bf16[1024,32]{1,0:T(8,128)(2,1)}', space=vmem, size = 0x40000, scoped, tag = 'scratch operand']
  #allocation3 [shape = 'bf16[144,512]{1,0:T(8,128)(2,1)}', space=vmem, size = 0x24000, scoped, tag = 'scratch operand']
  #allocation4 [shape = 'bf16[144,64]{1,0:T(8,128)(2,1)}', space=vmem, size = 0x9000, scoped, tag = 'scratch operand']
  #allocation5 [shape = 'bf16[16,576]{1,0:T(8,128)(2,1)}', space=vmem, size = 0x5000, scoped, tag = 'scratch operand']
  #allocation6 [shape = 'bf16[16,64]{1,0:T(8,128)(2,1)}', space=vmem, size = 0x1000, scoped, tag = 'scratch operand']
  %s0 = inlined_call_operand.vmem [shape: bf16[1,1024,64], index: 0, kind: input, shape index: {}]
  %s1 = inlined_call_operand.vmem [shape: bf16[64,32], index: 1, kind: input, shape index: {}]
  %s2 = inlined_call_operand.vmem [shape: f32[1,32], index: 2, kind: input, shape index: {}]
  %s3 = inlined_call_operand.vmem [shape: bf16[512,64], index: 3, kind: input, shape index: {}]
  %s4 = inlined_call_operand.vmem [shape: f32[1,64], index: 4, kind: input, shape index: {}]
  %s5 = inlined_call_operand.vmem [shape: bf16[576,64], index: 5, kind: input, shape index: {}]
  %s6 = inlined_call_operand.vmem [shape: f32[1,64], index: 6, kind: input, shape index: {}]
  %s7 = inlined_call_operand.vmem [shape: bf16[64,1024], index: 7, kind: input, shape index: {}]
  %s8 = inlined_call_operand.vmem [shape: f32[1,1024], index: 8, kind: input, shape index: {}]
  %s9 = inlined_call_operand.vmem [shape: bf16[1024,128], index: 9, kind: input, shape index: {}]
  %s10 = inlined_call_operand.vmem [shape: f32[1,128], index: 10, kind: input, shape index: {}]
  %s11 = inlined_call_operand.vmem [shape: f32[1,16,128], index: 11, kind: output, shape index: {}]
  %s12 = sld [smem:[#allocation0]]
  $region54: #{dueling_dqn_forward.1} parent=0
    _
  %s14 = ssub.s32 1, %s12
  %s15 = scalar_select 0, %s14, %s12
  // Predicated region
  $region2: #{dueling_dqn_forward.1} parent=0 // pred_check
    _
  $region3: #{dueling_dqn_forward.1} parent=0 // pred_check_branch
    %17 = sbr.rel (0) target = $region5
  $region4: #{dueling_dqn_forward.1} parent=0 // pred_region
    _
  $region5: #{dueling_dqn_forward.1} parent=0 // pred_fallthru
    _
  // Predicated region
  $region6: #{dueling_dqn_forward.1} parent=0 // pred_check
    _
  $region7: #{dueling_dqn_forward.1} parent=0 // pred_check_branch
    %19 = sbr.rel (0) target = $region9
  $region8: #{dueling_dqn_forward.1} parent=0 // pred_region
    _
  $region9: #{dueling_dqn_forward.1} parent=0 // pred_fallthru
    _
  // Predicated region
  $region10: #{dueling_dqn_forward.1} parent=0 // pred_check
    _
  $region11: #{dueling_dqn_forward.1} parent=0 // pred_check_branch
    %21 = sbr.rel (0) target = $region13
  $region12: #{dueling_dqn_forward.1} parent=0 // pred_region
    _
  $region13: #{dueling_dqn_forward.1} parent=0 // pred_fallthru
    _
  // Predicated region
  $region14: #{dueling_dqn_forward.1} parent=0 // pred_check
    _
  $region15: #{dueling_dqn_forward.1} parent=0 // pred_check_branch
    %23 = sbr.rel (0) target = $region17
  $region16: #{dueling_dqn_forward.1} parent=0 // pred_region
    _
  $region17: #{dueling_dqn_forward.1} parent=0 // pred_fallthru
    _
  // Predicated region
  $region18: #{dueling_dqn_forward.1} parent=0 // pred_check
    _
  $region19: #{dueling_dqn_forward.1} parent=0 // pred_check_branch
    %25 = sbr.rel (0) target = $region21
  $region20: #{dueling_dqn_forward.1} parent=0 // pred_region
    _
  $region21: #{dueling_dqn_forward.1} parent=0 // pred_fallthru
    _
  // Predicated region
  $region22: #{dueling_dqn_forward.1} parent=0 // pred_check
    _
  $region23: #{dueling_dqn_forward.1} parent=0 // pred_check_branch
    %27 = sbr.rel (0) target = $region25
  $region24: #{dueling_dqn_forward.1} parent=0 // pred_region
    _
  $region25: #{dueling_dqn_forward.1} parent=0 // pred_fallthru
    _
  // Predicated region
  $region26: #{dueling_dqn_forward.1} parent=0 // pred_check
    _
  $region27: #{dueling_dqn_forward.1} parent=0 // pred_check_branch
    %29 = sbr.rel (0) target = $region29
  $region28: #{dueling_dqn_forward.1} parent=0 // pred_region
    _
  $region29: #{dueling_dqn_forward.1} parent=0 // pred_fallthru
    _
  // Predicated region
  $region30: #{dueling_dqn_forward.1} parent=0 // pred_check
    _
  $region31: #{dueling_dqn_forward.1} parent=0 // pred_check_branch
    %31 = sbr.rel (0) target = $region33
  $region32: #{dueling_dqn_forward.1} parent=0 // pred_region
    _
  $region33: #{dueling_dqn_forward.1} parent=0 // pred_fallthru
    _
  // Predicated region
  $region34: #{dueling_dqn_forward.1} parent=0 // pred_check
    _
  $region35: #{dueling_dqn_forward.1} parent=0 // pred_check_branch
    %33 = sbr.rel (0) target = $region37
  $region36: #{dueling_dqn_forward.1} parent=0 // pred_region
    _
  $region37: #{dueling_dqn_forward.1} parent=0 // pred_fallthru
    _
  // Predicated region
  $region38: #{dueling_dqn_forward.1} parent=0 // pred_check
    _
  $region39: #{dueling_dqn_forward.1} parent=0 // pred_check_branch
    %35 = sbr.rel (0) target = $region41
  $region40: #{dueling_dqn_forward.1} parent=0 // pred_region
    _
  $region41: #{dueling_dqn_forward.1} parent=0 // pred_fallthru
    _
  // Predicated region
  $region42: #{dueling_dqn_forward.1} parent=0 // pred_check
    _
  $region43: #{dueling_dqn_forward.1} parent=0 // pred_check_branch
    %37 = sbr.rel (0) target = $region45
  $region44: #{dueling_dqn_forward.1} parent=0 // pred_region
    _
  $region45: #{dueling_dqn_forward.1} parent=0 // pred_fallthru
    _
  %v39 = vld [vmem:[%s0] sm:$0xf]
  %v40 = vld [vmem:[%s0 + $0x4] sm:$0xf]
  %v41 = vld [vmem:[%s0 + $0x8] sm:$0xf]
  %v42 = vld [vmem:[%s0 + $0xc] sm:$0xf]
  %v43 = vld [vmem:[%s0 + $0x10] sm:$0xf]
  %v44 = vld [vmem:[%s0 + $0x14] sm:$0xf]
  %v45 = vld [vmem:[%s0 + $0x18] sm:$0xf]
  %v46 = vld [vmem:[%s0 + $0x1c] sm:$0xf]
  %v47 = vld [vmem:[%s0 + $0x20] sm:$0xf]
  %v48 = vld [vmem:[%s0 + $0x24] sm:$0xf]
  %v49 = vld [vmem:[%s0 + $0x28] sm:$0xf]
  %v50 = vld [vmem:[%s0 + $0x2c] sm:$0xf]
  %v51 = vld [vmem:[%s0 + $0x30] sm:$0xf]
  %v52 = vld [vmem:[%s0 + $0x34] sm:$0xf]
  %v53 = vld [vmem:[%s0 + $0x38] sm:$0xf]
  %v54 = vld [vmem:[%s0 + $0x3c] sm:$0xf]
  %v55 = vld [vmem:[%s0 + $0x40] sm:$0xf]
  %v56 = vld [vmem:[%s0 + $0x44] sm:$0xf]
  %v57 = vld [vmem:[%s0 + $0x48] sm:$0xf]
  %v58 = vld [vmem:[%s0 + $0x4c] sm:$0xf]
  %v59 = vld [vmem:[%s0 + $0x50] sm:$0xf]
  %v60 = vld [vmem:[%s0 + $0x54] sm:$0xf]
  %v61 = vld [vmem:[%s0 + $0x58] sm:$0xf]
  %v62 = vld [vmem:[%s0 + $0x5c] sm:$0xf]
  %v63 = vld [vmem:[%s0 + $0x60] sm:$0xf]
  %v64 = vld [vmem:[%s0 + $0x64] sm:$0xf]
  %v65 = vld [vmem:[%s0 + $0x68] sm:$0xf]
  %v66 = vld [vmem:[%s0 + $0x6c] sm:$0xf]
  %v67 = vld [vmem:[%s0 + $0x70] sm:$0xf]
  %v68 = vld [vmem:[%s0 + $0x74] sm:$0xf]
  %v69 = vld [vmem:[%s0 + $0x78] sm:$0xf]
  %v70 = vld [vmem:[%s0 + $0x7c] sm:$0xf]
  %v71 = vld [vmem:[%s0 + $0x80] sm:$0xf]
  %v72 = vld [vmem:[%s0 + $0x84] sm:$0xf]
  %v73 = vld [vmem:[%s0 + $0x88] sm:$0xf]
  %v74 = vld [vmem:[%s0 + $0x8c] sm:$0xf]
  %v75 = vld [vmem:[%s0 + $0x90] sm:$0xf]
  %v76 = vld [vmem:[%s0 + $0x94] sm:$0xf]
  %v77 = vld [vmem:[%s0 + $0x98] sm:$0xf]
  %v78 = vld [vmem:[%s0 + $0x9c] sm:$0xf]
  %v79 = vld [vmem:[%s0 + $0xa0] sm:$0xf]
  %v80 = vld [vmem:[%s0 + $0xa4] sm:$0xf]
  %v81 = vld [vmem:[%s0 + $0xa8] sm:$0xf]
  %v82 = vld [vmem:[%s0 + $0xac] sm:$0xf]
  %v83 = vld [vmem:[%s0 + $0xb0] sm:$0xf]
  %v84 = vld [vmem:[%s0 + $0xb4] sm:$0xf]
  %v85 = vld [vmem:[%s0 + $0xb8] sm:$0xf]
  %v86 = vld [vmem:[%s0 + $0xbc] sm:$0xf]
  %v87 = vld [vmem:[%s0 + $0xc0] sm:$0xf]
  %v88 = vld [vmem:[%s0 + $0xc4] sm:$0xf]
  %v89 = vld [vmem:[%s0 + $0xc8] sm:$0xf]
  %v90 = vld [vmem:[%s0 + $0xcc] sm:$0xf]
  %v91 = vld [vmem:[%s0 + $0xd0] sm:$0xf]
  %v92 = vld [vmem:[%s0 + $0xd4] sm:$0xf]
  %v93 = vld [vmem:[%s0 + $0xd8] sm:$0xf]
  %v94 = vld [vmem:[%s0 + $0xdc] sm:$0xf]
  %v95 = vld [vmem:[%s0 + $0xe0] sm:$0xf]
  %v96 = vld [vmem:[%s0 + $0xe4] sm:$0xf]
  %v97 = vld [vmem:[%s0 + $0xe8] sm:$0xf]
  %v98 = vld [vmem:[%s0 + $0xec] sm:$0xf]
  %v99 = vld [vmem:[%s0 + $0xf0] sm:$0xf]
  %v100 = vld [vmem:[%s0 + $0xf4] sm:$0xf]
  %v101 = vld [vmem:[%s0 + $0xf8] sm:$0xf]
  %v102 = vld [vmem:[%s0 + $0xfc] sm:$0xf]
  %v103 = vld [vmem:[%s0 + $0x100] sm:$0xf]
  %v104 = vld [vmem:[%s0 + $0x104] sm:$0xf]
  %v105 = vld [vmem:[%s0 + $0x108] sm:$0xf]
  %v106 = vld [vmem:[%s0 + $0x10c] sm:$0xf]
  %v107 = vld [vmem:[%s0 + $0x110] sm:$0xf]
  %v108 = vld [vmem:[%s0 + $0x114] sm:$0xf]
  %v109 = vld [vmem:[%s0 + $0x118] sm:$0xf]
  %v110 = vld [vmem:[%s0 + $0x11c] sm:$0xf]
  %v111 = vld [vmem:[%s0 + $0x120] sm:$0xf]
  %v112 = vld [vmem:[%s0 + $0x124] sm:$0xf]
  %v113 = vld [vmem:[%s0 + $0x128] sm:$0xf]
  %v114 = vld [vmem:[%s0 + $0x12c] sm:$0xf]
  %v115 = vld [vmem:[%s0 + $0x130] sm:$0xf]
  %v116 = vld [vmem:[%s0 + $0x134] sm:$0xf]
  %v117 = vld [vmem:[%s0 + $0x138] sm:$0xf]
  %v118 = vld [vmem:[%s0 + $0x13c] sm:$0xf]
  %v119 = vld [vmem:[%s0 + $0x140] sm:$0xf]
  %v120 = vld [vmem:[%s0 + $0x144] sm:$0xf]
  %v121 = vld [vmem:[%s0 + $0x148] sm:$0xf]
  %v122 = vld [vmem:[%s0 + $0x14c] sm:$0xf]
  %v123 = vld [vmem:[%s0 + $0x150] sm:$0xf]
  %v124 = vld [vmem:[%s0 + $0x154] sm:$0xf]
  %v125 = vld [vmem:[%s0 + $0x158] sm:$0xf]
  %v126 = vld [vmem:[%s0 + $0x15c] sm:$0xf]
  %v127 = vld [vmem:[%s0 + $0x160] sm:$0xf]
  %v128 = vld [vmem:[%s0 + $0x164] sm:$0xf]
  %v129 = vld [vmem:[%s0 + $0x168] sm:$0xf]
  %v130 = vld [vmem:[%s0 + $0x16c] sm:$0xf]
  %v131 = vld [vmem:[%s0 + $0x170] sm:$0xf]
  %v132 = vld [vmem:[%s0 + $0x174] sm:$0xf]
  %v133 = vld [vmem:[%s0 + $0x178] sm:$0xf]
  %v134 = vld [vmem:[%s0 + $0x17c] sm:$0xf]
  %v135 = vld [vmem:[%s0 + $0x180] sm:$0xf]
  %v136 = vld [vmem:[%s0 + $0x184] sm:$0xf]
  %v137 = vld [vmem:[%s0 + $0x188] sm:$0xf]
  %v138 = vld [vmem:[%s0 + $0x18c] sm:$0xf]
  %v139 = vld [vmem:[%s0 + $0x190] sm:$0xf]
  %v140 = vld [vmem:[%s0 + $0x194] sm:$0xf]
  %v141 = vld [vmem:[%s0 + $0x198] sm:$0xf]
  %v142 = vld [vmem:[%s0 + $0x19c] sm:$0xf]
  %v143 = vld [vmem:[%s0 + $0x1a0] sm:$0xf]
  %v144 = vld [vmem:[%s0 + $0x1a4] sm:$0xf]
  %v145 = vld [vmem:[%s0 + $0x1a8] sm:$0xf]
  %v146 = vld [vmem:[%s0 + $0x1ac] sm:$0xf]
  %v147 = vld [vmem:[%s0 + $0x1b0] sm:$0xf]
  %v148 = vld [vmem:[%s0 + $0x1b4] sm:$0xf]
  %v149 = vld [vmem:[%s0 + $0x1b8] sm:$0xf]
  %v150 = vld [vmem:[%s0 + $0x1bc] sm:$0xf]
  %v151 = vld [vmem:[%s0 + $0x1c0] sm:$0xf]
  %v152 = vld [vmem:[%s0 + $0x1c4] sm:$0xf]
  %v153 = vld [vmem:[%s0 + $0x1c8] sm:$0xf]
  %v154 = vld [vmem:[%s0 + $0x1cc] sm:$0xf]
  %v155 = vld [vmem:[%s0 + $0x1d0] sm:$0xf]
  %v156 = vld [vmem:[%s0 + $0x1d4] sm:$0xf]
  %v157 = vld [vmem:[%s0 + $0x1d8] sm:$0xf]
  %v158 = vld [vmem:[%s0 + $0x1dc] sm:$0xf]
  %v159 = vld [vmem:[%s0 + $0x1e0] sm:$0xf]
  %v160 = vld [vmem:[%s0 + $0x1e4] sm:$0xf]
  %v161 = vld [vmem:[%s0 + $0x1e8] sm:$0xf]
  %v162 = vld [vmem:[%s0 + $0x1ec] sm:$0xf]
  %v163 = vld [vmem:[%s0 + $0x1f0] sm:$0xf]
  %v164 = vld [vmem:[%s0 + $0x1f4] sm:$0xf]
  %v165 = vld [vmem:[%s0 + $0x1f8] sm:$0xf]
  %v166 = vld [vmem:[%s0 + $0x1fc] sm:$0xf]
  %v167 = vld [vmem:[%s1] sm:$0xf]
  %v168 = vld [vmem:[%s1 + $0x4] sm:$0xf]
  %v169 = vld [vmem:[%s1 + $0x8] sm:$0xf]
  %v170 = vld [vmem:[%s1 + $0xc] sm:$0xf]
  %v171 = vld [vmem:[%s1 + $0x10] sm:$0xf]
  %v172 = vld [vmem:[%s1 + $0x14] sm:$0xf]
  %v173 = vld [vmem:[%s1 + $0x18] sm:$0xf]
  %v174 = vld [vmem:[%s1 + $0x1c] sm:$0xf]
  %v175 = vld [vmem:[%s2] sm:$0x1]
  %v177 = vperm.slane %v175, 0
  %v307 = vunpack.c.l.b16 %v39
  %v308 = vunpack.c.l.b16 %v40
  %v309 = vunpack.c.l.b16 %v41
  %v310 = vunpack.c.l.b16 %v42
  %v311 = vunpack.c.l.b16 %v43
  %v312 = vunpack.c.l.b16 %v44
  %v313 = vunpack.c.l.b16 %v45
  %v314 = vunpack.c.l.b16 %v46
  %v315 = vunpack.c.l.b16 %v47
  %v316 = vunpack.c.l.b16 %v48
  %v317 = vunpack.c.l.b16 %v49
  %v318 = vunpack.c.l.b16 %v50
  %v319 = vunpack.c.l.b16 %v51
  %v320 = vunpack.c.l.b16 %v52
  %v321 = vunpack.c.l.b16 %v53
  %v322 = vunpack.c.l.b16 %v54
  %v323 = vunpack.c.l.b16 %v55
  %v324 = vunpack.c.l.b16 %v56
  %v325 = vunpack.c.l.b16 %v57
  %v326 = vunpack.c.l.b16 %v58
  %v327 = vunpack.c.l.b16 %v59
  %v328 = vunpack.c.l.b16 %v60
  %v329 = vunpack.c.l.b16 %v61
  %v330 = vunpack.c.l.b16 %v62
  %v331 = vunpack.c.l.b16 %v63
  %v332 = vunpack.c.l.b16 %v64
  %v333 = vunpack.c.l.b16 %v65
  %v334 = vunpack.c.l.b16 %v66
  %v335 = vunpack.c.l.b16 %v67
  %v336 = vunpack.c.l.b16 %v68
  %v337 = vunpack.c.l.b16 %v69
  %v338 = vunpack.c.l.b16 %v70
  %v339 = vunpack.c.l.b16 %v71
  %v340 = vunpack.c.l.b16 %v72
  %v341 = vunpack.c.l.b16 %v73
  %v342 = vunpack.c.l.b16 %v74
  %v343 = vunpack.c.l.b16 %v75
  %v344 = vunpack.c.l.b16 %v76
  %v345 = vunpack.c.l.b16 %v77
  %v346 = vunpack.c.l.b16 %v78
  %v347 = vunpack.c.l.b16 %v79
  %v348 = vunpack.c.l.b16 %v80
  %v349 = vunpack.c.l.b16 %v81
  %v350 = vunpack.c.l.b16 %v82
  %v351 = vunpack.c.l.b16 %v83
  %v352 = vunpack.c.l.b16 %v84
  %v353 = vunpack.c.l.b16 %v85
  %v354 = vunpack.c.l.b16 %v86
  %v355 = vunpack.c.l.b16 %v87
  %v356 = vunpack.c.l.b16 %v88
  %v357 = vunpack.c.l.b16 %v89
  %v358 = vunpack.c.l.b16 %v90
  %v359 = vunpack.c.l.b16 %v91
  %v360 = vunpack.c.l.b16 %v92
  %v361 = vunpack.c.l.b16 %v93
  %v362 = vunpack.c.l.b16 %v94
  %v363 = vunpack.c.l.b16 %v95
  %v364 = vunpack.c.l.b16 %v96
  %v365 = vunpack.c.l.b16 %v97
  %v366 = vunpack.c.l.b16 %v98
  %v367 = vunpack.c.l.b16 %v99
  %v368 = vunpack.c.l.b16 %v100
  %v369 = vunpack.c.l.b16 %v101
  %v370 = vunpack.c.l.b16 %v102
  %v371 = vunpack.c.l.b16 %v103
  %v372 = vunpack.c.l.b16 %v104
  %v373 = vunpack.c.l.b16 %v105
  %v374 = vunpack.c.l.b16 %v106
  %v375 = vunpack.c.l.b16 %v107
  %v376 = vunpack.c.l.b16 %v108
  %v377 = vunpack.c.l.b16 %v109
  %v378 = vunpack.c.l.b16 %v110
  %v379 = vunpack.c.l.b16 %v111
  %v380 = vunpack.c.l.b16 %v112
  %v381 = vunpack.c.l.b16 %v113
  %v382 = vunpack.c.l.b16 %v114
  %v383 = vunpack.c.l.b16 %v115
  %v384 = vunpack.c.l.b16 %v116
  %v385 = vunpack.c.l.b16 %v117
  %v386 = vunpack.c.l.b16 %v118
  %v387 = vunpack.c.l.b16 %v119
  %v388 = vunpack.c.l.b16 %v120
  %v389 = vunpack.c.l.b16 %v121
  %v390 = vunpack.c.l.b16 %v122
  %v391 = vunpack.c.l.b16 %v123
  %v392 = vunpack.c.l.b16 %v124
  %v393 = vunpack.c.l.b16 %v125
  %v394 = vunpack.c.l.b16 %v126
  %v395 = vunpack.c.l.b16 %v127
  %v396 = vunpack.c.l.b16 %v128
  %v397 = vunpack.c.l.b16 %v129
  %v398 = vunpack.c.l.b16 %v130
  %v399 = vunpack.c.l.b16 %v131
  %v400 = vunpack.c.l.b16 %v132
  %v401 = vunpack.c.l.b16 %v133
  %v402 = vunpack.c.l.b16 %v134
  %v403 = vunpack.c.l.b16 %v135
  %v404 = vunpack.c.l.b16 %v136
  %v405 = vunpack.c.l.b16 %v137
  %v406 = vunpack.c.l.b16 %v138
  %v407 = vunpack.c.l.b16 %v139
  %v408 = vunpack.c.l.b16 %v140
  %v409 = vunpack.c.l.b16 %v141
  %v410 = vunpack.c.l.b16 %v142
  %v411 = vunpack.c.l.b16 %v143
  %v412 = vunpack.c.l.b16 %v144
  %v413 = vunpack.c.l.b16 %v145
  %v414 = vunpack.c.l.b16 %v146
  %v415 = vunpack.c.l.b16 %v147
  %v416 = vunpack.c.l.b16 %v148
  %v417 = vunpack.c.l.b16 %v149
  %v418 = vunpack.c.l.b16 %v150
  %v419 = vunpack.c.l.b16 %v151
  %v420 = vunpack.c.l.b16 %v152
  %v421 = vunpack.c.l.b16 %v153
  %v422 = vunpack.c.l.b16 %v154
  %v423 = vunpack.c.l.b16 %v155
  %v424 = vunpack.c.l.b16 %v156
  %v425 = vunpack.c.l.b16 %v157
  %v426 = vunpack.c.l.b16 %v158
  %v427 = vunpack.c.l.b16 %v159
  %v428 = vunpack.c.l.b16 %v160
  %v429 = vunpack.c.l.b16 %v161
  %v430 = vunpack.c.l.b16 %v162
  %v431 = vunpack.c.l.b16 %v163
  %v432 = vunpack.c.l.b16 %v164
  %v433 = vunpack.c.l.b16 %v165
  %v434 = vunpack.c.l.b16 %v166
  %v435 = vpack.c.b16 %v308, %v307
  %v436 = vpack.c.b16 %v310, %v309
  %v437 = vpack.c.b16 %v312, %v311
  %v438 = vpack.c.b16 %v314, %v313
  %v439 = vpack.c.b16 %v316, %v315
  %v440 = vpack.c.b16 %v318, %v317
  %v441 = vpack.c.b16 %v320, %v319
  %v442 = vpack.c.b16 %v322, %v321
  %v443 = vpack.c.b16 %v324, %v323
  %v444 = vpack.c.b16 %v326, %v325
  %v445 = vpack.c.b16 %v328, %v327
  %v446 = vpack.c.b16 %v330, %v329
  %v447 = vpack.c.b16 %v332, %v331
  %v448 = vpack.c.b16 %v334, %v333
  %v449 = vpack.c.b16 %v336, %v335
  %v450 = vpack.c.b16 %v338, %v337
  %v451 = vpack.c.b16 %v340, %v339
  %v452 = vpack.c.b16 %v342, %v341
  %v453 = vpack.c.b16 %v344, %v343
  %v454 = vpack.c.b16 %v346, %v345
  %v455 = vpack.c.b16 %v348, %v347
  %v456 = vpack.c.b16 %v350, %v349
  %v457 = vpack.c.b16 %v352, %v351
  %v458 = vpack.c.b16 %v354, %v353
  %v459 = vpack.c.b16 %v356, %v355
  %v460 = vpack.c.b16 %v358, %v357
  %v461 = vpack.c.b16 %v360, %v359
  %v462 = vpack.c.b16 %v362, %v361
  %v463 = vpack.c.b16 %v364, %v363
  %v464 = vpack.c.b16 %v366, %v365
  %v465 = vpack.c.b16 %v368, %v367
  %v466 = vpack.c.b16 %v370, %v369
  %v467 = vpack.c.b16 %v372, %v371
  %v468 = vpack.c.b16 %v374, %v373
  %v469 = vpack.c.b16 %v376, %v375
  %v470 = vpack.c.b16 %v378, %v377
  %v471 = vpack.c.b16 %v380, %v379
  %v472 = vpack.c.b16 %v382, %v381
  %v473 = vpack.c.b16 %v384, %v383
  %v474 = vpack.c.b16 %v386, %v385
  %v475 = vpack.c.b16 %v388, %v387
  %v476 = vpack.c.b16 %v390, %v389
  %v477 = vpack.c.b16 %v392, %v391
  %v478 = vpack.c.b16 %v394, %v393
  %v479 = vpack.c.b16 %v396, %v395
  %v480 = vpack.c.b16 %v398, %v397
  %v481 = vpack.c.b16 %v400, %v399
  %v482 = vpack.c.b16 %v402, %v401
  %v483 = vpack.c.b16 %v404, %v403
  %v484 = vpack.c.b16 %v406, %v405
  %v485 = vpack.c.b16 %v408, %v407
  %v486 = vpack.c.b16 %v410, %v409
  %v487 = vpack.c.b16 %v412, %v411
  %v488 = vpack.c.b16 %v414, %v413
  %v489 = vpack.c.b16 %v416, %v415
  %v490 = vpack.c.b16 %v418, %v417
  %v491 = vpack.c.b16 %v420, %v419
  %v492 = vpack.c.b16 %v422, %v421
  %v493 = vpack.c.b16 %v424, %v423
  %v494 = vpack.c.b16 %v426, %v425
  %v495 = vpack.c.b16 %v428, %v427
  %v496 = vpack.c.b16 %v430, %v429
  %v497 = vpack.c.b16 %v432, %v431
  %v498 = vpack.c.b16 %v434, %v433
  %v507 = vunpack.c.l.b16 %v167
  %v508 = vunpack.c.l.b16 %v168
  %v509 = vunpack.c.l.b16 %v169
  %v510 = vunpack.c.l.b16 %v170
  %v511 = vunpack.c.l.b16 %v171
  %v512 = vunpack.c.l.b16 %v172
  %v513 = vunpack.c.l.b16 %v173
  %v514 = vunpack.c.l.b16 %v174
  %v515 = vpack.c.b16 %v508, %v507
  %v516 = vpack.c.b16 %v510, %v509
  %v517 = vpack.c.b16 %v512, %v511
  %v518 = vpack.c.b16 %v514, %v513
  %vm523 = vcmask 523264
  %v525 = vsel %vm523, %v435, 0
  %v528 = vsel %vm523, %v436, 0
  %v531 = vsel %vm523, %v437, 0
  %v534 = vsel %vm523, %v438, 0
  %v537 = vsel %vm523, %v439, 0
  %v540 = vsel %vm523, %v440, 0
  %v543 = vsel %vm523, %v441, 0
  %v546 = vsel %vm523, %v442, 0
  %v549 = vsel %vm523, %v443, 0
  %v552 = vsel %vm523, %v444, 0
  %v555 = vsel %vm523, %v445, 0
  %v558 = vsel %vm523, %v446, 0
  %v561 = vsel %vm523, %v447, 0
  %v564 = vsel %vm523, %v448, 0
  %v567 = vsel %vm523, %v449, 0
  %v570 = vsel %vm523, %v450, 0
  %v573 = vsel %vm523, %v451, 0
  %v576 = vsel %vm523, %v452, 0
  %v579 = vsel %vm523, %v453, 0
  %v582 = vsel %vm523, %v454, 0
  %v585 = vsel %vm523, %v455, 0
  %v588 = vsel %vm523, %v456, 0
  %v591 = vsel %vm523, %v457, 0
  %v594 = vsel %vm523, %v458, 0
  %v597 = vsel %vm523, %v459, 0
  %v600 = vsel %vm523, %v460, 0
  %v603 = vsel %vm523, %v461, 0
  %v606 = vsel %vm523, %v462, 0
  %v609 = vsel %vm523, %v463, 0
  %v612 = vsel %vm523, %v464, 0
  %v615 = vsel %vm523, %v465, 0
  %v618 = vsel %vm523, %v466, 0
  %v621 = vsel %vm523, %v467, 0
  %v624 = vsel %vm523, %v468, 0
  %v627 = vsel %vm523, %v469, 0
  %v630 = vsel %vm523, %v470, 0
  %v633 = vsel %vm523, %v471, 0
  %v636 = vsel %vm523, %v472, 0
  %v639 = vsel %vm523, %v473, 0
  %v642 = vsel %vm523, %v474, 0
  %v645 = vsel %vm523, %v475, 0
  %v648 = vsel %vm523, %v476, 0
  %v651 = vsel %vm523, %v477, 0
  %v654 = vsel %vm523, %v478, 0
  %v657 = vsel %vm523, %v479, 0
  %v660 = vsel %vm523, %v480, 0
  %v663 = vsel %vm523, %v481, 0
  %v666 = vsel %vm523, %v482, 0
  %v669 = vsel %vm523, %v483, 0
  %v672 = vsel %vm523, %v484, 0
  %v675 = vsel %vm523, %v485, 0
  %v678 = vsel %vm523, %v486, 0
  %v681 = vsel %vm523, %v487, 0
  %v684 = vsel %vm523, %v488, 0
  %v687 = vsel %vm523, %v489, 0
  %v690 = vsel %vm523, %v490, 0
  %v693 = vsel %vm523, %v491, 0
  %v696 = vsel %vm523, %v492, 0
  %v699 = vsel %vm523, %v493, 0
  %v702 = vsel %vm523, %v494, 0
  %v705 = vsel %vm523, %v495, 0
  %v708 = vsel %vm523, %v496, 0
  %v711 = vsel %vm523, %v497, 0
  %v714 = vsel %vm523, %v498, 0
  %716 = vmatpush.bf16.msra.mxu0 0
  %717 = vmatpush.bf16.msra.mxu0 0
  %718 = vmatpush.bf16.msra.mxu0 0
  %719 = vmatpush.bf16.msra.mxu0 0
  %720 = vmatpush.bf16.msra.mxu0 %v518
  %721 = vmatpush.bf16.msra.mxu0 %v517
  %722 = vmatpush.bf16.msra.mxu0 %v516
  %723 = vmatpush.bf16.msra.mxu0 %v515
  %724 = vmatmul.bf16.gmra.mxu0 %v525
  %v725 = vpop.f32.mrf.mxu0
  %v726 = vadd.f32 %v177, %v725
  %v727 = vpop.f32.mrf.mxu0
  %v728 = vadd.f32 %v177, %v727
  %729 = vmatmul.bf16.gmra.mxu0 %v528
  %v730 = vpop.f32.mrf.mxu0
  %v731 = vadd.f32 %v177, %v730
  %v732 = vpop.f32.mrf.mxu0
  %v733 = vadd.f32 %v177, %v732
  %734 = vmatmul.bf16.gmra.mxu0 %v531
  %v735 = vpop.f32.mrf.mxu0
  %v736 = vadd.f32 %v177, %v735
  %v737 = vpop.f32.mrf.mxu0
  %v738 = vadd.f32 %v177, %v737
  %739 = vmatmul.bf16.gmra.mxu0 %v534
  %v740 = vpop.f32.mrf.mxu0
  %v741 = vadd.f32 %v177, %v740
  %v742 = vpop.f32.mrf.mxu0
  %v743 = vadd.f32 %v177, %v742
  %744 = vmatmul.bf16.gmra.mxu0 %v537
  %v745 = vpop.f32.mrf.mxu0
  %v746 = vadd.f32 %v177, %v745
  %v747 = vpop.f32.mrf.mxu0
  %v748 = vadd.f32 %v177, %v747
  %749 = vmatmul.bf16.gmra.mxu0 %v540
  %v750 = vpop.f32.mrf.mxu0
  %v751 = vadd.f32 %v177, %v750
  %v752 = vpop.f32.mrf.mxu0
  %v753 = vadd.f32 %v177, %v752
  %754 = vmatmul.bf16.gmra.mxu0 %v543
  %v755 = vpop.f32.mrf.mxu0
  %v756 = vadd.f32 %v177, %v755
  %v757 = vpop.f32.mrf.mxu0
  %v758 = vadd.f32 %v177, %v757
  %759 = vmatmul.bf16.gmra.mxu0 %v546
  %v760 = vpop.f32.mrf.mxu0
  %v761 = vadd.f32 %v177, %v760
  %v762 = vpop.f32.mrf.mxu0
  %v763 = vadd.f32 %v177, %v762
  %764 = vmatmul.bf16.gmra.mxu0 %v549
  %v765 = vpop.f32.mrf.mxu0
  %v766 = vadd.f32 %v177, %v765
  %v767 = vpop.f32.mrf.mxu0
  %v768 = vadd.f32 %v177, %v767
  %769 = vmatmul.bf16.gmra.mxu0 %v552
  %v770 = vpop.f32.mrf.mxu0
  %v771 = vadd.f32 %v177, %v770
  %v772 = vpop.f32.mrf.mxu0
  %v773 = vadd.f32 %v177, %v772
  %774 = vmatmul.bf16.gmra.mxu0 %v555
  %v775 = vpop.f32.mrf.mxu0
  %v776 = vadd.f32 %v177, %v775
  %v777 = vpop.f32.mrf.mxu0
  %v778 = vadd.f32 %v177, %v777
  %779 = vmatmul.bf16.gmra.mxu0 %v558
  %v780 = vpop.f32.mrf.mxu0
  %v781 = vadd.f32 %v177, %v780
  %v782 = vpop.f32.mrf.mxu0
  %v783 = vadd.f32 %v177, %v782
  %784 = vmatmul.bf16.gmra.mxu0 %v561
  %v785 = vpop.f32.mrf.mxu0
  %v786 = vadd.f32 %v177, %v785
  %v787 = vpop.f32.mrf.mxu0
  %v788 = vadd.f32 %v177, %v787
  %789 = vmatmul.bf16.gmra.mxu0 %v564
  %v790 = vpop.f32.mrf.mxu0
  %v791 = vadd.f32 %v177, %v790
  %v792 = vpop.f32.mrf.mxu0
  %v793 = vadd.f32 %v177, %v792
  %794 = vmatmul.bf16.gmra.mxu0 %v567
  %v795 = vpop.f32.mrf.mxu0
  %v796 = vadd.f32 %v177, %v795
  %v797 = vpop.f32.mrf.mxu0
  %v798 = vadd.f32 %v177, %v797
  %799 = vmatmul.bf16.gmra.mxu0 %v570
  %v800 = vpop.f32.mrf.mxu0
  %v801 = vadd.f32 %v177, %v800
  %v802 = vpop.f32.mrf.mxu0
  %v803 = vadd.f32 %v177, %v802
  %804 = vmatmul.bf16.gmra.mxu0 %v573
  %v805 = vpop.f32.mrf.mxu0
  %v806 = vadd.f32 %v177, %v805
  %v807 = vpop.f32.mrf.mxu0
  %v808 = vadd.f32 %v177, %v807
  %809 = vmatmul.bf16.gmra.mxu0 %v576
  %v810 = vpop.f32.mrf.mxu0
  %v811 = vadd.f32 %v177, %v810
  %v812 = vpop.f32.mrf.mxu0
  %v813 = vadd.f32 %v177, %v812
  %814 = vmatmul.bf16.gmra.mxu0 %v579
  %v815 = vpop.f32.mrf.mxu0
  %v816 = vadd.f32 %v177, %v815
  %v817 = vpop.f32.mrf.mxu0
  %v818 = vadd.f32 %v177, %v817
  %819 = vmatmul.bf16.gmra.mxu0 %v582
  %v820 = vpop.f32.mrf.mxu0
  %v821 = vadd.f32 %v177, %v820
  %v822 = vpop.f32.mrf.mxu0
  %v823 = vadd.f32 %v177, %v822
  %824 = vmatmul.bf16.gmra.mxu0 %v585
  %v825 = vpop.f32.mrf.mxu0
  %v826 = vadd.f32 %v177, %v825
  %v827 = vpop.f32.mrf.mxu0
  %v828 = vadd.f32 %v177, %v827
  %829 = vmatmul.bf16.gmra.mxu0 %v588
  %v830 = vpop.f32.mrf.mxu0
  %v831 = vadd.f32 %v177, %v830
  %v832 = vpop.f32.mrf.mxu0
  %v833 = vadd.f32 %v177, %v832
  %834 = vmatmul.bf16.gmra.mxu0 %v591
  %v835 = vpop.f32.mrf.mxu0
  %v836 = vadd.f32 %v177, %v835
  %v837 = vpop.f32.mrf.mxu0
  %v838 = vadd.f32 %v177, %v837
  %839 = vmatmul.bf16.gmra.mxu0 %v594
  %v840 = vpop.f32.mrf.mxu0
  %v841 = vadd.f32 %v177, %v840
  %v842 = vpop.f32.mrf.mxu0
  %v843 = vadd.f32 %v177, %v842
  %844 = vmatmul.bf16.gmra.mxu0 %v597
  %v845 = vpop.f32.mrf.mxu0
  %v846 = vadd.f32 %v177, %v845
  %v847 = vpop.f32.mrf.mxu0
  %v848 = vadd.f32 %v177, %v847
  %849 = vmatmul.bf16.gmra.mxu0 %v600
  %v850 = vpop.f32.mrf.mxu0
  %v851 = vadd.f32 %v177, %v850
  %v852 = vpop.f32.mrf.mxu0
  %v853 = vadd.f32 %v177, %v852
  %854 = vmatmul.bf16.gmra.mxu0 %v603
  %v855 = vpop.f32.mrf.mxu0
  %v856 = vadd.f32 %v177, %v855
  %v857 = vpop.f32.mrf.mxu0
  %v858 = vadd.f32 %v177, %v857
  %859 = vmatmul.bf16.gmra.mxu0 %v606
  %v860 = vpop.f32.mrf.mxu0
  %v861 = vadd.f32 %v177, %v860
  %v862 = vpop.f32.mrf.mxu0
  %v863 = vadd.f32 %v177, %v862
  %864 = vmatmul.bf16.gmra.mxu0 %v609
  %v865 = vpop.f32.mrf.mxu0
  %v866 = vadd.f32 %v177, %v865
  %v867 = vpop.f32.mrf.mxu0
  %v868 = vadd.f32 %v177, %v867
  %869 = vmatmul.bf16.gmra.mxu0 %v612
  %v870 = vpop.f32.mrf.mxu0
  %v871 = vadd.f32 %v177, %v870
  %v872 = vpop.f32.mrf.mxu0
  %v873 = vadd.f32 %v177, %v872
  %874 = vmatmul.bf16.gmra.mxu0 %v615
  %v875 = vpop.f32.mrf.mxu0
  %v876 = vadd.f32 %v177, %v875
  %v877 = vpop.f32.mrf.mxu0
  %v878 = vadd.f32 %v177, %v877
  %879 = vmatmul.bf16.gmra.mxu0 %v618
  %v880 = vpop.f32.mrf.mxu0
  %v881 = vadd.f32 %v177, %v880
  %v882 = vpop.f32.mrf.mxu0
  %v883 = vadd.f32 %v177, %v882
  %884 = vmatmul.bf16.gmra.mxu0 %v621
  %v885 = vpop.f32.mrf.mxu0
  %v886 = vadd.f32 %v177, %v885
  %v887 = vpop.f32.mrf.mxu0
  %v888 = vadd.f32 %v177, %v887
  %889 = vmatmul.bf16.gmra.mxu0 %v624
  %v890 = vpop.f32.mrf.mxu0
  %v891 = vadd.f32 %v177, %v890
  %v892 = vpop.f32.mrf.mxu0
  %v893 = vadd.f32 %v177, %v892
  %894 = vmatmul.bf16.gmra.mxu0 %v627
  %v895 = vpop.f32.mrf.mxu0
  %v896 = vadd.f32 %v177, %v895
  %v897 = vpop.f32.mrf.mxu0
  %v898 = vadd.f32 %v177, %v897
  %899 = vmatmul.bf16.gmra.mxu0 %v630
  %v900 = vpop.f32.mrf.mxu0
  %v901 = vadd.f32 %v177, %v900
  %v902 = vpop.f32.mrf.mxu0
  %v903 = vadd.f32 %v177, %v902
  %904 = vmatmul.bf16.gmra.mxu0 %v633
  %v905 = vpop.f32.mrf.mxu0
  %v906 = vadd.f32 %v177, %v905
  %v907 = vpop.f32.mrf.mxu0
  %v908 = vadd.f32 %v177, %v907
  %909 = vmatmul.bf16.gmra.mxu0 %v636
  %v910 = vpop.f32.mrf.mxu0
  %v911 = vadd.f32 %v177, %v910
  %v912 = vpop.f32.mrf.mxu0
  %v913 = vadd.f32 %v177, %v912
  %914 = vmatmul.bf16.gmra.mxu0 %v639
  %v915 = vpop.f32.mrf.mxu0
  %v916 = vadd.f32 %v177, %v915
  %v917 = vpop.f32.mrf.mxu0
  %v918 = vadd.f32 %v177, %v917
  %919 = vmatmul.bf16.gmra.mxu0 %v642
  %v920 = vpop.f32.mrf.mxu0
  %v921 = vadd.f32 %v177, %v920
  %v922 = vpop.f32.mrf.mxu0
  %v923 = vadd.f32 %v177, %v922
  %924 = vmatmul.bf16.gmra.mxu0 %v645
  %v925 = vpop.f32.mrf.mxu0
  %v926 = vadd.f32 %v177, %v925
  %v927 = vpop.f32.mrf.mxu0
  %v928 = vadd.f32 %v177, %v927
  %929 = vmatmul.bf16.gmra.mxu0 %v648
  %v930 = vpop.f32.mrf.mxu0
  %v931 = vadd.f32 %v177, %v930
  %v932 = vpop.f32.mrf.mxu0
  %v933 = vadd.f32 %v177, %v932
  %934 = vmatmul.bf16.gmra.mxu0 %v651
  %v935 = vpop.f32.mrf.mxu0
  %v936 = vadd.f32 %v177, %v935
  %v937 = vpop.f32.mrf.mxu0
  %v938 = vadd.f32 %v177, %v937
  %939 = vmatmul.bf16.gmra.mxu0 %v654
  %v940 = vpop.f32.mrf.mxu0
  %v941 = vadd.f32 %v177, %v940
  %v942 = vpop.f32.mrf.mxu0
  %v943 = vadd.f32 %v177, %v942
  %944 = vmatmul.bf16.gmra.mxu0 %v657
  %v945 = vpop.f32.mrf.mxu0
  %v946 = vadd.f32 %v177, %v945
  %v947 = vpop.f32.mrf.mxu0
  %v948 = vadd.f32 %v177, %v947
  %949 = vmatmul.bf16.gmra.mxu0 %v660
  %v950 = vpop.f32.mrf.mxu0
  %v951 = vadd.f32 %v177, %v950
  %v952 = vpop.f32.mrf.mxu0
  %v953 = vadd.f32 %v177, %v952
  %954 = vmatmul.bf16.gmra.mxu0 %v663
  %v955 = vpop.f32.mrf.mxu0
  %v956 = vadd.f32 %v177, %v955
  %v957 = vpop.f32.mrf.mxu0
  %v958 = vadd.f32 %v177, %v957
  %959 = vmatmul.bf16.gmra.mxu0 %v666
  %v960 = vpop.f32.mrf.mxu0
  %v961 = vadd.f32 %v177, %v960
  %v962 = vpop.f32.mrf.mxu0
  %v963 = vadd.f32 %v177, %v962
  %964 = vmatmul.bf16.gmra.mxu0 %v669
  %v965 = vpop.f32.mrf.mxu0
  %v966 = vadd.f32 %v177, %v965
  %v967 = vpop.f32.mrf.mxu0
  %v968 = vadd.f32 %v177, %v967
  %969 = vmatmul.bf16.gmra.mxu0 %v672
  %v970 = vpop.f32.mrf.mxu0
  %v971 = vadd.f32 %v177, %v970
  %v972 = vpop.f32.mrf.mxu0
  %v973 = vadd.f32 %v177, %v972
  %974 = vmatmul.bf16.gmra.mxu0 %v675
  %v975 = vpop.f32.mrf.mxu0
  %v976 = vadd.f32 %v177, %v975
  %v977 = vpop.f32.mrf.mxu0
  %v978 = vadd.f32 %v177, %v977
  %979 = vmatmul.bf16.gmra.mxu0 %v678
  %v980 = vpop.f32.mrf.mxu0
  %v981 = vadd.f32 %v177, %v980
  %v982 = vpop.f32.mrf.mxu0
  %v983 = vadd.f32 %v177, %v982
  %984 = vmatmul.bf16.gmra.mxu0 %v681
  %v985 = vpop.f32.mrf.mxu0
  %v986 = vadd.f32 %v177, %v985
  %v987 = vpop.f32.mrf.mxu0
  %v988 = vadd.f32 %v177, %v987
  %989 = vmatmul.bf16.gmra.mxu0 %v684
  %v990 = vpop.f32.mrf.mxu0
  %v991 = vadd.f32 %v177, %v990
  %v992 = vpop.f32.mrf.mxu0
  %v993 = vadd.f32 %v177, %v992
  %994 = vmatmul.bf16.gmra.mxu0 %v687
  %v995 = vpop.f32.mrf.mxu0
  %v996 = vadd.f32 %v177, %v995
  %v997 = vpop.f32.mrf.mxu0
  %v998 = vadd.f32 %v177, %v997
  %999 = vmatmul.bf16.gmra.mxu0 %v690
  %v1000 = vpop.f32.mrf.mxu0
  %v1001 = vadd.f32 %v177, %v1000
  %v1002 = vpop.f32.mrf.mxu0
  %v1003 = vadd.f32 %v177, %v1002
  %1004 = vmatmul.bf16.gmra.mxu0 %v693
  %v1005 = vpop.f32.mrf.mxu0
  %v1006 = vadd.f32 %v177, %v1005
  %v1007 = vpop.f32.mrf.mxu0
  %v1008 = vadd.f32 %v177, %v1007
  %1009 = vmatmul.bf16.gmra.mxu0 %v696
  %v1010 = vpop.f32.mrf.mxu0
  %v1011 = vadd.f32 %v177, %v1010
  %v1012 = vpop.f32.mrf.mxu0
  %v1013 = vadd.f32 %v177, %v1012
  %1014 = vmatmul.bf16.gmra.mxu0 %v699
  %v1015 = vpop.f32.mrf.mxu0
  %v1016 = vadd.f32 %v177, %v1015
  %v1017 = vpop.f32.mrf.mxu0
  %v1018 = vadd.f32 %v177, %v1017
  %1019 = vmatmul.bf16.gmra.mxu0 %v702
  %v1020 = vpop.f32.mrf.mxu0
  %v1021 = vadd.f32 %v177, %v1020
  %v1022 = vpop.f32.mrf.mxu0
  %v1023 = vadd.f32 %v177, %v1022
  %1024 = vmatmul.bf16.gmra.mxu0 %v705
  %v1025 = vpop.f32.mrf.mxu0
  %v1026 = vadd.f32 %v177, %v1025
  %v1027 = vpop.f32.mrf.mxu0
  %v1028 = vadd.f32 %v177, %v1027
  %1029 = vmatmul.bf16.gmra.mxu0 %v708
  %v1030 = vpop.f32.mrf.mxu0
  %v1031 = vadd.f32 %v177, %v1030
  %v1032 = vpop.f32.mrf.mxu0
  %v1033 = vadd.f32 %v177, %v1032
  %1034 = vmatmul.bf16.gmra.mxu0 %v711
  %v1035 = vpop.f32.mrf.mxu0
  %v1036 = vadd.f32 %v177, %v1035
  %v1037 = vpop.f32.mrf.mxu0
  %v1038 = vadd.f32 %v177, %v1037
  %1039 = vmatmul.bf16.gmra.mxu0 %v714
  %v1040 = vpop.f32.mrf.mxu0
  %v1041 = vadd.f32 %v177, %v1040
  %v1042 = vpop.f32.mrf.mxu0
  %v1043 = vadd.f32 %v177, %v1042
  %1044 = vdwg.mxu0
  %v1045 = vmax.f32 %v726, 0.0
  %v1046 = vmax.f32 %v728, 0.0
  %v1047 = vmax.f32 %v731, 0.0
  %v1048 = vmax.f32 %v733, 0.0
  %v1049 = vmax.f32 %v736, 0.0
  %v1050 = vmax.f32 %v738, 0.0
  %v1051 = vmax.f32 %v741, 0.0
  %v1052 = vmax.f32 %v743, 0.0
  %v1053 = vmax.f32 %v746, 0.0
  %v1054 = vmax.f32 %v748, 0.0
  %v1055 = vmax.f32 %v751, 0.0
  %v1056 = vmax.f32 %v753, 0.0
  %v1057 = vmax.f32 %v756, 0.0
  %v1058 = vmax.f32 %v758, 0.0
  %v1059 = vmax.f32 %v761, 0.0
  %v1060 = vmax.f32 %v763, 0.0
  %v1061 = vmax.f32 %v766, 0.0
  %v1062 = vmax.f32 %v768, 0.0
  %v1063 = vmax.f32 %v771, 0.0
  %v1064 = vmax.f32 %v773, 0.0
  %v1065 = vmax.f32 %v776, 0.0
  %v1066 = vmax.f32 %v778, 0.0
  %v1067 = vmax.f32 %v781, 0.0
  %v1068 = vmax.f32 %v783, 0.0
  %v1069 = vmax.f32 %v786, 0.0
  %v1070 = vmax.f32 %v788, 0.0
  %v1071 = vmax.f32 %v791, 0.0
  %v1072 = vmax.f32 %v793, 0.0
  %v1073 = vmax.f32 %v796, 0.0
  %v1074 = vmax.f32 %v798, 0.0
  %v1075 = vmax.f32 %v801, 0.0
  %v1076 = vmax.f32 %v803, 0.0
  %v1077 = vmax.f32 %v806, 0.0
  %v1078 = vmax.f32 %v808, 0.0
  %v1079 = vmax.f32 %v811, 0.0
  %v1080 = vmax.f32 %v813, 0.0
  %v1081 = vmax.f32 %v816, 0.0
  %v1082 = vmax.f32 %v818, 0.0
  %v1083 = vmax.f32 %v821, 0.0
  %v1084 = vmax.f32 %v823, 0.0
  %v1085 = vmax.f32 %v826, 0.0
  %v1086 = vmax.f32 %v828, 0.0
  %v1087 = vmax.f32 %v831, 0.0
  %v1088 = vmax.f32 %v833, 0.0
  %v1089 = vmax.f32 %v836, 0.0
  %v1090 = vmax.f32 %v838, 0.0
  %v1091 = vmax.f32 %v841, 0.0
  %v1092 = vmax.f32 %v843, 0.0
  %v1093 = vmax.f32 %v846, 0.0
  %v1094 = vmax.f32 %v848, 0.0
  %v1095 = vmax.f32 %v851, 0.0
  %v1096 = vmax.f32 %v853, 0.0
  %v1097 = vmax.f32 %v856, 0.0
  %v1098 = vmax.f32 %v858, 0.0
  %v1099 = vmax.f32 %v861, 0.0
  %v1100 = vmax.f32 %v863, 0.0
  %v1101 = vmax.f32 %v866, 0.0
  %v1102 = vmax.f32 %v868, 0.0
  %v1103 = vmax.f32 %v871, 0.0
  %v1104 = vmax.f32 %v873, 0.0
  %v1105 = vmax.f32 %v876, 0.0
  %v1106 = vmax.f32 %v878, 0.0
  %v1107 = vmax.f32 %v881, 0.0
  %v1108 = vmax.f32 %v883, 0.0
  %v1109 = vmax.f32 %v886, 0.0
  %v1110 = vmax.f32 %v888, 0.0
  %v1111 = vmax.f32 %v891, 0.0
  %v1112 = vmax.f32 %v893, 0.0
  %v1113 = vmax.f32 %v896, 0.0
  %v1114 = vmax.f32 %v898, 0.0
  %v1115 = vmax.f32 %v901, 0.0
  %v1116 = vmax.f32 %v903, 0.0
  %v1117 = vmax.f32 %v906, 0.0
  %v1118 = vmax.f32 %v908, 0.0
  %v1119 = vmax.f32 %v911, 0.0
  %v1120 = vmax.f32 %v913, 0.0
  %v1121 = vmax.f32 %v916, 0.0
  %v1122 = vmax.f32 %v918, 0.0
  %v1123 = vmax.f32 %v921, 0.0
  %v1124 = vmax.f32 %v923, 0.0
  %v1125 = vmax.f32 %v926, 0.0
  %v1126 = vmax.f32 %v928, 0.0
  %v1127 = vmax.f32 %v931, 0.0
  %v1128 = vmax.f32 %v933, 0.0
  %v1129 = vmax.f32 %v936, 0.0
  %v1130 = vmax.f32 %v938, 0.0
  %v1131 = vmax.f32 %v941, 0.0
  %v1132 = vmax.f32 %v943, 0.0
  %v1133 = vmax.f32 %v946, 0.0
  %v1134 = vmax.f32 %v948, 0.0
  %v1135 = vmax.f32 %v951, 0.0
  %v1136 = vmax.f32 %v953, 0.0
  %v1137 = vmax.f32 %v956, 0.0
  %v1138 = vmax.f32 %v958, 0.0
  %v1139 = vmax.f32 %v961, 0.0
  %v1140 = vmax.f32 %v963, 0.0
  %v1141 = vmax.f32 %v966, 0.0
  %v1142 = vmax.f32 %v968, 0.0
  %v1143 = vmax.f32 %v971, 0.0
  %v1144 = vmax.f32 %v973, 0.0
  %v1145 = vmax.f32 %v976, 0.0
  %v1146 = vmax.f32 %v978, 0.0
  %v1147 = vmax.f32 %v981, 0.0
  %v1148 = vmax.f32 %v983, 0.0
  %v1149 = vmax.f32 %v986, 0.0
  %v1150 = vmax.f32 %v988, 0.0
  %v1151 = vmax.f32 %v991, 0.0
  %v1152 = vmax.f32 %v993, 0.0
  %v1153 = vmax.f32 %v996, 0.0
  %v1154 = vmax.f32 %v998, 0.0
  %v1155 = vmax.f32 %v1001, 0.0
  %v1156 = vmax.f32 %v1003, 0.0
  %v1157 = vmax.f32 %v1006, 0.0
  %v1158 = vmax.f32 %v1008, 0.0
  %v1159 = vmax.f32 %v1011, 0.0
  %v1160 = vmax.f32 %v1013, 0.0
  %v1161 = vmax.f32 %v1016, 0.0
  %v1162 = vmax.f32 %v1018, 0.0
  %v1163 = vmax.f32 %v1021, 0.0
  %v1164 = vmax.f32 %v1023, 0.0
  %v1165 = vmax.f32 %v1026, 0.0
  %v1166 = vmax.f32 %v1028, 0.0
  %v1167 = vmax.f32 %v1031, 0.0
  %v1168 = vmax.f32 %v1033, 0.0
  %v1169 = vmax.f32 %v1036, 0.0
  %v1170 = vmax.f32 %v1038, 0.0
  %v1171 = vmax.f32 %v1041, 0.0
  %v1172 = vmax.f32 %v1043, 0.0
  %v1173 = vpack.c.bf16 %v1045, %v1045
  %v1174 = vpack.c.bf16 %v1046, %v1046
  %v1175 = vpack.c.bf16 %v1047, %v1047
  %v1176 = vpack.c.bf16 %v1048, %v1048
  %v1177 = vpack.c.bf16 %v1049, %v1049
  %v1178 = vpack.c.bf16 %v1050, %v1050
  %v1179 = vpack.c.bf16 %v1051, %v1051
  %v1180 = vpack.c.bf16 %v1052, %v1052
  %v1181 = vpack.c.bf16 %v1053, %v1053
  %v1182 = vpack.c.bf16 %v1054, %v1054
  %v1183 = vpack.c.bf16 %v1055, %v1055
  %v1184 = vpack.c.bf16 %v1056, %v1056
  %v1185 = vpack.c.bf16 %v1057, %v1057
  %v1186 = vpack.c.bf16 %v1058, %v1058
  %v1187 = vpack.c.bf16 %v1059, %v1059
  %v1188 = vpack.c.bf16 %v1060, %v1060
  %v1189 = vpack.c.bf16 %v1061, %v1061
  %v1190 = vpack.c.bf16 %v1062, %v1062
  %v1191 = vpack.c.bf16 %v1063, %v1063
  %v1192 = vpack.c.bf16 %v1064, %v1064
  %v1193 = vpack.c.bf16 %v1065, %v1065
  %v1194 = vpack.c.bf16 %v1066, %v1066
  %v1195 = vpack.c.bf16 %v1067, %v1067
  %v1196 = vpack.c.bf16 %v1068, %v1068
  %v1197 = vpack.c.bf16 %v1069, %v1069
  %v1198 = vpack.c.bf16 %v1070, %v1070
  %v1199 = vpack.c.bf16 %v1071, %v1071
  %v1200 = vpack.c.bf16 %v1072, %v1072
  %v1201 = vpack.c.bf16 %v1073, %v1073
  %v1202 = vpack.c.bf16 %v1074, %v1074
  %v1203 = vpack.c.bf16 %v1075, %v1075
  %v1204 = vpack.c.bf16 %v1076, %v1076
  %v1205 = vpack.c.bf16 %v1077, %v1077
  %v1206 = vpack.c.bf16 %v1078, %v1078
  %v1207 = vpack.c.bf16 %v1079, %v1079
  %v1208 = vpack.c.bf16 %v1080, %v1080
  %v1209 = vpack.c.bf16 %v1081, %v1081
  %v1210 = vpack.c.bf16 %v1082, %v1082
  %v1211 = vpack.c.bf16 %v1083, %v1083
  %v1212 = vpack.c.bf16 %v1084, %v1084
  %v1213 = vpack.c.bf16 %v1085, %v1085
  %v1214 = vpack.c.bf16 %v1086, %v1086
  %v1215 = vpack.c.bf16 %v1087, %v1087
  %v1216 = vpack.c.bf16 %v1088, %v1088
  %v1217 = vpack.c.bf16 %v1089, %v1089
  %v1218 = vpack.c.bf16 %v1090, %v1090
  %v1219 = vpack.c.bf16 %v1091, %v1091
  %v1220 = vpack.c.bf16 %v1092, %v1092
  %v1221 = vpack.c.bf16 %v1093, %v1093
  %v1222 = vpack.c.bf16 %v1094, %v1094
  %v1223 = vpack.c.bf16 %v1095, %v1095
  %v1224 = vpack.c.bf16 %v1096, %v1096
  %v1225 = vpack.c.bf16 %v1097, %v1097
  %v1226 = vpack.c.bf16 %v1098, %v1098
  %v1227 = vpack.c.bf16 %v1099, %v1099
  %v1228 = vpack.c.bf16 %v1100, %v1100
  %v1229 = vpack.c.bf16 %v1101, %v1101
  %v1230 = vpack.c.bf16 %v1102, %v1102
  %v1231 = vpack.c.bf16 %v1103, %v1103
  %v1232 = vpack.c.bf16 %v1104, %v1104
  %v1233 = vpack.c.bf16 %v1105, %v1105
  %v1234 = vpack.c.bf16 %v1106, %v1106
  %v1235 = vpack.c.bf16 %v1107, %v1107
  %v1236 = vpack.c.bf16 %v1108, %v1108
  %v1237 = vpack.c.bf16 %v1109, %v1109
  %v1238 = vpack.c.bf16 %v1110, %v1110
  %v1239 = vpack.c.bf16 %v1111, %v1111
  %v1240 = vpack.c.bf16 %v1112, %v1112
  %v1241 = vpack.c.bf16 %v1113, %v1113
  %v1242 = vpack.c.bf16 %v1114, %v1114
  %v1243 = vpack.c.bf16 %v1115, %v1115
  %v1244 = vpack.c.bf16 %v1116, %v1116
  %v1245 = vpack.c.bf16 %v1117, %v1117
  %v1246 = vpack.c.bf16 %v1118, %v1118
  %v1247 = vpack.c.bf16 %v1119, %v1119
  %v1248 = vpack.c.bf16 %v1120, %v1120
  %v1249 = vpack.c.bf16 %v1121, %v1121
  %v1250 = vpack.c.bf16 %v1122, %v1122
  %v1251 = vpack.c.bf16 %v1123, %v1123
  %v1252 = vpack.c.bf16 %v1124, %v1124
  %v1253 = vpack.c.bf16 %v1125, %v1125
  %v1254 = vpack.c.bf16 %v1126, %v1126
  %v1255 = vpack.c.bf16 %v1127, %v1127
  %v1256 = vpack.c.bf16 %v1128, %v1128
  %v1257 = vpack.c.bf16 %v1129, %v1129
  %v1258 = vpack.c.bf16 %v1130, %v1130
  %v1259 = vpack.c.bf16 %v1131, %v1131
  %v1260 = vpack.c.bf16 %v1132, %v1132
  %v1261 = vpack.c.bf16 %v1133, %v1133
  %v1262 = vpack.c.bf16 %v1134, %v1134
  %v1263 = vpack.c.bf16 %v1135, %v1135
  %v1264 = vpack.c.bf16 %v1136, %v1136
  %v1265 = vpack.c.bf16 %v1137, %v1137
  %v1266 = vpack.c.bf16 %v1138, %v1138
  %v1267 = vpack.c.bf16 %v1139, %v1139
  %v1268 = vpack.c.bf16 %v1140, %v1140
  %v1269 = vpack.c.bf16 %v1141, %v1141
  %v1270 = vpack.c.bf16 %v1142, %v1142
  %v1271 = vpack.c.bf16 %v1143, %v1143
  %v1272 = vpack.c.bf16 %v1144, %v1144
  %v1273 = vpack.c.bf16 %v1145, %v1145
  %v1274 = vpack.c.bf16 %v1146, %v1146
  %v1275 = vpack.c.bf16 %v1147, %v1147
  %v1276 = vpack.c.bf16 %v1148, %v1148
  %v1277 = vpack.c.bf16 %v1149, %v1149
  %v1278 = vpack.c.bf16 %v1150, %v1150
  %v1279 = vpack.c.bf16 %v1151, %v1151
  %v1280 = vpack.c.bf16 %v1152, %v1152
  %v1281 = vpack.c.bf16 %v1153, %v1153
  %v1282 = vpack.c.bf16 %v1154, %v1154
  %v1283 = vpack.c.bf16 %v1155, %v1155
  %v1284 = vpack.c.bf16 %v1156, %v1156
  %v1285 = vpack.c.bf16 %v1157, %v1157
  %v1286 = vpack.c.bf16 %v1158, %v1158
  %v1287 = vpack.c.bf16 %v1159, %v1159
  %v1288 = vpack.c.bf16 %v1160, %v1160
  %v1289 = vpack.c.bf16 %v1161, %v1161
  %v1290 = vpack.c.bf16 %v1162, %v1162
  %v1291 = vpack.c.bf16 %v1163, %v1163
  %v1292 = vpack.c.bf16 %v1164, %v1164
  %v1293 = vpack.c.bf16 %v1165, %v1165
  %v1294 = vpack.c.bf16 %v1166, %v1166
  %v1295 = vpack.c.bf16 %v1167, %v1167
  %v1296 = vpack.c.bf16 %v1168, %v1168
  %v1297 = vpack.c.bf16 %v1169, %v1169
  %v1298 = vpack.c.bf16 %v1170, %v1170
  %v1299 = vpack.c.bf16 %v1171, %v1171
  %v1300 = vpack.c.bf16 %v1172, %v1172
  %vm1301 = vcmask 257024
  %1302 = vst.msk [vmem:[#allocation2] sm:$0xf] %vm1301, %v1173
  %1303 = vst.msk [vmem:[#allocation2 + $0x4] sm:$0xf] %vm1301, %v1174
  %1304 = vst.msk [vmem:[#allocation2 + $0x8] sm:$0xf] %vm1301, %v1175
  %1305 = vst.msk [vmem:[#allocation2 + $0xc] sm:$0xf] %vm1301, %v1176
  %1306 = vst.msk [vmem:[#allocation2 + $0x10] sm:$0xf] %vm1301, %v1177
  %1307 = vst.msk [vmem:[#allocation2 + $0x14] sm:$0xf] %vm1301, %v1178
  %1308 = vst.msk [vmem:[#allocation2 + $0x18] sm:$0xf] %vm1301, %v1179
  %1309 = vst.msk [vmem:[#allocation2 + $0x1c] sm:$0xf] %vm1301, %v1180
  %1310 = vst.msk [vmem:[#allocation2 + $0x20] sm:$0xf] %vm1301, %v1181
  %1311 = vst.msk [vmem:[#allocation2 + $0x24] sm:$0xf] %vm1301, %v1182
  %1312 = vst.msk [vmem:[#allocation2 + $0x28] sm:$0xf] %vm1301, %v1183
  %1313 = vst.msk [vmem:[#allocation2 + $0x2c] sm:$0xf] %vm1301, %v1184
  %1314 = vst.msk [vmem:[#allocation2 + $0x30] sm:$0xf] %vm1301, %v1185
  %1315 = vst.msk [vmem:[#allocation2 + $0x34] sm:$0xf] %vm1301, %v1186
  %1316 = vst.msk [vmem:[#allocation2 + $0x38] sm:$0xf] %vm1301, %v1187
  %1317 = vst.msk [vmem:[#allocation2 + $0x3c] sm:$0xf] %vm1301, %v1188
  %1318 = vst.msk [vmem:[#allocation2 + $0x40] sm:$0xf] %vm1301, %v1189
  %1319 = vst.msk [vmem:[#allocation2 + $0x44] sm:$0xf] %vm1301, %v1190
  %1320 = vst.msk [vmem:[#allocation2 + $0x48] sm:$0xf] %vm1301, %v1191
  %1321 = vst.msk [vmem:[#allocation2 + $0x4c] sm:$0xf] %vm1301, %v1192
  %1322 = vst.msk [vmem:[#allocation2 + $0x50] sm:$0xf] %vm1301, %v1193
  %1323 = vst.msk [vmem:[#allocation2 + $0x54] sm:$0xf] %vm1301, %v1194
  %1324 = vst.msk [vmem:[#allocation2 + $0x58] sm:$0xf] %vm1301, %v1195
  %1325 = vst.msk [vmem:[#allocation2 + $0x5c] sm:$0xf] %vm1301, %v1196
  %1326 = vst.msk [vmem:[#allocation2 + $0x60] sm:$0xf] %vm1301, %v1197
  %1327 = vst.msk [vmem:[#allocation2 + $0x64] sm:$0xf] %vm1301, %v1198
  %1328 = vst.msk [vmem:[#allocation2 + $0x68] sm:$0xf] %vm1301, %v1199
  %1329 = vst.msk [vmem:[#allocation2 + $0x6c] sm:$0xf] %vm1301, %v1200
  %1330 = vst.msk [vmem:[#allocation2 + $0x70] sm:$0xf] %vm1301, %v1201
  %1331 = vst.msk [vmem:[#allocation2 + $0x74] sm:$0xf] %vm1301, %v1202
  %1332 = vst.msk [vmem:[#allocation2 + $0x78] sm:$0xf] %vm1301, %v1203
  %1333 = vst.msk [vmem:[#allocation2 + $0x7c] sm:$0xf] %vm1301, %v1204
  %1334 = vst.msk [vmem:[#allocation2 + $0x80] sm:$0xf] %vm1301, %v1205
  %1335 = vst.msk [vmem:[#allocation2 + $0x84] sm:$0xf] %vm1301, %v1206
  %1336 = vst.msk [vmem:[#allocation2 + $0x88] sm:$0xf] %vm1301, %v1207
  %1337 = vst.msk [vmem:[#allocation2 + $0x8c] sm:$0xf] %vm1301, %v1208
  %1338 = vst.msk [vmem:[#allocation2 + $0x90] sm:$0xf] %vm1301, %v1209
  %1339 = vst.msk [vmem:[#allocation2 + $0x94] sm:$0xf] %vm1301, %v1210
  %1340 = vst.msk [vmem:[#allocation2 + $0x98] sm:$0xf] %vm1301, %v1211
  %1341 = vst.msk [vmem:[#allocation2 + $0x9c] sm:$0xf] %vm1301, %v1212
  %1342 = vst.msk [vmem:[#allocation2 + $0xa0] sm:$0xf] %vm1301, %v1213
  %1343 = vst.msk [vmem:[#allocation2 + $0xa4] sm:$0xf] %vm1301, %v1214
  %1344 = vst.msk [vmem:[#allocation2 + $0xa8] sm:$0xf] %vm1301, %v1215
  %1345 = vst.msk [vmem:[#allocation2 + $0xac] sm:$0xf] %vm1301, %v1216
  %1346 = vst.msk [vmem:[#allocation2 + $0xb0] sm:$0xf] %vm1301, %v1217
  %1347 = vst.msk [vmem:[#allocation2 + $0xb4] sm:$0xf] %vm1301, %v1218
  %1348 = vst.msk [vmem:[#allocation2 + $0xb8] sm:$0xf] %vm1301, %v1219
  %1349 = vst.msk [vmem:[#allocation2 + $0xbc] sm:$0xf] %vm1301, %v1220
  %1350 = vst.msk [vmem:[#allocation2 + $0xc0] sm:$0xf] %vm1301, %v1221
  %1351 = vst.msk [vmem:[#allocation2 + $0xc4] sm:$0xf] %vm1301, %v1222
  %1352 = vst.msk [vmem:[#allocation2 + $0xc8] sm:$0xf] %vm1301, %v1223
  %1353 = vst.msk [vmem:[#allocation2 + $0xcc] sm:$0xf] %vm1301, %v1224
  %1354 = vst.msk [vmem:[#allocation2 + $0xd0] sm:$0xf] %vm1301, %v1225
  %1355 = vst.msk [vmem:[#allocation2 + $0xd4] sm:$0xf] %vm1301, %v1226
  %1356 = vst.msk [vmem:[#allocation2 + $0xd8] sm:$0xf] %vm1301, %v1227
  %1357 = vst.msk [vmem:[#allocation2 + $0xdc] sm:$0xf] %vm1301, %v1228
  %1358 = vst.msk [vmem:[#allocation2 + $0xe0] sm:$0xf] %vm1301, %v1229
  %1359 = vst.msk [vmem:[#allocation2 + $0xe4] sm:$0xf] %vm1301, %v1230
  %1360 = vst.msk [vmem:[#allocation2 + $0xe8] sm:$0xf] %vm1301, %v1231
  %1361 = vst.msk [vmem:[#allocation2 + $0xec] sm:$0xf] %vm1301, %v1232
  %1362 = vst.msk [vmem:[#allocation2 + $0xf0] sm:$0xf] %vm1301, %v1233
  %1363 = vst.msk [vmem:[#allocation2 + $0xf4] sm:$0xf] %vm1301, %v1234
  %1364 = vst.msk [vmem:[#allocation2 + $0xf8] sm:$0xf] %vm1301, %v1235
  %1365 = vst.msk [vmem:[#allocation2 + $0xfc] sm:$0xf] %vm1301, %v1236
  %1366 = vst.msk [vmem:[#allocation2 + $0x100] sm:$0xf] %vm1301, %v1237
  %1367 = vst.msk [vmem:[#allocation2 + $0x104] sm:$0xf] %vm1301, %v1238
  %1368 = vst.msk [vmem:[#allocation2 + $0x108] sm:$0xf] %vm1301, %v1239
  %1369 = vst.msk [vmem:[#allocation2 + $0x10c] sm:$0xf] %vm1301, %v1240
  %1370 = vst.msk [vmem:[#allocation2 + $0x110] sm:$0xf] %vm1301, %v1241
  %1371 = vst.msk [vmem:[#allocation2 + $0x114] sm:$0xf] %vm1301, %v1242
  %1372 = vst.msk [vmem:[#allocation2 + $0x118] sm:$0xf] %vm1301, %v1243
  %1373 = vst.msk [vmem:[#allocation2 + $0x11c] sm:$0xf] %vm1301, %v1244
  %1374 = vst.msk [vmem:[#allocation2 + $0x120] sm:$0xf] %vm1301, %v1245
  %1375 = vst.msk [vmem:[#allocation2 + $0x124] sm:$0xf] %vm1301, %v1246
  %1376 = vst.msk [vmem:[#allocation2 + $0x128] sm:$0xf] %vm1301, %v1247
  %1377 = vst.msk [vmem:[#allocation2 + $0x12c] sm:$0xf] %vm1301, %v1248
  %1378 = vst.msk [vmem:[#allocation2 + $0x130] sm:$0xf] %vm1301, %v1249
  %1379 = vst.msk [vmem:[#allocation2 + $0x134] sm:$0xf] %vm1301, %v1250
  %1380 = vst.msk [vmem:[#allocation2 + $0x138] sm:$0xf] %vm1301, %v1251
  %1381 = vst.msk [vmem:[#allocation2 + $0x13c] sm:$0xf] %vm1301, %v1252
  %1382 = vst.msk [vmem:[#allocation2 + $0x140] sm:$0xf] %vm1301, %v1253
  %1383 = vst.msk [vmem:[#allocation2 + $0x144] sm:$0xf] %vm1301, %v1254
  %1384 = vst.msk [vmem:[#allocation2 + $0x148] sm:$0xf] %vm1301, %v1255
  %1385 = vst.msk [vmem:[#allocation2 + $0x14c] sm:$0xf] %vm1301, %v1256
  %1386 = vst.msk [vmem:[#allocation2 + $0x150] sm:$0xf] %vm1301, %v1257
  %1387 = vst.msk [vmem:[#allocation2 + $0x154] sm:$0xf] %vm1301, %v1258
  %1388 = vst.msk [vmem:[#allocation2 + $0x158] sm:$0xf] %vm1301, %v1259
  %1389 = vst.msk [vmem:[#allocation2 + $0x15c] sm:$0xf] %vm1301, %v1260
  %1390 = vst.msk [vmem:[#allocation2 + $0x160] sm:$0xf] %vm1301, %v1261
  %1391 = vst.msk [vmem:[#allocation2 + $0x164] sm:$0xf] %vm1301, %v1262
  %1392 = vst.msk [vmem:[#allocation2 + $0x168] sm:$0xf] %vm1301, %v1263
  %1393 = vst.msk [vmem:[#allocation2 + $0x16c] sm:$0xf] %vm1301, %v1264
  %1394 = vst.msk [vmem:[#allocation2 + $0x170] sm:$0xf] %vm1301, %v1265
  %1395 = vst.msk [vmem:[#allocation2 + $0x174] sm:$0xf] %vm1301, %v1266
  %1396 = vst.msk [vmem:[#allocation2 + $0x178] sm:$0xf] %vm1301, %v1267
  %1397 = vst.msk [vmem:[#allocation2 + $0x17c] sm:$0xf] %vm1301, %v1268
  %1398 = vst.msk [vmem:[#allocation2 + $0x180] sm:$0xf] %vm1301, %v1269
  %1399 = vst.msk [vmem:[#allocation2 + $0x184] sm:$0xf] %vm1301, %v1270
  %1400 = vst.msk [vmem:[#allocation2 + $0x188] sm:$0xf] %vm1301, %v1271
  %1401 = vst.msk [vmem:[#allocation2 + $0x18c] sm:$0xf] %vm1301, %v1272
  %1402 = vst.msk [vmem:[#allocation2 + $0x190] sm:$0xf] %vm1301, %v1273
  %1403 = vst.msk [vmem:[#allocation2 + $0x194] sm:$0xf] %vm1301, %v1274
  %1404 = vst.msk [vmem:[#allocation2 + $0x198] sm:$0xf] %vm1301, %v1275
  %1405 = vst.msk [vmem:[#allocation2 + $0x19c] sm:$0xf] %vm1301, %v1276
  %1406 = vst.msk [vmem:[#allocation2 + $0x1a0] sm:$0xf] %vm1301, %v1277
  %1407 = vst.msk [vmem:[#allocation2 + $0x1a4] sm:$0xf] %vm1301, %v1278
  %1408 = vst.msk [vmem:[#allocation2 + $0x1a8] sm:$0xf] %vm1301, %v1279
  %1409 = vst.msk [vmem:[#allocation2 + $0x1ac] sm:$0xf] %vm1301, %v1280
  %1410 = vst.msk [vmem:[#allocation2 + $0x1b0] sm:$0xf] %vm1301, %v1281
  %1411 = vst.msk [vmem:[#allocation2 + $0x1b4] sm:$0xf] %vm1301, %v1282
  %1412 = vst.msk [vmem:[#allocation2 + $0x1b8] sm:$0xf] %vm1301, %v1283
  %1413 = vst.msk [vmem:[#allocation2 + $0x1bc] sm:$0xf] %vm1301, %v1284
  %1414 = vst.msk [vmem:[#allocation2 + $0x1c0] sm:$0xf] %vm1301, %v1285
  %1415 = vst.msk [vmem:[#allocation2 + $0x1c4] sm:$0xf] %vm1301, %v1286
  %1416 = vst.msk [vmem:[#allocation2 + $0x1c8] sm:$0xf] %vm1301, %v1287
  %1417 = vst.msk [vmem:[#allocation2 + $0x1cc] sm:$0xf] %vm1301, %v1288
  %1418 = vst.msk [vmem:[#allocation2 + $0x1d0] sm:$0xf] %vm1301, %v1289
  %1419 = vst.msk [vmem:[#allocation2 + $0x1d4] sm:$0xf] %vm1301, %v1290
  %1420 = vst.msk [vmem:[#allocation2 + $0x1d8] sm:$0xf] %vm1301, %v1291
  %1421 = vst.msk [vmem:[#allocation2 + $0x1dc] sm:$0xf] %vm1301, %v1292
  %1422 = vst.msk [vmem:[#allocation2 + $0x1e0] sm:$0xf] %vm1301, %v1293
  %1423 = vst.msk [vmem:[#allocation2 + $0x1e4] sm:$0xf] %vm1301, %v1294
  %1424 = vst.msk [vmem:[#allocation2 + $0x1e8] sm:$0xf] %vm1301, %v1295
  %1425 = vst.msk [vmem:[#allocation2 + $0x1ec] sm:$0xf] %vm1301, %v1296
  %1426 = vst.msk [vmem:[#allocation2 + $0x1f0] sm:$0xf] %vm1301, %v1297
  %1427 = vst.msk [vmem:[#allocation2 + $0x1f4] sm:$0xf] %vm1301, %v1298
  %1428 = vst.msk [vmem:[#allocation2 + $0x1f8] sm:$0xf] %vm1301, %v1299
  %1429 = vst.msk [vmem:[#allocation2 + $0x1fc] sm:$0xf] %vm1301, %v1300
  %v1430 = vld [vmem:[#allocation2] sm:$0xf]
  %v1431 = vld [vmem:[#allocation2 + $0x4] sm:$0xf]
  %1432 = vst.msk [vmem:[#allocation3] sm:$0xf] %vm1301, %v1430
  %1433 = vst.msk [vmem:[#allocation3 + $0x10] sm:$0xf] %vm1301, %v1431
  %v1434 = vld [vmem:[#allocation2 + $0x8] sm:$0xf]
  %v1435 = vld [vmem:[#allocation2 + $0xc] sm:$0xf]
  %1438 = vrot.lane.b32.xlu0 %v1434, 32
  %v1439 = vpop.permute.xlu0 %1438
  %1440 = vrot.lane.b32.xlu0 %v1435, 32
  %v1441 = vpop.permute.xlu0 %1440
  %vm1444 = vcmask 519424
  %1445 = vst.msk [vmem:[#allocation3] sm:$0xf] %vm1444, %v1439
  %1446 = vst.msk [vmem:[#allocation3 + $0x10] sm:$0xf] %vm1444, %v1441
  %v1447 = vld [vmem:[#allocation2 + $0x10] sm:$0xf]
  %v1448 = vld [vmem:[#allocation2 + $0x14] sm:$0xf]
  %1451 = vrot.lane.b32.xlu0 %v1447, 64
  %v1452 = vpop.permute.xlu0 %1451
  %1453 = vrot.lane.b32.xlu0 %v1448, 64
  %v1454 = vpop.permute.xlu0 %1453
  %vm1457 = vcmask 781824
  %1458 = vst.msk [vmem:[#allocation3] sm:$0xf] %vm1457, %v1452
  %1459 = vst.msk [vmem:[#allocation3 + $0x10] sm:$0xf] %vm1457, %v1454
  %v1460 = vld [vmem:[#allocation2 + $0x18] sm:$0xf]
  %v1461 = vld [vmem:[#allocation2 + $0x1c] sm:$0xf]
  %1464 = vrot.lane.b32.xlu0 %v1460, 96
  %v1465 = vpop.permute.xlu0 %1464
  %1466 = vrot.lane.b32.xlu0 %v1461, 96
  %v1467 = vpop.permute.xlu0 %1466
  %vm1470 = vcmask 1044224
  %1471 = vst.msk [vmem:[#allocation3] sm:$0xf] %vm1470, %v1465
  %1472 = vst.msk [vmem:[#allocation3 + $0x10] sm:$0xf] %vm1470, %v1467
  %v1473 = vld [vmem:[#allocation2 + $0x40] sm:$0xf]
  %v1474 = vld [vmem:[#allocation2 + $0x44] sm:$0xf]
  %1475 = vst.msk [vmem:[#allocation3 + $0x4] sm:$0xf] %vm1301, %v1473
  %1476 = vst.msk [vmem:[#allocation3 + $0x14] sm:$0xf] %vm1301, %v1474
  %v1477 = vld [vmem:[#allocation2 + $0x48] sm:$0xf]
  %v1478 = vld [vmem:[#allocation2 + $0x4c] sm:$0xf]
  %1481 = vrot.lane.b32.xlu0 %v1477, 32
  %v1482 = vpop.permute.xlu0 %1481
  %1483 = vrot.lane.b32.xlu0 %v1478, 32
  %v1484 = vpop.permute.xlu0 %1483
  %1487 = vst.msk [vmem:[#allocation3 + $0x4] sm:$0xf] %vm1444, %v1482
  %1488 = vst.msk [vmem:[#allocation3 + $0x14] sm:$0xf] %vm1444, %v1484
  %v1489 = vld [vmem:[#allocation2 + $0x50] sm:$0xf]
  %v1490 = vld [vmem:[#allocation2 + $0x54] sm:$0xf]
  %1493 = vrot.lane.b32.xlu0 %v1489, 64
  %v1494 = vpop.permute.xlu0 %1493
  %1495 = vrot.lane.b32.xlu0 %v1490, 64
  %v1496 = vpop.permute.xlu0 %1495
  %1499 = vst.msk [vmem:[#allocation3 + $0x4] sm:$0xf] %vm1457, %v1494
  %1500 = vst.msk [vmem:[#allocation3 + $0x14] sm:$0xf] %vm1457, %v1496
  %v1501 = vld [vmem:[#allocation2 + $0x58] sm:$0xf]
  %v1502 = vld [vmem:[#allocation2 + $0x5c] sm:$0xf]
  %1505 = vrot.lane.b32.xlu0 %v1501, 96
  %v1506 = vpop.permute.xlu0 %1505
  %1507 = vrot.lane.b32.xlu0 %v1502, 96
  %v1508 = vpop.permute.xlu0 %1507
  %1511 = vst.msk [vmem:[#allocation3 + $0x4] sm:$0xf] %vm1470, %v1506
  %1512 = vst.msk [vmem:[#allocation3 + $0x14] sm:$0xf] %vm1470, %v1508
  %v1513 = vld [vmem:[#allocation2 + $0x80] sm:$0xf]
  %v1514 = vld [vmem:[#allocation2 + $0x84] sm:$0xf]
  %1515 = vst.msk [vmem:[#allocation3 + $0x8] sm:$0xf] %vm1301, %v1513
  %1516 = vst.msk [vmem:[#allocation3 + $0x18] sm:$0xf] %vm1301, %v1514
  %v1517 = vld [vmem:[#allocation2 + $0x88] sm:$0xf]
  %v1518 = vld [vmem:[#allocation2 + $0x8c] sm:$0xf]
  %1521 = vrot.lane.b32.xlu0 %v1517, 32
  %v1522 = vpop.permute.xlu0 %1521
  %1523 = vrot.lane.b32.xlu0 %v1518, 32
  %v1524 = vpop.permute.xlu0 %1523
  %1527 = vst.msk [vmem:[#allocation3 + $0x8] sm:$0xf] %vm1444, %v1522
  %1528 = vst.msk [vmem:[#allocation3 + $0x18] sm:$0xf] %vm1444, %v1524
  %v1529 = vld [vmem:[#allocation2 + $0x90] sm:$0xf]
  %v1530 = vld [vmem:[#allocation2 + $0x94] sm:$0xf]
  %1533 = vrot.lane.b32.xlu0 %v1529, 64
  %v1534 = vpop.permute.xlu0 %1533
  %1535 = vrot.lane.b32.xlu0 %v1530, 64
  %v1536 = vpop.permute.xlu0 %1535
  %1539 = vst.msk [vmem:[#allocation3 + $0x8] sm:$0xf] %vm1457, %v1534
  %1540 = vst.msk [vmem:[#allocation3 + $0x18] sm:$0xf] %vm1457, %v1536
  %v1541 = vld [vmem:[#allocation2 + $0x98] sm:$0xf]
  %v1542 = vld [vmem:[#allocation2 + $0x9c] sm:$0xf]
  %1545 = vrot.lane.b32.xlu0 %v1541, 96
  %v1546 = vpop.permute.xlu0 %1545
  %1547 = vrot.lane.b32.xlu0 %v1542, 96
  %v1548 = vpop.permute.xlu0 %1547
  %1551 = vst.msk [vmem:[#allocation3 + $0x8] sm:$0xf] %vm1470, %v1546
  %1552 = vst.msk [vmem:[#allocation3 + $0x18] sm:$0xf] %vm1470, %v1548
  %v1553 = vld [vmem:[#allocation2 + $0xc0] sm:$0xf]
  %v1554 = vld [vmem:[#allocation2 + $0xc4] sm:$0xf]
  %1555 = vst.msk [vmem:[#allocation3 + $0xc] sm:$0xf] %vm1301, %v1553
  %1556 = vst.msk [vmem:[#allocation3 + $0x1c] sm:$0xf] %vm1301, %v1554
  %v1557 = vld [vmem:[#allocation2 + $0xc8] sm:$0xf]
  %v1558 = vld [vmem:[#allocation2 + $0xcc] sm:$0xf]
  %1561 = vrot.lane.b32.xlu0 %v1557, 32
  %v1562 = vpop.permute.xlu0 %1561
  %1563 = vrot.lane.b32.xlu0 %v1558, 32
  %v1564 = vpop.permute.xlu0 %1563
  %1567 = vst.msk [vmem:[#allocation3 + $0xc] sm:$0xf] %vm1444, %v1562
  %1568 = vst.msk [vmem:[#allocation3 + $0x1c] sm:$0xf] %vm1444, %v1564
  %v1569 = vld [vmem:[#allocation2 + $0xd0] sm:$0xf]
  %v1570 = vld [vmem:[#allocation2 + $0xd4] sm:$0xf]
  %1573 = vrot.lane.b32.xlu0 %v1569, 64
  %v1574 = vpop.permute.xlu0 %1573
  %1575 = vrot.lane.b32.xlu0 %v1570, 64
  %v1576 = vpop.permute.xlu0 %1575
  %1579 = vst.msk [vmem:[#allocation3 + $0xc] sm:$0xf] %vm1457, %v1574
  %1580 = vst.msk [vmem:[#allocation3 + $0x1c] sm:$0xf] %vm1457, %v1576
  %v1581 = vld [vmem:[#allocation2 + $0xd8] sm:$0xf]
  %v1582 = vld [vmem:[#allocation2 + $0xdc] sm:$0xf]
  %1585 = vrot.lane.b32.xlu0 %v1581, 96
  %v1586 = vpop.permute.xlu0 %1585
  %1587 = vrot.lane.b32.xlu0 %v1582, 96
  %v1588 = vpop.permute.xlu0 %1587
  %1591 = vst.msk [vmem:[#allocation3 + $0xc] sm:$0xf] %vm1470, %v1586
  %1592 = vst.msk [vmem:[#allocation3 + $0x1c] sm:$0xf] %vm1470, %v1588
  %v1593 = vld [vmem:[#allocation2 + $0x10] sm:$0xf]
  %v1594 = vld [vmem:[#allocation2 + $0x14] sm:$0xf]
  %1595 = vst.msk [vmem:[#allocation3 + $0x20] sm:$0xf] %vm1301, %v1593
  %1596 = vst.msk [vmem:[#allocation3 + $0x30] sm:$0xf] %vm1301, %v1594
  %v1597 = vld [vmem:[#allocation2 + $0x18] sm:$0xf]
  %v1598 = vld [vmem:[#allocation2 + $0x1c] sm:$0xf]
  %1601 = vrot.lane.b32.xlu0 %v1597, 32
  %v1602 = vpop.permute.xlu0 %1601
  %1603 = vrot.lane.b32.xlu0 %v1598, 32
  %v1604 = vpop.permute.xlu0 %1603
  %1607 = vst.msk [vmem:[#allocation3 + $0x20] sm:$0xf] %vm1444, %v1602
  %1608 = vst.msk [vmem:[#allocation3 + $0x30] sm:$0xf] %vm1444, %v1604
  %v1609 = vld [vmem:[#allocation2 + $0x20] sm:$0xf]
  %v1610 = vld [vmem:[#allocation2 + $0x24] sm:$0xf]
  %1613 = vrot.lane.b32.xlu0 %v1609, 64
  %v1614 = vpop.permute.xlu0 %1613
  %1615 = vrot.lane.b32.xlu0 %v1610, 64
  %v1616 = vpop.permute.xlu0 %1615
  %1619 = vst.msk [vmem:[#allocation3 + $0x20] sm:$0xf] %vm1457, %v1614
  %1620 = vst.msk [vmem:[#allocation3 + $0x30] sm:$0xf] %vm1457, %v1616
  %v1621 = vld [vmem:[#allocation2 + $0x28] sm:$0xf]
  %v1622 = vld [vmem:[#allocation2 + $0x2c] sm:$0xf]
  %1625 = vrot.lane.b32.xlu0 %v1621, 96
  %v1626 = vpop.permute.xlu0 %1625
  %1627 = vrot.lane.b32.xlu0 %v1622, 96
  %v1628 = vpop.permute.xlu0 %1627
  %1631 = vst.msk [vmem:[#allocation3 + $0x20] sm:$0xf] %vm1470, %v1626
  %1632 = vst.msk [vmem:[#allocation3 + $0x30] sm:$0xf] %vm1470, %v1628
  %v1633 = vld [vmem:[#allocation2 + $0x50] sm:$0xf]
  %v1634 = vld [vmem:[#allocation2 + $0x54] sm:$0xf]
  %1635 = vst.msk [vmem:[#allocation3 + $0x24] sm:$0xf] %vm1301, %v1633
  %1636 = vst.msk [vmem:[#allocation3 + $0x34] sm:$0xf] %vm1301, %v1634
  %v1637 = vld [vmem:[#allocation2 + $0x58] sm:$0xf]
  %v1638 = vld [vmem:[#allocation2 + $0x5c] sm:$0xf]
  %1641 = vrot.lane.b32.xlu0 %v1637, 32
  %v1642 = vpop.permute.xlu0 %1641
  %1643 = vrot.lane.b32.xlu0 %v1638, 32
  %v1644 = vpop.permute.xlu0 %1643
  %1647 = vst.msk [vmem:[#allocation3 + $0x24] sm:$0xf] %vm1444, %v1642
  %1648 = vst.msk [vmem:[#allocation3 + $0x34] sm:$0xf] %vm1444, %v1644
  %v1649 = vld [vmem:[#allocation2 + $0x60] sm:$0xf]
  %v1650 = vld [vmem:[#allocation2 + $0x64] sm:$0xf]
  %1653 = vrot.lane.b32.xlu0 %v1649, 64
  %v1654 = vpop.permute.xlu0 %1653
  %1655 = vrot.lane.b32.xlu0 %v1650, 64
  %v1656 = vpop.permute.xlu0 %1655
  %1659 = vst.msk [vmem:[#allocation3 + $0x24] sm:$0xf] %vm1457, %v1654
  %1660 = vst.msk [vmem:[#allocation3 + $0x34] sm:$0xf] %vm1457, %v1656
  %v1661 = vld [vmem:[#allocation2 + $0x68] sm:$0xf]
  %v1662 = vld [vmem:[#allocation2 + $0x6c] sm:$0xf]
  %1665 = vrot.lane.b32.xlu0 %v1661, 96
  %v1666 = vpop.permute.xlu0 %1665
  %1667 = vrot.lane.b32.xlu0 %v1662, 96
  %v1668 = vpop.permute.xlu0 %1667
  %1671 = vst.msk [vmem:[#allocation3 + $0x24] sm:$0xf] %vm1470, %v1666
  %1672 = vst.msk [vmem:[#allocation3 + $0x34] sm:$0xf] %vm1470, %v1668
  %v1673 = vld [vmem:[#allocation2 + $0x90] sm:$0xf]
  %v1674 = vld [vmem:[#allocation2 + $0x94] sm:$0xf]
  %1675 = vst.msk [vmem:[#allocation3 + $0x28] sm:$0xf] %vm1301, %v1673
  %1676 = vst.msk [vmem:[#allocation3 + $0x38] sm:$0xf] %vm1301, %v1674
  %v1677 = vld [vmem:[#allocation2 + $0x98] sm:$0xf]
  %v1678 = vld [vmem:[#allocation2 + $0x9c] sm:$0xf]
  %1681 = vrot.lane.b32.xlu0 %v1677, 32
  %v1682 = vpop.permute.xlu0 %1681
  %1683 = vrot.lane.b32.xlu0 %v1678, 32
  %v1684 = vpop.permute.xlu0 %1683
  %1687 = vst.msk [vmem:[#allocation3 + $0x28] sm:$0xf] %vm1444, %v1682
  %1688 = vst.msk [vmem:[#allocation3 + $0x38] sm:$0xf] %vm1444, %v1684
  %v1689 = vld [vmem:[#allocation2 + $0xa0] sm:$0xf]
  %v1690 = vld [vmem:[#allocation2 + $0xa4] sm:$0xf]
  %1693 = vrot.lane.b32.xlu0 %v1689, 64
  %v1694 = vpop.permute.xlu0 %1693
  %1695 = vrot.lane.b32.xlu0 %v1690, 64
  %v1696 = vpop.permute.xlu0 %1695
  %1699 = vst.msk [vmem:[#allocation3 + $0x28] sm:$0xf] %vm1457, %v1694
  %1700 = vst.msk [vmem:[#allocation3 + $0x38] sm:$0xf] %vm1457, %v1696
  %v1701 = vld [vmem:[#allocation2 + $0xa8] sm:$0xf]
  %v1702 = vld [vmem:[#allocation2 + $0xac] sm:$0xf]
  %1705 = vrot.lane.b32.xlu0 %v1701, 96
  %v1706 = vpop.permute.xlu0 %1705
  %1707 = vrot.lane.b32.xlu0 %v1702, 96
  %v1708 = vpop.permute.xlu0 %1707
  %1711 = vst.msk [vmem:[#allocation3 + $0x28] sm:$0xf] %vm1470, %v1706
  %1712 = vst.msk [vmem:[#allocation3 + $0x38] sm:$0xf] %vm1470, %v1708
  %v1713 = vld [vmem:[#allocation2 + $0xd0] sm:$0xf]
  %v1714 = vld [vmem:[#allocation2 + $0xd4] sm:$0xf]
  %1715 = vst.msk [vmem:[#allocation3 + $0x2c] sm:$0xf] %vm1301, %v1713
  %1716 = vst.msk [vmem:[#allocation3 + $0x3c] sm:$0xf] %vm1301, %v1714
  %v1717 = vld [vmem:[#allocation2 + $0xd8] sm:$0xf]
  %v1718 = vld [vmem:[#allocation2 + $0xdc] sm:$0xf]
  %1721 = vrot.lane.b32.xlu0 %v1717, 32
  %v1722 = vpop.permute.xlu0 %1721
  %1723 = vrot.lane.b32.xlu0 %v1718, 32
  %v1724 = vpop.permute.xlu0 %1723
  %1727 = vst.msk [vmem:[#allocation3 + $0x2c] sm:$0xf] %vm1444, %v1722
  %1728 = vst.msk [vmem:[#allocation3 + $0x3c] sm:$0xf] %vm1444, %v1724
  %v1729 = vld [vmem:[#allocation2 + $0xe0] sm:$0xf]
  %v1730 = vld [vmem:[#allocation2 + $0xe4] sm:$0xf]
  %1733 = vrot.lane.b32.xlu0 %v1729, 64
  %v1734 = vpop.permute.xlu0 %1733
  %1735 = vrot.lane.b32.xlu0 %v1730, 64
  %v1736 = vpop.permute.xlu0 %1735
  %1739 = vst.msk [vmem:[#allocation3 + $0x2c] sm:$0xf] %vm1457, %v1734
  %1740 = vst.msk [vmem:[#allocation3 + $0x3c] sm:$0xf] %vm1457, %v1736
  %v1741 = vld [vmem:[#allocation2 + $0xe8] sm:$0xf]
  %v1742 = vld [vmem:[#allocation2 + $0xec] sm:$0xf]
  %1745 = vrot.lane.b32.xlu0 %v1741, 96
  %v1746 = vpop.permute.xlu0 %1745
  %1747 = vrot.lane.b32.xlu0 %v1742, 96
  %v1748 = vpop.permute.xlu0 %1747
  %1751 = vst.msk [vmem:[#allocation3 + $0x2c] sm:$0xf] %vm1470, %v1746
  %1752 = vst.msk [vmem:[#allocation3 + $0x3c] sm:$0xf] %vm1470, %v1748
  %v1753 = vld [vmem:[#allocation2 + $0x20] sm:$0xf]
  %v1754 = vld [vmem:[#allocation2 + $0x24] sm:$0xf]
  %1755 = vst.msk [vmem:[#allocation3 + $0x40] sm:$0xf] %vm1301, %v1753
  %1756 = vst.msk [vmem:[#allocation3 + $0x50] sm:$0xf] %vm1301, %v1754
  %v1757 = vld [vmem:[#allocation2 + $0x28] sm:$0xf]
  %v1758 = vld [vmem:[#allocation2 + $0x2c] sm:$0xf]
  %1761 = vrot.lane.b32.xlu0 %v1757, 32
  %v1762 = vpop.permute.xlu0 %1761
  %1763 = vrot.lane.b32.xlu0 %v1758, 32
  %v1764 = vpop.permute.xlu0 %1763
  %1767 = vst.msk [vmem:[#allocation3 + $0x40] sm:$0xf] %vm1444, %v1762
  %1768 = vst.msk [vmem:[#allocation3 + $0x50] sm:$0xf] %vm1444, %v1764
  %v1769 = vld [vmem:[#allocation2 + $0x30] sm:$0xf]
  %v1770 = vld [vmem:[#allocation2 + $0x34] sm:$0xf]
  %1773 = vrot.lane.b32.xlu0 %v1769, 64
  %v1774 = vpop.permute.xlu0 %1773
  %1775 = vrot.lane.b32.xlu0 %v1770, 64
  %v1776 = vpop.permute.xlu0 %1775
  %1779 = vst.msk [vmem:[#allocation3 + $0x40] sm:$0xf] %vm1457, %v1774
  %1780 = vst.msk [vmem:[#allocation3 + $0x50] sm:$0xf] %vm1457, %v1776
  %v1781 = vld [vmem:[#allocation2 + $0x38] sm:$0xf]
  %v1782 = vld [vmem:[#allocation2 + $0x3c] sm:$0xf]
  %1785 = vrot.lane.b32.xlu0 %v1781, 96
  %v1786 = vpop.permute.xlu0 %1785
  %1787 = vrot.lane.b32.xlu0 %v1782, 96
  %v1788 = vpop.permute.xlu0 %1787
  %1791 = vst.msk [vmem:[#allocation3 + $0x40] sm:$0xf] %vm1470, %v1786
  %1792 = vst.msk [vmem:[#allocation3 + $0x50] sm:$0xf] %vm1470, %v1788
  %v1793 = vld [vmem:[#allocation2 + $0x60] sm:$0xf]
  %v1794 = vld [vmem:[#allocation2 + $0x64] sm:$0xf]
  %1795 = vst.msk [vmem:[#allocation3 + $0x44] sm:$0xf] %vm1301, %v1793
  %1796 = vst.msk [vmem:[#allocation3 + $0x54] sm:$0xf] %vm1301, %v1794
  %v1797 = vld [vmem:[#allocation2 + $0x68] sm:$0xf]
  %v1798 = vld [vmem:[#allocation2 + $0x6c] sm:$0xf]
  %1801 = vrot.lane.b32.xlu0 %v1797, 32
  %v1802 = vpop.permute.xlu0 %1801
  %1803 = vrot.lane.b32.xlu0 %v1798, 32
  %v1804 = vpop.permute.xlu0 %1803
  %1807 = vst.msk [vmem:[#allocation3 + $0x44] sm:$0xf] %vm1444, %v1802
  %1808 = vst.msk [vmem:[#allocation3 + $0x54] sm:$0xf] %vm1444, %v1804
  %v1809 = vld [vmem:[#allocation2 + $0x70] sm:$0xf]
  %v1810 = vld [vmem:[#allocation2 + $0x74] sm:$0xf]
  %1813 = vrot.lane.b32.xlu0 %v1809, 64
  %v1814 = vpop.permute.xlu0 %1813
  %1815 = vrot.lane.b32.xlu0 %v1810, 64
  %v1816 = vpop.permute.xlu0 %1815
  %1819 = vst.msk [vmem:[#allocation3 + $0x44] sm:$0xf] %vm1457, %v1814
  %1820 = vst.msk [vmem:[#allocation3 + $0x54] sm:$0xf] %vm1457, %v1816
  %v1821 = vld [vmem:[#allocation2 + $0x78] sm:$0xf]
  %v1822 = vld [vmem:[#allocation2 + $0x7c] sm:$0xf]
  %1825 = vrot.lane.b32.xlu0 %v1821, 96
  %v1826 = vpop.permute.xlu0 %1825
  %1827 = vrot.lane.b32.xlu0 %v1822, 96
  %v1828 = vpop.permute.xlu0 %1827
  %1831 = vst.msk [vmem:[#allocation3 + $0x44] sm:$0xf] %vm1470, %v1826
  %1832 = vst.msk [vmem:[#allocation3 + $0x54] sm:$0xf] %vm1470, %v1828
  %v1833 = vld [vmem:[#allocation2 + $0xa0] sm:$0xf]
  %v1834 = vld [vmem:[#allocation2 + $0xa4] sm:$0xf]
  %1835 = vst.msk [vmem:[#allocation3 + $0x48] sm:$0xf] %vm1301, %v1833
  %1836 = vst.msk [vmem:[#allocation3 + $0x58] sm:$0xf] %vm1301, %v1834
  %v1837 = vld [vmem:[#allocation2 + $0xa8] sm:$0xf]
  %v1838 = vld [vmem:[#allocation2 + $0xac] sm:$0xf]
  %1841 = vrot.lane.b32.xlu0 %v1837, 32
  %v1842 = vpop.permute.xlu0 %1841
  %1843 = vrot.lane.b32.xlu0 %v1838, 32
  %v1844 = vpop.permute.xlu0 %1843
  %1847 = vst.msk [vmem:[#allocation3 + $0x48] sm:$0xf] %vm1444, %v1842
  %1848 = vst.msk [vmem:[#allocation3 + $0x58] sm:$0xf] %vm1444, %v1844
  %v1849 = vld [vmem:[#allocation2 + $0xb0] sm:$0xf]
  %v1850 = vld [vmem:[#allocation2 + $0xb4] sm:$0xf]
  %1853 = vrot.lane.b32.xlu0 %v1849, 64
  %v1854 = vpop.permute.xlu0 %1853
  %1855 = vrot.lane.b32.xlu0 %v1850, 64
  %v1856 = vpop.permute.xlu0 %1855
  %1859 = vst.msk [vmem:[#allocation3 + $0x48] sm:$0xf] %vm1457, %v1854
  %1860 = vst.msk [vmem:[#allocation3 + $0x58] sm:$0xf] %vm1457, %v1856
  %v1861 = vld [vmem:[#allocation2 + $0xb8] sm:$0xf]
  %v1862 = vld [vmem:[#allocation2 + $0xbc] sm:$0xf]
  %1865 = vrot.lane.b32.xlu0 %v1861, 96
  %v1866 = vpop.permute.xlu0 %1865
  %1867 = vrot.lane.b32.xlu0 %v1862, 96
  %v1868 = vpop.permute.xlu0 %1867
  %1871 = vst.msk [vmem:[#allocation3 + $0x48] sm:$0xf] %vm1470, %v1866
  %1872 = vst.msk [vmem:[#allocation3 + $0x58] sm:$0xf] %vm1470, %v1868
  %v1873 = vld [vmem:[#allocation2 + $0xe0] sm:$0xf]
  %v1874 = vld [vmem:[#allocation2 + $0xe4] sm:$0xf]
  %1875 = vst.msk [vmem:[#allocation3 + $0x4c] sm:$0xf] %vm1301, %v1873
  %1876 = vst.msk [vmem:[#allocation3 + $0x5c] sm:$0xf] %vm1301, %v1874
  %v1877 = vld [vmem:[#allocation2 + $0xe8] sm:$0xf]
  %v1878 = vld [vmem:[#allocation2 + $0xec] sm:$0xf]
  %1881 = vrot.lane.b32.xlu0 %v1877, 32
  %v1882 = vpop.permute.xlu0 %1881
  %1883 = vrot.lane.b32.xlu0 %v1878, 32
  %v1884 = vpop.permute.xlu0 %1883
  %1887 = vst.msk [vmem:[#allocation3 + $0x4c] sm:$0xf] %vm1444, %v1882
  %1888 = vst.msk [vmem:[#allocation3 + $0x5c] sm:$0xf] %vm1444, %v1884
  %v1889 = vld [vmem:[#allocation2 + $0xf0] sm:$0xf]
  %v1890 = vld [vmem:[#allocation2 + $0xf4] sm:$0xf]
  %1893 = vrot.lane.b32.xlu0 %v1889, 64
  %v1894 = vpop.permute.xlu0 %1893
  %1895 = vrot.lane.b32.xlu0 %v1890, 64
  %v1896 = vpop.permute.xlu0 %1895
  %1899 = vst.msk [vmem:[#allocation3 + $0x4c] sm:$0xf] %vm1457, %v1894
  %1900 = vst.msk [vmem:[#allocation3 + $0x5c] sm:$0xf] %vm1457, %v1896
  %v1901 = vld [vmem:[#allocation2 + $0xf8] sm:$0xf]
  %v1902 = vld [vmem:[#allocation2 + $0xfc] sm:$0xf]
  %1905 = vrot.lane.b32.xlu0 %v1901, 96
  %v1906 = vpop.permute.xlu0 %1905
  %1907 = vrot.lane.b32.xlu0 %v1902, 96
  %v1908 = vpop.permute.xlu0 %1907
  %1911 = vst.msk [vmem:[#allocation3 + $0x4c] sm:$0xf] %vm1470, %v1906
  %1912 = vst.msk [vmem:[#allocation3 + $0x5c] sm:$0xf] %vm1470, %v1908
  %v1913 = vld [vmem:[#allocation2 + $0x80] sm:$0xf]
  %v1914 = vld [vmem:[#allocation2 + $0x84] sm:$0xf]
  %1915 = vst.msk [vmem:[#allocation3 + $0x60] sm:$0xf] %vm1301, %v1913
  %1916 = vst.msk [vmem:[#allocation3 + $0x70] sm:$0xf] %vm1301, %v1914
  %v1917 = vld [vmem:[#allocation2 + $0x88] sm:$0xf]
  %v1918 = vld [vmem:[#allocation2 + $0x8c] sm:$0xf]
  %1921 = vrot.lane.b32.xlu0 %v1917, 32
  %v1922 = vpop.permute.xlu0 %1921
  %1923 = vrot.lane.b32.xlu0 %v1918, 32
  %v1924 = vpop.permute.xlu0 %1923
  %1927 = vst.msk [vmem:[#allocation3 + $0x60] sm:$0xf] %vm1444, %v1922
  %1928 = vst.msk [vmem:[#allocation3 + $0x70] sm:$0xf] %vm1444, %v1924
  %v1929 = vld [vmem:[#allocation2 + $0x90] sm:$0xf]
  %v1930 = vld [vmem:[#allocation2 + $0x94] sm:$0xf]
  %1933 = vrot.lane.b32.xlu0 %v1929, 64
  %v1934 = vpop.permute.xlu0 %1933
  %1935 = vrot.lane.b32.xlu0 %v1930, 64
  %v1936 = vpop.permute.xlu0 %1935
  %1939 = vst.msk [vmem:[#allocation3 + $0x60] sm:$0xf] %vm1457, %v1934
  %1940 = vst.msk [vmem:[#allocation3 + $0x70] sm:$0xf] %vm1457, %v1936
  %v1941 = vld [vmem:[#allocation2 + $0x98] sm:$0xf]
  %v1942 = vld [vmem:[#allocation2 + $0x9c] sm:$0xf]
  %1945 = vrot.lane.b32.xlu0 %v1941, 96
  %v1946 = vpop.permute.xlu0 %1945
  %1947 = vrot.lane.b32.xlu0 %v1942, 96
  %v1948 = vpop.permute.xlu0 %1947
  %1951 = vst.msk [vmem:[#allocation3 + $0x60] sm:$0xf] %vm1470, %v1946
  %1952 = vst.msk [vmem:[#allocation3 + $0x70] sm:$0xf] %vm1470, %v1948
  %v1953 = vld [vmem:[#allocation2 + $0xc0] sm:$0xf]
  %v1954 = vld [vmem:[#allocation2 + $0xc4] sm:$0xf]
  %1955 = vst.msk [vmem:[#allocation3 + $0x64] sm:$0xf] %vm1301, %v1953
  %1956 = vst.msk [vmem:[#allocation3 + $0x74] sm:$0xf] %vm1301, %v1954
  %v1957 = vld [vmem:[#allocation2 + $0xc8] sm:$0xf]
  %v1958 = vld [vmem:[#allocation2 + $0xcc] sm:$0xf]
  %1961 = vrot.lane.b32.xlu0 %v1957, 32
  %v1962 = vpop.permute.xlu0 %1961
  %1963 = vrot.lane.b32.xlu0 %v1958, 32
  %v1964 = vpop.permute.xlu0 %1963
  %1967 = vst.msk [vmem:[#allocation3 + $0x64] sm:$0xf] %vm1444, %v1962
  %1968 = vst.msk [vmem:[#allocation3 + $0x74] sm:$0xf] %vm1444, %v1964
  %v1969 = vld [vmem:[#allocation2 + $0xd0] sm:$0xf]
  %v1970 = vld [vmem:[#allocation2 + $0xd4] sm:$0xf]
  %1973 = vrot.lane.b32.xlu0 %v1969, 64
  %v1974 = vpop.permute.xlu0 %1973
  %1975 = vrot.lane.b32.xlu0 %v1970, 64
  %v1976 = vpop.permute.xlu0 %1975
  %1979 = vst.msk [vmem:[#allocation3 + $0x64] sm:$0xf] %vm1457, %v1974
  %1980 = vst.msk [vmem:[#allocation3 + $0x74] sm:$0xf] %vm1457, %v1976
  %v1981 = vld [vmem:[#allocation2 + $0xd8] sm:$0xf]
  %v1982 = vld [vmem:[#allocation2 + $0xdc] sm:$0xf]
  %1985 = vrot.lane.b32.xlu0 %v1981, 96
  %v1986 = vpop.permute.xlu0 %1985
  %1987 = vrot.lane.b32.xlu0 %v1982, 96
  %v1988 = vpop.permute.xlu0 %1987
  %1991 = vst.msk [vmem:[#allocation3 + $0x64] sm:$0xf] %vm1470, %v1986
  %1992 = vst.msk [vmem:[#allocation3 + $0x74] sm:$0xf] %vm1470, %v1988
  %v1993 = vld [vmem:[#allocation2 + $0x100] sm:$0xf]
  %v1994 = vld [vmem:[#allocation2 + $0x104] sm:$0xf]
  %1995 = vst.msk [vmem:[#allocation3 + $0x68] sm:$0xf] %vm1301, %v1993
  %1996 = vst.msk [vmem:[#allocation3 + $0x78] sm:$0xf] %vm1301, %v1994
  %v1997 = vld [vmem:[#allocation2 + $0x108] sm:$0xf]
  %v1998 = vld [vmem:[#allocation2 + $0x10c] sm:$0xf]
  %2001 = vrot.lane.b32.xlu0 %v1997, 32
  %v2002 = vpop.permute.xlu0 %2001
  %2003 = vrot.lane.b32.xlu0 %v1998, 32
  %v2004 = vpop.permute.xlu0 %2003
  %2007 = vst.msk [vmem:[#allocation3 + $0x68] sm:$0xf] %vm1444, %v2002
  %2008 = vst.msk [vmem:[#allocation3 + $0x78] sm:$0xf] %vm1444, %v2004
  %v2009 = vld [vmem:[#allocation2 + $0x110] sm:$0xf]
  %v2010 = vld [vmem:[#allocation2 + $0x114] sm:$0xf]
  %2013 = vrot.lane.b32.xlu0 %v2009, 64
  %v2014 = vpop.permute.xlu0 %2013
  %2015 = vrot.lane.b32.xlu0 %v2010, 64
  %v2016 = vpop.permute.xlu0 %2015
  %2019 = vst.msk [vmem:[#allocation3 + $0x68] sm:$0xf] %vm1457, %v2014
  %2020 = vst.msk [vmem:[#allocation3 + $0x78] sm:$0xf] %vm1457, %v2016
  %v2021 = vld [vmem:[#allocation2 + $0x118] sm:$0xf]
  %v2022 = vld [vmem:[#allocation2 + $0x11c] sm:$0xf]
  %2025 = vrot.lane.b32.xlu0 %v2021, 96
  %v2026 = vpop.permute.xlu0 %2025
  %2027 = vrot.lane.b32.xlu0 %v2022, 96
  %v2028 = vpop.permute.xlu0 %2027
  %2031 = vst.msk [vmem:[#allocation3 + $0x68] sm:$0xf] %vm1470, %v2026
  %2032 = vst.msk [vmem:[#allocation3 + $0x78] sm:$0xf] %vm1470, %v2028
  %v2033 = vld [vmem:[#allocation2 + $0x140] sm:$0xf]
  %v2034 = vld [vmem:[#allocation2 + $0x144] sm:$0xf]
  %2035 = vst.msk [vmem:[#allocation3 + $0x6c] sm:$0xf] %vm1301, %v2033
  %2036 = vst.msk [vmem:[#allocation3 + $0x7c] sm:$0xf] %vm1301, %v2034
  %v2037 = vld [vmem:[#allocation2 + $0x148] sm:$0xf]
  %v2038 = vld [vmem:[#allocation2 + $0x14c] sm:$0xf]
  %2041 = vrot.lane.b32.xlu0 %v2037, 32
  %v2042 = vpop.permute.xlu0 %2041
  %2043 = vrot.lane.b32.xlu0 %v2038, 32
  %v2044 = vpop.permute.xlu0 %2043
  %2047 = vst.msk [vmem:[#allocation3 + $0x6c] sm:$0xf] %vm1444, %v2042
  %2048 = vst.msk [vmem:[#allocation3 + $0x7c] sm:$0xf] %vm1444, %v2044
  %v2049 = vld [vmem:[#allocation2 + $0x150] sm:$0xf]
  %v2050 = vld [vmem:[#allocation2 + $0x154] sm:$0xf]
  %2053 = vrot.lane.b32.xlu0 %v2049, 64
  %v2054 = vpop.permute.xlu0 %2053
  %2055 = vrot.lane.b32.xlu0 %v2050, 64
  %v2056 = vpop.permute.xlu0 %2055
  %2059 = vst.msk [vmem:[#allocation3 + $0x6c] sm:$0xf] %vm1457, %v2054
  %2060 = vst.msk [vmem:[#allocation3 + $0x7c] sm:$0xf] %vm1457, %v2056
  %v2061 = vld [vmem:[#allocation2 + $0x158] sm:$0xf]
  %v2062 = vld [vmem:[#allocation2 + $0x15c] sm:$0xf]
  %2065 = vrot.lane.b32.xlu0 %v2061, 96
  %v2066 = vpop.permute.xlu0 %2065
  %2067 = vrot.lane.b32.xlu0 %v2062, 96
  %v2068 = vpop.permute.xlu0 %2067
  %2071 = vst.msk [vmem:[#allocation3 + $0x6c] sm:$0xf] %vm1470, %v2066
  %2072 = vst.msk [vmem:[#allocation3 + $0x7c] sm:$0xf] %vm1470, %v2068
  %v2073 = vld [vmem:[#allocation2 + $0x90] sm:$0xf]
  %v2074 = vld [vmem:[#allocation2 + $0x94] sm:$0xf]
  %2075 = vst.msk [vmem:[#allocation3 + $0x80] sm:$0xf] %vm1301, %v2073
  %2076 = vst.msk [vmem:[#allocation3 + $0x90] sm:$0xf] %vm1301, %v2074
  %v2077 = vld [vmem:[#allocation2 + $0x98] sm:$0xf]
  %v2078 = vld [vmem:[#allocation2 + $0x9c] sm:$0xf]
  %2081 = vrot.lane.b32.xlu0 %v2077, 32
  %v2082 = vpop.permute.xlu0 %2081
  %2083 = vrot.lane.b32.xlu0 %v2078, 32
  %v2084 = vpop.permute.xlu0 %2083
  %2087 = vst.msk [vmem:[#allocation3 + $0x80] sm:$0xf] %vm1444, %v2082
  %2088 = vst.msk [vmem:[#allocation3 + $0x90] sm:$0xf] %vm1444, %v2084
  %v2089 = vld [vmem:[#allocation2 + $0xa0] sm:$0xf]
  %v2090 = vld [vmem:[#allocation2 + $0xa4] sm:$0xf]
  %2093 = vrot.lane.b32.xlu0 %v2089, 64
  %v2094 = vpop.permute.xlu0 %2093
  %2095 = vrot.lane.b32.xlu0 %v2090, 64
  %v2096 = vpop.permute.xlu0 %2095
  %2099 = vst.msk [vmem:[#allocation3 + $0x80] sm:$0xf] %vm1457, %v2094
  %2100 = vst.msk [vmem:[#allocation3 + $0x90] sm:$0xf] %vm1457, %v2096
  %v2101 = vld [vmem:[#allocation2 + $0xa8] sm:$0xf]
  %v2102 = vld [vmem:[#allocation2 + $0xac] sm:$0xf]
  %2105 = vrot.lane.b32.xlu0 %v2101, 96
  %v2106 = vpop.permute.xlu0 %2105
  %2107 = vrot.lane.b32.xlu0 %v2102, 96
  %v2108 = vpop.permute.xlu0 %2107
  %2111 = vst.msk [vmem:[#allocation3 + $0x80] sm:$0xf] %vm1470, %v2106
  %2112 = vst.msk [vmem:[#allocation3 + $0x90] sm:$0xf] %vm1470, %v2108
  %v2113 = vld [vmem:[#allocation2 + $0xd0] sm:$0xf]
  %v2114 = vld [vmem:[#allocation2 + $0xd4] sm:$0xf]
  %2115 = vst.msk [vmem:[#allocation3 + $0x84] sm:$0xf] %vm1301, %v2113
  %2116 = vst.msk [vmem:[#allocation3 + $0x94] sm:$0xf] %vm1301, %v2114
  %v2117 = vld [vmem:[#allocation2 + $0xd8] sm:$0xf]
  %v2118 = vld [vmem:[#allocation2 + $0xdc] sm:$0xf]
  %2121 = vrot.lane.b32.xlu0 %v2117, 32
  %v2122 = vpop.permute.xlu0 %2121
  %2123 = vrot.lane.b32.xlu0 %v2118, 32
  %v2124 = vpop.permute.xlu0 %2123
  %2127 = vst.msk [vmem:[#allocation3 + $0x84] sm:$0xf] %vm1444, %v2122
  %2128 = vst.msk [vmem:[#allocation3 + $0x94] sm:$0xf] %vm1444, %v2124
  %v2129 = vld [vmem:[#allocation2 + $0xe0] sm:$0xf]
  %v2130 = vld [vmem:[#allocation2 + $0xe4] sm:$0xf]
  %2133 = vrot.lane.b32.xlu0 %v2129, 64
  %v2134 = vpop.permute.xlu0 %2133
  %2135 = vrot.lane.b32.xlu0 %v2130, 64
  %v2136 = vpop.permute.xlu0 %2135
  %2139 = vst.msk [vmem:[#allocation3 + $0x84] sm:$0xf] %vm1457, %v2134
  %2140 = vst.msk [vmem:[#allocation3 + $0x94] sm:$0xf] %vm1457, %v2136
  %v2141 = vld [vmem:[#allocation2 + $0xe8] sm:$0xf]
  %v2142 = vld [vmem:[#allocation2 + $0xec] sm:$0xf]
  %2145 = vrot.lane.b32.xlu0 %v2141, 96
  %v2146 = vpop.permute.xlu0 %2145
  %2147 = vrot.lane.b32.xlu0 %v2142, 96
  %v2148 = vpop.permute.xlu0 %2147
  %2151 = vst.msk [vmem:[#allocation3 + $0x84] sm:$0xf] %vm1470, %v2146
  %2152 = vst.msk [vmem:[#allocation3 + $0x94] sm:$0xf] %vm1470, %v2148
  %v2153 = vld [vmem:[#allocation2 + $0x110] sm:$0xf]
  %v2154 = vld [vmem:[#allocation2 + $0x114] sm:$0xf]
  %2155 = vst.msk [vmem:[#allocation3 + $0x88] sm:$0xf] %vm1301, %v2153
  %2156 = vst.msk [vmem:[#allocation3 + $0x98] sm:$0xf] %vm1301, %v2154
  %v2157 = vld [vmem:[#allocation2 + $0x118] sm:$0xf]
  %v2158 = vld [vmem:[#allocation2 + $0x11c] sm:$0xf]
  %2161 = vrot.lane.b32.xlu0 %v2157, 32
  %v2162 = vpop.permute.xlu0 %2161
  %2163 = vrot.lane.b32.xlu0 %v2158, 32
  %v2164 = vpop.permute.xlu0 %2163
  %2167 = vst.msk [vmem:[#allocation3 + $0x88] sm:$0xf] %vm1444, %v2162
  %2168 = vst.msk [vmem:[#allocation3 + $0x98] sm:$0xf] %vm1444, %v2164
  %v2169 = vld [vmem:[#allocation2 + $0x120] sm:$0xf]
  %v2170 = vld [vmem:[#allocation2 + $0x124] sm:$0xf]
  %2173 = vrot.lane.b32.xlu0 %v2169, 64
  %v2174 = vpop.permute.xlu0 %2173
  %2175 = vrot.lane.b32.xlu0 %v2170, 64
  %v2176 = vpop.permute.xlu0 %2175
  %2179 = vst.msk [vmem:[#allocation3 + $0x88] sm:$0xf] %vm1457, %v2174
  %2180 = vst.msk [vmem:[#allocation3 + $0x98] sm:$0xf] %vm1457, %v2176
  %v2181 = vld [vmem:[#allocation2 + $0x128] sm:$0xf]
  %v2182 = vld [vmem:[#allocation2 + $0x12c] sm:$0xf]
  %2185 = vrot.lane.b32.xlu0 %v2181, 96
  %v2186 = vpop.permute.xlu0 %2185
  %2187 = vrot.lane.b32.xlu0 %v2182, 96
  %v2188 = vpop.permute.xlu0 %2187
  %2191 = vst.msk [vmem:[#allocation3 + $0x88] sm:$0xf] %vm1470, %v2186
  %2192 = vst.msk [vmem:[#allocation3 + $0x98] sm:$0xf] %vm1470, %v2188
  %v2193 = vld [vmem:[#allocation2 + $0x150] sm:$0xf]
  %v2194 = vld [vmem:[#allocation2 + $0x154] sm:$0xf]
  %2195 = vst.msk [vmem:[#allocation3 + $0x8c] sm:$0xf] %vm1301, %v2193
  %2196 = vst.msk [vmem:[#allocation3 + $0x9c] sm:$0xf] %vm1301, %v2194
  %v2197 = vld [vmem:[#allocation2 + $0x158] sm:$0xf]
  %v2198 = vld [vmem:[#allocation2 + $0x15c] sm:$0xf]
  %2201 = vrot.lane.b32.xlu0 %v2197, 32
  %v2202 = vpop.permute.xlu0 %2201
  %2203 = vrot.lane.b32.xlu0 %v2198, 32
  %v2204 = vpop.permute.xlu0 %2203
  %2207 = vst.msk [vmem:[#allocation3 + $0x8c] sm:$0xf] %vm1444, %v2202
  %2208 = vst.msk [vmem:[#allocation3 + $0x9c] sm:$0xf] %vm1444, %v2204
  %v2209 = vld [vmem:[#allocation2 + $0x160] sm:$0xf]
  %v2210 = vld [vmem:[#allocation2 + $0x164] sm:$0xf]
  %2213 = vrot.lane.b32.xlu0 %v2209, 64
  %v2214 = vpop.permute.xlu0 %2213
  %2215 = vrot.lane.b32.xlu0 %v2210, 64
  %v2216 = vpop.permute.xlu0 %2215
  %2219 = vst.msk [vmem:[#allocation3 + $0x8c] sm:$0xf] %vm1457, %v2214
  %2220 = vst.msk [vmem:[#allocation3 + $0x9c] sm:$0xf] %vm1457, %v2216
  %v2221 = vld [vmem:[#allocation2 + $0x168] sm:$0xf]
  %v2222 = vld [vmem:[#allocation2 + $0x16c] sm:$0xf]
  %2225 = vrot.lane.b32.xlu0 %v2221, 96
  %v2226 = vpop.permute.xlu0 %2225
  %2227 = vrot.lane.b32.xlu0 %v2222, 96
  %v2228 = vpop.permute.xlu0 %2227
  %2231 = vst.msk [vmem:[#allocation3 + $0x8c] sm:$0xf] %vm1470, %v2226
  %2232 = vst.msk [vmem:[#allocation3 + $0x9c] sm:$0xf] %vm1470, %v2228
  %v2233 = vld [vmem:[#allocation2 + $0xa0] sm:$0xf]
  %v2234 = vld [vmem:[#allocation2 + $0xa4] sm:$0xf]
  %2235 = vst.msk [vmem:[#allocation3 + $0xa0] sm:$0xf] %vm1301, %v2233
  %2236 = vst.msk [vmem:[#allocation3 + $0xb0] sm:$0xf] %vm1301, %v2234
  %v2237 = vld [vmem:[#allocation2 + $0xa8] sm:$0xf]
  %v2238 = vld [vmem:[#allocation2 + $0xac] sm:$0xf]
  %2241 = vrot.lane.b32.xlu0 %v2237, 32
  %v2242 = vpop.permute.xlu0 %2241
  %2243 = vrot.lane.b32.xlu0 %v2238, 32
  %v2244 = vpop.permute.xlu0 %2243
  %2247 = vst.msk [vmem:[#allocation3 + $0xa0] sm:$0xf] %vm1444, %v2242
  %2248 = vst.msk [vmem:[#allocation3 + $0xb0] sm:$0xf] %vm1444, %v2244
  %v2249 = vld [vmem:[#allocation2 + $0xb0] sm:$0xf]
  %v2250 = vld [vmem:[#allocation2 + $0xb4] sm:$0xf]
  %2253 = vrot.lane.b32.xlu0 %v2249, 64
  %v2254 = vpop.permute.xlu0 %2253
  %2255 = vrot.lane.b32.xlu0 %v2250, 64
  %v2256 = vpop.permute.xlu0 %2255
  %2259 = vst.msk [vmem:[#allocation3 + $0xa0] sm:$0xf] %vm1457, %v2254
  %2260 = vst.msk [vmem:[#allocation3 + $0xb0] sm:$0xf] %vm1457, %v2256
  %v2261 = vld [vmem:[#allocation2 + $0xb8] sm:$0xf]
  %v2262 = vld [vmem:[#allocation2 + $0xbc] sm:$0xf]
  %2265 = vrot.lane.b32.xlu0 %v2261, 96
  %v2266 = vpop.permute.xlu0 %2265
  %2267 = vrot.lane.b32.xlu0 %v2262, 96
  %v2268 = vpop.permute.xlu0 %2267
  %2271 = vst.msk [vmem:[#allocation3 + $0xa0] sm:$0xf] %vm1470, %v2266
  %2272 = vst.msk [vmem:[#allocation3 + $0xb0] sm:$0xf] %vm1470, %v2268
  %v2273 = vld [vmem:[#allocation2 + $0xe0] sm:$0xf]
  %v2274 = vld [vmem:[#allocation2 + $0xe4] sm:$0xf]
  %2275 = vst.msk [vmem:[#allocation3 + $0xa4] sm:$0xf] %vm1301, %v2273
  %2276 = vst.msk [vmem:[#allocation3 + $0xb4] sm:$0xf] %vm1301, %v2274
  %v2277 = vld [vmem:[#allocation2 + $0xe8] sm:$0xf]
  %v2278 = vld [vmem:[#allocation2 + $0xec] sm:$0xf]
  %2281 = vrot.lane.b32.xlu0 %v2277, 32
  %v2282 = vpop.permute.xlu0 %2281
  %2283 = vrot.lane.b32.xlu0 %v2278, 32
  %v2284 = vpop.permute.xlu0 %2283
  %2287 = vst.msk [vmem:[#allocation3 + $0xa4] sm:$0xf] %vm1444, %v2282
  %2288 = vst.msk [vmem:[#allocation3 + $0xb4] sm:$0xf] %vm1444, %v2284
  %v2289 = vld [vmem:[#allocation2 + $0xf0] sm:$0xf]
  %v2290 = vld [vmem:[#allocation2 + $0xf4] sm:$0xf]
  %2293 = vrot.lane.b32.xlu0 %v2289, 64
  %v2294 = vpop.permute.xlu0 %2293
  %2295 = vrot.lane.b32.xlu0 %v2290, 64
  %v2296 = vpop.permute.xlu0 %2295
  %2299 = vst.msk [vmem:[#allocation3 + $0xa4] sm:$0xf] %vm1457, %v2294
  %2300 = vst.msk [vmem:[#allocation3 + $0xb4] sm:$0xf] %vm1457, %v2296
  %v2301 = vld [vmem:[#allocation2 + $0xf8] sm:$0xf]
  %v2302 = vld [vmem:[#allocation2 + $0xfc] sm:$0xf]
  %2305 = vrot.lane.b32.xlu0 %v2301, 96
  %v2306 = vpop.permute.xlu0 %2305
  %2307 = vrot.lane.b32.xlu0 %v2302, 96
  %v2308 = vpop.permute.xlu0 %2307
  %2311 = vst.msk [vmem:[#allocation3 + $0xa4] sm:$0xf] %vm1470, %v2306
  %2312 = vst.msk [vmem:[#allocation3 + $0xb4] sm:$0xf] %vm1470, %v2308
  %v2313 = vld [vmem:[#allocation2 + $0x120] sm:$0xf]
  %v2314 = vld [vmem:[#allocation2 + $0x124] sm:$0xf]
  %2315 = vst.msk [vmem:[#allocation3 + $0xa8] sm:$0xf] %vm1301, %v2313
  %2316 = vst.msk [vmem:[#allocation3 + $0xb8] sm:$0xf] %vm1301, %v2314
  %v2317 = vld [vmem:[#allocation2 + $0x128] sm:$0xf]
  %v2318 = vld [vmem:[#allocation2 + $0x12c] sm:$0xf]
  %2321 = vrot.lane.b32.xlu0 %v2317, 32
  %v2322 = vpop.permute.xlu0 %2321
  %2323 = vrot.lane.b32.xlu0 %v2318, 32
  %v2324 = vpop.permute.xlu0 %2323
  %2327 = vst.msk [vmem:[#allocation3 + $0xa8] sm:$0xf] %vm1444, %v2322
  %2328 = vst.msk [vmem:[#allocation3 + $0xb8] sm:$0xf] %vm1444, %v2324
  %v2329 = vld [vmem:[#allocation2 + $0x130] sm:$0xf]
  %v2330 = vld [vmem:[#allocation2 + $0x134] sm:$0xf]
  %2333 = vrot.lane.b32.xlu0 %v2329, 64
  %v2334 = vpop.permute.xlu0 %2333
  %2335 = vrot.lane.b32.xlu0 %v2330, 64
  %v2336 = vpop.permute.xlu0 %2335
  %2339 = vst.msk [vmem:[#allocation3 + $0xa8] sm:$0xf] %vm1457, %v2334
  %2340 = vst.msk [vmem:[#allocation3 + $0xb8] sm:$0xf] %vm1457, %v2336
  %v2341 = vld [vmem:[#allocation2 + $0x138] sm:$0xf]
  %v2342 = vld [vmem:[#allocation2 + $0x13c] sm:$0xf]
  %2345 = vrot.lane.b32.xlu0 %v2341, 96
  %v2346 = vpop.permute.xlu0 %2345
  %2347 = vrot.lane.b32.xlu0 %v2342, 96
  %v2348 = vpop.permute.xlu0 %2347
  %2351 = vst.msk [vmem:[#allocation3 + $0xa8] sm:$0xf] %vm1470, %v2346
  %2352 = vst.msk [vmem:[#allocation3 + $0xb8] sm:$0xf] %vm1470, %v2348
  %v2353 = vld [vmem:[#allocation2 + $0x160] sm:$0xf]
  %v2354 = vld [vmem:[#allocation2 + $0x164] sm:$0xf]
  %2355 = vst.msk [vmem:[#allocation3 + $0xac] sm:$0xf] %vm1301, %v2353
  %2356 = vst.msk [vmem:[#allocation3 + $0xbc] sm:$0xf] %vm1301, %v2354
  %v2357 = vld [vmem:[#allocation2 + $0x168] sm:$0xf]
  %v2358 = vld [vmem:[#allocation2 + $0x16c] sm:$0xf]
  %2361 = vrot.lane.b32.xlu0 %v2357, 32
  %v2362 = vpop.permute.xlu0 %2361
  %2363 = vrot.lane.b32.xlu0 %v2358, 32
  %v2364 = vpop.permute.xlu0 %2363
  %2367 = vst.msk [vmem:[#allocation3 + $0xac] sm:$0xf] %vm1444, %v2362
  %2368 = vst.msk [vmem:[#allocation3 + $0xbc] sm:$0xf] %vm1444, %v2364
  %v2369 = vld [vmem:[#allocation2 + $0x170] sm:$0xf]
  %v2370 = vld [vmem:[#allocation2 + $0x174] sm:$0xf]
  %2373 = vrot.lane.b32.xlu0 %v2369, 64
  %v2374 = vpop.permute.xlu0 %2373
  %2375 = vrot.lane.b32.xlu0 %v2370, 64
  %v2376 = vpop.permute.xlu0 %2375
  %2379 = vst.msk [vmem:[#allocation3 + $0xac] sm:$0xf] %vm1457, %v2374
  %2380 = vst.msk [vmem:[#allocation3 + $0xbc] sm:$0xf] %vm1457, %v2376
  %v2381 = vld [vmem:[#allocation2 + $0x178] sm:$0xf]
  %v2382 = vld [vmem:[#allocation2 + $0x17c] sm:$0xf]
  %2385 = vrot.lane.b32.xlu0 %v2381, 96
  %v2386 = vpop.permute.xlu0 %2385
  %2387 = vrot.lane.b32.xlu0 %v2382, 96
  %v2388 = vpop.permute.xlu0 %2387
  %2391 = vst.msk [vmem:[#allocation3 + $0xac] sm:$0xf] %vm1470, %v2386
  %2392 = vst.msk [vmem:[#allocation3 + $0xbc] sm:$0xf] %vm1470, %v2388
  %v2393 = vld [vmem:[#allocation2 + $0x100] sm:$0xf]
  %v2394 = vld [vmem:[#allocation2 + $0x104] sm:$0xf]
  %2395 = vst.msk [vmem:[#allocation3 + $0xc0] sm:$0xf] %vm1301, %v2393
  %2396 = vst.msk [vmem:[#allocation3 + $0xd0] sm:$0xf] %vm1301, %v2394
  %v2397 = vld [vmem:[#allocation2 + $0x108] sm:$0xf]
  %v2398 = vld [vmem:[#allocation2 + $0x10c] sm:$0xf]
  %2401 = vrot.lane.b32.xlu0 %v2397, 32
  %v2402 = vpop.permute.xlu0 %2401
  %2403 = vrot.lane.b32.xlu0 %v2398, 32
  %v2404 = vpop.permute.xlu0 %2403
  %2407 = vst.msk [vmem:[#allocation3 + $0xc0] sm:$0xf] %vm1444, %v2402
  %2408 = vst.msk [vmem:[#allocation3 + $0xd0] sm:$0xf] %vm1444, %v2404
  %v2409 = vld [vmem:[#allocation2 + $0x110] sm:$0xf]
  %v2410 = vld [vmem:[#allocation2 + $0x114] sm:$0xf]
  %2413 = vrot.lane.b32.xlu0 %v2409, 64
  %v2414 = vpop.permute.xlu0 %2413
  %2415 = vrot.lane.b32.xlu0 %v2410, 64
  %v2416 = vpop.permute.xlu0 %2415
  %2419 = vst.msk [vmem:[#allocation3 + $0xc0] sm:$0xf] %vm1457, %v2414
  %2420 = vst.msk [vmem:[#allocation3 + $0xd0] sm:$0xf] %vm1457, %v2416
  %v2421 = vld [vmem:[#allocation2 + $0x118] sm:$0xf]
  %v2422 = vld [vmem:[#allocation2 + $0x11c] sm:$0xf]
  %2425 = vrot.lane.b32.xlu0 %v2421, 96
  %v2426 = vpop.permute.xlu0 %2425
  %2427 = vrot.lane.b32.xlu0 %v2422, 96
  %v2428 = vpop.permute.xlu0 %2427
  %2431 = vst.msk [vmem:[#allocation3 + $0xc0] sm:$0xf] %vm1470, %v2426
  %2432 = vst.msk [vmem:[#allocation3 + $0xd0] sm:$0xf] %vm1470, %v2428
  %v2433 = vld [vmem:[#allocation2 + $0x140] sm:$0xf]
  %v2434 = vld [vmem:[#allocation2 + $0x144] sm:$0xf]
  %2435 = vst.msk [vmem:[#allocation3 + $0xc4] sm:$0xf] %vm1301, %v2433
  %2436 = vst.msk [vmem:[#allocation3 + $0xd4] sm:$0xf] %vm1301, %v2434
  %v2437 = vld [vmem:[#allocation2 + $0x148] sm:$0xf]
  %v2438 = vld [vmem:[#allocation2 + $0x14c] sm:$0xf]
  %2441 = vrot.lane.b32.xlu0 %v2437, 32
  %v2442 = vpop.permute.xlu0 %2441
  %2443 = vrot.lane.b32.xlu0 %v2438, 32
  %v2444 = vpop.permute.xlu0 %2443
  %2447 = vst.msk [vmem:[#allocation3 + $0xc4] sm:$0xf] %vm1444, %v2442
  %2448 = vst.msk [vmem:[#allocation3 + $0xd4] sm:$0xf] %vm1444, %v2444
  %v2449 = vld [vmem:[#allocation2 + $0x150] sm:$0xf]
  %v2450 = vld [vmem:[#allocation2 + $0x154] sm:$0xf]
  %2453 = vrot.lane.b32.xlu0 %v2449, 64
  %v2454 = vpop.permute.xlu0 %2453
  %2455 = vrot.lane.b32.xlu0 %v2450, 64
  %v2456 = vpop.permute.xlu0 %2455
  %2459 = vst.msk [vmem:[#allocation3 + $0xc4] sm:$0xf] %vm1457, %v2454
  %2460 = vst.msk [vmem:[#allocation3 + $0xd4] sm:$0xf] %vm1457, %v2456
  %v2461 = vld [vmem:[#allocation2 + $0x158] sm:$0xf]
  %v2462 = vld [vmem:[#allocation2 + $0x15c] sm:$0xf]
  %2465 = vrot.lane.b32.xlu0 %v2461, 96
  %v2466 = vpop.permute.xlu0 %2465
  %2467 = vrot.lane.b32.xlu0 %v2462, 96
  %v2468 = vpop.permute.xlu0 %2467
  %2471 = vst.msk [vmem:[#allocation3 + $0xc4] sm:$0xf] %vm1470, %v2466
  %2472 = vst.msk [vmem:[#allocation3 + $0xd4] sm:$0xf] %vm1470, %v2468
  %v2473 = vld [vmem:[#allocation2 + $0x180] sm:$0xf]
  %v2474 = vld [vmem:[#allocation2 + $0x184] sm:$0xf]
  %2475 = vst.msk [vmem:[#allocation3 + $0xc8] sm:$0xf] %vm1301, %v2473
  %2476 = vst.msk [vmem:[#allocation3 + $0xd8] sm:$0xf] %vm1301, %v2474
  %v2477 = vld [vmem:[#allocation2 + $0x188] sm:$0xf]
  %v2478 = vld [vmem:[#allocation2 + $0x18c] sm:$0xf]
  %2481 = vrot.lane.b32.xlu0 %v2477, 32
  %v2482 = vpop.permute.xlu0 %2481
  %2483 = vrot.lane.b32.xlu0 %v2478, 32
  %v2484 = vpop.permute.xlu0 %2483
  %2487 = vst.msk [vmem:[#allocation3 + $0xc8] sm:$0xf] %vm1444, %v2482
  %2488 = vst.msk [vmem:[#allocation3 + $0xd8] sm:$0xf] %vm1444, %v2484
  %v2489 = vld [vmem:[#allocation2 + $0x190] sm:$0xf]
  %v2490 = vld [vmem:[#allocation2 + $0x194] sm:$0xf]
  %2493 = vrot.lane.b32.xlu0 %v2489, 64
  %v2494 = vpop.permute.xlu0 %2493
  %2495 = vrot.lane.b32.xlu0 %v2490, 64
  %v2496 = vpop.permute.xlu0 %2495
  %2499 = vst.msk [vmem:[#allocation3 + $0xc8] sm:$0xf] %vm1457, %v2494
  %2500 = vst.msk [vmem:[#allocation3 + $0xd8] sm:$0xf] %vm1457, %v2496
  %v2501 = vld [vmem:[#allocation2 + $0x198] sm:$0xf]
  %v2502 = vld [vmem:[#allocation2 + $0x19c] sm:$0xf]
  %2505 = vrot.lane.b32.xlu0 %v2501, 96
  %v2506 = vpop.permute.xlu0 %2505
  %2507 = vrot.lane.b32.xlu0 %v2502, 96
  %v2508 = vpop.permute.xlu0 %2507
  %2511 = vst.msk [vmem:[#allocation3 + $0xc8] sm:$0xf] %vm1470, %v2506
  %2512 = vst.msk [vmem:[#allocation3 + $0xd8] sm:$0xf] %vm1470, %v2508
  %v2513 = vld [vmem:[#allocation2 + $0x1c0] sm:$0xf]
  %v2514 = vld [vmem:[#allocation2 + $0x1c4] sm:$0xf]
  %2515 = vst.msk [vmem:[#allocation3 + $0xcc] sm:$0xf] %vm1301, %v2513
  %2516 = vst.msk [vmem:[#allocation3 + $0xdc] sm:$0xf] %vm1301, %v2514
  %v2517 = vld [vmem:[#allocation2 + $0x1c8] sm:$0xf]
  %v2518 = vld [vmem:[#allocation2 + $0x1cc] sm:$0xf]
  %2521 = vrot.lane.b32.xlu0 %v2517, 32
  %v2522 = vpop.permute.xlu0 %2521
  %2523 = vrot.lane.b32.xlu0 %v2518, 32
  %v2524 = vpop.permute.xlu0 %2523
  %2527 = vst.msk [vmem:[#allocation3 + $0xcc] sm:$0xf] %vm1444, %v2522
  %2528 = vst.msk [vmem:[#allocation3 + $0xdc] sm:$0xf] %vm1444, %v2524
  %v2529 = vld [vmem:[#allocation2 + $0x1d0] sm:$0xf]
  %v2530 = vld [vmem:[#allocation2 + $0x1d4] sm:$0xf]
  %2533 = vrot.lane.b32.xlu0 %v2529, 64
  %v2534 = vpop.permute.xlu0 %2533
  %2535 = vrot.lane.b32.xlu0 %v2530, 64
  %v2536 = vpop.permute.xlu0 %2535
  %2539 = vst.msk [vmem:[#allocation3 + $0xcc] sm:$0xf] %vm1457, %v2534
  %2540 = vst.msk [vmem:[#allocation3 + $0xdc] sm:$0xf] %vm1457, %v2536
  %v2541 = vld [vmem:[#allocation2 + $0x1d8] sm:$0xf]
  %v2542 = vld [vmem:[#allocation2 + $0x1dc] sm:$0xf]
  %2545 = vrot.lane.b32.xlu0 %v2541, 96
  %v2546 = vpop.permute.xlu0 %2545
  %2547 = vrot.lane.b32.xlu0 %v2542, 96
  %v2548 = vpop.permute.xlu0 %2547
  %2551 = vst.msk [vmem:[#allocation3 + $0xcc] sm:$0xf] %vm1470, %v2546
  %2552 = vst.msk [vmem:[#allocation3 + $0xdc] sm:$0xf] %vm1470, %v2548
  %v2553 = vld [vmem:[#allocation2 + $0x110] sm:$0xf]
  %v2554 = vld [vmem:[#allocation2 + $0x114] sm:$0xf]
  %2555 = vst.msk [vmem:[#allocation3 + $0xe0] sm:$0xf] %vm1301, %v2553
  %2556 = vst.msk [vmem:[#allocation3 + $0xf0] sm:$0xf] %vm1301, %v2554
  %v2557 = vld [vmem:[#allocation2 + $0x118] sm:$0xf]
  %v2558 = vld [vmem:[#allocation2 + $0x11c] sm:$0xf]
  %2561 = vrot.lane.b32.xlu0 %v2557, 32
  %v2562 = vpop.permute.xlu0 %2561
  %2563 = vrot.lane.b32.xlu0 %v2558, 32
  %v2564 = vpop.permute.xlu0 %2563
  %2567 = vst.msk [vmem:[#allocation3 + $0xe0] sm:$0xf] %vm1444, %v2562
  %2568 = vst.msk [vmem:[#allocation3 + $0xf0] sm:$0xf] %vm1444, %v2564
  %v2569 = vld [vmem:[#allocation2 + $0x120] sm:$0xf]
  %v2570 = vld [vmem:[#allocation2 + $0x124] sm:$0xf]
  %2573 = vrot.lane.b32.xlu0 %v2569, 64
  %v2574 = vpop.permute.xlu0 %2573
  %2575 = vrot.lane.b32.xlu0 %v2570, 64
  %v2576 = vpop.permute.xlu0 %2575
  %2579 = vst.msk [vmem:[#allocation3 + $0xe0] sm:$0xf] %vm1457, %v2574
  %2580 = vst.msk [vmem:[#allocation3 + $0xf0] sm:$0xf] %vm1457, %v2576
  %v2581 = vld [vmem:[#allocation2 + $0x128] sm:$0xf]
  %v2582 = vld [vmem:[#allocation2 + $0x12c] sm:$0xf]
  %2585 = vrot.lane.b32.xlu0 %v2581, 96
  %v2586 = vpop.permute.xlu0 %2585
  %2587 = vrot.lane.b32.xlu0 %v2582, 96
  %v2588 = vpop.permute.xlu0 %2587
  %2591 = vst.msk [vmem:[#allocation3 + $0xe0] sm:$0xf] %vm1470, %v2586
  %2592 = vst.msk [vmem:[#allocation3 + $0xf0] sm:$0xf] %vm1470, %v2588
  %v2593 = vld [vmem:[#allocation2 + $0x150] sm:$0xf]
  %v2594 = vld [vmem:[#allocation2 + $0x154] sm:$0xf]
  %2595 = vst.msk [vmem:[#allocation3 + $0xe4] sm:$0xf] %vm1301, %v2593
  %2596 = vst.msk [vmem:[#allocation3 + $0xf4] sm:$0xf] %vm1301, %v2594
  %v2597 = vld [vmem:[#allocation2 + $0x158] sm:$0xf]
  %v2598 = vld [vmem:[#allocation2 + $0x15c] sm:$0xf]
  %2601 = vrot.lane.b32.xlu0 %v2597, 32
  %v2602 = vpop.permute.xlu0 %2601
  %2603 = vrot.lane.b32.xlu0 %v2598, 32
  %v2604 = vpop.permute.xlu0 %2603
  %2607 = vst.msk [vmem:[#allocation3 + $0xe4] sm:$0xf] %vm1444, %v2602
  %2608 = vst.msk [vmem:[#allocation3 + $0xf4] sm:$0xf] %vm1444, %v2604
  %v2609 = vld [vmem:[#allocation2 + $0x160] sm:$0xf]
  %v2610 = vld [vmem:[#allocation2 + $0x164] sm:$0xf]
  %2613 = vrot.lane.b32.xlu0 %v2609, 64
  %v2614 = vpop.permute.xlu0 %2613
  %2615 = vrot.lane.b32.xlu0 %v2610, 64
  %v2616 = vpop.permute.xlu0 %2615
  %2619 = vst.msk [vmem:[#allocation3 + $0xe4] sm:$0xf] %vm1457, %v2614
  %2620 = vst.msk [vmem:[#allocation3 + $0xf4] sm:$0xf] %vm1457, %v2616
  %v2621 = vld [vmem:[#allocation2 + $0x168] sm:$0xf]
  %v2622 = vld [vmem:[#allocation2 + $0x16c] sm:$0xf]
  %2625 = vrot.lane.b32.xlu0 %v2621, 96
  %v2626 = vpop.permute.xlu0 %2625
  %2627 = vrot.lane.b32.xlu0 %v2622, 96
  %v2628 = vpop.permute.xlu0 %2627
  %2631 = vst.msk [vmem:[#allocation3 + $0xe4] sm:$0xf] %vm1470, %v2626
  %2632 = vst.msk [vmem:[#allocation3 + $0xf4] sm:$0xf] %vm1470, %v2628
  %v2633 = vld [vmem:[#allocation2 + $0x190] sm:$0xf]
  %v2634 = vld [vmem:[#allocation2 + $0x194] sm:$0xf]
  %2635 = vst.msk [vmem:[#allocation3 + $0xe8] sm:$0xf] %vm1301, %v2633
  %2636 = vst.msk [vmem:[#allocation3 + $0xf8] sm:$0xf] %vm1301, %v2634
  %v2637 = vld [vmem:[#allocation2 + $0x198] sm:$0xf]
  %v2638 = vld [vmem:[#allocation2 + $0x19c] sm:$0xf]
  %2641 = vrot.lane.b32.xlu0 %v2637, 32
  %v2642 = vpop.permute.xlu0 %2641
  %2643 = vrot.lane.b32.xlu0 %v2638, 32
  %v2644 = vpop.permute.xlu0 %2643
  %2647 = vst.msk [vmem:[#allocation3 + $0xe8] sm:$0xf] %vm1444, %v2642
  %2648 = vst.msk [vmem:[#allocation3 + $0xf8] sm:$0xf] %vm1444, %v2644
  %v2649 = vld [vmem:[#allocation2 + $0x1a0] sm:$0xf]
  %v2650 = vld [vmem:[#allocation2 + $0x1a4] sm:$0xf]
  %2653 = vrot.lane.b32.xlu0 %v2649, 64
  %v2654 = vpop.permute.xlu0 %2653
  %2655 = vrot.lane.b32.xlu0 %v2650, 64
  %v2656 = vpop.permute.xlu0 %2655
  %2659 = vst.msk [vmem:[#allocation3 + $0xe8] sm:$0xf] %vm1457, %v2654
  %2660 = vst.msk [vmem:[#allocation3 + $0xf8] sm:$0xf] %vm1457, %v2656
  %v2661 = vld [vmem:[#allocation2 + $0x1a8] sm:$0xf]
  %v2662 = vld [vmem:[#allocation2 + $0x1ac] sm:$0xf]
  %2665 = vrot.lane.b32.xlu0 %v2661, 96
  %v2666 = vpop.permute.xlu0 %2665
  %2667 = vrot.lane.b32.xlu0 %v2662, 96
  %v2668 = vpop.permute.xlu0 %2667
  %2671 = vst.msk [vmem:[#allocation3 + $0xe8] sm:$0xf] %vm1470, %v2666
  %2672 = vst.msk [vmem:[#allocation3 + $0xf8] sm:$0xf] %vm1470, %v2668
  %v2673 = vld [vmem:[#allocation2 + $0x1d0] sm:$0xf]
  %v2674 = vld [vmem:[#allocation2 + $0x1d4] sm:$0xf]
  %2675 = vst.msk [vmem:[#allocation3 + $0xec] sm:$0xf] %vm1301, %v2673
  %2676 = vst.msk [vmem:[#allocation3 + $0xfc] sm:$0xf] %vm1301, %v2674
  %v2677 = vld [vmem:[#allocation2 + $0x1d8] sm:$0xf]
  %v2678 = vld [vmem:[#allocation2 + $0x1dc] sm:$0xf]
  %2681 = vrot.lane.b32.xlu0 %v2677, 32
  %v2682 = vpop.permute.xlu0 %2681
  %2683 = vrot.lane.b32.xlu0 %v2678, 32
  %v2684 = vpop.permute.xlu0 %2683
  %2687 = vst.msk [vmem:[#allocation3 + $0xec] sm:$0xf] %vm1444, %v2682
  %2688 = vst.msk [vmem:[#allocation3 + $0xfc] sm:$0xf] %vm1444, %v2684
  %v2689 = vld [vmem:[#allocation2 + $0x1e0] sm:$0xf]
  %v2690 = vld [vmem:[#allocation2 + $0x1e4] sm:$0xf]
  %2693 = vrot.lane.b32.xlu0 %v2689, 64
  %v2694 = vpop.permute.xlu0 %2693
  %2695 = vrot.lane.b32.xlu0 %v2690, 64
  %v2696 = vpop.permute.xlu0 %2695
  %2699 = vst.msk [vmem:[#allocation3 + $0xec] sm:$0xf] %vm1457, %v2694
  %2700 = vst.msk [vmem:[#allocation3 + $0xfc] sm:$0xf] %vm1457, %v2696
  %v2701 = vld [vmem:[#allocation2 + $0x1e8] sm:$0xf]
  %v2702 = vld [vmem:[#allocation2 + $0x1ec] sm:$0xf]
  %2705 = vrot.lane.b32.xlu0 %v2701, 96
  %v2706 = vpop.permute.xlu0 %2705
  %2707 = vrot.lane.b32.xlu0 %v2702, 96
  %v2708 = vpop.permute.xlu0 %2707
  %2711 = vst.msk [vmem:[#allocation3 + $0xec] sm:$0xf] %vm1470, %v2706
  %2712 = vst.msk [vmem:[#allocation3 + $0xfc] sm:$0xf] %vm1470, %v2708
  %v2713 = vld [vmem:[#allocation2 + $0x120] sm:$0xf]
  %v2714 = vld [vmem:[#allocation2 + $0x124] sm:$0xf]
  %2715 = vst.msk [vmem:[#allocation3 + $0x100] sm:$0xf] %vm1301, %v2713
  %2716 = vst.msk [vmem:[#allocation3 + $0x110] sm:$0xf] %vm1301, %v2714
  %v2717 = vld [vmem:[#allocation2 + $0x128] sm:$0xf]
  %v2718 = vld [vmem:[#allocation2 + $0x12c] sm:$0xf]
  %2721 = vrot.lane.b32.xlu0 %v2717, 32
  %v2722 = vpop.permute.xlu0 %2721
  %2723 = vrot.lane.b32.xlu0 %v2718, 32
  %v2724 = vpop.permute.xlu0 %2723
  %2727 = vst.msk [vmem:[#allocation3 + $0x100] sm:$0xf] %vm1444, %v2722
  %2728 = vst.msk [vmem:[#allocation3 + $0x110] sm:$0xf] %vm1444, %v2724
  %v2729 = vld [vmem:[#allocation2 + $0x130] sm:$0xf]
  %v2730 = vld [vmem:[#allocation2 + $0x134] sm:$0xf]
  %2733 = vrot.lane.b32.xlu0 %v2729, 64
  %v2734 = vpop.permute.xlu0 %2733
  %2735 = vrot.lane.b32.xlu0 %v2730, 64
  %v2736 = vpop.permute.xlu0 %2735
  %2739 = vst.msk [vmem:[#allocation3 + $0x100] sm:$0xf] %vm1457, %v2734
  %2740 = vst.msk [vmem:[#allocation3 + $0x110] sm:$0xf] %vm1457, %v2736
  %v2741 = vld [vmem:[#allocation2 + $0x138] sm:$0xf]
  %v2742 = vld [vmem:[#allocation2 + $0x13c] sm:$0xf]
  %2745 = vrot.lane.b32.xlu0 %v2741, 96
  %v2746 = vpop.permute.xlu0 %2745
  %2747 = vrot.lane.b32.xlu0 %v2742, 96
  %v2748 = vpop.permute.xlu0 %2747
  %2751 = vst.msk [vmem:[#allocation3 + $0x100] sm:$0xf] %vm1470, %v2746
  %2752 = vst.msk [vmem:[#allocation3 + $0x110] sm:$0xf] %vm1470, %v2748
  %v2753 = vld [vmem:[#allocation2 + $0x160] sm:$0xf]
  %v2754 = vld [vmem:[#allocation2 + $0x164] sm:$0xf]
  %2755 = vst.msk [vmem:[#allocation3 + $0x104] sm:$0xf] %vm1301, %v2753
  %2756 = vst.msk [vmem:[#allocation3 + $0x114] sm:$0xf] %vm1301, %v2754
  %v2757 = vld [vmem:[#allocation2 + $0x168] sm:$0xf]
  %v2758 = vld [vmem:[#allocation2 + $0x16c] sm:$0xf]
  %2761 = vrot.lane.b32.xlu0 %v2757, 32
  %v2762 = vpop.permute.xlu0 %2761
  %2763 = vrot.lane.b32.xlu0 %v2758, 32
  %v2764 = vpop.permute.xlu0 %2763
  %2767 = vst.msk [vmem:[#allocation3 + $0x104] sm:$0xf] %vm1444, %v2762
  %2768 = vst.msk [vmem:[#allocation3 + $0x114] sm:$0xf] %vm1444, %v2764
  %v2769 = vld [vmem:[#allocation2 + $0x170] sm:$0xf]
  %v2770 = vld [vmem:[#allocation2 + $0x174] sm:$0xf]
  %2773 = vrot.lane.b32.xlu0 %v2769, 64
  %v2774 = vpop.permute.xlu0 %2773
  %2775 = vrot.lane.b32.xlu0 %v2770, 64
  %v2776 = vpop.permute.xlu0 %2775
  %2779 = vst.msk [vmem:[#allocation3 + $0x104] sm:$0xf] %vm1457, %v2774
  %2780 = vst.msk [vmem:[#allocation3 + $0x114] sm:$0xf] %vm1457, %v2776
  %v2781 = vld [vmem:[#allocation2 + $0x178] sm:$0xf]
  %v2782 = vld [vmem:[#allocation2 + $0x17c] sm:$0xf]
  %2785 = vrot.lane.b32.xlu0 %v2781, 96
  %v2786 = vpop.permute.xlu0 %2785
  %2787 = vrot.lane.b32.xlu0 %v2782, 96
  %v2788 = vpop.permute.xlu0 %2787
  %2791 = vst.msk [vmem:[#allocation3 + $0x104] sm:$0xf] %vm1470, %v2786
  %2792 = vst.msk [vmem:[#allocation3 + $0x114] sm:$0xf] %vm1470, %v2788
  %v2793 = vld [vmem:[#allocation2 + $0x1a0] sm:$0xf]
  %v2794 = vld [vmem:[#allocation2 + $0x1a4] sm:$0xf]
  %2795 = vst.msk [vmem:[#allocation3 + $0x108] sm:$0xf] %vm1301, %v2793
  %2796 = vst.msk [vmem:[#allocation3 + $0x118] sm:$0xf] %vm1301, %v2794
  %v2797 = vld [vmem:[#allocation2 + $0x1a8] sm:$0xf]
  %v2798 = vld [vmem:[#allocation2 + $0x1ac] sm:$0xf]
  %2801 = vrot.lane.b32.xlu0 %v2797, 32
  %v2802 = vpop.permute.xlu0 %2801
  %2803 = vrot.lane.b32.xlu0 %v2798, 32
  %v2804 = vpop.permute.xlu0 %2803
  %2807 = vst.msk [vmem:[#allocation3 + $0x108] sm:$0xf] %vm1444, %v2802
  %2808 = vst.msk [vmem:[#allocation3 + $0x118] sm:$0xf] %vm1444, %v2804
  %v2809 = vld [vmem:[#allocation2 + $0x1b0] sm:$0xf]
  %v2810 = vld [vmem:[#allocation2 + $0x1b4] sm:$0xf]
  %2813 = vrot.lane.b32.xlu0 %v2809, 64
  %v2814 = vpop.permute.xlu0 %2813
  %2815 = vrot.lane.b32.xlu0 %v2810, 64
  %v2816 = vpop.permute.xlu0 %2815
  %2819 = vst.msk [vmem:[#allocation3 + $0x108] sm:$0xf] %vm1457, %v2814
  %2820 = vst.msk [vmem:[#allocation3 + $0x118] sm:$0xf] %vm1457, %v2816
  %v2821 = vld [vmem:[#allocation2 + $0x1b8] sm:$0xf]
  %v2822 = vld [vmem:[#allocation2 + $0x1bc] sm:$0xf]
  %2825 = vrot.lane.b32.xlu0 %v2821, 96
  %v2826 = vpop.permute.xlu0 %2825
  %2827 = vrot.lane.b32.xlu0 %v2822, 96
  %v2828 = vpop.permute.xlu0 %2827
  %2831 = vst.msk [vmem:[#allocation3 + $0x108] sm:$0xf] %vm1470, %v2826
  %2832 = vst.msk [vmem:[#allocation3 + $0x118] sm:$0xf] %vm1470, %v2828
  %v2833 = vld [vmem:[#allocation2 + $0x1e0] sm:$0xf]
  %v2834 = vld [vmem:[#allocation2 + $0x1e4] sm:$0xf]
  %2835 = vst.msk [vmem:[#allocation3 + $0x10c] sm:$0xf] %vm1301, %v2833
  %2836 = vst.msk [vmem:[#allocation3 + $0x11c] sm:$0xf] %vm1301, %v2834
  %v2837 = vld [vmem:[#allocation2 + $0x1e8] sm:$0xf]
  %v2838 = vld [vmem:[#allocation2 + $0x1ec] sm:$0xf]
  %2841 = vrot.lane.b32.xlu0 %v2837, 32
  %v2842 = vpop.permute.xlu0 %2841
  %2843 = vrot.lane.b32.xlu0 %v2838, 32
  %v2844 = vpop.permute.xlu0 %2843
  %2847 = vst.msk [vmem:[#allocation3 + $0x10c] sm:$0xf] %vm1444, %v2842
  %2848 = vst.msk [vmem:[#allocation3 + $0x11c] sm:$0xf] %vm1444, %v2844
  %v2849 = vld [vmem:[#allocation2 + $0x1f0] sm:$0xf]
  %v2850 = vld [vmem:[#allocation2 + $0x1f4] sm:$0xf]
  %2853 = vrot.lane.b32.xlu0 %v2849, 64
  %v2854 = vpop.permute.xlu0 %2853
  %2855 = vrot.lane.b32.xlu0 %v2850, 64
  %v2856 = vpop.permute.xlu0 %2855
  %2859 = vst.msk [vmem:[#allocation3 + $0x10c] sm:$0xf] %vm1457, %v2854
  %2860 = vst.msk [vmem:[#allocation3 + $0x11c] sm:$0xf] %vm1457, %v2856
  %v2861 = vld [vmem:[#allocation2 + $0x1f8] sm:$0xf]
  %v2862 = vld [vmem:[#allocation2 + $0x1fc] sm:$0xf]
  %2865 = vrot.lane.b32.xlu0 %v2861, 96
  %v2866 = vpop.permute.xlu0 %2865
  %2867 = vrot.lane.b32.xlu0 %v2862, 96
  %v2868 = vpop.permute.xlu0 %2867
  %2871 = vst.msk [vmem:[#allocation3 + $0x10c] sm:$0xf] %vm1470, %v2866
  %2872 = vst.msk [vmem:[#allocation3 + $0x11c] sm:$0xf] %vm1470, %v2868
  %v2873 = vld [vmem:[#allocation3] sm:$0xff]
  %v2874 = vld [vmem:[#allocation3 + $0x8] sm:$0xff]
  %v2875 = vld [vmem:[#allocation3 + $0x10] sm:$0xff]
  %v2876 = vld [vmem:[#allocation3 + $0x18] sm:$0xff]
  %v2877 = vld [vmem:[#allocation3 + $0x20] sm:$0xff]
  %v2878 = vld [vmem:[#allocation3 + $0x28] sm:$0xff]
  %v2879 = vld [vmem:[#allocation3 + $0x30] sm:$0xff]
  %v2880 = vld [vmem:[#allocation3 + $0x38] sm:$0xff]
  %v2881 = vld [vmem:[#allocation3 + $0x40] sm:$0xff]
  %v2882 = vld [vmem:[#allocation3 + $0x48] sm:$0xff]
  %v2883 = vld [vmem:[#allocation3 + $0x50] sm:$0xff]
  %v2884 = vld [vmem:[#allocation3 + $0x58] sm:$0xff]
  %v2885 = vld [vmem:[#allocation3 + $0x60] sm:$0xff]
  %v2886 = vld [vmem:[#allocation3 + $0x68] sm:$0xff]
  %v2887 = vld [vmem:[#allocation3 + $0x70] sm:$0xff]
  %v2888 = vld [vmem:[#allocation3 + $0x78] sm:$0xff]
  %v2889 = vld [vmem:[#allocation3 + $0x80] sm:$0xff]
  %v2890 = vld [vmem:[#allocation3 + $0x88] sm:$0xff]
  %v2891 = vld [vmem:[#allocation3 + $0x90] sm:$0xff]
  %v2892 = vld [vmem:[#allocation3 + $0x98] sm:$0xff]
  %v2893 = vld [vmem:[#allocation3 + $0xa0] sm:$0xff]
  %v2894 = vld [vmem:[#allocation3 + $0xa8] sm:$0xff]
  %v2895 = vld [vmem:[#allocation3 + $0xb0] sm:$0xff]
  %v2896 = vld [vmem:[#allocation3 + $0xb8] sm:$0xff]
  %v2897 = vld [vmem:[#allocation3 + $0xc0] sm:$0xff]
  %v2898 = vld [vmem:[#allocation3 + $0xc8] sm:$0xff]
  %v2899 = vld [vmem:[#allocation3 + $0xd0] sm:$0xff]
  %v2900 = vld [vmem:[#allocation3 + $0xd8] sm:$0xff]
  %v2901 = vld [vmem:[#allocation3 + $0xe0] sm:$0xff]
  %v2902 = vld [vmem:[#allocation3 + $0xe8] sm:$0xff]
  %v2903 = vld [vmem:[#allocation3 + $0xf0] sm:$0xff]
  %v2904 = vld [vmem:[#allocation3 + $0xf8] sm:$0xff]
  %v2905 = vld [vmem:[#allocation3 + $0x100] sm:$0xff]
  %v2906 = vld [vmem:[#allocation3 + $0x108] sm:$0xff]
  %v2907 = vld [vmem:[#allocation3 + $0x110] sm:$0xff]
  %v2908 = vld [vmem:[#allocation3 + $0x118] sm:$0xff]
  %v2909 = vld [vmem:[%s3] sm:$0xf]
  %v2910 = vld [vmem:[%s3 + $0x4] sm:$0xf]
  %v2911 = vld [vmem:[%s3 + $0x8] sm:$0xf]
  %v2912 = vld [vmem:[%s3 + $0xc] sm:$0xf]
  %v2913 = vld [vmem:[%s3 + $0x10] sm:$0xf]
  %v2914 = vld [vmem:[%s3 + $0x14] sm:$0xf]
  %v2915 = vld [vmem:[%s3 + $0x18] sm:$0xf]
  %v2916 = vld [vmem:[%s3 + $0x1c] sm:$0xf]
  %v2917 = vld [vmem:[%s3 + $0x20] sm:$0xf]
  %v2918 = vld [vmem:[%s3 + $0x24] sm:$0xf]
  %v2919 = vld [vmem:[%s3 + $0x28] sm:$0xf]
  %v2920 = vld [vmem:[%s3 + $0x2c] sm:$0xf]
  %v2921 = vld [vmem:[%s3 + $0x30] sm:$0xf]
  %v2922 = vld [vmem:[%s3 + $0x34] sm:$0xf]
  %v2923 = vld [vmem:[%s3 + $0x38] sm:$0xf]
  %v2924 = vld [vmem:[%s3 + $0x3c] sm:$0xf]
  %v2925 = vld [vmem:[%s3 + $0x40] sm:$0xf]
  %v2926 = vld [vmem:[%s3 + $0x44] sm:$0xf]
  %v2927 = vld [vmem:[%s3 + $0x48] sm:$0xf]
  %v2928 = vld [vmem:[%s3 + $0x4c] sm:$0xf]
  %v2929 = vld [vmem:[%s3 + $0x50] sm:$0xf]
  %v2930 = vld [vmem:[%s3 + $0x54] sm:$0xf]
  %v2931 = vld [vmem:[%s3 + $0x58] sm:$0xf]
  %v2932 = vld [vmem:[%s3 + $0x5c] sm:$0xf]
  %v2933 = vld [vmem:[%s3 + $0x60] sm:$0xf]
  %v2934 = vld [vmem:[%s3 + $0x64] sm:$0xf]
  %v2935 = vld [vmem:[%s3 + $0x68] sm:$0xf]
  %v2936 = vld [vmem:[%s3 + $0x6c] sm:$0xf]
  %v2937 = vld [vmem:[%s3 + $0x70] sm:$0xf]
  %v2938 = vld [vmem:[%s3 + $0x74] sm:$0xf]
  %v2939 = vld [vmem:[%s3 + $0x78] sm:$0xf]
  %v2940 = vld [vmem:[%s3 + $0x7c] sm:$0xf]
  %v2941 = vld [vmem:[%s3 + $0x80] sm:$0xf]
  %v2942 = vld [vmem:[%s3 + $0x84] sm:$0xf]
  %v2943 = vld [vmem:[%s3 + $0x88] sm:$0xf]
  %v2944 = vld [vmem:[%s3 + $0x8c] sm:$0xf]
  %v2945 = vld [vmem:[%s3 + $0x90] sm:$0xf]
  %v2946 = vld [vmem:[%s3 + $0x94] sm:$0xf]
  %v2947 = vld [vmem:[%s3 + $0x98] sm:$0xf]
  %v2948 = vld [vmem:[%s3 + $0x9c] sm:$0xf]
  %v2949 = vld [vmem:[%s3 + $0xa0] sm:$0xf]
  %v2950 = vld [vmem:[%s3 + $0xa4] sm:$0xf]
  %v2951 = vld [vmem:[%s3 + $0xa8] sm:$0xf]
  %v2952 = vld [vmem:[%s3 + $0xac] sm:$0xf]
  %v2953 = vld [vmem:[%s3 + $0xb0] sm:$0xf]
  %v2954 = vld [vmem:[%s3 + $0xb4] sm:$0xf]
  %v2955 = vld [vmem:[%s3 + $0xb8] sm:$0xf]
  %v2956 = vld [vmem:[%s3 + $0xbc] sm:$0xf]
  %v2957 = vld [vmem:[%s3 + $0xc0] sm:$0xf]
  %v2958 = vld [vmem:[%s3 + $0xc4] sm:$0xf]
  %v2959 = vld [vmem:[%s3 + $0xc8] sm:$0xf]
  %v2960 = vld [vmem:[%s3 + $0xcc] sm:$0xf]
  %v2961 = vld [vmem:[%s3 + $0xd0] sm:$0xf]
  %v2962 = vld [vmem:[%s3 + $0xd4] sm:$0xf]
  %v2963 = vld [vmem:[%s3 + $0xd8] sm:$0xf]
  %v2964 = vld [vmem:[%s3 + $0xdc] sm:$0xf]
  %v2965 = vld [vmem:[%s3 + $0xe0] sm:$0xf]
  %v2966 = vld [vmem:[%s3 + $0xe4] sm:$0xf]
  %v2967 = vld [vmem:[%s3 + $0xe8] sm:$0xf]
  %v2968 = vld [vmem:[%s3 + $0xec] sm:$0xf]
  %v2969 = vld [vmem:[%s3 + $0xf0] sm:$0xf]
  %v2970 = vld [vmem:[%s3 + $0xf4] sm:$0xf]
  %v2971 = vld [vmem:[%s3 + $0xf8] sm:$0xf]
  %v2972 = vld [vmem:[%s3 + $0xfc] sm:$0xf]
  %v2973 = vld [vmem:[%s4] sm:$0x1]
  %v2975 = vperm.slane %v2973, 0
  %v3013 = vunpack.c.l.b16 %v2873
  %v3014 = vunpack.c.h.b16 %v2873
  %v3015 = vunpack.c.l.b16 %v2874
  %v3016 = vunpack.c.h.b16 %v2874
  %v3017 = vunpack.c.l.b16 %v2875
  %v3018 = vunpack.c.h.b16 %v2875
  %v3019 = vunpack.c.l.b16 %v2876
  %v3020 = vunpack.c.h.b16 %v2876
  %v3021 = vunpack.c.l.b16 %v2877
  %v3022 = vunpack.c.h.b16 %v2877
  %v3023 = vunpack.c.l.b16 %v2878
  %v3024 = vunpack.c.h.b16 %v2878
  %v3025 = vunpack.c.l.b16 %v2879
  %v3026 = vunpack.c.h.b16 %v2879
  %v3027 = vunpack.c.l.b16 %v2880
  %v3028 = vunpack.c.h.b16 %v2880
  %v3029 = vunpack.c.l.b16 %v2881
  %v3030 = vunpack.c.h.b16 %v2881
  %v3031 = vunpack.c.l.b16 %v2882
  %v3032 = vunpack.c.h.b16 %v2882
  %v3033 = vunpack.c.l.b16 %v2883
  %v3034 = vunpack.c.h.b16 %v2883
  %v3035 = vunpack.c.l.b16 %v2884
  %v3036 = vunpack.c.h.b16 %v2884
  %v3037 = vunpack.c.l.b16 %v2885
  %v3038 = vunpack.c.h.b16 %v2885
  %v3039 = vunpack.c.l.b16 %v2886
  %v3040 = vunpack.c.h.b16 %v2886
  %v3041 = vunpack.c.l.b16 %v2887
  %v3042 = vunpack.c.h.b16 %v2887
  %v3043 = vunpack.c.l.b16 %v2888
  %v3044 = vunpack.c.h.b16 %v2888
  %v3045 = vunpack.c.l.b16 %v2889
  %v3046 = vunpack.c.h.b16 %v2889
  %v3047 = vunpack.c.l.b16 %v2890
  %v3048 = vunpack.c.h.b16 %v2890
  %v3049 = vunpack.c.l.b16 %v2891
  %v3050 = vunpack.c.h.b16 %v2891
  %v3051 = vunpack.c.l.b16 %v2892
  %v3052 = vunpack.c.h.b16 %v2892
  %v3053 = vunpack.c.l.b16 %v2893
  %v3054 = vunpack.c.h.b16 %v2893
  %v3055 = vunpack.c.l.b16 %v2894
  %v3056 = vunpack.c.h.b16 %v2894
  %v3057 = vunpack.c.l.b16 %v2895
  %v3058 = vunpack.c.h.b16 %v2895
  %v3059 = vunpack.c.l.b16 %v2896
  %v3060 = vunpack.c.h.b16 %v2896
  %v3061 = vunpack.c.l.b16 %v2897
  %v3062 = vunpack.c.h.b16 %v2897
  %v3063 = vunpack.c.l.b16 %v2898
  %v3064 = vunpack.c.h.b16 %v2898
  %v3065 = vunpack.c.l.b16 %v2899
  %v3066 = vunpack.c.h.b16 %v2899
  %v3067 = vunpack.c.l.b16 %v2900
  %v3068 = vunpack.c.h.b16 %v2900
  %v3069 = vunpack.c.l.b16 %v2901
  %v3070 = vunpack.c.h.b16 %v2901
  %v3071 = vunpack.c.l.b16 %v2902
  %v3072 = vunpack.c.h.b16 %v2902
  %v3073 = vunpack.c.l.b16 %v2903
  %v3074 = vunpack.c.h.b16 %v2903
  %v3075 = vunpack.c.l.b16 %v2904
  %v3076 = vunpack.c.h.b16 %v2904
  %v3077 = vunpack.c.l.b16 %v2905
  %v3078 = vunpack.c.h.b16 %v2905
  %v3079 = vunpack.c.l.b16 %v2906
  %v3080 = vunpack.c.h.b16 %v2906
  %v3081 = vunpack.c.l.b16 %v2907
  %v3082 = vunpack.c.h.b16 %v2907
  %v3083 = vunpack.c.l.b16 %v2908
  %v3084 = vunpack.c.h.b16 %v2908
  %v3085 = vpack.c.b16 %v3017, %v3013
  %v3086 = vpack.c.b16 %v3018, %v3014
  %v3087 = vpack.c.b16 %v3019, %v3015
  %v3088 = vpack.c.b16 %v3020, %v3016
  %v3089 = vpack.c.b16 %v3025, %v3021
  %v3090 = vpack.c.b16 %v3026, %v3022
  %v3091 = vpack.c.b16 %v3027, %v3023
  %v3092 = vpack.c.b16 %v3028, %v3024
  %v3093 = vpack.c.b16 %v3033, %v3029
  %v3094 = vpack.c.b16 %v3034, %v3030
  %v3095 = vpack.c.b16 %v3035, %v3031
  %v3096 = vpack.c.b16 %v3036, %v3032
  %v3097 = vpack.c.b16 %v3041, %v3037
  %v3098 = vpack.c.b16 %v3042, %v3038
  %v3099 = vpack.c.b16 %v3043, %v3039
  %v3100 = vpack.c.b16 %v3044, %v3040
  %v3101 = vpack.c.b16 %v3049, %v3045
  %v3102 = vpack.c.b16 %v3050, %v3046
  %v3103 = vpack.c.b16 %v3051, %v3047
  %v3104 = vpack.c.b16 %v3052, %v3048
  %v3105 = vpack.c.b16 %v3057, %v3053
  %v3106 = vpack.c.b16 %v3058, %v3054
  %v3107 = vpack.c.b16 %v3059, %v3055
  %v3108 = vpack.c.b16 %v3060, %v3056
  %v3109 = vpack.c.b16 %v3065, %v3061
  %v3110 = vpack.c.b16 %v3066, %v3062
  %v3111 = vpack.c.b16 %v3067, %v3063
  %v3112 = vpack.c.b16 %v3068, %v3064
  %v3113 = vpack.c.b16 %v3073, %v3069
  %v3114 = vpack.c.b16 %v3074, %v3070
  %v3115 = vpack.c.b16 %v3075, %v3071
  %v3116 = vpack.c.b16 %v3076, %v3072
  %v3117 = vpack.c.b16 %v3081, %v3077
  %v3118 = vpack.c.b16 %v3082, %v3078
  %v3119 = vpack.c.b16 %v3083, %v3079
  %v3120 = vpack.c.b16 %v3084, %v3080
  %v3221 = vunpack.c.l.b16 %v2909
  %v3222 = vunpack.c.l.b16 %v2910
  %v3223 = vunpack.c.l.b16 %v2911
  %v3224 = vunpack.c.l.b16 %v2912
  %v3225 = vunpack.c.l.b16 %v2913
  %v3226 = vunpack.c.l.b16 %v2914
  %v3227 = vunpack.c.l.b16 %v2915
  %v3228 = vunpack.c.l.b16 %v2916
  %v3229 = vunpack.c.l.b16 %v2917
  %v3230 = vunpack.c.l.b16 %v2918
  %v3231 = vunpack.c.l.b16 %v2919
  %v3232 = vunpack.c.l.b16 %v2920
  %v3233 = vunpack.c.l.b16 %v2921
  %v3234 = vunpack.c.l.b16 %v2922
  %v3235 = vunpack.c.l.b16 %v2923
  %v3236 = vunpack.c.l.b16 %v2924
  %v3237 = vunpack.c.l.b16 %v2925
  %v3238 = vunpack.c.l.b16 %v2926
  %v3239 = vunpack.c.l.b16 %v2927
  %v3240 = vunpack.c.l.b16 %v2928
  %v3241 = vunpack.c.l.b16 %v2929
  %v3242 = vunpack.c.l.b16 %v2930
  %v3243 = vunpack.c.l.b16 %v2931
  %v3244 = vunpack.c.l.b16 %v2932
  %v3245 = vunpack.c.l.b16 %v2933
  %v3246 = vunpack.c.l.b16 %v2934
  %v3247 = vunpack.c.l.b16 %v2935
  %v3248 = vunpack.c.l.b16 %v2936
  %v3249 = vunpack.c.l.b16 %v2937
  %v3250 = vunpack.c.l.b16 %v2938
  %v3251 = vunpack.c.l.b16 %v2939
  %v3252 = vunpack.c.l.b16 %v2940
  %v3253 = vunpack.c.l.b16 %v2941
  %v3254 = vunpack.c.l.b16 %v2942
  %v3255 = vunpack.c.l.b16 %v2943
  %v3256 = vunpack.c.l.b16 %v2944
  %v3257 = vunpack.c.l.b16 %v2945
  %v3258 = vunpack.c.l.b16 %v2946
  %v3259 = vunpack.c.l.b16 %v2947
  %v3260 = vunpack.c.l.b16 %v2948
  %v3261 = vunpack.c.l.b16 %v2949
  %v3262 = vunpack.c.l.b16 %v2950
  %v3263 = vunpack.c.l.b16 %v2951
  %v3264 = vunpack.c.l.b16 %v2952
  %v3265 = vunpack.c.l.b16 %v2953
  %v3266 = vunpack.c.l.b16 %v2954
  %v3267 = vunpack.c.l.b16 %v2955
  %v3268 = vunpack.c.l.b16 %v2956
  %v3269 = vunpack.c.l.b16 %v2957
  %v3270 = vunpack.c.l.b16 %v2958
  %v3271 = vunpack.c.l.b16 %v2959
  %v3272 = vunpack.c.l.b16 %v2960
  %v3273 = vunpack.c.l.b16 %v2961
  %v3274 = vunpack.c.l.b16 %v2962
  %v3275 = vunpack.c.l.b16 %v2963
  %v3276 = vunpack.c.l.b16 %v2964
  %v3277 = vunpack.c.l.b16 %v2965
  %v3278 = vunpack.c.l.b16 %v2966
  %v3279 = vunpack.c.l.b16 %v2967
  %v3280 = vunpack.c.l.b16 %v2968
  %v3281 = vunpack.c.l.b16 %v2969
  %v3282 = vunpack.c.l.b16 %v2970
  %v3283 = vunpack.c.l.b16 %v2971
  %v3284 = vunpack.c.l.b16 %v2972
  %v3285 = vpack.c.b16 %v3222, %v3221
  %v3286 = vpack.c.b16 %v3224, %v3223
  %v3287 = vpack.c.b16 %v3226, %v3225
  %v3288 = vpack.c.b16 %v3228, %v3227
  %v3289 = vpack.c.b16 %v3230, %v3229
  %v3290 = vpack.c.b16 %v3232, %v3231
  %v3291 = vpack.c.b16 %v3234, %v3233
  %v3292 = vpack.c.b16 %v3236, %v3235
  %v3293 = vpack.c.b16 %v3238, %v3237
  %v3294 = vpack.c.b16 %v3240, %v3239
  %v3295 = vpack.c.b16 %v3242, %v3241
  %v3296 = vpack.c.b16 %v3244, %v3243
  %v3297 = vpack.c.b16 %v3246, %v3245
  %v3298 = vpack.c.b16 %v3248, %v3247
  %v3299 = vpack.c.b16 %v3250, %v3249
  %v3300 = vpack.c.b16 %v3252, %v3251
  %v3301 = vpack.c.b16 %v3254, %v3253
  %v3302 = vpack.c.b16 %v3256, %v3255
  %v3303 = vpack.c.b16 %v3258, %v3257
  %v3304 = vpack.c.b16 %v3260, %v3259
  %v3305 = vpack.c.b16 %v3262, %v3261
  %v3306 = vpack.c.b16 %v3264, %v3263
  %v3307 = vpack.c.b16 %v3266, %v3265
  %v3308 = vpack.c.b16 %v3268, %v3267
  %v3309 = vpack.c.b16 %v3270, %v3269
  %v3310 = vpack.c.b16 %v3272, %v3271
  %v3311 = vpack.c.b16 %v3274, %v3273
  %v3312 = vpack.c.b16 %v3276, %v3275
  %v3313 = vpack.c.b16 %v3278, %v3277
  %v3314 = vpack.c.b16 %v3280, %v3279
  %v3315 = vpack.c.b16 %v3282, %v3281
  %v3316 = vpack.c.b16 %v3284, %v3283
  %3349 = vmatpush.bf16.msra.mxu0 %v3292
  %3350 = vmatpush.bf16.msra.mxu0 %v3291
  %3351 = vmatpush.bf16.msra.mxu0 %v3290
  %3352 = vmatpush.bf16.msra.mxu0 %v3289
  %3353 = vmatpush.bf16.msra.mxu0 %v3288
  %3354 = vmatpush.bf16.msra.mxu0 %v3287
  %3355 = vmatpush.bf16.msra.mxu0 %v3286
  %3356 = vmatpush.bf16.msra.mxu0 %v3285
  %3357 = vmatmul.bf16.gmra.mxu0 %v3085
  %v3358 = vpop.f32.mrf.mxu0
  %v3359 = vadd.f32 %v2975, %v3358
  %v3360 = vpop.f32.mrf.mxu0
  %v3361 = vadd.f32 %v2975, %v3360
  %3362 = vmatmul.bf16.gmra.mxu0 %v3089
  %v3363 = vpop.f32.mrf.mxu0
  %v3364 = vadd.f32 %v2975, %v3363
  %v3365 = vpop.f32.mrf.mxu0
  %v3366 = vadd.f32 %v2975, %v3365
  %3367 = vmatmul.bf16.gmra.mxu0 %v3093
  %v3368 = vpop.f32.mrf.mxu0
  %v3369 = vadd.f32 %v2975, %v3368
  %v3370 = vpop.f32.mrf.mxu0
  %v3371 = vadd.f32 %v2975, %v3370
  %3372 = vmatmul.bf16.gmra.mxu0 %v3097
  %v3373 = vpop.f32.mrf.mxu0
  %v3374 = vadd.f32 %v2975, %v3373
  %v3375 = vpop.f32.mrf.mxu0
  %v3376 = vadd.f32 %v2975, %v3375
  %3377 = vmatmul.bf16.gmra.mxu0 %v3101
  %v3378 = vpop.f32.mrf.mxu0
  %v3379 = vadd.f32 %v2975, %v3378
  %v3380 = vpop.f32.mrf.mxu0
  %v3381 = vadd.f32 %v2975, %v3380
  %3382 = vmatmul.bf16.gmra.mxu0 %v3105
  %v3383 = vpop.f32.mrf.mxu0
  %v3384 = vadd.f32 %v2975, %v3383
  %v3385 = vpop.f32.mrf.mxu0
  %v3386 = vadd.f32 %v2975, %v3385
  %3387 = vmatmul.bf16.gmra.mxu0 %v3109
  %v3388 = vpop.f32.mrf.mxu0
  %v3389 = vadd.f32 %v2975, %v3388
  %v3390 = vpop.f32.mrf.mxu0
  %v3391 = vadd.f32 %v2975, %v3390
  %3392 = vmatmul.bf16.gmra.mxu0 %v3113
  %v3393 = vpop.f32.mrf.mxu0
  %v3394 = vadd.f32 %v2975, %v3393
  %v3395 = vpop.f32.mrf.mxu0
  %v3396 = vadd.f32 %v2975, %v3395
  %3397 = vmatmul.bf16.gmra.mxu0 %v3117
  %v3398 = vpop.f32.mrf.mxu0
  %v3399 = vadd.f32 %v2975, %v3398
  %v3400 = vpop.f32.mrf.mxu0
  %v3401 = vadd.f32 %v2975, %v3400
  %3402 = vdwg.mxu0
  %3403 = vmatpush.bf16.msra.mxu0 %v3300
  %3404 = vmatpush.bf16.msra.mxu0 %v3299
  %3405 = vmatpush.bf16.msra.mxu0 %v3298
  %3406 = vmatpush.bf16.msra.mxu0 %v3297
  %3407 = vmatpush.bf16.msra.mxu0 %v3296
  %3408 = vmatpush.bf16.msra.mxu0 %v3295
  %3409 = vmatpush.bf16.msra.mxu0 %v3294
  %3410 = vmatpush.bf16.msra.mxu0 %v3293
  %3411 = vmatmul.bf16.gmra.mxu0 %v3086
  %v3412 = vpop.f32.mrf.mxu0
  %v3413 = vadd.f32 %v3359, %v3412
  %v3414 = vpop.f32.mrf.mxu0
  %v3415 = vadd.f32 %v3361, %v3414
  %3416 = vmatmul.bf16.gmra.mxu0 %v3090
  %v3417 = vpop.f32.mrf.mxu0
  %v3418 = vadd.f32 %v3364, %v3417
  %v3419 = vpop.f32.mrf.mxu0
  %v3420 = vadd.f32 %v3366, %v3419
  %3421 = vmatmul.bf16.gmra.mxu0 %v3094
  %v3422 = vpop.f32.mrf.mxu0
  %v3423 = vadd.f32 %v3369, %v3422
  %v3424 = vpop.f32.mrf.mxu0
  %v3425 = vadd.f32 %v3371, %v3424
  %3426 = vmatmul.bf16.gmra.mxu0 %v3098
  %v3427 = vpop.f32.mrf.mxu0
  %v3428 = vadd.f32 %v3374, %v3427
  %v3429 = vpop.f32.mrf.mxu0
  %v3430 = vadd.f32 %v3376, %v3429
  %3431 = vmatmul.bf16.gmra.mxu0 %v3102
  %v3432 = vpop.f32.mrf.mxu0
  %v3433 = vadd.f32 %v3379, %v3432
  %v3434 = vpop.f32.mrf.mxu0
  %v3435 = vadd.f32 %v3381, %v3434
  %3436 = vmatmul.bf16.gmra.mxu0 %v3106
  %v3437 = vpop.f32.mrf.mxu0
  %v3438 = vadd.f32 %v3384, %v3437
  %v3439 = vpop.f32.mrf.mxu0
  %v3440 = vadd.f32 %v3386, %v3439
  %3441 = vmatmul.bf16.gmra.mxu0 %v3110
  %v3442 = vpop.f32.mrf.mxu0
  %v3443 = vadd.f32 %v3389, %v3442
  %v3444 = vpop.f32.mrf.mxu0
  %v3445 = vadd.f32 %v3391, %v3444
  %3446 = vmatmul.bf16.gmra.mxu0 %v3114
  %v3447 = vpop.f32.mrf.mxu0
  %v3448 = vadd.f32 %v3394, %v3447
  %v3449 = vpop.f32.mrf.mxu0
  %v3450 = vadd.f32 %v3396, %v3449
  %3451 = vmatmul.bf16.gmra.mxu0 %v3118
  %v3452 = vpop.f32.mrf.mxu0
  %v3453 = vadd.f32 %v3399, %v3452
  %v3454 = vpop.f32.mrf.mxu0
  %v3455 = vadd.f32 %v3401, %v3454
  %3456 = vdwg.mxu0
  %3457 = vmatpush.bf16.msra.mxu0 %v3308
  %3458 = vmatpush.bf16.msra.mxu0 %v3307
  %3459 = vmatpush.bf16.msra.mxu0 %v3306
  %3460 = vmatpush.bf16.msra.mxu0 %v3305
  %3461 = vmatpush.bf16.msra.mxu0 %v3304
  %3462 = vmatpush.bf16.msra.mxu0 %v3303
  %3463 = vmatpush.bf16.msra.mxu0 %v3302
  %3464 = vmatpush.bf16.msra.mxu0 %v3301
  %3465 = vmatmul.bf16.gmra.mxu0 %v3087
  %v3466 = vpop.f32.mrf.mxu0
  %v3467 = vadd.f32 %v3413, %v3466
  %v3468 = vpop.f32.mrf.mxu0
  %v3469 = vadd.f32 %v3415, %v3468
  %3470 = vmatmul.bf16.gmra.mxu0 %v3091
  %v3471 = vpop.f32.mrf.mxu0
  %v3472 = vadd.f32 %v3418, %v3471
  %v3473 = vpop.f32.mrf.mxu0
  %v3474 = vadd.f32 %v3420, %v3473
  %3475 = vmatmul.bf16.gmra.mxu0 %v3095
  %v3476 = vpop.f32.mrf.mxu0
  %v3477 = vadd.f32 %v3423, %v3476
  %v3478 = vpop.f32.mrf.mxu0
  %v3479 = vadd.f32 %v3425, %v3478
  %3480 = vmatmul.bf16.gmra.mxu0 %v3099
  %v3481 = vpop.f32.mrf.mxu0
  %v3482 = vadd.f32 %v3428, %v3481
  %v3483 = vpop.f32.mrf.mxu0
  %v3484 = vadd.f32 %v3430, %v3483
  %3485 = vmatmul.bf16.gmra.mxu0 %v3103
  %v3486 = vpop.f32.mrf.mxu0
  %v3487 = vadd.f32 %v3433, %v3486
  %v3488 = vpop.f32.mrf.mxu0
  %v3489 = vadd.f32 %v3435, %v3488
  %3490 = vmatmul.bf16.gmra.mxu0 %v3107
  %v3491 = vpop.f32.mrf.mxu0
  %v3492 = vadd.f32 %v3438, %v3491
  %v3493 = vpop.f32.mrf.mxu0
  %v3494 = vadd.f32 %v3440, %v3493
  %3495 = vmatmul.bf16.gmra.mxu0 %v3111
  %v3496 = vpop.f32.mrf.mxu0
  %v3497 = vadd.f32 %v3443, %v3496
  %v3498 = vpop.f32.mrf.mxu0
  %v3499 = vadd.f32 %v3445, %v3498
  %3500 = vmatmul.bf16.gmra.mxu0 %v3115
  %v3501 = vpop.f32.mrf.mxu0
  %v3502 = vadd.f32 %v3448, %v3501
  %v3503 = vpop.f32.mrf.mxu0
  %v3504 = vadd.f32 %v3450, %v3503
  %3505 = vmatmul.bf16.gmra.mxu0 %v3119
  %v3506 = vpop.f32.mrf.mxu0
  %v3507 = vadd.f32 %v3453, %v3506
  %v3508 = vpop.f32.mrf.mxu0
  %v3509 = vadd.f32 %v3455, %v3508
  %3510 = vdwg.mxu0
  %3511 = vmatpush.bf16.msra.mxu0 %v3316
  %3512 = vmatpush.bf16.msra.mxu0 %v3315
  %3513 = vmatpush.bf16.msra.mxu0 %v3314
  %3514 = vmatpush.bf16.msra.mxu0 %v3313
  %3515 = vmatpush.bf16.msra.mxu0 %v3312
  %3516 = vmatpush.bf16.msra.mxu0 %v3311
  %3517 = vmatpush.bf16.msra.mxu0 %v3310
  %3518 = vmatpush.bf16.msra.mxu0 %v3309
  %3519 = vmatmul.bf16.gmra.mxu0 %v3088
  %v3520 = vpop.f32.mrf.mxu0
  %v3521 = vadd.f32 %v3467, %v3520
  %v3522 = vpop.f32.mrf.mxu0
  %v3523 = vadd.f32 %v3469, %v3522
  %3524 = vmatmul.bf16.gmra.mxu0 %v3092
  %v3525 = vpop.f32.mrf.mxu0
  %v3526 = vadd.f32 %v3472, %v3525
  %v3527 = vpop.f32.mrf.mxu0
  %v3528 = vadd.f32 %v3474, %v3527
  %3529 = vmatmul.bf16.gmra.mxu0 %v3096
  %v3530 = vpop.f32.mrf.mxu0
  %v3531 = vadd.f32 %v3477, %v3530
  %v3532 = vpop.f32.mrf.mxu0
  %v3533 = vadd.f32 %v3479, %v3532
  %3534 = vmatmul.bf16.gmra.mxu0 %v3100
  %v3535 = vpop.f32.mrf.mxu0
  %v3536 = vadd.f32 %v3482, %v3535
  %v3537 = vpop.f32.mrf.mxu0
  %v3538 = vadd.f32 %v3484, %v3537
  %3539 = vmatmul.bf16.gmra.mxu0 %v3104
  %v3540 = vpop.f32.mrf.mxu0
  %v3541 = vadd.f32 %v3487, %v3540
  %v3542 = vpop.f32.mrf.mxu0
  %v3543 = vadd.f32 %v3489, %v3542
  %3544 = vmatmul.bf16.gmra.mxu0 %v3108
  %v3545 = vpop.f32.mrf.mxu0
  %v3546 = vadd.f32 %v3492, %v3545
  %v3547 = vpop.f32.mrf.mxu0
  %v3548 = vadd.f32 %v3494, %v3547
  %3549 = vmatmul.bf16.gmra.mxu0 %v3112
  %v3550 = vpop.f32.mrf.mxu0
  %v3551 = vadd.f32 %v3497, %v3550
  %v3552 = vpop.f32.mrf.mxu0
  %v3553 = vadd.f32 %v3499, %v3552
  %3554 = vmatmul.bf16.gmra.mxu0 %v3116
  %v3555 = vpop.f32.mrf.mxu0
  %v3556 = vadd.f32 %v3502, %v3555
  %v3557 = vpop.f32.mrf.mxu0
  %v3558 = vadd.f32 %v3504, %v3557
  %3559 = vmatmul.bf16.gmra.mxu0 %v3120
  %v3560 = vpop.f32.mrf.mxu0
  %v3561 = vadd.f32 %v3507, %v3560
  %v3562 = vpop.f32.mrf.mxu0
  %v3563 = vadd.f32 %v3509, %v3562
  %3564 = vdwg.mxu0
  %v3565 = vmax.f32 %v3521, 0.0
  %v3566 = vmax.f32 %v3523, 0.0
  %v3567 = vmax.f32 %v3526, 0.0
  %v3568 = vmax.f32 %v3528, 0.0
  %v3569 = vmax.f32 %v3531, 0.0
  %v3570 = vmax.f32 %v3533, 0.0
  %v3571 = vmax.f32 %v3536, 0.0
  %v3572 = vmax.f32 %v3538, 0.0
  %v3573 = vmax.f32 %v3541, 0.0
  %v3574 = vmax.f32 %v3543, 0.0
  %v3575 = vmax.f32 %v3546, 0.0
  %v3576 = vmax.f32 %v3548, 0.0
  %v3577 = vmax.f32 %v3551, 0.0
  %v3578 = vmax.f32 %v3553, 0.0
  %v3579 = vmax.f32 %v3556, 0.0
  %v3580 = vmax.f32 %v3558, 0.0
  %v3581 = vmax.f32 %v3561, 0.0
  %v3582 = vmax.f32 %v3563, 0.0
  %v3583 = vpack.c.bf16 %v3565, %v3565
  %v3584 = vpack.c.bf16 %v3566, %v3566
  %v3585 = vpack.c.bf16 %v3567, %v3567
  %v3586 = vpack.c.bf16 %v3568, %v3568
  %v3587 = vpack.c.bf16 %v3569, %v3569
  %v3588 = vpack.c.bf16 %v3570, %v3570
  %v3589 = vpack.c.bf16 %v3571, %v3571
  %v3590 = vpack.c.bf16 %v3572, %v3572
  %v3591 = vpack.c.bf16 %v3573, %v3573
  %v3592 = vpack.c.bf16 %v3574, %v3574
  %v3593 = vpack.c.bf16 %v3575, %v3575
  %v3594 = vpack.c.bf16 %v3576, %v3576
  %v3595 = vpack.c.bf16 %v3577, %v3577
  %v3596 = vpack.c.bf16 %v3578, %v3578
  %v3597 = vpack.c.bf16 %v3579, %v3579
  %v3598 = vpack.c.bf16 %v3580, %v3580
  %v3599 = vpack.c.bf16 %v3581, %v3581
  %v3600 = vpack.c.bf16 %v3582, %v3582
  %vm3601 = vcmask 519168
  %3602 = vst.msk [vmem:[#allocation4] sm:$0xf] %vm3601, %v3583
  %3603 = vst.msk [vmem:[#allocation4 + $0x4] sm:$0xf] %vm3601, %v3584
  %3604 = vst.msk [vmem:[#allocation4 + $0x8] sm:$0xf] %vm3601, %v3585
  %3605 = vst.msk [vmem:[#allocation4 + $0xc] sm:$0xf] %vm3601, %v3586
  %3606 = vst.msk [vmem:[#allocation4 + $0x10] sm:$0xf] %vm3601, %v3587
  %3607 = vst.msk [vmem:[#allocation4 + $0x14] sm:$0xf] %vm3601, %v3588
  %3608 = vst.msk [vmem:[#allocation4 + $0x18] sm:$0xf] %vm3601, %v3589
  %3609 = vst.msk [vmem:[#allocation4 + $0x1c] sm:$0xf] %vm3601, %v3590
  %3610 = vst.msk [vmem:[#allocation4 + $0x20] sm:$0xf] %vm3601, %v3591
  %3611 = vst.msk [vmem:[#allocation4 + $0x24] sm:$0xf] %vm3601, %v3592
  %3612 = vst.msk [vmem:[#allocation4 + $0x28] sm:$0xf] %vm3601, %v3593
  %3613 = vst.msk [vmem:[#allocation4 + $0x2c] sm:$0xf] %vm3601, %v3594
  %3614 = vst.msk [vmem:[#allocation4 + $0x30] sm:$0xf] %vm3601, %v3595
  %3615 = vst.msk [vmem:[#allocation4 + $0x34] sm:$0xf] %vm3601, %v3596
  %3616 = vst.msk [vmem:[#allocation4 + $0x38] sm:$0xf] %vm3601, %v3597
  %3617 = vst.msk [vmem:[#allocation4 + $0x3c] sm:$0xf] %vm3601, %v3598
  %3618 = vst.msk [vmem:[#allocation4 + $0x40] sm:$0xf] %vm3601, %v3599
  %3619 = vst.msk [vmem:[#allocation4 + $0x44] sm:$0xf] %vm3601, %v3600
  %v3620 = vld [vmem:[#allocation4] sm:$0xf]
  %v3621 = vld [vmem:[#allocation4 + $0x4] sm:$0xf]
  %3622 = vst.msk [vmem:[#allocation5] sm:$0xf] %vm3601, %v3620
  %3623 = vst.msk [vmem:[#allocation5 + $0x14] sm:$0xf] %vm3601, %v3621
  %v3624 = vld [vmem:[#allocation4 + $0x8] sm:$0xf]
  %v3625 = vld [vmem:[#allocation4 + $0xc] sm:$0xf]
  %3628 = vrot.lane.b32.xlu0 %v3624, 64
  %v3629 = vpop.permute.xlu0 %3628
  %3630 = vrot.lane.b32.xlu0 %v3625, 64
  %v3631 = vpop.permute.xlu0 %3630
  %vm3634 = vcmask 1043968
  %3635 = vst.msk [vmem:[#allocation5] sm:$0xf] %vm3634, %v3629
  %3636 = vst.msk [vmem:[#allocation5 + $0x14] sm:$0xf] %vm3634, %v3631
  %v3637 = vld [vmem:[#allocation4 + $0x10] sm:$0xf]
  %v3638 = vld [vmem:[#allocation4 + $0x14] sm:$0xf]
  %3639 = vst.msk [vmem:[#allocation5 + $0x4] sm:$0xf] %vm3601, %v3637
  %3640 = vst.msk [vmem:[#allocation5 + $0x18] sm:$0xf] %vm3601, %v3638
  %v3641 = vld [vmem:[#allocation4 + $0x18] sm:$0xf]
  %v3642 = vld [vmem:[#allocation4 + $0x1c] sm:$0xf]
  %3645 = vrot.lane.b32.xlu0 %v3641, 64
  %v3646 = vpop.permute.xlu0 %3645
  %3647 = vrot.lane.b32.xlu0 %v3642, 64
  %v3648 = vpop.permute.xlu0 %3647
  %3651 = vst.msk [vmem:[#allocation5 + $0x4] sm:$0xf] %vm3634, %v3646
  %3652 = vst.msk [vmem:[#allocation5 + $0x18] sm:$0xf] %vm3634, %v3648
  %v3653 = vld [vmem:[#allocation4 + $0x20] sm:$0xf]
  %v3654 = vld [vmem:[#allocation4 + $0x24] sm:$0xf]
  %3655 = vst.msk [vmem:[#allocation5 + $0x8] sm:$0xf] %vm3601, %v3653
  %3656 = vst.msk [vmem:[#allocation5 + $0x1c] sm:$0xf] %vm3601, %v3654
  %v3657 = vld [vmem:[#allocation4 + $0x28] sm:$0xf]
  %v3658 = vld [vmem:[#allocation4 + $0x2c] sm:$0xf]
  %3661 = vrot.lane.b32.xlu0 %v3657, 64
  %v3662 = vpop.permute.xlu0 %3661
  %3663 = vrot.lane.b32.xlu0 %v3658, 64
  %v3664 = vpop.permute.xlu0 %3663
  %3667 = vst.msk [vmem:[#allocation5 + $0x8] sm:$0xf] %vm3634, %v3662
  %3668 = vst.msk [vmem:[#allocation5 + $0x1c] sm:$0xf] %vm3634, %v3664
  %v3669 = vld [vmem:[#allocation4 + $0x30] sm:$0xf]
  %v3670 = vld [vmem:[#allocation4 + $0x34] sm:$0xf]
  %3671 = vst.msk [vmem:[#allocation5 + $0xc] sm:$0xf] %vm3601, %v3669
  %3672 = vst.msk [vmem:[#allocation5 + $0x20] sm:$0xf] %vm3601, %v3670
  %v3673 = vld [vmem:[#allocation4 + $0x38] sm:$0xf]
  %v3674 = vld [vmem:[#allocation4 + $0x3c] sm:$0xf]
  %3677 = vrot.lane.b32.xlu0 %v3673, 64
  %v3678 = vpop.permute.xlu0 %3677
  %3679 = vrot.lane.b32.xlu0 %v3674, 64
  %v3680 = vpop.permute.xlu0 %3679
  %3683 = vst.msk [vmem:[#allocation5 + $0xc] sm:$0xf] %vm3634, %v3678
  %3684 = vst.msk [vmem:[#allocation5 + $0x20] sm:$0xf] %vm3634, %v3680
  %v3685 = vld [vmem:[#allocation4 + $0x40] sm:$0xf]
  %v3686 = vld [vmem:[#allocation4 + $0x44] sm:$0xf]
  %3687 = vst.msk [vmem:[#allocation5 + $0x10] sm:$0xf] %vm3601, %v3685
  %3688 = vst.msk [vmem:[#allocation5 + $0x24] sm:$0xf] %vm3601, %v3686
  %v3689 = vld [vmem:[#allocation5] sm:$0xff]
  %v3690 = vld [vmem:[#allocation5 + $0x8] sm:$0xff]
  %v3691 = vld [vmem:[#allocation5 + $0x10] sm:$0xf]
  %v3692 = vld [vmem:[#allocation5 + $0x14] sm:$0xff]
  %v3693 = vld [vmem:[#allocation5 + $0x1c] sm:$0xff]
  %v3694 = vld [vmem:[#allocation5 + $0x24] sm:$0xf]
  %v3695 = vld [vmem:[%s5] sm:$0xf]
  %v3696 = vld [vmem:[%s5 + $0x4] sm:$0xf]
  %v3697 = vld [vmem:[%s5 + $0x8] sm:$0xf]
  %v3698 = vld [vmem:[%s5 + $0xc] sm:$0xf]
  %v3699 = vld [vmem:[%s5 + $0x10] sm:$0xf]
  %v3700 = vld [vmem:[%s5 + $0x14] sm:$0xf]
  %v3701 = vld [vmem:[%s5 + $0x18] sm:$0xf]
  %v3702 = vld [vmem:[%s5 + $0x1c] sm:$0xf]
  %v3703 = vld [vmem:[%s5 + $0x20] sm:$0xf]
  %v3704 = vld [vmem:[%s5 + $0x24] sm:$0xf]
  %v3705 = vld [vmem:[%s5 + $0x28] sm:$0xf]
  %v3706 = vld [vmem:[%s5 + $0x2c] sm:$0xf]
  %v3707 = vld [vmem:[%s5 + $0x30] sm:$0xf]
  %v3708 = vld [vmem:[%s5 + $0x34] sm:$0xf]
  %v3709 = vld [vmem:[%s5 + $0x38] sm:$0xf]
  %v3710 = vld [vmem:[%s5 + $0x3c] sm:$0xf]
  %v3711 = vld [vmem:[%s5 + $0x40] sm:$0xf]
  %v3712 = vld [vmem:[%s5 + $0x44] sm:$0xf]
  %v3713 = vld [vmem:[%s5 + $0x48] sm:$0xf]
  %v3714 = vld [vmem:[%s5 + $0x4c] sm:$0xf]
  %v3715 = vld [vmem:[%s5 + $0x50] sm:$0xf]
  %v3716 = vld [vmem:[%s5 + $0x54] sm:$0xf]
  %v3717 = vld [vmem:[%s5 + $0x58] sm:$0xf]
  %v3718 = vld [vmem:[%s5 + $0x5c] sm:$0xf]
  %v3719 = vld [vmem:[%s5 + $0x60] sm:$0xf]
  %v3720 = vld [vmem:[%s5 + $0x64] sm:$0xf]
  %v3721 = vld [vmem:[%s5 + $0x68] sm:$0xf]
  %v3722 = vld [vmem:[%s5 + $0x6c] sm:$0xf]
  %v3723 = vld [vmem:[%s5 + $0x70] sm:$0xf]
  %v3724 = vld [vmem:[%s5 + $0x74] sm:$0xf]
  %v3725 = vld [vmem:[%s5 + $0x78] sm:$0xf]
  %v3726 = vld [vmem:[%s5 + $0x7c] sm:$0xf]
  %v3727 = vld [vmem:[%s5 + $0x80] sm:$0xf]
  %v3728 = vld [vmem:[%s5 + $0x84] sm:$0xf]
  %v3729 = vld [vmem:[%s5 + $0x88] sm:$0xf]
  %v3730 = vld [vmem:[%s5 + $0x8c] sm:$0xf]
  %v3731 = vld [vmem:[%s5 + $0x90] sm:$0xf]
  %v3732 = vld [vmem:[%s5 + $0x94] sm:$0xf]
  %v3733 = vld [vmem:[%s5 + $0x98] sm:$0xf]
  %v3734 = vld [vmem:[%s5 + $0x9c] sm:$0xf]
  %v3735 = vld [vmem:[%s5 + $0xa0] sm:$0xf]
  %v3736 = vld [vmem:[%s5 + $0xa4] sm:$0xf]
  %v3737 = vld [vmem:[%s5 + $0xa8] sm:$0xf]
  %v3738 = vld [vmem:[%s5 + $0xac] sm:$0xf]
  %v3739 = vld [vmem:[%s5 + $0xb0] sm:$0xf]
  %v3740 = vld [vmem:[%s5 + $0xb4] sm:$0xf]
  %v3741 = vld [vmem:[%s5 + $0xb8] sm:$0xf]
  %v3742 = vld [vmem:[%s5 + $0xbc] sm:$0xf]
  %v3743 = vld [vmem:[%s5 + $0xc0] sm:$0xf]
  %v3744 = vld [vmem:[%s5 + $0xc4] sm:$0xf]
  %v3745 = vld [vmem:[%s5 + $0xc8] sm:$0xf]
  %v3746 = vld [vmem:[%s5 + $0xcc] sm:$0xf]
  %v3747 = vld [vmem:[%s5 + $0xd0] sm:$0xf]
  %v3748 = vld [vmem:[%s5 + $0xd4] sm:$0xf]
  %v3749 = vld [vmem:[%s5 + $0xd8] sm:$0xf]
  %v3750 = vld [vmem:[%s5 + $0xdc] sm:$0xf]
  %v3751 = vld [vmem:[%s5 + $0xe0] sm:$0xf]
  %v3752 = vld [vmem:[%s5 + $0xe4] sm:$0xf]
  %v3753 = vld [vmem:[%s5 + $0xe8] sm:$0xf]
  %v3754 = vld [vmem:[%s5 + $0xec] sm:$0xf]
  %v3755 = vld [vmem:[%s5 + $0xf0] sm:$0xf]
  %v3756 = vld [vmem:[%s5 + $0xf4] sm:$0xf]
  %v3757 = vld [vmem:[%s5 + $0xf8] sm:$0xf]
  %v3758 = vld [vmem:[%s5 + $0xfc] sm:$0xf]
  %v3759 = vld [vmem:[%s5 + $0x100] sm:$0xf]
  %v3760 = vld [vmem:[%s5 + $0x104] sm:$0xf]
  %v3761 = vld [vmem:[%s5 + $0x108] sm:$0xf]
  %v3762 = vld [vmem:[%s5 + $0x10c] sm:$0xf]
  %v3763 = vld [vmem:[%s5 + $0x110] sm:$0xf]
  %v3764 = vld [vmem:[%s5 + $0x114] sm:$0xf]
  %v3765 = vld [vmem:[%s5 + $0x118] sm:$0xf]
  %v3766 = vld [vmem:[%s5 + $0x11c] sm:$0xf]
  %v3767 = vld [vmem:[%s6] sm:$0x1]
  %v3769 = vperm.slane %v3767, 0
  %v3777 = vunpack.c.l.b16 %v3689
  %v3778 = vunpack.c.h.b16 %v3689
  %v3779 = vunpack.c.l.b16 %v3690
  %v3780 = vunpack.c.h.b16 %v3690
  %v3781 = vunpack.c.l.b16 %v3691
  %v3782 = vunpack.c.l.b16 %v3692
  %v3783 = vunpack.c.h.b16 %v3692
  %v3784 = vunpack.c.l.b16 %v3693
  %v3785 = vunpack.c.h.b16 %v3693
  %v3786 = vunpack.c.l.b16 %v3694
  %v3787 = vpack.c.b16 %v3782, %v3777
  %v3788 = vpack.c.b16 %v3783, %v3778
  %v3789 = vpack.c.b16 %v3784, %v3779
  %v3790 = vpack.c.b16 %v3785, %v3780
  %v3791 = vpack.c.b16 %v3786, %v3781
  %v3868 = vunpack.c.l.b16 %v3695
  %v3869 = vunpack.c.l.b16 %v3696
  %v3870 = vunpack.c.l.b16 %v3697
  %v3871 = vunpack.c.l.b16 %v3698
  %v3872 = vunpack.c.l.b16 %v3699
  %v3873 = vunpack.c.l.b16 %v3700
  %v3874 = vunpack.c.l.b16 %v3701
  %v3875 = vunpack.c.l.b16 %v3702
  %v3876 = vunpack.c.l.b16 %v3703
  %v3877 = vunpack.c.l.b16 %v3704
  %v3878 = vunpack.c.l.b16 %v3705
  %v3879 = vunpack.c.l.b16 %v3706
  %v3880 = vunpack.c.l.b16 %v3707
  %v3881 = vunpack.c.l.b16 %v3708
  %v3882 = vunpack.c.l.b16 %v3709
  %v3883 = vunpack.c.l.b16 %v3710
  %v3884 = vunpack.c.l.b16 %v3711
  %v3885 = vunpack.c.l.b16 %v3712
  %v3886 = vunpack.c.l.b16 %v3713
  %v3887 = vunpack.c.l.b16 %v3714
  %v3888 = vunpack.c.l.b16 %v3715
  %v3889 = vunpack.c.l.b16 %v3716
  %v3890 = vunpack.c.l.b16 %v3717
  %v3891 = vunpack.c.l.b16 %v3718
  %v3892 = vunpack.c.l.b16 %v3719
  %v3893 = vunpack.c.l.b16 %v3720
  %v3894 = vunpack.c.l.b16 %v3721
  %v3895 = vunpack.c.l.b16 %v3722
  %v3896 = vunpack.c.l.b16 %v3723
  %v3897 = vunpack.c.l.b16 %v3724
  %v3898 = vunpack.c.l.b16 %v3725
  %v3899 = vunpack.c.l.b16 %v3726
  %v3900 = vunpack.c.l.b16 %v3727
  %v3901 = vunpack.c.l.b16 %v3728
  %v3902 = vunpack.c.l.b16 %v3729
  %v3903 = vunpack.c.l.b16 %v3730
  %v3904 = vunpack.c.l.b16 %v3731
  %v3905 = vunpack.c.l.b16 %v3732
  %v3906 = vunpack.c.l.b16 %v3733
  %v3907 = vunpack.c.l.b16 %v3734
  %v3908 = vunpack.c.l.b16 %v3735
  %v3909 = vunpack.c.l.b16 %v3736
  %v3910 = vunpack.c.l.b16 %v3737
  %v3911 = vunpack.c.l.b16 %v3738
  %v3912 = vunpack.c.l.b16 %v3739
  %v3913 = vunpack.c.l.b16 %v3740
  %v3914 = vunpack.c.l.b16 %v3741
  %v3915 = vunpack.c.l.b16 %v3742
  %v3916 = vunpack.c.l.b16 %v3743
  %v3917 = vunpack.c.l.b16 %v3744
  %v3918 = vunpack.c.l.b16 %v3745
  %v3919 = vunpack.c.l.b16 %v3746
  %v3920 = vunpack.c.l.b16 %v3747
  %v3921 = vunpack.c.l.b16 %v3748
  %v3922 = vunpack.c.l.b16 %v3749
  %v3923 = vunpack.c.l.b16 %v3750
  %v3924 = vunpack.c.l.b16 %v3751
  %v3925 = vunpack.c.l.b16 %v3752
  %v3926 = vunpack.c.l.b16 %v3753
  %v3927 = vunpack.c.l.b16 %v3754
  %v3928 = vunpack.c.l.b16 %v3755
  %v3929 = vunpack.c.l.b16 %v3756
  %v3930 = vunpack.c.l.b16 %v3757
  %v3931 = vunpack.c.l.b16 %v3758
  %v3932 = vunpack.c.l.b16 %v3759
  %v3933 = vunpack.c.l.b16 %v3760
  %v3934 = vunpack.c.l.b16 %v3761
  %v3935 = vunpack.c.l.b16 %v3762
  %v3936 = vunpack.c.l.b16 %v3763
  %v3937 = vunpack.c.l.b16 %v3764
  %v3938 = vunpack.c.l.b16 %v3765
  %v3939 = vunpack.c.l.b16 %v3766
  %v3940 = vpack.c.b16 %v3869, %v3868
  %v3941 = vpack.c.b16 %v3871, %v3870
  %v3942 = vpack.c.b16 %v3873, %v3872
  %v3943 = vpack.c.b16 %v3875, %v3874
  %v3944 = vpack.c.b16 %v3877, %v3876
  %v3945 = vpack.c.b16 %v3879, %v3878
  %v3946 = vpack.c.b16 %v3881, %v3880
  %v3947 = vpack.c.b16 %v3883, %v3882
  %v3948 = vpack.c.b16 %v3885, %v3884
  %v3949 = vpack.c.b16 %v3887, %v3886
  %v3950 = vpack.c.b16 %v3889, %v3888
  %v3951 = vpack.c.b16 %v3891, %v3890
  %v3952 = vpack.c.b16 %v3893, %v3892
  %v3953 = vpack.c.b16 %v3895, %v3894
  %v3954 = vpack.c.b16 %v3897, %v3896
  %v3955 = vpack.c.b16 %v3899, %v3898
  %v3956 = vpack.c.b16 %v3901, %v3900
  %v3957 = vpack.c.b16 %v3903, %v3902
  %v3958 = vpack.c.b16 %v3905, %v3904
  %v3959 = vpack.c.b16 %v3907, %v3906
  %v3960 = vpack.c.b16 %v3909, %v3908
  %v3961 = vpack.c.b16 %v3911, %v3910
  %v3962 = vpack.c.b16 %v3913, %v3912
  %v3963 = vpack.c.b16 %v3915, %v3914
  %v3964 = vpack.c.b16 %v3917, %v3916
  %v3965 = vpack.c.b16 %v3919, %v3918
  %v3966 = vpack.c.b16 %v3921, %v3920
  %v3967 = vpack.c.b16 %v3923, %v3922
  %v3968 = vpack.c.b16 %v3925, %v3924
  %v3969 = vpack.c.b16 %v3927, %v3926
  %v3970 = vpack.c.b16 %v3929, %v3928
  %v3971 = vpack.c.b16 %v3931, %v3930
  %v3972 = vpack.c.b16 %v3933, %v3932
  %v3973 = vpack.c.b16 %v3935, %v3934
  %v3974 = vpack.c.b16 %v3937, %v3936
  %v3975 = vpack.c.b16 %v3939, %v3938
  %v4013 = vsel %vm523, %v3791, 0
  %4015 = vmatpush.bf16.msra.mxu0 %v3947
  %4016 = vmatpush.bf16.msra.mxu0 %v3946
  %4017 = vmatpush.bf16.msra.mxu0 %v3945
  %4018 = vmatpush.bf16.msra.mxu0 %v3944
  %4019 = vmatpush.bf16.msra.mxu0 %v3943
  %4020 = vmatpush.bf16.msra.mxu0 %v3942
  %4021 = vmatpush.bf16.msra.mxu0 %v3941
  %4022 = vmatpush.bf16.msra.mxu0 %v3940
  %4023 = vmatmul.bf16.gmra.mxu0 %v3787
  %v4024 = vpop.f32.mrf.mxu0
  %v4025 = vadd.f32 %v3769, %v4024
  %v4026 = vpop.f32.mrf.mxu0
  %v4027 = vadd.f32 %v3769, %v4026
  %4028 = vdwg.mxu0
  %4029 = vmatpush.bf16.msra.mxu0 %v3955
  %4030 = vmatpush.bf16.msra.mxu0 %v3954
  %4031 = vmatpush.bf16.msra.mxu0 %v3953
  %4032 = vmatpush.bf16.msra.mxu0 %v3952
  %4033 = vmatpush.bf16.msra.mxu0 %v3951
  %4034 = vmatpush.bf16.msra.mxu0 %v3950
  %4035 = vmatpush.bf16.msra.mxu0 %v3949
  %4036 = vmatpush.bf16.msra.mxu0 %v3948
  %4037 = vmatmul.bf16.gmra.mxu0 %v3788
  %v4038 = vpop.f32.mrf.mxu0
  %v4039 = vadd.f32 %v4025, %v4038
  %v4040 = vpop.f32.mrf.mxu0
  %v4041 = vadd.f32 %v4027, %v4040
  %4042 = vdwg.mxu0
  %4043 = vmatpush.bf16.msra.mxu0 %v3963
  %4044 = vmatpush.bf16.msra.mxu0 %v3962
  %4045 = vmatpush.bf16.msra.mxu0 %v3961
  %4046 = vmatpush.bf16.msra.mxu0 %v3960
  %4047 = vmatpush.bf16.msra.mxu0 %v3959
  %4048 = vmatpush.bf16.msra.mxu0 %v3958
  %4049 = vmatpush.bf16.msra.mxu0 %v3957
  %4050 = vmatpush.bf16.msra.mxu0 %v3956
  %4051 = vmatmul.bf16.gmra.mxu0 %v3789
  %v4052 = vpop.f32.mrf.mxu0
  %v4053 = vadd.f32 %v4039, %v4052
  %v4054 = vpop.f32.mrf.mxu0
  %v4055 = vadd.f32 %v4041, %v4054
  %4056 = vdwg.mxu0
  %4057 = vmatpush.bf16.msra.mxu0 %v3971
  %4058 = vmatpush.bf16.msra.mxu0 %v3970
  %4059 = vmatpush.bf16.msra.mxu0 %v3969
  %4060 = vmatpush.bf16.msra.mxu0 %v3968
  %4061 = vmatpush.bf16.msra.mxu0 %v3967
  %4062 = vmatpush.bf16.msra.mxu0 %v3966
  %4063 = vmatpush.bf16.msra.mxu0 %v3965
  %4064 = vmatpush.bf16.msra.mxu0 %v3964
  %4065 = vmatmul.bf16.gmra.mxu0 %v3790
  %v4066 = vpop.f32.mrf.mxu0
  %v4067 = vadd.f32 %v4053, %v4066
  %v4068 = vpop.f32.mrf.mxu0
  %v4069 = vadd.f32 %v4055, %v4068
  %4070 = vdwg.mxu0
  %4071 = vmatpush.bf16.msra.mxu0 0
  %4072 = vmatpush.bf16.msra.mxu0 0
  %4073 = vmatpush.bf16.msra.mxu0 0
  %4074 = vmatpush.bf16.msra.mxu0 0
  %4075 = vmatpush.bf16.msra.mxu0 %v3975
  %4076 = vmatpush.bf16.msra.mxu0 %v3974
  %4077 = vmatpush.bf16.msra.mxu0 %v3973
  %4078 = vmatpush.bf16.msra.mxu0 %v3972
  %4079 = vmatmul.bf16.gmra.mxu0 %v4013
  %v4080 = vpop.f32.mrf.mxu0
  %v4081 = vadd.f32 %v4067, %v4080
  %v4082 = vpop.f32.mrf.mxu0
  %v4083 = vadd.f32 %v4069, %v4082
  %4084 = vdwg.mxu0
  %v4085 = vmax.f32 %v4081, 0.0
  %v4086 = vmax.f32 %v4083, 0.0
  %v4087 = vpack.c.bf16 %v4085, %v4085
  %v4088 = vpack.c.bf16 %v4086, %v4086
  %4089 = vst.msk [vmem:[#allocation6] sm:$0xf] %vm3601, %v4087
  %4090 = vst.msk [vmem:[#allocation6 + $0x4] sm:$0xf] %vm3601, %v4088
  %v4091 = vld [vmem:[#allocation6] sm:$0xf]
  %v4092 = vld [vmem:[#allocation6 + $0x4] sm:$0xf]
  %v4093 = vld [vmem:[%s7] sm:$0xff]
  %v4094 = vld [vmem:[%s7 + $0x8] sm:$0xff]
  %v4095 = vld [vmem:[%s7 + $0x10] sm:$0xff]
  %v4096 = vld [vmem:[%s7 + $0x18] sm:$0xff]
  %v4097 = vld [vmem:[%s7 + $0x20] sm:$0xff]
  %v4098 = vld [vmem:[%s7 + $0x28] sm:$0xff]
  %v4099 = vld [vmem:[%s7 + $0x30] sm:$0xff]
  %v4100 = vld [vmem:[%s7 + $0x38] sm:$0xff]
  %v4101 = vld [vmem:[%s7 + $0x40] sm:$0xff]
  %v4102 = vld [vmem:[%s7 + $0x48] sm:$0xff]
  %v4103 = vld [vmem:[%s7 + $0x50] sm:$0xff]
  %v4104 = vld [vmem:[%s7 + $0x58] sm:$0xff]
  %v4105 = vld [vmem:[%s7 + $0x60] sm:$0xff]
  %v4106 = vld [vmem:[%s7 + $0x68] sm:$0xff]
  %v4107 = vld [vmem:[%s7 + $0x70] sm:$0xff]
  %v4108 = vld [vmem:[%s7 + $0x78] sm:$0xff]
  %v4109 = vld [vmem:[%s7 + $0x80] sm:$0xff]
  %v4110 = vld [vmem:[%s7 + $0x88] sm:$0xff]
  %v4111 = vld [vmem:[%s7 + $0x90] sm:$0xff]
  %v4112 = vld [vmem:[%s7 + $0x98] sm:$0xff]
  %v4113 = vld [vmem:[%s7 + $0xa0] sm:$0xff]
  %v4114 = vld [vmem:[%s7 + $0xa8] sm:$0xff]
  %v4115 = vld [vmem:[%s7 + $0xb0] sm:$0xff]
  %v4116 = vld [vmem:[%s7 + $0xb8] sm:$0xff]
  %v4117 = vld [vmem:[%s7 + $0xc0] sm:$0xff]
  %v4118 = vld [vmem:[%s7 + $0xc8] sm:$0xff]
  %v4119 = vld [vmem:[%s7 + $0xd0] sm:$0xff]
  %v4120 = vld [vmem:[%s7 + $0xd8] sm:$0xff]
  %v4121 = vld [vmem:[%s7 + $0xe0] sm:$0xff]
  %v4122 = vld [vmem:[%s7 + $0xe8] sm:$0xff]
  %v4123 = vld [vmem:[%s7 + $0xf0] sm:$0xff]
  %v4124 = vld [vmem:[%s7 + $0xf8] sm:$0xff]
  %v4125 = vld [vmem:[%s8] sm:$0xff]
  %v4127 = vperm.slane %v4125, 0
  %v4128 = vperm.slane %v4125, 1
  %v4129 = vperm.slane %v4125, 2
  %v4130 = vperm.slane %v4125, 3
  %v4131 = vperm.slane %v4125, 4
  %v4132 = vperm.slane %v4125, 5
  %v4133 = vperm.slane %v4125, 6
  %v4134 = vperm.slane %v4125, 7
  %v4145 = vunpack.c.l.b16 %v4091
  %v4146 = vunpack.c.l.b16 %v4092
  %v4147 = vpack.c.b16 %v4146, %v4145
  %v4180 = vunpack.c.l.b16 %v4093
  %v4181 = vunpack.c.h.b16 %v4093
  %v4182 = vunpack.c.l.b16 %v4094
  %v4183 = vunpack.c.h.b16 %v4094
  %v4184 = vunpack.c.l.b16 %v4095
  %v4185 = vunpack.c.h.b16 %v4095
  %v4186 = vunpack.c.l.b16 %v4096
  %v4187 = vunpack.c.h.b16 %v4096
  %v4188 = vunpack.c.l.b16 %v4097
  %v4189 = vunpack.c.h.b16 %v4097
  %v4190 = vunpack.c.l.b16 %v4098
  %v4191 = vunpack.c.h.b16 %v4098
  %v4192 = vunpack.c.l.b16 %v4099
  %v4193 = vunpack.c.h.b16 %v4099
  %v4194 = vunpack.c.l.b16 %v4100
  %v4195 = vunpack.c.h.b16 %v4100
  %v4196 = vunpack.c.l.b16 %v4101
  %v4197 = vunpack.c.h.b16 %v4101
  %v4198 = vunpack.c.l.b16 %v4102
  %v4199 = vunpack.c.h.b16 %v4102
  %v4200 = vunpack.c.l.b16 %v4103
  %v4201 = vunpack.c.h.b16 %v4103
  %v4202 = vunpack.c.l.b16 %v4104
  %v4203 = vunpack.c.h.b16 %v4104
  %v4204 = vunpack.c.l.b16 %v4105
  %v4205 = vunpack.c.h.b16 %v4105
  %v4206 = vunpack.c.l.b16 %v4106
  %v4207 = vunpack.c.h.b16 %v4106
  %v4208 = vunpack.c.l.b16 %v4107
  %v4209 = vunpack.c.h.b16 %v4107
  %v4210 = vunpack.c.l.b16 %v4108
  %v4211 = vunpack.c.h.b16 %v4108
  %v4212 = vunpack.c.l.b16 %v4109
  %v4213 = vunpack.c.h.b16 %v4109
  %v4214 = vunpack.c.l.b16 %v4110
  %v4215 = vunpack.c.h.b16 %v4110
  %v4216 = vunpack.c.l.b16 %v4111
  %v4217 = vunpack.c.h.b16 %v4111
  %v4218 = vunpack.c.l.b16 %v4112
  %v4219 = vunpack.c.h.b16 %v4112
  %v4220 = vunpack.c.l.b16 %v4113
  %v4221 = vunpack.c.h.b16 %v4113
  %v4222 = vunpack.c.l.b16 %v4114
  %v4223 = vunpack.c.h.b16 %v4114
  %v4224 = vunpack.c.l.b16 %v4115
  %v4225 = vunpack.c.h.b16 %v4115
  %v4226 = vunpack.c.l.b16 %v4116
  %v4227 = vunpack.c.h.b16 %v4116
  %v4228 = vunpack.c.l.b16 %v4117
  %v4229 = vunpack.c.h.b16 %v4117
  %v4230 = vunpack.c.l.b16 %v4118
  %v4231 = vunpack.c.h.b16 %v4118
  %v4232 = vunpack.c.l.b16 %v4119
  %v4233 = vunpack.c.h.b16 %v4119
  %v4234 = vunpack.c.l.b16 %v4120
  %v4235 = vunpack.c.h.b16 %v4120
  %v4236 = vunpack.c.l.b16 %v4121
  %v4237 = vunpack.c.h.b16 %v4121
  %v4238 = vunpack.c.l.b16 %v4122
  %v4239 = vunpack.c.h.b16 %v4122
  %v4240 = vunpack.c.l.b16 %v4123
  %v4241 = vunpack.c.h.b16 %v4123
  %v4242 = vunpack.c.l.b16 %v4124
  %v4243 = vunpack.c.h.b16 %v4124
  %v4244 = vpack.c.b16 %v4188, %v4180
  %v4245 = vpack.c.b16 %v4189, %v4181
  %v4246 = vpack.c.b16 %v4190, %v4182
  %v4247 = vpack.c.b16 %v4191, %v4183
  %v4248 = vpack.c.b16 %v4192, %v4184
  %v4249 = vpack.c.b16 %v4193, %v4185
  %v4250 = vpack.c.b16 %v4194, %v4186
  %v4251 = vpack.c.b16 %v4195, %v4187
  %v4252 = vpack.c.b16 %v4204, %v4196
  %v4253 = vpack.c.b16 %v4205, %v4197
  %v4254 = vpack.c.b16 %v4206, %v4198
  %v4255 = vpack.c.b16 %v4207, %v4199
  %v4256 = vpack.c.b16 %v4208, %v4200
  %v4257 = vpack.c.b16 %v4209, %v4201
  %v4258 = vpack.c.b16 %v4210, %v4202
  %v4259 = vpack.c.b16 %v4211, %v4203
  %v4260 = vpack.c.b16 %v4220, %v4212
  %v4261 = vpack.c.b16 %v4221, %v4213
  %v4262 = vpack.c.b16 %v4222, %v4214
  %v4263 = vpack.c.b16 %v4223, %v4215
  %v4264 = vpack.c.b16 %v4224, %v4216
  %v4265 = vpack.c.b16 %v4225, %v4217
  %v4266 = vpack.c.b16 %v4226, %v4218
  %v4267 = vpack.c.b16 %v4227, %v4219
  %v4268 = vpack.c.b16 %v4236, %v4228
  %v4269 = vpack.c.b16 %v4237, %v4229
  %v4270 = vpack.c.b16 %v4238, %v4230
  %v4271 = vpack.c.b16 %v4239, %v4231
  %v4272 = vpack.c.b16 %v4240, %v4232
  %v4273 = vpack.c.b16 %v4241, %v4233
  %v4274 = vpack.c.b16 %v4242, %v4234
  %v4275 = vpack.c.b16 %v4243, %v4235
  %v4309 = vsel %vm523, %v4147, 0
  %4311 = vmatpush.bf16.msra.mxu0 0
  %4312 = vmatpush.bf16.msra.mxu0 0
  %4313 = vmatpush.bf16.msra.mxu0 0
  %4314 = vmatpush.bf16.msra.mxu0 0
  %4315 = vmatpush.bf16.msra.mxu0 %v4268
  %4316 = vmatpush.bf16.msra.mxu0 %v4260
  %4317 = vmatpush.bf16.msra.mxu0 %v4252
  %4318 = vmatpush.bf16.msra.mxu0 %v4244
  %4319 = vmatmul.bf16.gmra.mxu0 %v4309
  %v4320 = vpop.f32.mrf.mxu0
  %v4321 = vadd.f32 %v4127, %v4320
  %v4322 = vpop.f32.mrf.mxu0
  %v4323 = vadd.f32 %v4127, %v4322
  %4324 = vdwg.mxu0
  %4325 = vmatpush.bf16.msra.mxu0 0
  %4326 = vmatpush.bf16.msra.mxu0 0
  %4327 = vmatpush.bf16.msra.mxu0 0
  %4328 = vmatpush.bf16.msra.mxu0 0
  %4329 = vmatpush.bf16.msra.mxu0 %v4269
  %4330 = vmatpush.bf16.msra.mxu0 %v4261
  %4331 = vmatpush.bf16.msra.mxu0 %v4253
  %4332 = vmatpush.bf16.msra.mxu0 %v4245
  %4333 = vmatmul.bf16.gmra.mxu0 %v4309
  %v4334 = vpop.f32.mrf.mxu0
  %v4335 = vadd.f32 %v4128, %v4334
  %v4336 = vpop.f32.mrf.mxu0
  %v4337 = vadd.f32 %v4128, %v4336
  %4338 = vdwg.mxu0
  %4339 = vmatpush.bf16.msra.mxu0 0
  %4340 = vmatpush.bf16.msra.mxu0 0
  %4341 = vmatpush.bf16.msra.mxu0 0
  %4342 = vmatpush.bf16.msra.mxu0 0
  %4343 = vmatpush.bf16.msra.mxu0 %v4270
  %4344 = vmatpush.bf16.msra.mxu0 %v4262
  %4345 = vmatpush.bf16.msra.mxu0 %v4254
  %4346 = vmatpush.bf16.msra.mxu0 %v4246
  %4347 = vmatmul.bf16.gmra.mxu0 %v4309
  %v4348 = vpop.f32.mrf.mxu0
  %v4349 = vadd.f32 %v4129, %v4348
  %v4350 = vpop.f32.mrf.mxu0
  %v4351 = vadd.f32 %v4129, %v4350
  %4352 = vdwg.mxu0
  %4353 = vmatpush.bf16.msra.mxu0 0
  %4354 = vmatpush.bf16.msra.mxu0 0
  %4355 = vmatpush.bf16.msra.mxu0 0
  %4356 = vmatpush.bf16.msra.mxu0 0
  %4357 = vmatpush.bf16.msra.mxu0 %v4271
  %4358 = vmatpush.bf16.msra.mxu0 %v4263
  %4359 = vmatpush.bf16.msra.mxu0 %v4255
  %4360 = vmatpush.bf16.msra.mxu0 %v4247
  %4361 = vmatmul.bf16.gmra.mxu0 %v4309
  %v4362 = vpop.f32.mrf.mxu0
  %v4363 = vadd.f32 %v4130, %v4362
  %v4364 = vpop.f32.mrf.mxu0
  %v4365 = vadd.f32 %v4130, %v4364
  %4366 = vdwg.mxu0
  %4367 = vmatpush.bf16.msra.mxu0 0
  %4368 = vmatpush.bf16.msra.mxu0 0
  %4369 = vmatpush.bf16.msra.mxu0 0
  %4370 = vmatpush.bf16.msra.mxu0 0
  %4371 = vmatpush.bf16.msra.mxu0 %v4272
  %4372 = vmatpush.bf16.msra.mxu0 %v4264
  %4373 = vmatpush.bf16.msra.mxu0 %v4256
  %4374 = vmatpush.bf16.msra.mxu0 %v4248
  %4375 = vmatmul.bf16.gmra.mxu0 %v4309
  %v4376 = vpop.f32.mrf.mxu0
  %v4377 = vadd.f32 %v4131, %v4376
  %v4378 = vpop.f32.mrf.mxu0
  %v4379 = vadd.f32 %v4131, %v4378
  %4380 = vdwg.mxu0
  %4381 = vmatpush.bf16.msra.mxu0 0
  %4382 = vmatpush.bf16.msra.mxu0 0
  %4383 = vmatpush.bf16.msra.mxu0 0
  %4384 = vmatpush.bf16.msra.mxu0 0
  %4385 = vmatpush.bf16.msra.mxu0 %v4273
  %4386 = vmatpush.bf16.msra.mxu0 %v4265
  %4387 = vmatpush.bf16.msra.mxu0 %v4257
  %4388 = vmatpush.bf16.msra.mxu0 %v4249
  %4389 = vmatmul.bf16.gmra.mxu0 %v4309
  %v4390 = vpop.f32.mrf.mxu0
  %v4391 = vadd.f32 %v4132, %v4390
  %v4392 = vpop.f32.mrf.mxu0
  %v4393 = vadd.f32 %v4132, %v4392
  %4394 = vdwg.mxu0
  %4395 = vmatpush.bf16.msra.mxu0 0
  %4396 = vmatpush.bf16.msra.mxu0 0
  %4397 = vmatpush.bf16.msra.mxu0 0
  %4398 = vmatpush.bf16.msra.mxu0 0
  %4399 = vmatpush.bf16.msra.mxu0 %v4274
  %4400 = vmatpush.bf16.msra.mxu0 %v4266
  %4401 = vmatpush.bf16.msra.mxu0 %v4258
  %4402 = vmatpush.bf16.msra.mxu0 %v4250
  %4403 = vmatmul.bf16.gmra.mxu0 %v4309
  %v4404 = vpop.f32.mrf.mxu0
  %v4405 = vadd.f32 %v4133, %v4404
  %v4406 = vpop.f32.mrf.mxu0
  %v4407 = vadd.f32 %v4133, %v4406
  %4408 = vdwg.mxu0
  %4409 = vmatpush.bf16.msra.mxu0 0
  %4410 = vmatpush.bf16.msra.mxu0 0
  %4411 = vmatpush.bf16.msra.mxu0 0
  %4412 = vmatpush.bf16.msra.mxu0 0
  %4413 = vmatpush.bf16.msra.mxu0 %v4275
  %4414 = vmatpush.bf16.msra.mxu0 %v4267
  %4415 = vmatpush.bf16.msra.mxu0 %v4259
  %4416 = vmatpush.bf16.msra.mxu0 %v4251
  %4417 = vmatmul.bf16.gmra.mxu0 %v4309
  %v4418 = vpop.f32.mrf.mxu0
  %v4419 = vadd.f32 %v4134, %v4418
  %v4420 = vpop.f32.mrf.mxu0
  %v4421 = vadd.f32 %v4134, %v4420
  %4422 = vdwg.mxu0
  %v4423 = vmax.f32 %v4321, 0.0
  %v4424 = vmax.f32 %v4335, 0.0
  %v4425 = vmax.f32 %v4349, 0.0
  %v4426 = vmax.f32 %v4363, 0.0
  %v4427 = vmax.f32 %v4377, 0.0
  %v4428 = vmax.f32 %v4391, 0.0
  %v4429 = vmax.f32 %v4405, 0.0
  %v4430 = vmax.f32 %v4419, 0.0
  %v4431 = vmax.f32 %v4323, 0.0
  %v4432 = vmax.f32 %v4337, 0.0
  %v4433 = vmax.f32 %v4351, 0.0
  %v4434 = vmax.f32 %v4365, 0.0
  %v4435 = vmax.f32 %v4379, 0.0
  %v4436 = vmax.f32 %v4393, 0.0
  %v4437 = vmax.f32 %v4407, 0.0
  %v4438 = vmax.f32 %v4421, 0.0
  %v4439 = vpack.c.bf16 %v4431, %v4423
  %v4440 = vpack.c.bf16 %v4432, %v4424
  %v4441 = vpack.c.bf16 %v4433, %v4425
  %v4442 = vpack.c.bf16 %v4434, %v4426
  %v4443 = vpack.c.bf16 %v4435, %v4427
  %v4444 = vpack.c.bf16 %v4436, %v4428
  %v4445 = vpack.c.bf16 %v4437, %v4429
  %v4446 = vpack.c.bf16 %v4438, %v4430
  %v4447 = vld [vmem:[%s9] sm:$0xf]
  %v4448 = vld [vmem:[%s9 + $0x4] sm:$0xf]
  %v4449 = vld [vmem:[%s9 + $0x8] sm:$0xf]
  %v4450 = vld [vmem:[%s9 + $0xc] sm:$0xf]
  %v4451 = vld [vmem:[%s9 + $0x10] sm:$0xf]
  %v4452 = vld [vmem:[%s9 + $0x14] sm:$0xf]
  %v4453 = vld [vmem:[%s9 + $0x18] sm:$0xf]
  %v4454 = vld [vmem:[%s9 + $0x1c] sm:$0xf]
  %v4455 = vld [vmem:[%s9 + $0x20] sm:$0xf]
  %v4456 = vld [vmem:[%s9 + $0x24] sm:$0xf]
  %v4457 = vld [vmem:[%s9 + $0x28] sm:$0xf]
  %v4458 = vld [vmem:[%s9 + $0x2c] sm:$0xf]
  %v4459 = vld [vmem:[%s9 + $0x30] sm:$0xf]
  %v4460 = vld [vmem:[%s9 + $0x34] sm:$0xf]
  %v4461 = vld [vmem:[%s9 + $0x38] sm:$0xf]
  %v4462 = vld [vmem:[%s9 + $0x3c] sm:$0xf]
  %v4463 = vld [vmem:[%s9 + $0x40] sm:$0xf]
  %v4464 = vld [vmem:[%s9 + $0x44] sm:$0xf]
  %v4465 = vld [vmem:[%s9 + $0x48] sm:$0xf]
  %v4466 = vld [vmem:[%s9 + $0x4c] sm:$0xf]
  %v4467 = vld [vmem:[%s9 + $0x50] sm:$0xf]
  %v4468 = vld [vmem:[%s9 + $0x54] sm:$0xf]
  %v4469 = vld [vmem:[%s9 + $0x58] sm:$0xf]
  %v4470 = vld [vmem:[%s9 + $0x5c] sm:$0xf]
  %v4471 = vld [vmem:[%s9 + $0x60] sm:$0xf]
  %v4472 = vld [vmem:[%s9 + $0x64] sm:$0xf]
  %v4473 = vld [vmem:[%s9 + $0x68] sm:$0xf]
  %v4474 = vld [vmem:[%s9 + $0x6c] sm:$0xf]
  %v4475 = vld [vmem:[%s9 + $0x70] sm:$0xf]
  %v4476 = vld [vmem:[%s9 + $0x74] sm:$0xf]
  %v4477 = vld [vmem:[%s9 + $0x78] sm:$0xf]
  %v4478 = vld [vmem:[%s9 + $0x7c] sm:$0xf]
  %v4479 = vld [vmem:[%s9 + $0x80] sm:$0xf]
  %v4480 = vld [vmem:[%s9 + $0x84] sm:$0xf]
  %v4481 = vld [vmem:[%s9 + $0x88] sm:$0xf]
  %v4482 = vld [vmem:[%s9 + $0x8c] sm:$0xf]
  %v4483 = vld [vmem:[%s9 + $0x90] sm:$0xf]
  %v4484 = vld [vmem:[%s9 + $0x94] sm:$0xf]
  %v4485 = vld [vmem:[%s9 + $0x98] sm:$0xf]
  %v4486 = vld [vmem:[%s9 + $0x9c] sm:$0xf]
  %v4487 = vld [vmem:[%s9 + $0xa0] sm:$0xf]
  %v4488 = vld [vmem:[%s9 + $0xa4] sm:$0xf]
  %v4489 = vld [vmem:[%s9 + $0xa8] sm:$0xf]
  %v4490 = vld [vmem:[%s9 + $0xac] sm:$0xf]
  %v4491 = vld [vmem:[%s9 + $0xb0] sm:$0xf]
  %v4492 = vld [vmem:[%s9 + $0xb4] sm:$0xf]
  %v4493 = vld [vmem:[%s9 + $0xb8] sm:$0xf]
  %v4494 = vld [vmem:[%s9 + $0xbc] sm:$0xf]
  %v4495 = vld [vmem:[%s9 + $0xc0] sm:$0xf]
  %v4496 = vld [vmem:[%s9 + $0xc4] sm:$0xf]
  %v4497 = vld [vmem:[%s9 + $0xc8] sm:$0xf]
  %v4498 = vld [vmem:[%s9 + $0xcc] sm:$0xf]
  %v4499 = vld [vmem:[%s9 + $0xd0] sm:$0xf]
  %v4500 = vld [vmem:[%s9 + $0xd4] sm:$0xf]
  %v4501 = vld [vmem:[%s9 + $0xd8] sm:$0xf]
  %v4502 = vld [vmem:[%s9 + $0xdc] sm:$0xf]
  %v4503 = vld [vmem:[%s9 + $0xe0] sm:$0xf]
  %v4504 = vld [vmem:[%s9 + $0xe4] sm:$0xf]
  %v4505 = vld [vmem:[%s9 + $0xe8] sm:$0xf]
  %v4506 = vld [vmem:[%s9 + $0xec] sm:$0xf]
  %v4507 = vld [vmem:[%s9 + $0xf0] sm:$0xf]
  %v4508 = vld [vmem:[%s9 + $0xf4] sm:$0xf]
  %v4509 = vld [vmem:[%s9 + $0xf8] sm:$0xf]
  %v4510 = vld [vmem:[%s9 + $0xfc] sm:$0xf]
  %v4511 = vld [vmem:[%s9 + $0x100] sm:$0xf]
  %v4512 = vld [vmem:[%s9 + $0x104] sm:$0xf]
  %v4513 = vld [vmem:[%s9 + $0x108] sm:$0xf]
  %v4514 = vld [vmem:[%s9 + $0x10c] sm:$0xf]
  %v4515 = vld [vmem:[%s9 + $0x110] sm:$0xf]
  %v4516 = vld [vmem:[%s9 + $0x114] sm:$0xf]
  %v4517 = vld [vmem:[%s9 + $0x118] sm:$0xf]
  %v4518 = vld [vmem:[%s9 + $0x11c] sm:$0xf]
  %v4519 = vld [vmem:[%s9 + $0x120] sm:$0xf]
  %v4520 = vld [vmem:[%s9 + $0x124] sm:$0xf]
  %v4521 = vld [vmem:[%s9 + $0x128] sm:$0xf]
  %v4522 = vld [vmem:[%s9 + $0x12c] sm:$0xf]
  %v4523 = vld [vmem:[%s9 + $0x130] sm:$0xf]
  %v4524 = vld [vmem:[%s9 + $0x134] sm:$0xf]
  %v4525 = vld [vmem:[%s9 + $0x138] sm:$0xf]
  %v4526 = vld [vmem:[%s9 + $0x13c] sm:$0xf]
  %v4527 = vld [vmem:[%s9 + $0x140] sm:$0xf]
  %v4528 = vld [vmem:[%s9 + $0x144] sm:$0xf]
  %v4529 = vld [vmem:[%s9 + $0x148] sm:$0xf]
  %v4530 = vld [vmem:[%s9 + $0x14c] sm:$0xf]
  %v4531 = vld [vmem:[%s9 + $0x150] sm:$0xf]
  %v4532 = vld [vmem:[%s9 + $0x154] sm:$0xf]
  %v4533 = vld [vmem:[%s9 + $0x158] sm:$0xf]
  %v4534 = vld [vmem:[%s9 + $0x15c] sm:$0xf]
  %v4535 = vld [vmem:[%s9 + $0x160] sm:$0xf]
  %v4536 = vld [vmem:[%s9 + $0x164] sm:$0xf]
  %v4537 = vld [vmem:[%s9 + $0x168] sm:$0xf]
  %v4538 = vld [vmem:[%s9 + $0x16c] sm:$0xf]
  %v4539 = vld [vmem:[%s9 + $0x170] sm:$0xf]
  %v4540 = vld [vmem:[%s9 + $0x174] sm:$0xf]
  %v4541 = vld [vmem:[%s9 + $0x178] sm:$0xf]
  %v4542 = vld [vmem:[%s9 + $0x17c] sm:$0xf]
  %v4543 = vld [vmem:[%s9 + $0x180] sm:$0xf]
  %v4544 = vld [vmem:[%s9 + $0x184] sm:$0xf]
  %v4545 = vld [vmem:[%s9 + $0x188] sm:$0xf]
  %v4546 = vld [vmem:[%s9 + $0x18c] sm:$0xf]
  %v4547 = vld [vmem:[%s9 + $0x190] sm:$0xf]
  %v4548 = vld [vmem:[%s9 + $0x194] sm:$0xf]
  %v4549 = vld [vmem:[%s9 + $0x198] sm:$0xf]
  %v4550 = vld [vmem:[%s9 + $0x19c] sm:$0xf]
  %v4551 = vld [vmem:[%s9 + $0x1a0] sm:$0xf]
  %v4552 = vld [vmem:[%s9 + $0x1a4] sm:$0xf]
  %v4553 = vld [vmem:[%s9 + $0x1a8] sm:$0xf]
  %v4554 = vld [vmem:[%s9 + $0x1ac] sm:$0xf]
  %v4555 = vld [vmem:[%s9 + $0x1b0] sm:$0xf]
  %v4556 = vld [vmem:[%s9 + $0x1b4] sm:$0xf]
  %v4557 = vld [vmem:[%s9 + $0x1b8] sm:$0xf]
  %v4558 = vld [vmem:[%s9 + $0x1bc] sm:$0xf]
  %v4559 = vld [vmem:[%s9 + $0x1c0] sm:$0xf]
  %v4560 = vld [vmem:[%s9 + $0x1c4] sm:$0xf]
  %v4561 = vld [vmem:[%s9 + $0x1c8] sm:$0xf]
  %v4562 = vld [vmem:[%s9 + $0x1cc] sm:$0xf]
  %v4563 = vld [vmem:[%s9 + $0x1d0] sm:$0xf]
  %v4564 = vld [vmem:[%s9 + $0x1d4] sm:$0xf]
  %v4565 = vld [vmem:[%s9 + $0x1d8] sm:$0xf]
  %v4566 = vld [vmem:[%s9 + $0x1dc] sm:$0xf]
  %v4567 = vld [vmem:[%s9 + $0x1e0] sm:$0xf]
  %v4568 = vld [vmem:[%s9 + $0x1e4] sm:$0xf]
  %v4569 = vld [vmem:[%s9 + $0x1e8] sm:$0xf]
  %v4570 = vld [vmem:[%s9 + $0x1ec] sm:$0xf]
  %v4571 = vld [vmem:[%s9 + $0x1f0] sm:$0xf]
  %v4572 = vld [vmem:[%s9 + $0x1f4] sm:$0xf]
  %v4573 = vld [vmem:[%s9 + $0x1f8] sm:$0xf]
  %v4574 = vld [vmem:[%s9 + $0x1fc] sm:$0xf]
  %v4575 = vld [vmem:[%s10] sm:$0x1]
  %v4577 = vperm.slane %v4575, 0
  %v4707 = vunpack.c.l.b16 %v4447
  %v4708 = vunpack.c.l.b16 %v4448
  %v4709 = vunpack.c.l.b16 %v4449
  %v4710 = vunpack.c.l.b16 %v4450
  %v4711 = vunpack.c.l.b16 %v4451
  %v4712 = vunpack.c.l.b16 %v4452
  %v4713 = vunpack.c.l.b16 %v4453
  %v4714 = vunpack.c.l.b16 %v4454
  %v4715 = vunpack.c.l.b16 %v4455
  %v4716 = vunpack.c.l.b16 %v4456
  %v4717 = vunpack.c.l.b16 %v4457
  %v4718 = vunpack.c.l.b16 %v4458
  %v4719 = vunpack.c.l.b16 %v4459
  %v4720 = vunpack.c.l.b16 %v4460
  %v4721 = vunpack.c.l.b16 %v4461
  %v4722 = vunpack.c.l.b16 %v4462
  %v4723 = vunpack.c.l.b16 %v4463
  %v4724 = vunpack.c.l.b16 %v4464
  %v4725 = vunpack.c.l.b16 %v4465
  %v4726 = vunpack.c.l.b16 %v4466
  %v4727 = vunpack.c.l.b16 %v4467
  %v4728 = vunpack.c.l.b16 %v4468
  %v4729 = vunpack.c.l.b16 %v4469
  %v4730 = vunpack.c.l.b16 %v4470
  %v4731 = vunpack.c.l.b16 %v4471
  %v4732 = vunpack.c.l.b16 %v4472
  %v4733 = vunpack.c.l.b16 %v4473
  %v4734 = vunpack.c.l.b16 %v4474
  %v4735 = vunpack.c.l.b16 %v4475
  %v4736 = vunpack.c.l.b16 %v4476
  %v4737 = vunpack.c.l.b16 %v4477
  %v4738 = vunpack.c.l.b16 %v4478
  %v4739 = vunpack.c.l.b16 %v4479
  %v4740 = vunpack.c.l.b16 %v4480
  %v4741 = vunpack.c.l.b16 %v4481
  %v4742 = vunpack.c.l.b16 %v4482
  %v4743 = vunpack.c.l.b16 %v4483
  %v4744 = vunpack.c.l.b16 %v4484
  %v4745 = vunpack.c.l.b16 %v4485
  %v4746 = vunpack.c.l.b16 %v4486
  %v4747 = vunpack.c.l.b16 %v4487
  %v4748 = vunpack.c.l.b16 %v4488
  %v4749 = vunpack.c.l.b16 %v4489
  %v4750 = vunpack.c.l.b16 %v4490
  %v4751 = vunpack.c.l.b16 %v4491
  %v4752 = vunpack.c.l.b16 %v4492
  %v4753 = vunpack.c.l.b16 %v4493
  %v4754 = vunpack.c.l.b16 %v4494
  %v4755 = vunpack.c.l.b16 %v4495
  %v4756 = vunpack.c.l.b16 %v4496
  %v4757 = vunpack.c.l.b16 %v4497
  %v4758 = vunpack.c.l.b16 %v4498
  %v4759 = vunpack.c.l.b16 %v4499
  %v4760 = vunpack.c.l.b16 %v4500
  %v4761 = vunpack.c.l.b16 %v4501
  %v4762 = vunpack.c.l.b16 %v4502
  %v4763 = vunpack.c.l.b16 %v4503
  %v4764 = vunpack.c.l.b16 %v4504
  %v4765 = vunpack.c.l.b16 %v4505
  %v4766 = vunpack.c.l.b16 %v4506
  %v4767 = vunpack.c.l.b16 %v4507
  %v4768 = vunpack.c.l.b16 %v4508
  %v4769 = vunpack.c.l.b16 %v4509
  %v4770 = vunpack.c.l.b16 %v4510
  %v4771 = vunpack.c.l.b16 %v4511
  %v4772 = vunpack.c.l.b16 %v4512
  %v4773 = vunpack.c.l.b16 %v4513
  %v4774 = vunpack.c.l.b16 %v4514
  %v4775 = vunpack.c.l.b16 %v4515
  %v4776 = vunpack.c.l.b16 %v4516
  %v4777 = vunpack.c.l.b16 %v4517
  %v4778 = vunpack.c.l.b16 %v4518
  %v4779 = vunpack.c.l.b16 %v4519
  %v4780 = vunpack.c.l.b16 %v4520
  %v4781 = vunpack.c.l.b16 %v4521
  %v4782 = vunpack.c.l.b16 %v4522
  %v4783 = vunpack.c.l.b16 %v4523
  %v4784 = vunpack.c.l.b16 %v4524
  %v4785 = vunpack.c.l.b16 %v4525
  %v4786 = vunpack.c.l.b16 %v4526
  %v4787 = vunpack.c.l.b16 %v4527
  %v4788 = vunpack.c.l.b16 %v4528
  %v4789 = vunpack.c.l.b16 %v4529
  %v4790 = vunpack.c.l.b16 %v4530
  %v4791 = vunpack.c.l.b16 %v4531
  %v4792 = vunpack.c.l.b16 %v4532
  %v4793 = vunpack.c.l.b16 %v4533
  %v4794 = vunpack.c.l.b16 %v4534
  %v4795 = vunpack.c.l.b16 %v4535
  %v4796 = vunpack.c.l.b16 %v4536
  %v4797 = vunpack.c.l.b16 %v4537
  %v4798 = vunpack.c.l.b16 %v4538
  %v4799 = vunpack.c.l.b16 %v4539
  %v4800 = vunpack.c.l.b16 %v4540
  %v4801 = vunpack.c.l.b16 %v4541
  %v4802 = vunpack.c.l.b16 %v4542
  %v4803 = vunpack.c.l.b16 %v4543
  %v4804 = vunpack.c.l.b16 %v4544
  %v4805 = vunpack.c.l.b16 %v4545
  %v4806 = vunpack.c.l.b16 %v4546
  %v4807 = vunpack.c.l.b16 %v4547
  %v4808 = vunpack.c.l.b16 %v4548
  %v4809 = vunpack.c.l.b16 %v4549
  %v4810 = vunpack.c.l.b16 %v4550
  %v4811 = vunpack.c.l.b16 %v4551
  %v4812 = vunpack.c.l.b16 %v4552
  %v4813 = vunpack.c.l.b16 %v4553
  %v4814 = vunpack.c.l.b16 %v4554
  %v4815 = vunpack.c.l.b16 %v4555
  %v4816 = vunpack.c.l.b16 %v4556
  %v4817 = vunpack.c.l.b16 %v4557
  %v4818 = vunpack.c.l.b16 %v4558
  %v4819 = vunpack.c.l.b16 %v4559
  %v4820 = vunpack.c.l.b16 %v4560
  %v4821 = vunpack.c.l.b16 %v4561
  %v4822 = vunpack.c.l.b16 %v4562
  %v4823 = vunpack.c.l.b16 %v4563
  %v4824 = vunpack.c.l.b16 %v4564
  %v4825 = vunpack.c.l.b16 %v4565
  %v4826 = vunpack.c.l.b16 %v4566
  %v4827 = vunpack.c.l.b16 %v4567
  %v4828 = vunpack.c.l.b16 %v4568
  %v4829 = vunpack.c.l.b16 %v4569
  %v4830 = vunpack.c.l.b16 %v4570
  %v4831 = vunpack.c.l.b16 %v4571
  %v4832 = vunpack.c.l.b16 %v4572
  %v4833 = vunpack.c.l.b16 %v4573
  %v4834 = vunpack.c.l.b16 %v4574
  %v4835 = vpack.c.b16 %v4708, %v4707
  %v4836 = vpack.c.b16 %v4710, %v4709
  %v4837 = vpack.c.b16 %v4712, %v4711
  %v4838 = vpack.c.b16 %v4714, %v4713
  %v4839 = vpack.c.b16 %v4716, %v4715
  %v4840 = vpack.c.b16 %v4718, %v4717
  %v4841 = vpack.c.b16 %v4720, %v4719
  %v4842 = vpack.c.b16 %v4722, %v4721
  %v4843 = vpack.c.b16 %v4724, %v4723
  %v4844 = vpack.c.b16 %v4726, %v4725
  %v4845 = vpack.c.b16 %v4728, %v4727
  %v4846 = vpack.c.b16 %v4730, %v4729
  %v4847 = vpack.c.b16 %v4732, %v4731
  %v4848 = vpack.c.b16 %v4734, %v4733
  %v4849 = vpack.c.b16 %v4736, %v4735
  %v4850 = vpack.c.b16 %v4738, %v4737
  %v4851 = vpack.c.b16 %v4740, %v4739
  %v4852 = vpack.c.b16 %v4742, %v4741
  %v4853 = vpack.c.b16 %v4744, %v4743
  %v4854 = vpack.c.b16 %v4746, %v4745
  %v4855 = vpack.c.b16 %v4748, %v4747
  %v4856 = vpack.c.b16 %v4750, %v4749
  %v4857 = vpack.c.b16 %v4752, %v4751
  %v4858 = vpack.c.b16 %v4754, %v4753
  %v4859 = vpack.c.b16 %v4756, %v4755
  %v4860 = vpack.c.b16 %v4758, %v4757
  %v4861 = vpack.c.b16 %v4760, %v4759
  %v4862 = vpack.c.b16 %v4762, %v4761
  %v4863 = vpack.c.b16 %v4764, %v4763
  %v4864 = vpack.c.b16 %v4766, %v4765
  %v4865 = vpack.c.b16 %v4768, %v4767
  %v4866 = vpack.c.b16 %v4770, %v4769
  %v4867 = vpack.c.b16 %v4772, %v4771
  %v4868 = vpack.c.b16 %v4774, %v4773
  %v4869 = vpack.c.b16 %v4776, %v4775
  %v4870 = vpack.c.b16 %v4778, %v4777
  %v4871 = vpack.c.b16 %v4780, %v4779
  %v4872 = vpack.c.b16 %v4782, %v4781
  %v4873 = vpack.c.b16 %v4784, %v4783
  %v4874 = vpack.c.b16 %v4786, %v4785
  %v4875 = vpack.c.b16 %v4788, %v4787
  %v4876 = vpack.c.b16 %v4790, %v4789
  %v4877 = vpack.c.b16 %v4792, %v4791
  %v4878 = vpack.c.b16 %v4794, %v4793
  %v4879 = vpack.c.b16 %v4796, %v4795
  %v4880 = vpack.c.b16 %v4798, %v4797
  %v4881 = vpack.c.b16 %v4800, %v4799
  %v4882 = vpack.c.b16 %v4802, %v4801
  %v4883 = vpack.c.b16 %v4804, %v4803
  %v4884 = vpack.c.b16 %v4806, %v4805
  %v4885 = vpack.c.b16 %v4808, %v4807
  %v4886 = vpack.c.b16 %v4810, %v4809
  %v4887 = vpack.c.b16 %v4812, %v4811
  %v4888 = vpack.c.b16 %v4814, %v4813
  %v4889 = vpack.c.b16 %v4816, %v4815
  %v4890 = vpack.c.b16 %v4818, %v4817
  %v4891 = vpack.c.b16 %v4820, %v4819
  %v4892 = vpack.c.b16 %v4822, %v4821
  %v4893 = vpack.c.b16 %v4824, %v4823
  %v4894 = vpack.c.b16 %v4826, %v4825
  %v4895 = vpack.c.b16 %v4828, %v4827
  %v4896 = vpack.c.b16 %v4830, %v4829
  %v4897 = vpack.c.b16 %v4832, %v4831
  %v4898 = vpack.c.b16 %v4834, %v4833
  %4963 = vmatpush.bf16.msra.mxu0 %v4842
  %4964 = vmatpush.bf16.msra.mxu0 %v4841
  %4965 = vmatpush.bf16.msra.mxu0 %v4840
  %4966 = vmatpush.bf16.msra.mxu0 %v4839
  %4967 = vmatpush.bf16.msra.mxu0 %v4838
  %4968 = vmatpush.bf16.msra.mxu0 %v4837
  %4969 = vmatpush.bf16.msra.mxu0 %v4836
  %4970 = vmatpush.bf16.msra.mxu0 %v4835
  %4971 = vmatmul.bf16.gmra.mxu0 %v4439
  %v4972 = vpop.f32.mrf.mxu0
  %v4973 = vadd.f32 %v4577, %v4972
  %v4974 = vpop.f32.mrf.mxu0
  %v4975 = vadd.f32 %v4577, %v4974
  %4976 = vdwg.mxu0
  %4977 = vmatpush.bf16.msra.mxu0 %v4850
  %4978 = vmatpush.bf16.msra.mxu0 %v4849
  %4979 = vmatpush.bf16.msra.mxu0 %v4848
  %4980 = vmatpush.bf16.msra.mxu0 %v4847
  %4981 = vmatpush.bf16.msra.mxu0 %v4846
  %4982 = vmatpush.bf16.msra.mxu0 %v4845
  %4983 = vmatpush.bf16.msra.mxu0 %v4844
  %4984 = vmatpush.bf16.msra.mxu0 %v4843
  %4985 = vmatmul.bf16.gmra.mxu0 %v4440
  %v4986 = vpop.f32.mrf.mxu0
  %v4987 = vadd.f32 %v4973, %v4986
  %v4988 = vpop.f32.mrf.mxu0
  %v4989 = vadd.f32 %v4975, %v4988
  %4990 = vdwg.mxu0
  %4991 = vmatpush.bf16.msra.mxu0 %v4858
  %4992 = vmatpush.bf16.msra.mxu0 %v4857
  %4993 = vmatpush.bf16.msra.mxu0 %v4856
  %4994 = vmatpush.bf16.msra.mxu0 %v4855
  %4995 = vmatpush.bf16.msra.mxu0 %v4854
  %4996 = vmatpush.bf16.msra.mxu0 %v4853
  %4997 = vmatpush.bf16.msra.mxu0 %v4852
  %4998 = vmatpush.bf16.msra.mxu0 %v4851
  %4999 = vmatmul.bf16.gmra.mxu0 %v4441
  %v5000 = vpop.f32.mrf.mxu0
  %v5001 = vadd.f32 %v4987, %v5000
  %v5002 = vpop.f32.mrf.mxu0
  %v5003 = vadd.f32 %v4989, %v5002
  %5004 = vdwg.mxu0
  %5005 = vmatpush.bf16.msra.mxu0 %v4866
  %5006 = vmatpush.bf16.msra.mxu0 %v4865
  %5007 = vmatpush.bf16.msra.mxu0 %v4864
  %5008 = vmatpush.bf16.msra.mxu0 %v4863
  %5009 = vmatpush.bf16.msra.mxu0 %v4862
  %5010 = vmatpush.bf16.msra.mxu0 %v4861
  %5011 = vmatpush.bf16.msra.mxu0 %v4860
  %5012 = vmatpush.bf16.msra.mxu0 %v4859
  %5013 = vmatmul.bf16.gmra.mxu0 %v4442
  %v5014 = vpop.f32.mrf.mxu0
  %v5015 = vadd.f32 %v5001, %v5014
  %v5016 = vpop.f32.mrf.mxu0
  %v5017 = vadd.f32 %v5003, %v5016
  %5018 = vdwg.mxu0
  %5019 = vmatpush.bf16.msra.mxu0 %v4874
  %5020 = vmatpush.bf16.msra.mxu0 %v4873
  %5021 = vmatpush.bf16.msra.mxu0 %v4872
  %5022 = vmatpush.bf16.msra.mxu0 %v4871
  %5023 = vmatpush.bf16.msra.mxu0 %v4870
  %5024 = vmatpush.bf16.msra.mxu0 %v4869
  %5025 = vmatpush.bf16.msra.mxu0 %v4868
  %5026 = vmatpush.bf16.msra.mxu0 %v4867
  %5027 = vmatmul.bf16.gmra.mxu0 %v4443
  %v5028 = vpop.f32.mrf.mxu0
  %v5029 = vadd.f32 %v5015, %v5028
  %v5030 = vpop.f32.mrf.mxu0
  %v5031 = vadd.f32 %v5017, %v5030
  %5032 = vdwg.mxu0
  %5033 = vmatpush.bf16.msra.mxu0 %v4882
  %5034 = vmatpush.bf16.msra.mxu0 %v4881
  %5035 = vmatpush.bf16.msra.mxu0 %v4880
  %5036 = vmatpush.bf16.msra.mxu0 %v4879
  %5037 = vmatpush.bf16.msra.mxu0 %v4878
  %5038 = vmatpush.bf16.msra.mxu0 %v4877
  %5039 = vmatpush.bf16.msra.mxu0 %v4876
  %5040 = vmatpush.bf16.msra.mxu0 %v4875
  %5041 = vmatmul.bf16.gmra.mxu0 %v4444
  %v5042 = vpop.f32.mrf.mxu0
  %v5043 = vadd.f32 %v5029, %v5042
  %v5044 = vpop.f32.mrf.mxu0
  %v5045 = vadd.f32 %v5031, %v5044
  %5046 = vdwg.mxu0
  %5047 = vmatpush.bf16.msra.mxu0 %v4890
  %5048 = vmatpush.bf16.msra.mxu0 %v4889
  %5049 = vmatpush.bf16.msra.mxu0 %v4888
  %5050 = vmatpush.bf16.msra.mxu0 %v4887
  %5051 = vmatpush.bf16.msra.mxu0 %v4886
  %5052 = vmatpush.bf16.msra.mxu0 %v4885
  %5053 = vmatpush.bf16.msra.mxu0 %v4884
  %5054 = vmatpush.bf16.msra.mxu0 %v4883
  %5055 = vmatmul.bf16.gmra.mxu0 %v4445
  %v5056 = vpop.f32.mrf.mxu0
  %v5057 = vadd.f32 %v5043, %v5056
  %v5058 = vpop.f32.mrf.mxu0
  %v5059 = vadd.f32 %v5045, %v5058
  %5060 = vdwg.mxu0
  %5061 = vmatpush.bf16.msra.mxu0 %v4898
  %5062 = vmatpush.bf16.msra.mxu0 %v4897
  %5063 = vmatpush.bf16.msra.mxu0 %v4896
  %5064 = vmatpush.bf16.msra.mxu0 %v4895
  %5065 = vmatpush.bf16.msra.mxu0 %v4894
  %5066 = vmatpush.bf16.msra.mxu0 %v4893
  %5067 = vmatpush.bf16.msra.mxu0 %v4892
  %5068 = vmatpush.bf16.msra.mxu0 %v4891
  %5069 = vmatmul.bf16.gmra.mxu0 %v4446
  %v5070 = vpop.f32.mrf.mxu0
  %v5071 = vadd.f32 %v5057, %v5070
  %v5072 = vpop.f32.mrf.mxu0
  %v5073 = vadd.f32 %v5059, %v5072
  %5074 = vdwg.mxu0
  %5075 = vst [vmem:[%s11] sm:$0xff] %v5071
  %5076 = vst [vmem:[%s11 + $0x8] sm:$0xff] %v5073
  // Predicated region
  $region46: #{dueling_dqn_forward.1} parent=0 // pred_check
    _
  $region47: #{dueling_dqn_forward.1} parent=0 // pred_check_branch
    %5078 = sbr.rel (0) target = $region49
  $region48: #{dueling_dqn_forward.1} parent=0 // pred_region
    _
  $region49: #{dueling_dqn_forward.1} parent=0 // pred_fallthru
    _
  // Predicated region
  $region50: #{dueling_dqn_forward.1} parent=0 // pred_check
    _
  $region51: #{dueling_dqn_forward.1} parent=0 // pred_check_branch
    %5080 = sbr.rel (0) target = $region53
  $region52: #{dueling_dqn_forward.1} parent=0 // pred_region
    _
  $region53: #{dueling_dqn_forward.1} parent=0 // pred_fallthru
    _

</llo_original>
